<compile_context>
chip_gen: v6e
topology: v6e:2x2x1
jax: 0.10.0
libtpu: 0.0.40
codegen_flags: <defaults>
</compile_context>

<pallas_src>
import functools

import jax
import jax.numpy as jnp
from jax.experimental import pallas as pl
from jax.experimental.pallas import tpu as pltpu

LANE = 128


def _lstm_chunk_kernel(
    x_ref,      # (T_BLK, B, I)     f32  input chunk
    ew_ref,     # (I, H)            bf16 embed weight (pre-transposed)
    eb_ref,     # (B, H)            f32  embed bias (pre-broadcast)
    w_ref,      # (L, 2H, 4H)       bf16 stacked [W_ih; W_hh] (gate order i,f,o,g)
    b_ref,      # (L, B, 4H)        f32  combined bias b_ih+b_hh (pre-broadcast)
    h0_ref,     # (L, B, H)         f32  initial hidden state
    c0_ref,     # (L, B, H)         f32  initial cell state
    ow_ref,     # (H, O_pad)        bf16 output weight (pre-transposed, lane padded)
    ob_ref,     # (B, O_pad)        f32  output bias (pre-broadcast, lane padded)
    y_ref,      # (T_BLK, B, O_pad) f32  output chunk
    h_ref,      # (L, B, H)         f32  carried / final hidden state (resident)
    c_ref,      # (L, B, H)         f32  carried / final cell state (resident)
    *,
    n_layers: int,
    hidden_size: int,
    t_block: int,
):
    H = hidden_size

    # Load the initial state into the VMEM-resident output blocks on the first
    # grid step; later steps keep updating the same blocks and Pallas writes
    # them back to HBM once, after the last grid step (accumulator pattern).
    @pl.when(pl.program_id(0) == 0)
    def _():
        h_ref[...] = h0_ref[...]
        c_ref[...] = c0_ref[...]

    ew = ew_ref[...]
    eb = eb_ref[...]
    ow = ow_ref[...]
    ob = ob_ref[...]

    # Unrolled chunk of timesteps (static loop -> full LLO scheduler visibility).
    for tt in range(t_block):
        # --- embed: Linear(input_size, hidden_size) -----------------------
        x = x_ref[tt].astype(jnp.bfloat16)                              # (B, I)
        h_in = jnp.dot(x, ew, preferred_element_type=jnp.float32) + eb  # (B, H) f32

        # --- stacked LSTMCells: one fused K=2H matmul per layer -----------
        for l in range(n_layers):
            xh = jnp.concatenate([h_in, h_ref[l]], axis=-1)             # (B, 2H) f32
            gates = (jnp.dot(xh.astype(jnp.bfloat16), w_ref[l],
                             preferred_element_type=jnp.float32)
                     + b_ref[l])                                        # (B, 4H) f32

            sig = jax.nn.sigmoid(gates[:, : 3 * H])                     # i, f, o in one EUP pass
            i_g = sig[:, 0 * H:1 * H]
            f_g = sig[:, 1 * H:2 * H]
            o_g = sig[:, 2 * H:3 * H]
            g_g = jnp.tanh(gates[:, 3 * H:4 * H])

            c_new = f_g * c_ref[l] + i_g * g_g
            h_new = o_g * jnp.tanh(c_new)

            h_ref[l] = h_new
            c_ref[l] = c_new
            h_in = h_new

        # --- output head: Linear(hidden_size, output_size) + Tanh ---------
        y_ref[tt] = jnp.tanh(
            jnp.dot(h_in.astype(jnp.bfloat16), ow,
                    preferred_element_type=jnp.float32) + ob)


def _pick_t_block(T, max_block=8):
    for d in range(min(max_block, T), 0, -1):
        if T % d == 0:
            return d
    return 1


def lstm_forward_sequence(x_seq, kp, hidden_state, *, t_block=None):
    """Run T timesteps of the svg.lstm forward inside one Pallas kernel.

    Args:
      x_seq: (T, B, input_size) f32.
      kp: kernel params from prepare_kernel_params (bf16 weights, reordered,
          biases pre-broadcast to the batch size).
      hidden_state: (h0, c0), each (n_layers, B, hidden_size) f32.  These
          buffers are DONATED into the final-state outputs.
      t_block: timesteps per grid step (must divide T); default <= 8.

    Returns:
      y_pad: (T, B, O_pad) f32 (lane-padded output; slice [..., :output_size]
             downstream if the narrow width is needed), and the final (h, c).
    """
    h0, c0 = hidden_state
    T, B, I = x_seq.shape
    L, _, H = h0.shape
    O_pad = kp["out_w"].shape[1]
    if t_block is None:
        t_block = _pick_t_block(T)
    assert T % t_block == 0, "t_block must divide T"

    kernel = functools.partial(
        _lstm_chunk_kernel, n_layers=L, hidden_size=H, t_block=t_block)

    grid_spec = pltpu.PrefetchScalarGridSpec(
        num_scalar_prefetch=0,
        grid=(T // t_block,),
        in_specs=[
            pl.BlockSpec((t_block, B, I), lambda t: (t, 0, 0)),      # x chunk
            pl.BlockSpec((I, H), lambda t: (0, 0)),                  # embed_w (resident)
            pl.BlockSpec((B, H), lambda t: (0, 0)),                  # embed_b
            pl.BlockSpec((L, 2 * H, 4 * H), lambda t: (0, 0, 0)),    # stacked W (resident)
            pl.BlockSpec((L, B, 4 * H), lambda t: (0, 0, 0)),        # bias
            pl.BlockSpec((L, B, H), lambda t: (0, 0, 0)),            # h0
            pl.BlockSpec((L, B, H), lambda t: (0, 0, 0)),            # c0
            pl.BlockSpec((H, O_pad), lambda t: (0, 0)),              # out_w (resident)
            pl.BlockSpec((B, O_pad), lambda t: (0, 0)),              # out_b
        ],
        out_specs=(
            pl.BlockSpec((t_block, B, O_pad), lambda t: (t, 0, 0)),  # y chunk
            pl.BlockSpec((L, B, H), lambda t: (0, 0, 0)),            # final h (resident)
            pl.BlockSpec((L, B, H), lambda t: (0, 0, 0)),            # final c (resident)
        ),
    )

    y_pad, h_new, c_new = pl.pallas_call(
        kernel,
        out_shape=(
            jax.ShapeDtypeStruct((T, B, O_pad), jnp.float32),
            jax.ShapeDtypeStruct((L, B, H), jnp.float32),
            jax.ShapeDtypeStruct((L, B, H), jnp.float32),
        ),
        grid_spec=grid_spec,
        compiler_params=pltpu.CompilerParams(
            dimension_semantics=("arbitrary",)),
        input_output_aliases={5: 1, 6: 2},   # h0 -> h_out, c0 -> c_out
    )(
        x_seq,
        kp["embed_w"], kp["embed_b"],
        kp["w"], kp["bias"],
        h0, c0,
        kp["out_w"], kp["out_b"],
    )
    return y_pad, (h_new, c_new)


def lstm_forward(x, kp, hidden_state, output_size):
    """Single-timestep forward matching the PyTorch module's forward()."""
    y_pad, state = lstm_forward_sequence(x[None], kp, hidden_state, t_block=1)
    return y_pad[0, :, :output_size], state


# --------------------------------------------------------------------------
# Parameter construction (PyTorch layout) and conversion to the kernel layout
# --------------------------------------------------------------------------
def init_torch_like_params(key, input_size, output_size, hidden_size, n_layers):
    """Synthetic params with the exact PyTorch parameter shapes."""
    ks = jax.random.split(key, 8)
    H = hidden_size
    s = 0.1
    return {
        "embed_w": s * jax.random.normal(ks[0], (H, input_size), jnp.float32),
        "embed_b": s * jax.random.normal(ks[1], (H,), jnp.float32),
        "w_ih": s * jax.random.normal(ks[2], (n_layers, 4 * H, H), jnp.float32),
        "w_hh": s * jax.random.normal(ks[3], (n_layers, 4 * H, H), jnp.float32),
        "b_ih": s * jax.random.normal(ks[4], (n_layers, 4 * H), jnp.float32),
        "b_hh": s * jax.random.normal(ks[5], (n_layers, 4 * H), jnp.float32),
        "out_w": s * jax.random.normal(ks[6], (output_size, H), jnp.float32),
        "out_b": s * jax.random.normal(ks[7], (output_size,), jnp.float32),
    }


def prepare_kernel_params(tp, batch_size):
    """Transpose, reorder gates (i,f,g,o)->(i,f,o,g), stack [W_ih; W_hh] into a
    single (2H, 4H) weight per layer, combine + pre-broadcast biases, pad the
    output head to a lane multiple, and cast matmul weights to bf16."""
    H = tp["embed_w"].shape[0]
    O = tp["out_w"].shape[0]
    L = tp["w_ih"].shape[0]
    B = batch_size
    O_pad = ((O + LANE - 1) // LANE) * LANE

    def reorder_ifog(m):
        # leading axis is 4H (gate-major, PyTorch order i,f,g,o) -> i,f,o,g
        i, f, g, o = jnp.split(m, 4, axis=0)
        return jnp.concatenate([i, f, o, g], axis=0)

    ws, bs = [], []
    for l in range(L):
        w_ih = reorder_ifog(tp["w_ih"][l]).T                          # (H, 4H)
        w_hh = reorder_ifog(tp["w_hh"][l]).T                          # (H, 4H)
        ws.append(jnp.concatenate([w_ih, w_hh], axis=0))              # (2H, 4H)
        bs.append(reorder_ifog(tp["b_ih"][l] + tp["b_hh"][l]))        # (4H,)

    out_w = jnp.zeros((H, O_pad), jnp.float32).at[:, :O].set(tp["out_w"].T)
    out_b = jnp.zeros((O_pad,), jnp.float32).at[:O].set(tp["out_b"])

    return {
        "embed_w": tp["embed_w"].T.astype(jnp.bfloat16),                         # (I, H)
        "embed_b": jnp.broadcast_to(tp["embed_b"][None, :], (B, H)
                                    ).astype(jnp.float32),                       # (B, H)
        "w": jnp.stack(ws).astype(jnp.bfloat16),                                 # (L, 2H, 4H)
        "bias": jnp.broadcast_to(jnp.stack(bs)[:, None, :], (L, B, 4 * H)
                                 ).astype(jnp.float32),                          # (L, B, 4H)
        "out_w": out_w.astype(jnp.bfloat16),                                     # (H, O_pad)
        "out_b": jnp.broadcast_to(out_b[None, :], (B, O_pad)).astype(jnp.float32),
    }


def _reference_forward_seq(x_seq, tp, hidden_state):
    """Pure-JAX f32 reference: the PyTorch module's forward applied T times."""
    h, c = hidden_state
    L, _, H = h.shape
    ys = []
    for t in range(x_seq.shape[0]):
        h_in = x_seq[t] @ tp["embed_w"].T + tp["embed_b"]
        new_h, new_c = [], []
        for l in range(L):
            gates = (h_in @ tp["w_ih"][l].T + h[l] @ tp["w_hh"][l].T
                     + tp["b_ih"][l] + tp["b_hh"][l])
            ig = jax.nn.sigmoid(gates[:, 0 * H:1 * H])
            fg = jax.nn.sigmoid(gates[:, 1 * H:2 * H])
            gg = jnp.tanh(gates[:, 2 * H:3 * H])
            og = jax.nn.sigmoid(gates[:, 3 * H:4 * H])
            cn = fg * c[l] + ig * gg
            hn = og * jnp.tanh(cn)
            new_h.append(hn)
            new_c.append(cn)
            h_in = hn
        h = jnp.stack(new_h)
        c = jnp.stack(new_c)
        ys.append(jnp.tanh(h_in @ tp["out_w"].T + tp["out_b"]))
    return jnp.stack(ys), (h, c)


if __name__ == "__main__":
    # Small shapes consistent with the module's forward.
    # Note: B=8 under-fills the MXU (128/256 rows); per-step latency is flat
    # up to B~128 (256 on v6e/v7x), so larger batches are free throughput.
    T, B = 16, 8
    INPUT, OUTPUT, HIDDEN, N_LAYERS = 64, 64, 128, 2

    key = jax.random.PRNGKey(0)
    k_param, k_x = jax.random.split(key)

    tparams = init_torch_like_params(k_param, INPUT, OUTPUT, HIDDEN, N_LAYERS)
    kparams = prepare_kernel_params(tparams, B)

    x_seq = jax.random.normal(k_x, (T, B, INPUT), jnp.float32)
    # init_hidden(batch_size): zeros for every layer.
    h0 = jnp.zeros((N_LAYERS, B, HIDDEN), jnp.float32)
    c0 = jnp.zeros((N_LAYERS, B, HIDDEN), jnp.float32)

    # Compute the f32 reference first (h0/c0 are donated into kernel outputs).
    y_ref, (h_ref, c_ref) = _reference_forward_seq(x_seq, tparams, (h0, c0))

    # T=16 with t_block=8 -> grid=(2,): exercises both the in-kernel unrolled
    # chunk and the cross-grid-step state carry in the resident output blocks.
    y_pad, (h1, c1) = lstm_forward_sequence(x_seq, kparams, (h0, c0), t_block=8)
    jax.block_until_ready((y_pad, h1, c1))

    # The kernel keeps the lane-padded width; slice only for verification here.
    y = y_pad[..., :OUTPUT]

    assert y.shape == (T, B, OUTPUT)
    # bf16 matmul operands (f32 accumulation) -> looser tolerance vs f32 ref.
    assert jnp.allclose(y, y_ref, atol=3e-2), "output mismatch"
    assert jnp.allclose(h1, h_ref, atol=3e-2), "hidden mismatch"
    assert jnp.allclose(c1, c_ref, atol=3e-2), "cell mismatch"

    print("KERNEL_OK")
</pallas_src>

<mosaic_0001>
module attributes {stable_mosaic.version = 11 : i64} {
  func.func @_lstm_chunk_kernel(%arg0: i32, %arg1: memref<8x8x64xf32, #tpu.memory_space<vmem>>, %arg2: memref<64x128xbf16, #tpu.memory_space<vmem>>, %arg3: memref<8x128xf32, #tpu.memory_space<vmem>>, %arg4: memref<2x256x512xbf16, #tpu.memory_space<vmem>>, %arg5: memref<2x8x512xf32, #tpu.memory_space<vmem>>, %arg6: memref<2x8x128xf32, #tpu.memory_space<vmem>>, %arg7: memref<2x8x128xf32, #tpu.memory_space<vmem>>, %arg8: memref<128x128xbf16, #tpu.memory_space<vmem>>, %arg9: memref<8x128xf32, #tpu.memory_space<vmem>>, %arg10: memref<8x8x128xf32, #tpu.memory_space<vmem>>, %arg11: memref<2x8x128xf32, #tpu.memory_space<vmem>>, %arg12: memref<2x8x128xf32, #tpu.memory_space<vmem>>) attributes {dimension_semantics = [#tpu.dimension_semantics<arbitrary>], iteration_bounds = array<i64: 2>, scalar_prefetch = 0 : i64, scratch_operands = 0 : i64, tpu.core_type = #tpu.core_type<tc>, window_params = [{transform_indices = @transform_0, window_bounds = array<i64: 8, 8, 64>}, {pipeline_mode = #tpu.pipeline_mode<synchronous>, transform_indices = @transform_1, window_bounds = array<i64: 64, 128>}, {pipeline_mode = #tpu.pipeline_mode<synchronous>, transform_indices = @transform_2, window_bounds = array<i64: 8, 128>}, {pipeline_mode = #tpu.pipeline_mode<synchronous>, transform_indices = @transform_3, window_bounds = array<i64: 2, 256, 512>}, {pipeline_mode = #tpu.pipeline_mode<synchronous>, transform_indices = @transform_4, window_bounds = array<i64: 2, 8, 512>}, {pipeline_mode = #tpu.pipeline_mode<synchronous>, transform_indices = @transform_5, window_bounds = array<i64: 2, 8, 128>}, {pipeline_mode = #tpu.pipeline_mode<synchronous>, transform_indices = @transform_6, window_bounds = array<i64: 2, 8, 128>}, {pipeline_mode = #tpu.pipeline_mode<synchronous>, transform_indices = @transform_7, window_bounds = array<i64: 128, 128>}, {pipeline_mode = #tpu.pipeline_mode<synchronous>, transform_indices = @transform_8, window_bounds = array<i64: 8, 128>}, {transform_indices = @transform_9, window_bounds = array<i64: 8, 8, 128>}, {pipeline_mode = #tpu.pipeline_mode<synchronous>, transform_indices = @transform_10, window_bounds = array<i64: 2, 8, 128>}, {pipeline_mode = #tpu.pipeline_mode<synchronous>, transform_indices = @transform_11, window_bounds = array<i64: 2, 8, 128>}]} {
    %c0_i32 = arith.constant 0 : i32
    %0 = arith.cmpi eq, %arg0, %c0_i32 : i32
    %1 = arith.extui %0 : i1 to i32
    %c0_i32_0 = arith.constant 0 : i32
    %2 = arith.cmpi ne, %1, %c0_i32_0 : i32
    scf.if %2 {
      %c0_384 = arith.constant 0 : index
      %c0_385 = arith.constant 0 : index
      %c0_386 = arith.constant 0 : index
      %647 = vector.load %arg6[%c0_384, %c0_385, %c0_386] : memref<2x8x128xf32, #tpu.memory_space<vmem>>, vector<2x8x128xf32>
      %c0_387 = arith.constant 0 : index
      %c0_388 = arith.constant 0 : index
      %c0_389 = arith.constant 0 : index
      %648 = vector.load %arg11[%c0_387, %c0_388, %c0_389] : memref<2x8x128xf32, #tpu.memory_space<vmem>>, vector<2x8x128xf32>
      tpu.vector_store %arg11[%c0_387, %c0_388, %c0_389], %647 {strides = array<i32>} : memref<2x8x128xf32, #tpu.memory_space<vmem>>, vector<2x8x128xf32>,
      %c0_390 = arith.constant 0 : index
      %c0_391 = arith.constant 0 : index
      %c0_392 = arith.constant 0 : index
      %649 = vector.load %arg7[%c0_390, %c0_391, %c0_392] : memref<2x8x128xf32, #tpu.memory_space<vmem>>, vector<2x8x128xf32>
      %c0_393 = arith.constant 0 : index
      %c0_394 = arith.constant 0 : index
      %c0_395 = arith.constant 0 : index
      %650 = vector.load %arg12[%c0_393, %c0_394, %c0_395] : memref<2x8x128xf32, #tpu.memory_space<vmem>>, vector<2x8x128xf32>
      tpu.vector_store %arg12[%c0_393, %c0_394, %c0_395], %649 {strides = array<i32>} : memref<2x8x128xf32, #tpu.memory_space<vmem>>, vector<2x8x128xf32>,
    } else {
    }
    %c0 = arith.constant 0 : index
    %c0_1 = arith.constant 0 : index
    %3 = vector.load %arg2[%c0, %c0_1] : memref<64x128xbf16, #tpu.memory_space<vmem>>, vector<64x128xbf16>
    %c0_2 = arith.constant 0 : index
    %c0_3 = arith.constant 0 : index
    %4 = vector.load %arg3[%c0_2, %c0_3] : memref<8x128xf32, #tpu.memory_space<vmem>>, vector<8x128xf32>
    %c0_4 = arith.constant 0 : index
    %c0_5 = arith.constant 0 : index
    %5 = vector.load %arg8[%c0_4, %c0_5] : memref<128x128xbf16, #tpu.memory_space<vmem>>, vector<128x128xbf16>
    %c0_6 = arith.constant 0 : index
    %c0_7 = arith.constant 0 : index
    %6 = vector.load %arg9[%c0_6, %c0_7] : memref<8x128xf32, #tpu.memory_space<vmem>>, vector<8x128xf32>
    %c0_8 = arith.constant 0 : index
    %c0_9 = arith.constant 0 : index
    %c0_10 = arith.constant 0 : index
    %7 = vector.load %arg1[%c0_8, %c0_9, %c0_10] : memref<8x8x64xf32, #tpu.memory_space<vmem>>, vector<1x8x64xf32>
    %8 = vector.shape_cast %7 : vector<1x8x64xf32> to vector<8x64xf32>
    %9 = arith.truncf %8 : vector<8x64xf32> to vector<8x64xbf16>
    %cst = arith.constant dense<0.000000e+00> : vector<8x128xf32>
    %10 = tpu.matmul %9, %3, %cst {dimension_numbers = #tpu.dot_dimension_numbers<[1], [0], [0], [1], [0, 0, 1, 1], [], []>} : vector<8x64xbf16>, vector<64x128xbf16>, vector<8x128xf32> -> vector<8x128xf32>
    %11 = arith.addf %10, %4 : vector<8x128xf32>
    %c0_11 = arith.constant 0 : index
    %c0_12 = arith.constant 0 : index
    %c0_13 = arith.constant 0 : index
    %12 = vector.load %arg11[%c0_11, %c0_12, %c0_13] : memref<2x8x128xf32, #tpu.memory_space<vmem>>, vector<1x8x128xf32>
    %13 = vector.shape_cast %12 : vector<1x8x128xf32> to vector<8x128xf32>
    %14 = tpu.concatenate %11, %13 in 1 : vector<8x128xf32>, vector<8x128xf32> -> vector<8x256xf32>
    %15 = arith.truncf %14 : vector<8x256xf32> to vector<8x256xbf16>
    %c0_14 = arith.constant 0 : index
    %c0_15 = arith.constant 0 : index
    %c0_16 = arith.constant 0 : index
    %16 = vector.load %arg4[%c0_14, %c0_15, %c0_16] : memref<2x256x512xbf16, #tpu.memory_space<vmem>>, vector<1x256x512xbf16>
    %17 = vector.shape_cast %16 : vector<1x256x512xbf16> to vector<256x512xbf16>
    %cst_17 = arith.constant dense<0.000000e+00> : vector<8x512xf32>
    %18 = tpu.matmul %15, %17, %cst_17 {dimension_numbers = #tpu.dot_dimension_numbers<[1], [0], [0], [1], [0, 0, 1, 1], [], []>} : vector<8x256xbf16>, vector<256x512xbf16>, vector<8x512xf32> -> vector<8x512xf32>
    %c0_18 = arith.constant 0 : index
    %c0_19 = arith.constant 0 : index
    %c0_20 = arith.constant 0 : index
    %19 = vector.load %arg5[%c0_18, %c0_19, %c0_20] : memref<2x8x512xf32, #tpu.memory_space<vmem>>, vector<1x8x512xf32>
    %20 = vector.shape_cast %19 : vector<1x8x512xf32> to vector<8x512xf32>
    %21 = arith.addf %18, %20 : vector<8x512xf32>
    %22 = vector.extract_strided_slice %21 {offsets = [0, 0], sizes = [8, 384], strides = [1, 1]} : vector<8x512xf32> to vector<8x384xf32>
    %23 = arith.negf %22 : vector<8x384xf32>
    %24 = math.exp %23 : vector<8x384xf32>
    %cst_21 = arith.constant 1.000000e+00 : f32
    %25 = vector.broadcast %cst_21 : f32 to vector<8x384xf32>
    %26 = arith.addf %25, %24 : vector<8x384xf32>
    %27 = arith.divf %25, %26 : vector<8x384xf32>
    %28 = vector.extract_strided_slice %27 {offsets = [0, 0], sizes = [8, 128], strides = [1, 1]} : vector<8x384xf32> to vector<8x128xf32>
    %29 = vector.extract_strided_slice %27 {offsets = [0, 128], sizes = [8, 128], strides = [1, 1]} : vector<8x384xf32> to vector<8x128xf32>
    %30 = vector.extract_strided_slice %27 {offsets = [0, 256], sizes = [8, 128], strides = [1, 1]} : vector<8x384xf32> to vector<8x128xf32>
    %31 = vector.extract_strided_slice %21 {offsets = [0, 384], sizes = [8, 128], strides = [1, 1]} : vector<8x512xf32> to vector<8x128xf32>
    %32 = math.tanh %31 : vector<8x128xf32>
    %c0_22 = arith.constant 0 : index
    %c0_23 = arith.constant 0 : index
    %c0_24 = arith.constant 0 : index
    %33 = vector.load %arg12[%c0_22, %c0_23, %c0_24] : memref<2x8x128xf32, #tpu.memory_space<vmem>>, vector<1x8x128xf32>
    %34 = vector.shape_cast %33 : vector<1x8x128xf32> to vector<8x128xf32>
    %35 = arith.mulf %29, %34 : vector<8x128xf32>
    %36 = arith.mulf %28, %32 : vector<8x128xf32>
    %37 = arith.addf %35, %36 : vector<8x128xf32>
    %38 = math.tanh %37 : vector<8x128xf32>
    %39 = arith.mulf %30, %38 : vector<8x128xf32>
    %c0_25 = arith.constant 0 : index
    %c0_26 = arith.constant 0 : index
    %c0_27 = arith.constant 0 : index
    %40 = vector.load %arg11[%c0_25, %c0_26, %c0_27] : memref<2x8x128xf32, #tpu.memory_space<vmem>>, vector<1x8x128xf32>
    %41 = vector.shape_cast %40 : vector<1x8x128xf32> to vector<8x128xf32>
    %42 = vector.shape_cast %39 : vector<8x128xf32> to vector<1x8x128xf32>
    tpu.vector_store %arg11[%c0_25, %c0_26, %c0_27], %42 {strides = array<i32>} : memref<2x8x128xf32, #tpu.memory_space<vmem>>, vector<1x8x128xf32>,
    %c0_28 = arith.constant 0 : index
    %c0_29 = arith.constant 0 : index
    %c0_30 = arith.constant 0 : index
    %43 = vector.load %arg12[%c0_28, %c0_29, %c0_30] : memref<2x8x128xf32, #tpu.memory_space<vmem>>, vector<1x8x128xf32>
    %44 = vector.shape_cast %43 : vector<1x8x128xf32> to vector<8x128xf32>
    %45 = vector.shape_cast %37 : vector<8x128xf32> to vector<1x8x128xf32>
    tpu.vector_store %arg12[%c0_28, %c0_29, %c0_30], %45 {strides = array<i32>} : memref<2x8x128xf32, #tpu.memory_space<vmem>>, vector<1x8x128xf32>,
    %c1 = arith.constant 1 : index
    %c0_31 = arith.constant 0 : index
    %c0_32 = arith.constant 0 : index
    %46 = vector.load %arg11[%c1, %c0_31, %c0_32] : memref<2x8x128xf32, #tpu.memory_space<vmem>>, vector<1x8x128xf32>
    %47 = vector.shape_cast %46 : vector<1x8x128xf32> to vector<8x128xf32>
    %48 = tpu.concatenate %39, %47 in 1 : vector<8x128xf32>, vector<8x128xf32> -> vector<8x256xf32>
    %49 = arith.truncf %48 : vector<8x256xf32> to vector<8x256xbf16>
    %c1_33 = arith.constant 1 : index
    %c0_34 = arith.constant 0 : index
    %c0_35 = arith.constant 0 : index
    %50 = vector.load %arg4[%c1_33, %c0_34, %c0_35] : memref<2x256x512xbf16, #tpu.memory_space<vmem>>, vector<1x256x512xbf16>
    %51 = vector.shape_cast %50 : vector<1x256x512xbf16> to vector<256x512xbf16>
    %cst_36 = arith.constant dense<0.000000e+00> : vector<8x512xf32>
    %52 = tpu.matmul %49, %51, %cst_36 {dimension_numbers = #tpu.dot_dimension_numbers<[1], [0], [0], [1], [0, 0, 1, 1], [], []>} : vector<8x256xbf16>, vector<256x512xbf16>, vector<8x512xf32> -> vector<8x512xf32>
    %c1_37 = arith.constant 1 : index
    %c0_38 = arith.constant 0 : index
    %c0_39 = arith.constant 0 : index
    %53 = vector.load %arg5[%c1_37, %c0_38, %c0_39] : memref<2x8x512xf32, #tpu.memory_space<vmem>>, vector<1x8x512xf32>
    %54 = vector.shape_cast %53 : vector<1x8x512xf32> to vector<8x512xf32>
    %55 = arith.addf %52, %54 : vector<8x512xf32>
    %56 = vector.extract_strided_slice %55 {offsets = [0, 0], sizes = [8, 384], strides = [1, 1]} : vector<8x512xf32> to vector<8x384xf32>
    %57 = arith.negf %56 : vector<8x384xf32>
    %58 = math.exp %57 : vector<8x384xf32>
    %cst_40 = arith.constant 1.000000e+00 : f32
    %59 = vector.broadcast %cst_40 : f32 to vector<8x384xf32>
    %60 = arith.addf %59, %58 : vector<8x384xf32>
    %61 = arith.divf %59, %60 : vector<8x384xf32>
    %62 = vector.extract_strided_slice %61 {offsets = [0, 0], sizes = [8, 128], strides = [1, 1]} : vector<8x384xf32> to vector<8x128xf32>
    %63 = vector.extract_strided_slice %61 {offsets = [0, 128], sizes = [8, 128], strides = [1, 1]} : vector<8x384xf32> to vector<8x128xf32>
    %64 = vector.extract_strided_slice %61 {offsets = [0, 256], sizes = [8, 128], strides = [1, 1]} : vector<8x384xf32> to vector<8x128xf32>
    %65 = vector.extract_strided_slice %55 {offsets = [0, 384], sizes = [8, 128], strides = [1, 1]} : vector<8x512xf32> to vector<8x128xf32>
    %66 = math.tanh %65 : vector<8x128xf32>
    %c1_41 = arith.constant 1 : index
    %c0_42 = arith.constant 0 : index
    %c0_43 = arith.constant 0 : index
    %67 = vector.load %arg12[%c1_41, %c0_42, %c0_43] : memref<2x8x128xf32, #tpu.memory_space<vmem>>, vector<1x8x128xf32>
    %68 = vector.shape_cast %67 : vector<1x8x128xf32> to vector<8x128xf32>
    %69 = arith.mulf %63, %68 : vector<8x128xf32>
    %70 = arith.mulf %62, %66 : vector<8x128xf32>
    %71 = arith.addf %69, %70 : vector<8x128xf32>
    %72 = math.tanh %71 : vector<8x128xf32>
    %73 = arith.mulf %64, %72 : vector<8x128xf32>
    %c1_44 = arith.constant 1 : index
    %c0_45 = arith.constant 0 : index
    %c0_46 = arith.constant 0 : index
    %74 = vector.load %arg11[%c1_44, %c0_45, %c0_46] : memref<2x8x128xf32, #tpu.memory_space<vmem>>, vector<1x8x128xf32>
    %75 = vector.shape_cast %74 : vector<1x8x128xf32> to vector<8x128xf32>
    %76 = vector.shape_cast %73 : vector<8x128xf32> to vector<1x8x128xf32>
    tpu.vector_store %arg11[%c1_44, %c0_45, %c0_46], %76 {strides = array<i32>} : memref<2x8x128xf32, #tpu.memory_space<vmem>>, vector<1x8x128xf32>,
    %c1_47 = arith.constant 1 : index
    %c0_48 = arith.constant 0 : index
    %c0_49 = arith.constant 0 : index
    %77 = vector.load %arg12[%c1_47, %c0_48, %c0_49] : memref<2x8x128xf32, #tpu.memory_space<vmem>>, vector<1x8x128xf32>
    %78 = vector.shape_cast %77 : vector<1x8x128xf32> to vector<8x128xf32>
    %79 = vector.shape_cast %71 : vector<8x128xf32> to vector<1x8x128xf32>
    tpu.vector_store %arg12[%c1_47, %c0_48, %c0_49], %79 {strides = array<i32>} : memref<2x8x128xf32, #tpu.memory_space<vmem>>, vector<1x8x128xf32>,
    %80 = arith.truncf %73 : vector<8x128xf32> to vector<8x128xbf16>
    %cst_50 = arith.constant dense<0.000000e+00> : vector<8x128xf32>
    %81 = tpu.matmul %80, %5, %cst_50 {dimension_numbers = #tpu.dot_dimension_numbers<[1], [0], [0], [1], [0, 0, 1, 1], [], []>} : vector<8x128xbf16>, vector<128x128xbf16>, vector<8x128xf32> -> vector<8x128xf32>
    %82 = arith.addf %81, %6 : vector<8x128xf32>
    %83 = math.tanh %82 : vector<8x128xf32>
    %c0_51 = arith.constant 0 : index
    %c0_52 = arith.constant 0 : index
    %c0_53 = arith.constant 0 : index
    %84 = vector.load %arg10[%c0_51, %c0_52, %c0_53] : memref<8x8x128xf32, #tpu.memory_space<vmem>>, vector<1x8x128xf32>
    %85 = vector.shape_cast %84 : vector<1x8x128xf32> to vector<8x128xf32>
    %86 = vector.shape_cast %83 : vector<8x128xf32> to vector<1x8x128xf32>
    tpu.vector_store %arg10[%c0_51, %c0_52, %c0_53], %86 {strides = array<i32>} : memref<8x8x128xf32, #tpu.memory_space<vmem>>, vector<1x8x128xf32>,
    %c1_54 = arith.constant 1 : index
    %c0_55 = arith.constant 0 : index
    %c0_56 = arith.constant 0 : index
    %87 = vector.load %arg1[%c1_54, %c0_55, %c0_56] : memref<8x8x64xf32, #tpu.memory_space<vmem>>, vector<1x8x64xf32>
    %88 = vector.shape_cast %87 : vector<1x8x64xf32> to vector<8x64xf32>
    %89 = arith.truncf %88 : vector<8x64xf32> to vector<8x64xbf16>
    %cst_57 = arith.constant dense<0.000000e+00> : vector<8x128xf32>
    %90 = tpu.matmul %89, %3, %cst_57 {dimension_numbers = #tpu.dot_dimension_numbers<[1], [0], [0], [1], [0, 0, 1, 1], [], []>} : vector<8x64xbf16>, vector<64x128xbf16>, vector<8x128xf32> -> vector<8x128xf32>
    %91 = arith.addf %90, %4 : vector<8x128xf32>
    %c0_58 = arith.constant 0 : index
    %c0_59 = arith.constant 0 : index
    %c0_60 = arith.constant 0 : index
    %92 = vector.load %arg11[%c0_58, %c0_59, %c0_60] : memref<2x8x128xf32, #tpu.memory_space<vmem>>, vector<1x8x128xf32>
    %93 = vector.shape_cast %92 : vector<1x8x128xf32> to vector<8x128xf32>
    %94 = tpu.concatenate %91, %93 in 1 : vector<8x128xf32>, vector<8x128xf32> -> vector<8x256xf32>
    %95 = arith.truncf %94 : vector<8x256xf32> to vector<8x256xbf16>
    %c0_61 = arith.constant 0 : index
    %c0_62 = arith.constant 0 : index
    %c0_63 = arith.constant 0 : index
    %96 = vector.load %arg4[%c0_61, %c0_62, %c0_63] : memref<2x256x512xbf16, #tpu.memory_space<vmem>>, vector<1x256x512xbf16>
    %97 = vector.shape_cast %96 : vector<1x256x512xbf16> to vector<256x512xbf16>
    %cst_64 = arith.constant dense<0.000000e+00> : vector<8x512xf32>
    %98 = tpu.matmul %95, %97, %cst_64 {dimension_numbers = #tpu.dot_dimension_numbers<[1], [0], [0], [1], [0, 0, 1, 1], [], []>} : vector<8x256xbf16>, vector<256x512xbf16>, vector<8x512xf32> -> vector<8x512xf32>
    %c0_65 = arith.constant 0 : index
    %c0_66 = arith.constant 0 : index
    %c0_67 = arith.constant 0 : index
    %99 = vector.load %arg5[%c0_65, %c0_66, %c0_67] : memref<2x8x512xf32, #tpu.memory_space<vmem>>, vector<1x8x512xf32>
    %100 = vector.shape_cast %99 : vector<1x8x512xf32> to vector<8x512xf32>
    %101 = arith.addf %98, %100 : vector<8x512xf32>
    %102 = vector.extract_strided_slice %101 {offsets = [0, 0], sizes = [8, 384], strides = [1, 1]} : vector<8x512xf32> to vector<8x384xf32>
    %103 = arith.negf %102 : vector<8x384xf32>
    %104 = math.exp %103 : vector<8x384xf32>
    %cst_68 = arith.constant 1.000000e+00 : f32
    %105 = vector.broadcast %cst_68 : f32 to vector<8x384xf32>
    %106 = arith.addf %105, %104 : vector<8x384xf32>
    %107 = arith.divf %105, %106 : vector<8x384xf32>
    %108 = vector.extract_strided_slice %107 {offsets = [0, 0], sizes = [8, 128], strides = [1, 1]} : vector<8x384xf32> to vector<8x128xf32>
    %109 = vector.extract_strided_slice %107 {offsets = [0, 128], sizes = [8, 128], strides = [1, 1]} : vector<8x384xf32> to vector<8x128xf32>
    %110 = vector.extract_strided_slice %107 {offsets = [0, 256], sizes = [8, 128], strides = [1, 1]} : vector<8x384xf32> to vector<8x128xf32>
    %111 = vector.extract_strided_slice %101 {offsets = [0, 384], sizes = [8, 128], strides = [1, 1]} : vector<8x512xf32> to vector<8x128xf32>
    %112 = math.tanh %111 : vector<8x128xf32>
    %c0_69 = arith.constant 0 : index
    %c0_70 = arith.constant 0 : index
    %c0_71 = arith.constant 0 : index
    %113 = vector.load %arg12[%c0_69, %c0_70, %c0_71] : memref<2x8x128xf32, #tpu.memory_space<vmem>>, vector<1x8x128xf32>
    %114 = vector.shape_cast %113 : vector<1x8x128xf32> to vector<8x128xf32>
    %115 = arith.mulf %109, %114 : vector<8x128xf32>
    %116 = arith.mulf %108, %112 : vector<8x128xf32>
    %117 = arith.addf %115, %116 : vector<8x128xf32>
    %118 = math.tanh %117 : vector<8x128xf32>
    %119 = arith.mulf %110, %118 : vector<8x128xf32>
    %c0_72 = arith.constant 0 : index
    %c0_73 = arith.constant 0 : index
    %c0_74 = arith.constant 0 : index
    %120 = vector.load %arg11[%c0_72, %c0_73, %c0_74] : memref<2x8x128xf32, #tpu.memory_space<vmem>>, vector<1x8x128xf32>
    %121 = vector.shape_cast %120 : vector<1x8x128xf32> to vector<8x128xf32>
    %122 = vector.shape_cast %119 : vector<8x128xf32> to vector<1x8x128xf32>
    tpu.vector_store %arg11[%c0_72, %c0_73, %c0_74], %122 {strides = array<i32>} : memref<2x8x128xf32, #tpu.memory_space<vmem>>, vector<1x8x128xf32>,
    %c0_75 = arith.constant 0 : index
    %c0_76 = arith.constant 0 : index
    %c0_77 = arith.constant 0 : index
    %123 = vector.load %arg12[%c0_75, %c0_76, %c0_77] : memref<2x8x128xf32, #tpu.memory_space<vmem>>, vector<1x8x128xf32>
    %124 = vector.shape_cast %123 : vector<1x8x128xf32> to vector<8x128xf32>
    %125 = vector.shape_cast %117 : vector<8x128xf32> to vector<1x8x128xf32>
    tpu.vector_store %arg12[%c0_75, %c0_76, %c0_77], %125 {strides = array<i32>} : memref<2x8x128xf32, #tpu.memory_space<vmem>>, vector<1x8x128xf32>,
    %c1_78 = arith.constant 1 : index
    %c0_79 = arith.constant 0 : index
    %c0_80 = arith.constant 0 : index
    %126 = vector.load %arg11[%c1_78, %c0_79, %c0_80] : memref<2x8x128xf32, #tpu.memory_space<vmem>>, vector<1x8x128xf32>
    %127 = vector.shape_cast %126 : vector<1x8x128xf32> to vector<8x128xf32>
    %128 = tpu.concatenate %119, %127 in 1 : vector<8x128xf32>, vector<8x128xf32> -> vector<8x256xf32>
    %129 = arith.truncf %128 : vector<8x256xf32> to vector<8x256xbf16>
    %c1_81 = arith.constant 1 : index
    %c0_82 = arith.constant 0 : index
    %c0_83 = arith.constant 0 : index
    %130 = vector.load %arg4[%c1_81, %c0_82, %c0_83] : memref<2x256x512xbf16, #tpu.memory_space<vmem>>, vector<1x256x512xbf16>
    %131 = vector.shape_cast %130 : vector<1x256x512xbf16> to vector<256x512xbf16>
    %cst_84 = arith.constant dense<0.000000e+00> : vector<8x512xf32>
    %132 = tpu.matmul %129, %131, %cst_84 {dimension_numbers = #tpu.dot_dimension_numbers<[1], [0], [0], [1], [0, 0, 1, 1], [], []>} : vector<8x256xbf16>, vector<256x512xbf16>, vector<8x512xf32> -> vector<8x512xf32>
    %c1_85 = arith.constant 1 : index
    %c0_86 = arith.constant 0 : index
    %c0_87 = arith.constant 0 : index
    %133 = vector.load %arg5[%c1_85, %c0_86, %c0_87] : memref<2x8x512xf32, #tpu.memory_space<vmem>>, vector<1x8x512xf32>
    %134 = vector.shape_cast %133 : vector<1x8x512xf32> to vector<8x512xf32>
    %135 = arith.addf %132, %134 : vector<8x512xf32>
    %136 = vector.extract_strided_slice %135 {offsets = [0, 0], sizes = [8, 384], strides = [1, 1]} : vector<8x512xf32> to vector<8x384xf32>
    %137 = arith.negf %136 : vector<8x384xf32>
    %138 = math.exp %137 : vector<8x384xf32>
    %cst_88 = arith.constant 1.000000e+00 : f32
    %139 = vector.broadcast %cst_88 : f32 to vector<8x384xf32>
    %140 = arith.addf %139, %138 : vector<8x384xf32>
    %141 = arith.divf %139, %140 : vector<8x384xf32>
    %142 = vector.extract_strided_slice %141 {offsets = [0, 0], sizes = [8, 128], strides = [1, 1]} : vector<8x384xf32> to vector<8x128xf32>
    %143 = vector.extract_strided_slice %141 {offsets = [0, 128], sizes = [8, 128], strides = [1, 1]} : vector<8x384xf32> to vector<8x128xf32>
    %144 = vector.extract_strided_slice %141 {offsets = [0, 256], sizes = [8, 128], strides = [1, 1]} : vector<8x384xf32> to vector<8x128xf32>
    %145 = vector.extract_strided_slice %135 {offsets = [0, 384], sizes = [8, 128], strides = [1, 1]} : vector<8x512xf32> to vector<8x128xf32>
    %146 = math.tanh %145 : vector<8x128xf32>
    %c1_89 = arith.constant 1 : index
    %c0_90 = arith.constant 0 : index
    %c0_91 = arith.constant 0 : index
    %147 = vector.load %arg12[%c1_89, %c0_90, %c0_91] : memref<2x8x128xf32, #tpu.memory_space<vmem>>, vector<1x8x128xf32>
    %148 = vector.shape_cast %147 : vector<1x8x128xf32> to vector<8x128xf32>
    %149 = arith.mulf %143, %148 : vector<8x128xf32>
    %150 = arith.mulf %142, %146 : vector<8x128xf32>
    %151 = arith.addf %149, %150 : vector<8x128xf32>
    %152 = math.tanh %151 : vector<8x128xf32>
    %153 = arith.mulf %144, %152 : vector<8x128xf32>
    %c1_92 = arith.constant 1 : index
    %c0_93 = arith.constant 0 : index
    %c0_94 = arith.constant 0 : index
    %154 = vector.load %arg11[%c1_92, %c0_93, %c0_94] : memref<2x8x128xf32, #tpu.memory_space<vmem>>, vector<1x8x128xf32>
    %155 = vector.shape_cast %154 : vector<1x8x128xf32> to vector<8x128xf32>
    %156 = vector.shape_cast %153 : vector<8x128xf32> to vector<1x8x128xf32>
    tpu.vector_store %arg11[%c1_92, %c0_93, %c0_94], %156 {strides = array<i32>} : memref<2x8x128xf32, #tpu.memory_space<vmem>>, vector<1x8x128xf32>,
    %c1_95 = arith.constant 1 : index
    %c0_96 = arith.constant 0 : index
    %c0_97 = arith.constant 0 : index
    %157 = vector.load %arg12[%c1_95, %c0_96, %c0_97] : memref<2x8x128xf32, #tpu.memory_space<vmem>>, vector<1x8x128xf32>
    %158 = vector.shape_cast %157 : vector<1x8x128xf32> to vector<8x128xf32>
    %159 = vector.shape_cast %151 : vector<8x128xf32> to vector<1x8x128xf32>
    tpu.vector_store %arg12[%c1_95, %c0_96, %c0_97], %159 {strides = array<i32>} : memref<2x8x128xf32, #tpu.memory_space<vmem>>, vector<1x8x128xf32>,
    %160 = arith.truncf %153 : vector<8x128xf32> to vector<8x128xbf16>
    %cst_98 = arith.constant dense<0.000000e+00> : vector<8x128xf32>
    %161 = tpu.matmul %160, %5, %cst_98 {dimension_numbers = #tpu.dot_dimension_numbers<[1], [0], [0], [1], [0, 0, 1, 1], [], []>} : vector<8x128xbf16>, vector<128x128xbf16>, vector<8x128xf32> -> vector<8x128xf32>
    %162 = arith.addf %161, %6 : vector<8x128xf32>
    %163 = math.tanh %162 : vector<8x128xf32>
    %c1_99 = arith.constant 1 : index
    %c0_100 = arith.constant 0 : index
    %c0_101 = arith.constant 0 : index
    %164 = vector.load %arg10[%c1_99, %c0_100, %c0_101] : memref<8x8x128xf32, #tpu.memory_space<vmem>>, vector<1x8x128xf32>
    %165 = vector.shape_cast %164 : vector<1x8x128xf32> to vector<8x128xf32>
    %166 = vector.shape_cast %163 : vector<8x128xf32> to vector<1x8x128xf32>
    tpu.vector_store %arg10[%c1_99, %c0_100, %c0_101], %166 {strides = array<i32>} : memref<8x8x128xf32, #tpu.memory_space<vmem>>, vector<1x8x128xf32>,
    %c2 = arith.constant 2 : index
    %c0_102 = arith.constant 0 : index
    %c0_103 = arith.constant 0 : index
    %167 = vector.load %arg1[%c2, %c0_102, %c0_103] : memref<8x8x64xf32, #tpu.memory_space<vmem>>, vector<1x8x64xf32>
    %168 = vector.shape_cast %167 : vector<1x8x64xf32> to vector<8x64xf32>
    %169 = arith.truncf %168 : vector<8x64xf32> to vector<8x64xbf16>
    %cst_104 = arith.constant dense<0.000000e+00> : vector<8x128xf32>
    %170 = tpu.matmul %169, %3, %cst_104 {dimension_numbers = #tpu.dot_dimension_numbers<[1], [0], [0], [1], [0, 0, 1, 1], [], []>} : vector<8x64xbf16>, vector<64x128xbf16>, vector<8x128xf32> -> vector<8x128xf32>
    %171 = arith.addf %170, %4 : vector<8x128xf32>
    %c0_105 = arith.constant 0 : index
    %c0_106 = arith.constant 0 : index
    %c0_107 = arith.constant 0 : index
    %172 = vector.load %arg11[%c0_105, %c0_106, %c0_107] : memref<2x8x128xf32, #tpu.memory_space<vmem>>, vector<1x8x128xf32>
    %173 = vector.shape_cast %172 : vector<1x8x128xf32> to vector<8x128xf32>
    %174 = tpu.concatenate %171, %173 in 1 : vector<8x128xf32>, vector<8x128xf32> -> vector<8x256xf32>
    %175 = arith.truncf %174 : vector<8x256xf32> to vector<8x256xbf16>
    %c0_108 = arith.constant 0 : index
    %c0_109 = arith.constant 0 : index
    %c0_110 = arith.constant 0 : index
    %176 = vector.load %arg4[%c0_108, %c0_109, %c0_110] : memref<2x256x512xbf16, #tpu.memory_space<vmem>>, vector<1x256x512xbf16>
    %177 = vector.shape_cast %176 : vector<1x256x512xbf16> to vector<256x512xbf16>
    %cst_111 = arith.constant dense<0.000000e+00> : vector<8x512xf32>
    %178 = tpu.matmul %175, %177, %cst_111 {dimension_numbers = #tpu.dot_dimension_numbers<[1], [0], [0], [1], [0, 0, 1, 1], [], []>} : vector<8x256xbf16>, vector<256x512xbf16>, vector<8x512xf32> -> vector<8x512xf32>
    %c0_112 = arith.constant 0 : index
    %c0_113 = arith.constant 0 : index
    %c0_114 = arith.constant 0 : index
    %179 = vector.load %arg5[%c0_112, %c0_113, %c0_114] : memref<2x8x512xf32, #tpu.memory_space<vmem>>, vector<1x8x512xf32>
    %180 = vector.shape_cast %179 : vector<1x8x512xf32> to vector<8x512xf32>
    %181 = arith.addf %178, %180 : vector<8x512xf32>
    %182 = vector.extract_strided_slice %181 {offsets = [0, 0], sizes = [8, 384], strides = [1, 1]} : vector<8x512xf32> to vector<8x384xf32>
    %183 = arith.negf %182 : vector<8x384xf32>
    %184 = math.exp %183 : vector<8x384xf32>
    %cst_115 = arith.constant 1.000000e+00 : f32
    %185 = vector.broadcast %cst_115 : f32 to vector<8x384xf32>
    %186 = arith.addf %185, %184 : vector<8x384xf32>
    %187 = arith.divf %185, %186 : vector<8x384xf32>
    %188 = vector.extract_strided_slice %187 {offsets = [0, 0], sizes = [8, 128], strides = [1, 1]} : vector<8x384xf32> to vector<8x128xf32>
    %189 = vector.extract_strided_slice %187 {offsets = [0, 128], sizes = [8, 128], strides = [1, 1]} : vector<8x384xf32> to vector<8x128xf32>
    %190 = vector.extract_strided_slice %187 {offsets = [0, 256], sizes = [8, 128], strides = [1, 1]} : vector<8x384xf32> to vector<8x128xf32>
    %191 = vector.extract_strided_slice %181 {offsets = [0, 384], sizes = [8, 128], strides = [1, 1]} : vector<8x512xf32> to vector<8x128xf32>
    %192 = math.tanh %191 : vector<8x128xf32>
    %c0_116 = arith.constant 0 : index
    %c0_117 = arith.constant 0 : index
    %c0_118 = arith.constant 0 : index
    %193 = vector.load %arg12[%c0_116, %c0_117, %c0_118] : memref<2x8x128xf32, #tpu.memory_space<vmem>>, vector<1x8x128xf32>
    %194 = vector.shape_cast %193 : vector<1x8x128xf32> to vector<8x128xf32>
    %195 = arith.mulf %189, %194 : vector<8x128xf32>
    %196 = arith.mulf %188, %192 : vector<8x128xf32>
    %197 = arith.addf %195, %196 : vector<8x128xf32>
    %198 = math.tanh %197 : vector<8x128xf32>
    %199 = arith.mulf %190, %198 : vector<8x128xf32>
    %c0_119 = arith.constant 0 : index
    %c0_120 = arith.constant 0 : index
    %c0_121 = arith.constant 0 : index
    %200 = vector.load %arg11[%c0_119, %c0_120, %c0_121] : memref<2x8x128xf32, #tpu.memory_space<vmem>>, vector<1x8x128xf32>
    %201 = vector.shape_cast %200 : vector<1x8x128xf32> to vector<8x128xf32>
    %202 = vector.shape_cast %199 : vector<8x128xf32> to vector<1x8x128xf32>
    tpu.vector_store %arg11[%c0_119, %c0_120, %c0_121], %202 {strides = array<i32>} : memref<2x8x128xf32, #tpu.memory_space<vmem>>, vector<1x8x128xf32>,
    %c0_122 = arith.constant 0 : index
    %c0_123 = arith.constant 0 : index
    %c0_124 = arith.constant 0 : index
    %203 = vector.load %arg12[%c0_122, %c0_123, %c0_124] : memref<2x8x128xf32, #tpu.memory_space<vmem>>, vector<1x8x128xf32>
    %204 = vector.shape_cast %203 : vector<1x8x128xf32> to vector<8x128xf32>
    %205 = vector.shape_cast %197 : vector<8x128xf32> to vector<1x8x128xf32>
    tpu.vector_store %arg12[%c0_122, %c0_123, %c0_124], %205 {strides = array<i32>} : memref<2x8x128xf32, #tpu.memory_space<vmem>>, vector<1x8x128xf32>,
    %c1_125 = arith.constant 1 : index
    %c0_126 = arith.constant 0 : index
    %c0_127 = arith.constant 0 : index
    %206 = vector.load %arg11[%c1_125, %c0_126, %c0_127] : memref<2x8x128xf32, #tpu.memory_space<vmem>>, vector<1x8x128xf32>
    %207 = vector.shape_cast %206 : vector<1x8x128xf32> to vector<8x128xf32>
    %208 = tpu.concatenate %199, %207 in 1 : vector<8x128xf32>, vector<8x128xf32> -> vector<8x256xf32>
    %209 = arith.truncf %208 : vector<8x256xf32> to vector<8x256xbf16>
    %c1_128 = arith.constant 1 : index
    %c0_129 = arith.constant 0 : index
    %c0_130 = arith.constant 0 : index
    %210 = vector.load %arg4[%c1_128, %c0_129, %c0_130] : memref<2x256x512xbf16, #tpu.memory_space<vmem>>, vector<1x256x512xbf16>
    %211 = vector.shape_cast %210 : vector<1x256x512xbf16> to vector<256x512xbf16>
    %cst_131 = arith.constant dense<0.000000e+00> : vector<8x512xf32>
    %212 = tpu.matmul %209, %211, %cst_131 {dimension_numbers = #tpu.dot_dimension_numbers<[1], [0], [0], [1], [0, 0, 1, 1], [], []>} : vector<8x256xbf16>, vector<256x512xbf16>, vector<8x512xf32> -> vector<8x512xf32>
    %c1_132 = arith.constant 1 : index
    %c0_133 = arith.constant 0 : index
    %c0_134 = arith.constant 0 : index
    %213 = vector.load %arg5[%c1_132, %c0_133, %c0_134] : memref<2x8x512xf32, #tpu.memory_space<vmem>>, vector<1x8x512xf32>
    %214 = vector.shape_cast %213 : vector<1x8x512xf32> to vector<8x512xf32>
    %215 = arith.addf %212, %214 : vector<8x512xf32>
    %216 = vector.extract_strided_slice %215 {offsets = [0, 0], sizes = [8, 384], strides = [1, 1]} : vector<8x512xf32> to vector<8x384xf32>
    %217 = arith.negf %216 : vector<8x384xf32>
    %218 = math.exp %217 : vector<8x384xf32>
    %cst_135 = arith.constant 1.000000e+00 : f32
    %219 = vector.broadcast %cst_135 : f32 to vector<8x384xf32>
    %220 = arith.addf %219, %218 : vector<8x384xf32>
    %221 = arith.divf %219, %220 : vector<8x384xf32>
    %222 = vector.extract_strided_slice %221 {offsets = [0, 0], sizes = [8, 128], strides = [1, 1]} : vector<8x384xf32> to vector<8x128xf32>
    %223 = vector.extract_strided_slice %221 {offsets = [0, 128], sizes = [8, 128], strides = [1, 1]} : vector<8x384xf32> to vector<8x128xf32>
    %224 = vector.extract_strided_slice %221 {offsets = [0, 256], sizes = [8, 128], strides = [1, 1]} : vector<8x384xf32> to vector<8x128xf32>
    %225 = vector.extract_strided_slice %215 {offsets = [0, 384], sizes = [8, 128], strides = [1, 1]} : vector<8x512xf32> to vector<8x128xf32>
    %226 = math.tanh %225 : vector<8x128xf32>
    %c1_136 = arith.constant 1 : index
    %c0_137 = arith.constant 0 : index
    %c0_138 = arith.constant 0 : index
    %227 = vector.load %arg12[%c1_136, %c0_137, %c0_138] : memref<2x8x128xf32, #tpu.memory_space<vmem>>, vector<1x8x128xf32>
    %228 = vector.shape_cast %227 : vector<1x8x128xf32> to vector<8x128xf32>
    %229 = arith.mulf %223, %228 : vector<8x128xf32>
    %230 = arith.mulf %222, %226 : vector<8x128xf32>
    %231 = arith.addf %229, %230 : vector<8x128xf32>
    %232 = math.tanh %231 : vector<8x128xf32>
    %233 = arith.mulf %224, %232 : vector<8x128xf32>
    %c1_139 = arith.constant 1 : index
    %c0_140 = arith.constant 0 : index
    %c0_141 = arith.constant 0 : index
    %234 = vector.load %arg11[%c1_139, %c0_140, %c0_141] : memref<2x8x128xf32, #tpu.memory_space<vmem>>, vector<1x8x128xf32>
    %235 = vector.shape_cast %234 : vector<1x8x128xf32> to vector<8x128xf32>
    %236 = vector.shape_cast %233 : vector<8x128xf32> to vector<1x8x128xf32>
    tpu.vector_store %arg11[%c1_139, %c0_140, %c0_141], %236 {strides = array<i32>} : memref<2x8x128xf32, #tpu.memory_space<vmem>>, vector<1x8x128xf32>,
    %c1_142 = arith.constant 1 : index
    %c0_143 = arith.constant 0 : index
    %c0_144 = arith.constant 0 : index
    %237 = vector.load %arg12[%c1_142, %c0_143, %c0_144] : memref<2x8x128xf32, #tpu.memory_space<vmem>>, vector<1x8x128xf32>
    %238 = vector.shape_cast %237 : vector<1x8x128xf32> to vector<8x128xf32>
    %239 = vector.shape_cast %231 : vector<8x128xf32> to vector<1x8x128xf32>
    tpu.vector_store %arg12[%c1_142, %c0_143, %c0_144], %239 {strides = array<i32>} : memref<2x8x128xf32, #tpu.memory_space<vmem>>, vector<1x8x128xf32>,
    %240 = arith.truncf %233 : vector<8x128xf32> to vector<8x128xbf16>
    %cst_145 = arith.constant dense<0.000000e+00> : vector<8x128xf32>
    %241 = tpu.matmul %240, %5, %cst_145 {dimension_numbers = #tpu.dot_dimension_numbers<[1], [0], [0], [1], [0, 0, 1, 1], [], []>} : vector<8x128xbf16>, vector<128x128xbf16>, vector<8x128xf32> -> vector<8x128xf32>
    %242 = arith.addf %241, %6 : vector<8x128xf32>
    %243 = math.tanh %242 : vector<8x128xf32>
    %c2_146 = arith.constant 2 : index
    %c0_147 = arith.constant 0 : index
    %c0_148 = arith.constant 0 : index
    %244 = vector.load %arg10[%c2_146, %c0_147, %c0_148] : memref<8x8x128xf32, #tpu.memory_space<vmem>>, vector<1x8x128xf32>
    %245 = vector.shape_cast %244 : vector<1x8x128xf32> to vector<8x128xf32>
    %246 = vector.shape_cast %243 : vector<8x128xf32> to vector<1x8x128xf32>
    tpu.vector_store %arg10[%c2_146, %c0_147, %c0_148], %246 {strides = array<i32>} : memref<8x8x128xf32, #tpu.memory_space<vmem>>, vector<1x8x128xf32>,
    %c3 = arith.constant 3 : index
    %c0_149 = arith.constant 0 : index
    %c0_150 = arith.constant 0 : index
    %247 = vector.load %arg1[%c3, %c0_149, %c0_150] : memref<8x8x64xf32, #tpu.memory_space<vmem>>, vector<1x8x64xf32>
    %248 = vector.shape_cast %247 : vector<1x8x64xf32> to vector<8x64xf32>
    %249 = arith.truncf %248 : vector<8x64xf32> to vector<8x64xbf16>
    %cst_151 = arith.constant dense<0.000000e+00> : vector<8x128xf32>
    %250 = tpu.matmul %249, %3, %cst_151 {dimension_numbers = #tpu.dot_dimension_numbers<[1], [0], [0], [1], [0, 0, 1, 1], [], []>} : vector<8x64xbf16>, vector<64x128xbf16>, vector<8x128xf32> -> vector<8x128xf32>
    %251 = arith.addf %250, %4 : vector<8x128xf32>
    %c0_152 = arith.constant 0 : index
    %c0_153 = arith.constant 0 : index
    %c0_154 = arith.constant 0 : index
    %252 = vector.load %arg11[%c0_152, %c0_153, %c0_154] : memref<2x8x128xf32, #tpu.memory_space<vmem>>, vector<1x8x128xf32>
    %253 = vector.shape_cast %252 : vector<1x8x128xf32> to vector<8x128xf32>
    %254 = tpu.concatenate %251, %253 in 1 : vector<8x128xf32>, vector<8x128xf32> -> vector<8x256xf32>
    %255 = arith.truncf %254 : vector<8x256xf32> to vector<8x256xbf16>
    %c0_155 = arith.constant 0 : index
    %c0_156 = arith.constant 0 : index
    %c0_157 = arith.constant 0 : index
    %256 = vector.load %arg4[%c0_155, %c0_156, %c0_157] : memref<2x256x512xbf16, #tpu.memory_space<vmem>>, vector<1x256x512xbf16>
    %257 = vector.shape_cast %256 : vector<1x256x512xbf16> to vector<256x512xbf16>
    %cst_158 = arith.constant dense<0.000000e+00> : vector<8x512xf32>
    %258 = tpu.matmul %255, %257, %cst_158 {dimension_numbers = #tpu.dot_dimension_numbers<[1], [0], [0], [1], [0, 0, 1, 1], [], []>} : vector<8x256xbf16>, vector<256x512xbf16>, vector<8x512xf32> -> vector<8x512xf32>
    %c0_159 = arith.constant 0 : index
    %c0_160 = arith.constant 0 : index
    %c0_161 = arith.constant 0 : index
    %259 = vector.load %arg5[%c0_159, %c0_160, %c0_161] : memref<2x8x512xf32, #tpu.memory_space<vmem>>, vector<1x8x512xf32>
    %260 = vector.shape_cast %259 : vector<1x8x512xf32> to vector<8x512xf32>
    %261 = arith.addf %258, %260 : vector<8x512xf32>
    %262 = vector.extract_strided_slice %261 {offsets = [0, 0], sizes = [8, 384], strides = [1, 1]} : vector<8x512xf32> to vector<8x384xf32>
    %263 = arith.negf %262 : vector<8x384xf32>
    %264 = math.exp %263 : vector<8x384xf32>
    %cst_162 = arith.constant 1.000000e+00 : f32
    %265 = vector.broadcast %cst_162 : f32 to vector<8x384xf32>
    %266 = arith.addf %265, %264 : vector<8x384xf32>
    %267 = arith.divf %265, %266 : vector<8x384xf32>
    %268 = vector.extract_strided_slice %267 {offsets = [0, 0], sizes = [8, 128], strides = [1, 1]} : vector<8x384xf32> to vector<8x128xf32>
    %269 = vector.extract_strided_slice %267 {offsets = [0, 128], sizes = [8, 128], strides = [1, 1]} : vector<8x384xf32> to vector<8x128xf32>
    %270 = vector.extract_strided_slice %267 {offsets = [0, 256], sizes = [8, 128], strides = [1, 1]} : vector<8x384xf32> to vector<8x128xf32>
    %271 = vector.extract_strided_slice %261 {offsets = [0, 384], sizes = [8, 128], strides = [1, 1]} : vector<8x512xf32> to vector<8x128xf32>
    %272 = math.tanh %271 : vector<8x128xf32>
    %c0_163 = arith.constant 0 : index
    %c0_164 = arith.constant 0 : index
    %c0_165 = arith.constant 0 : index
    %273 = vector.load %arg12[%c0_163, %c0_164, %c0_165] : memref<2x8x128xf32, #tpu.memory_space<vmem>>, vector<1x8x128xf32>
    %274 = vector.shape_cast %273 : vector<1x8x128xf32> to vector<8x128xf32>
    %275 = arith.mulf %269, %274 : vector<8x128xf32>
    %276 = arith.mulf %268, %272 : vector<8x128xf32>
    %277 = arith.addf %275, %276 : vector<8x128xf32>
    %278 = math.tanh %277 : vector<8x128xf32>
    %279 = arith.mulf %270, %278 : vector<8x128xf32>
    %c0_166 = arith.constant 0 : index
    %c0_167 = arith.constant 0 : index
    %c0_168 = arith.constant 0 : index
    %280 = vector.load %arg11[%c0_166, %c0_167, %c0_168] : memref<2x8x128xf32, #tpu.memory_space<vmem>>, vector<1x8x128xf32>
    %281 = vector.shape_cast %280 : vector<1x8x128xf32> to vector<8x128xf32>
    %282 = vector.shape_cast %279 : vector<8x128xf32> to vector<1x8x128xf32>
    tpu.vector_store %arg11[%c0_166, %c0_167, %c0_168], %282 {strides = array<i32>} : memref<2x8x128xf32, #tpu.memory_space<vmem>>, vector<1x8x128xf32>,
    %c0_169 = arith.constant 0 : index
    %c0_170 = arith.constant 0 : index
    %c0_171 = arith.constant 0 : index
    %283 = vector.load %arg12[%c0_169, %c0_170, %c0_171] : memref<2x8x128xf32, #tpu.memory_space<vmem>>, vector<1x8x128xf32>
    %284 = vector.shape_cast %283 : vector<1x8x128xf32> to vector<8x128xf32>
    %285 = vector.shape_cast %277 : vector<8x128xf32> to vector<1x8x128xf32>
    tpu.vector_store %arg12[%c0_169, %c0_170, %c0_171], %285 {strides = array<i32>} : memref<2x8x128xf32, #tpu.memory_space<vmem>>, vector<1x8x128xf32>,
    %c1_172 = arith.constant 1 : index
    %c0_173 = arith.constant 0 : index
    %c0_174 = arith.constant 0 : index
    %286 = vector.load %arg11[%c1_172, %c0_173, %c0_174] : memref<2x8x128xf32, #tpu.memory_space<vmem>>, vector<1x8x128xf32>
    %287 = vector.shape_cast %286 : vector<1x8x128xf32> to vector<8x128xf32>
    %288 = tpu.concatenate %279, %287 in 1 : vector<8x128xf32>, vector<8x128xf32> -> vector<8x256xf32>
    %289 = arith.truncf %288 : vector<8x256xf32> to vector<8x256xbf16>
    %c1_175 = arith.constant 1 : index
    %c0_176 = arith.constant 0 : index
    %c0_177 = arith.constant 0 : index
    %290 = vector.load %arg4[%c1_175, %c0_176, %c0_177] : memref<2x256x512xbf16, #tpu.memory_space<vmem>>, vector<1x256x512xbf16>
    %291 = vector.shape_cast %290 : vector<1x256x512xbf16> to vector<256x512xbf16>
    %cst_178 = arith.constant dense<0.000000e+00> : vector<8x512xf32>
    %292 = tpu.matmul %289, %291, %cst_178 {dimension_numbers = #tpu.dot_dimension_numbers<[1], [0], [0], [1], [0, 0, 1, 1], [], []>} : vector<8x256xbf16>, vector<256x512xbf16>, vector<8x512xf32> -> vector<8x512xf32>
    %c1_179 = arith.constant 1 : index
    %c0_180 = arith.constant 0 : index
    %c0_181 = arith.constant 0 : index
    %293 = vector.load %arg5[%c1_179, %c0_180, %c0_181] : memref<2x8x512xf32, #tpu.memory_space<vmem>>, vector<1x8x512xf32>
    %294 = vector.shape_cast %293 : vector<1x8x512xf32> to vector<8x512xf32>
    %295 = arith.addf %292, %294 : vector<8x512xf32>
    %296 = vector.extract_strided_slice %295 {offsets = [0, 0], sizes = [8, 384], strides = [1, 1]} : vector<8x512xf32> to vector<8x384xf32>
    %297 = arith.negf %296 : vector<8x384xf32>
    %298 = math.exp %297 : vector<8x384xf32>
    %cst_182 = arith.constant 1.000000e+00 : f32
    %299 = vector.broadcast %cst_182 : f32 to vector<8x384xf32>
    %300 = arith.addf %299, %298 : vector<8x384xf32>
    %301 = arith.divf %299, %300 : vector<8x384xf32>
    %302 = vector.extract_strided_slice %301 {offsets = [0, 0], sizes = [8, 128], strides = [1, 1]} : vector<8x384xf32> to vector<8x128xf32>
    %303 = vector.extract_strided_slice %301 {offsets = [0, 128], sizes = [8, 128], strides = [1, 1]} : vector<8x384xf32> to vector<8x128xf32>
    %304 = vector.extract_strided_slice %301 {offsets = [0, 256], sizes = [8, 128], strides = [1, 1]} : vector<8x384xf32> to vector<8x128xf32>
    %305 = vector.extract_strided_slice %295 {offsets = [0, 384], sizes = [8, 128], strides = [1, 1]} : vector<8x512xf32> to vector<8x128xf32>
    %306 = math.tanh %305 : vector<8x128xf32>
    %c1_183 = arith.constant 1 : index
    %c0_184 = arith.constant 0 : index
    %c0_185 = arith.constant 0 : index
    %307 = vector.load %arg12[%c1_183, %c0_184, %c0_185] : memref<2x8x128xf32, #tpu.memory_space<vmem>>, vector<1x8x128xf32>
    %308 = vector.shape_cast %307 : vector<1x8x128xf32> to vector<8x128xf32>
    %309 = arith.mulf %303, %308 : vector<8x128xf32>
    %310 = arith.mulf %302, %306 : vector<8x128xf32>
    %311 = arith.addf %309, %310 : vector<8x128xf32>
    %312 = math.tanh %311 : vector<8x128xf32>
    %313 = arith.mulf %304, %312 : vector<8x128xf32>
    %c1_186 = arith.constant 1 : index
    %c0_187 = arith.constant 0 : index
    %c0_188 = arith.constant 0 : index
    %314 = vector.load %arg11[%c1_186, %c0_187, %c0_188] : memref<2x8x128xf32, #tpu.memory_space<vmem>>, vector<1x8x128xf32>
    %315 = vector.shape_cast %314 : vector<1x8x128xf32> to vector<8x128xf32>
    %316 = vector.shape_cast %313 : vector<8x128xf32> to vector<1x8x128xf32>
    tpu.vector_store %arg11[%c1_186, %c0_187, %c0_188], %316 {strides = array<i32>} : memref<2x8x128xf32, #tpu.memory_space<vmem>>, vector<1x8x128xf32>,
    %c1_189 = arith.constant 1 : index
    %c0_190 = arith.constant 0 : index
    %c0_191 = arith.constant 0 : index
    %317 = vector.load %arg12[%c1_189, %c0_190, %c0_191] : memref<2x8x128xf32, #tpu.memory_space<vmem>>, vector<1x8x128xf32>
    %318 = vector.shape_cast %317 : vector<1x8x128xf32> to vector<8x128xf32>
    %319 = vector.shape_cast %311 : vector<8x128xf32> to vector<1x8x128xf32>
    tpu.vector_store %arg12[%c1_189, %c0_190, %c0_191], %319 {strides = array<i32>} : memref<2x8x128xf32, #tpu.memory_space<vmem>>, vector<1x8x128xf32>,
    %320 = arith.truncf %313 : vector<8x128xf32> to vector<8x128xbf16>
    %cst_192 = arith.constant dense<0.000000e+00> : vector<8x128xf32>
    %321 = tpu.matmul %320, %5, %cst_192 {dimension_numbers = #tpu.dot_dimension_numbers<[1], [0], [0], [1], [0, 0, 1, 1], [], []>} : vector<8x128xbf16>, vector<128x128xbf16>, vector<8x128xf32> -> vector<8x128xf32>
    %322 = arith.addf %321, %6 : vector<8x128xf32>
    %323 = math.tanh %322 : vector<8x128xf32>
    %c3_193 = arith.constant 3 : index
    %c0_194 = arith.constant 0 : index
    %c0_195 = arith.constant 0 : index
    %324 = vector.load %arg10[%c3_193, %c0_194, %c0_195] : memref<8x8x128xf32, #tpu.memory_space<vmem>>, vector<1x8x128xf32>
    %325 = vector.shape_cast %324 : vector<1x8x128xf32> to vector<8x128xf32>
    %326 = vector.shape_cast %323 : vector<8x128xf32> to vector<1x8x128xf32>
    tpu.vector_store %arg10[%c3_193, %c0_194, %c0_195], %326 {strides = array<i32>} : memref<8x8x128xf32, #tpu.memory_space<vmem>>, vector<1x8x128xf32>,
    %c4 = arith.constant 4 : index
    %c0_196 = arith.constant 0 : index
    %c0_197 = arith.constant 0 : index
    %327 = vector.load %arg1[%c4, %c0_196, %c0_197] : memref<8x8x64xf32, #tpu.memory_space<vmem>>, vector<1x8x64xf32>
    %328 = vector.shape_cast %327 : vector<1x8x64xf32> to vector<8x64xf32>
    %329 = arith.truncf %328 : vector<8x64xf32> to vector<8x64xbf16>
    %cst_198 = arith.constant dense<0.000000e+00> : vector<8x128xf32>
    %330 = tpu.matmul %329, %3, %cst_198 {dimension_numbers = #tpu.dot_dimension_numbers<[1], [0], [0], [1], [0, 0, 1, 1], [], []>} : vector<8x64xbf16>, vector<64x128xbf16>, vector<8x128xf32> -> vector<8x128xf32>
    %331 = arith.addf %330, %4 : vector<8x128xf32>
    %c0_199 = arith.constant 0 : index
    %c0_200 = arith.constant 0 : index
    %c0_201 = arith.constant 0 : index
    %332 = vector.load %arg11[%c0_199, %c0_200, %c0_201] : memref<2x8x128xf32, #tpu.memory_space<vmem>>, vector<1x8x128xf32>
    %333 = vector.shape_cast %332 : vector<1x8x128xf32> to vector<8x128xf32>
    %334 = tpu.concatenate %331, %333 in 1 : vector<8x128xf32>, vector<8x128xf32> -> vector<8x256xf32>
    %335 = arith.truncf %334 : vector<8x256xf32> to vector<8x256xbf16>
    %c0_202 = arith.constant 0 : index
    %c0_203 = arith.constant 0 : index
    %c0_204 = arith.constant 0 : index
    %336 = vector.load %arg4[%c0_202, %c0_203, %c0_204] : memref<2x256x512xbf16, #tpu.memory_space<vmem>>, vector<1x256x512xbf16>
    %337 = vector.shape_cast %336 : vector<1x256x512xbf16> to vector<256x512xbf16>
    %cst_205 = arith.constant dense<0.000000e+00> : vector<8x512xf32>
    %338 = tpu.matmul %335, %337, %cst_205 {dimension_numbers = #tpu.dot_dimension_numbers<[1], [0], [0], [1], [0, 0, 1, 1], [], []>} : vector<8x256xbf16>, vector<256x512xbf16>, vector<8x512xf32> -> vector<8x512xf32>
    %c0_206 = arith.constant 0 : index
    %c0_207 = arith.constant 0 : index
    %c0_208 = arith.constant 0 : index
    %339 = vector.load %arg5[%c0_206, %c0_207, %c0_208] : memref<2x8x512xf32, #tpu.memory_space<vmem>>, vector<1x8x512xf32>
    %340 = vector.shape_cast %339 : vector<1x8x512xf32> to vector<8x512xf32>
    %341 = arith.addf %338, %340 : vector<8x512xf32>
    %342 = vector.extract_strided_slice %341 {offsets = [0, 0], sizes = [8, 384], strides = [1, 1]} : vector<8x512xf32> to vector<8x384xf32>
    %343 = arith.negf %342 : vector<8x384xf32>
    %344 = math.exp %343 : vector<8x384xf32>
    %cst_209 = arith.constant 1.000000e+00 : f32
    %345 = vector.broadcast %cst_209 : f32 to vector<8x384xf32>
    %346 = arith.addf %345, %344 : vector<8x384xf32>
    %347 = arith.divf %345, %346 : vector<8x384xf32>
    %348 = vector.extract_strided_slice %347 {offsets = [0, 0], sizes = [8, 128], strides = [1, 1]} : vector<8x384xf32> to vector<8x128xf32>
    %349 = vector.extract_strided_slice %347 {offsets = [0, 128], sizes = [8, 128], strides = [1, 1]} : vector<8x384xf32> to vector<8x128xf32>
    %350 = vector.extract_strided_slice %347 {offsets = [0, 256], sizes = [8, 128], strides = [1, 1]} : vector<8x384xf32> to vector<8x128xf32>
    %351 = vector.extract_strided_slice %341 {offsets = [0, 384], sizes = [8, 128], strides = [1, 1]} : vector<8x512xf32> to vector<8x128xf32>
    %352 = math.tanh %351 : vector<8x128xf32>
    %c0_210 = arith.constant 0 : index
    %c0_211 = arith.constant 0 : index
    %c0_212 = arith.constant 0 : index
    %353 = vector.load %arg12[%c0_210, %c0_211, %c0_212] : memref<2x8x128xf32, #tpu.memory_space<vmem>>, vector<1x8x128xf32>
    %354 = vector.shape_cast %353 : vector<1x8x128xf32> to vector<8x128xf32>
    %355 = arith.mulf %349, %354 : vector<8x128xf32>
    %356 = arith.mulf %348, %352 : vector<8x128xf32>
    %357 = arith.addf %355, %356 : vector<8x128xf32>
    %358 = math.tanh %357 : vector<8x128xf32>
    %359 = arith.mulf %350, %358 : vector<8x128xf32>
    %c0_213 = arith.constant 0 : index
    %c0_214 = arith.constant 0 : index
    %c0_215 = arith.constant 0 : index
    %360 = vector.load %arg11[%c0_213, %c0_214, %c0_215] : memref<2x8x128xf32, #tpu.memory_space<vmem>>, vector<1x8x128xf32>
    %361 = vector.shape_cast %360 : vector<1x8x128xf32> to vector<8x128xf32>
    %362 = vector.shape_cast %359 : vector<8x128xf32> to vector<1x8x128xf32>
    tpu.vector_store %arg11[%c0_213, %c0_214, %c0_215], %362 {strides = array<i32>} : memref<2x8x128xf32, #tpu.memory_space<vmem>>, vector<1x8x128xf32>,
    %c0_216 = arith.constant 0 : index
    %c0_217 = arith.constant 0 : index
    %c0_218 = arith.constant 0 : index
    %363 = vector.load %arg12[%c0_216, %c0_217, %c0_218] : memref<2x8x128xf32, #tpu.memory_space<vmem>>, vector<1x8x128xf32>
    %364 = vector.shape_cast %363 : vector<1x8x128xf32> to vector<8x128xf32>
    %365 = vector.shape_cast %357 : vector<8x128xf32> to vector<1x8x128xf32>
    tpu.vector_store %arg12[%c0_216, %c0_217, %c0_218], %365 {strides = array<i32>} : memref<2x8x128xf32, #tpu.memory_space<vmem>>, vector<1x8x128xf32>,
    %c1_219 = arith.constant 1 : index
    %c0_220 = arith.constant 0 : index
    %c0_221 = arith.constant 0 : index
    %366 = vector.load %arg11[%c1_219, %c0_220, %c0_221] : memref<2x8x128xf32, #tpu.memory_space<vmem>>, vector<1x8x128xf32>
    %367 = vector.shape_cast %366 : vector<1x8x128xf32> to vector<8x128xf32>
    %368 = tpu.concatenate %359, %367 in 1 : vector<8x128xf32>, vector<8x128xf32> -> vector<8x256xf32>
    %369 = arith.truncf %368 : vector<8x256xf32> to vector<8x256xbf16>
    %c1_222 = arith.constant 1 : index
    %c0_223 = arith.constant 0 : index
    %c0_224 = arith.constant 0 : index
    %370 = vector.load %arg4[%c1_222, %c0_223, %c0_224] : memref<2x256x512xbf16, #tpu.memory_space<vmem>>, vector<1x256x512xbf16>
    %371 = vector.shape_cast %370 : vector<1x256x512xbf16> to vector<256x512xbf16>
    %cst_225 = arith.constant dense<0.000000e+00> : vector<8x512xf32>
    %372 = tpu.matmul %369, %371, %cst_225 {dimension_numbers = #tpu.dot_dimension_numbers<[1], [0], [0], [1], [0, 0, 1, 1], [], []>} : vector<8x256xbf16>, vector<256x512xbf16>, vector<8x512xf32> -> vector<8x512xf32>
    %c1_226 = arith.constant 1 : index
    %c0_227 = arith.constant 0 : index
    %c0_228 = arith.constant 0 : index
    %373 = vector.load %arg5[%c1_226, %c0_227, %c0_228] : memref<2x8x512xf32, #tpu.memory_space<vmem>>, vector<1x8x512xf32>
    %374 = vector.shape_cast %373 : vector<1x8x512xf32> to vector<8x512xf32>
    %375 = arith.addf %372, %374 : vector<8x512xf32>
    %376 = vector.extract_strided_slice %375 {offsets = [0, 0], sizes = [8, 384], strides = [1, 1]} : vector<8x512xf32> to vector<8x384xf32>
    %377 = arith.negf %376 : vector<8x384xf32>
    %378 = math.exp %377 : vector<8x384xf32>
    %cst_229 = arith.constant 1.000000e+00 : f32
    %379 = vector.broadcast %cst_229 : f32 to vector<8x384xf32>
    %380 = arith.addf %379, %378 : vector<8x384xf32>
    %381 = arith.divf %379, %380 : vector<8x384xf32>
    %382 = vector.extract_strided_slice %381 {offsets = [0, 0], sizes = [8, 128], strides = [1, 1]} : vector<8x384xf32> to vector<8x128xf32>
    %383 = vector.extract_strided_slice %381 {offsets = [0, 128], sizes = [8, 128], strides = [1, 1]} : vector<8x384xf32> to vector<8x128xf32>
    %384 = vector.extract_strided_slice %381 {offsets = [0, 256], sizes = [8, 128], strides = [1, 1]} : vector<8x384xf32> to vector<8x128xf32>
    %385 = vector.extract_strided_slice %375 {offsets = [0, 384], sizes = [8, 128], strides = [1, 1]} : vector<8x512xf32> to vector<8x128xf32>
    %386 = math.tanh %385 : vector<8x128xf32>
    %c1_230 = arith.constant 1 : index
    %c0_231 = arith.constant 0 : index
    %c0_232 = arith.constant 0 : index
    %387 = vector.load %arg12[%c1_230, %c0_231, %c0_232] : memref<2x8x128xf32, #tpu.memory_space<vmem>>, vector<1x8x128xf32>
    %388 = vector.shape_cast %387 : vector<1x8x128xf32> to vector<8x128xf32>
    %389 = arith.mulf %383, %388 : vector<8x128xf32>
    %390 = arith.mulf %382, %386 : vector<8x128xf32>
    %391 = arith.addf %389, %390 : vector<8x128xf32>
    %392 = math.tanh %391 : vector<8x128xf32>
    %393 = arith.mulf %384, %392 : vector<8x128xf32>
    %c1_233 = arith.constant 1 : index
    %c0_234 = arith.constant 0 : index
    %c0_235 = arith.constant 0 : index
    %394 = vector.load %arg11[%c1_233, %c0_234, %c0_235] : memref<2x8x128xf32, #tpu.memory_space<vmem>>, vector<1x8x128xf32>
    %395 = vector.shape_cast %394 : vector<1x8x128xf32> to vector<8x128xf32>
    %396 = vector.shape_cast %393 : vector<8x128xf32> to vector<1x8x128xf32>
    tpu.vector_store %arg11[%c1_233, %c0_234, %c0_235], %396 {strides = array<i32>} : memref<2x8x128xf32, #tpu.memory_space<vmem>>, vector<1x8x128xf32>,
    %c1_236 = arith.constant 1 : index
    %c0_237 = arith.constant 0 : index
    %c0_238 = arith.constant 0 : index
    %397 = vector.load %arg12[%c1_236, %c0_237, %c0_238] : memref<2x8x128xf32, #tpu.memory_space<vmem>>, vector<1x8x128xf32>
    %398 = vector.shape_cast %397 : vector<1x8x128xf32> to vector<8x128xf32>
    %399 = vector.shape_cast %391 : vector<8x128xf32> to vector<1x8x128xf32>
    tpu.vector_store %arg12[%c1_236, %c0_237, %c0_238], %399 {strides = array<i32>} : memref<2x8x128xf32, #tpu.memory_space<vmem>>, vector<1x8x128xf32>,
    %400 = arith.truncf %393 : vector<8x128xf32> to vector<8x128xbf16>
    %cst_239 = arith.constant dense<0.000000e+00> : vector<8x128xf32>
    %401 = tpu.matmul %400, %5, %cst_239 {dimension_numbers = #tpu.dot_dimension_numbers<[1], [0], [0], [1], [0, 0, 1, 1], [], []>} : vector<8x128xbf16>, vector<128x128xbf16>, vector<8x128xf32> -> vector<8x128xf32>
    %402 = arith.addf %401, %6 : vector<8x128xf32>
    %403 = math.tanh %402 : vector<8x128xf32>
    %c4_240 = arith.constant 4 : index
    %c0_241 = arith.constant 0 : index
    %c0_242 = arith.constant 0 : index
    %404 = vector.load %arg10[%c4_240, %c0_241, %c0_242] : memref<8x8x128xf32, #tpu.memory_space<vmem>>, vector<1x8x128xf32>
    %405 = vector.shape_cast %404 : vector<1x8x128xf32> to vector<8x128xf32>
    %406 = vector.shape_cast %403 : vector<8x128xf32> to vector<1x8x128xf32>
    tpu.vector_store %arg10[%c4_240, %c0_241, %c0_242], %406 {strides = array<i32>} : memref<8x8x128xf32, #tpu.memory_space<vmem>>, vector<1x8x128xf32>,
    %c5 = arith.constant 5 : index
    %c0_243 = arith.constant 0 : index
    %c0_244 = arith.constant 0 : index
    %407 = vector.load %arg1[%c5, %c0_243, %c0_244] : memref<8x8x64xf32, #tpu.memory_space<vmem>>, vector<1x8x64xf32>
    %408 = vector.shape_cast %407 : vector<1x8x64xf32> to vector<8x64xf32>
    %409 = arith.truncf %408 : vector<8x64xf32> to vector<8x64xbf16>
    %cst_245 = arith.constant dense<0.000000e+00> : vector<8x128xf32>
    %410 = tpu.matmul %409, %3, %cst_245 {dimension_numbers = #tpu.dot_dimension_numbers<[1], [0], [0], [1], [0, 0, 1, 1], [], []>} : vector<8x64xbf16>, vector<64x128xbf16>, vector<8x128xf32> -> vector<8x128xf32>
    %411 = arith.addf %410, %4 : vector<8x128xf32>
    %c0_246 = arith.constant 0 : index
    %c0_247 = arith.constant 0 : index
    %c0_248 = arith.constant 0 : index
    %412 = vector.load %arg11[%c0_246, %c0_247, %c0_248] : memref<2x8x128xf32, #tpu.memory_space<vmem>>, vector<1x8x128xf32>
    %413 = vector.shape_cast %412 : vector<1x8x128xf32> to vector<8x128xf32>
    %414 = tpu.concatenate %411, %413 in 1 : vector<8x128xf32>, vector<8x128xf32> -> vector<8x256xf32>
    %415 = arith.truncf %414 : vector<8x256xf32> to vector<8x256xbf16>
    %c0_249 = arith.constant 0 : index
    %c0_250 = arith.constant 0 : index
    %c0_251 = arith.constant 0 : index
    %416 = vector.load %arg4[%c0_249, %c0_250, %c0_251] : memref<2x256x512xbf16, #tpu.memory_space<vmem>>, vector<1x256x512xbf16>
    %417 = vector.shape_cast %416 : vector<1x256x512xbf16> to vector<256x512xbf16>
    %cst_252 = arith.constant dense<0.000000e+00> : vector<8x512xf32>
    %418 = tpu.matmul %415, %417, %cst_252 {dimension_numbers = #tpu.dot_dimension_numbers<[1], [0], [0], [1], [0, 0, 1, 1], [], []>} : vector<8x256xbf16>, vector<256x512xbf16>, vector<8x512xf32> -> vector<8x512xf32>
    %c0_253 = arith.constant 0 : index
    %c0_254 = arith.constant 0 : index
    %c0_255 = arith.constant 0 : index
    %419 = vector.load %arg5[%c0_253, %c0_254, %c0_255] : memref<2x8x512xf32, #tpu.memory_space<vmem>>, vector<1x8x512xf32>
    %420 = vector.shape_cast %419 : vector<1x8x512xf32> to vector<8x512xf32>
    %421 = arith.addf %418, %420 : vector<8x512xf32>
    %422 = vector.extract_strided_slice %421 {offsets = [0, 0], sizes = [8, 384], strides = [1, 1]} : vector<8x512xf32> to vector<8x384xf32>
    %423 = arith.negf %422 : vector<8x384xf32>
    %424 = math.exp %423 : vector<8x384xf32>
    %cst_256 = arith.constant 1.000000e+00 : f32
    %425 = vector.broadcast %cst_256 : f32 to vector<8x384xf32>
    %426 = arith.addf %425, %424 : vector<8x384xf32>
    %427 = arith.divf %425, %426 : vector<8x384xf32>
    %428 = vector.extract_strided_slice %427 {offsets = [0, 0], sizes = [8, 128], strides = [1, 1]} : vector<8x384xf32> to vector<8x128xf32>
    %429 = vector.extract_strided_slice %427 {offsets = [0, 128], sizes = [8, 128], strides = [1, 1]} : vector<8x384xf32> to vector<8x128xf32>
    %430 = vector.extract_strided_slice %427 {offsets = [0, 256], sizes = [8, 128], strides = [1, 1]} : vector<8x384xf32> to vector<8x128xf32>
    %431 = vector.extract_strided_slice %421 {offsets = [0, 384], sizes = [8, 128], strides = [1, 1]} : vector<8x512xf32> to vector<8x128xf32>
    %432 = math.tanh %431 : vector<8x128xf32>
    %c0_257 = arith.constant 0 : index
    %c0_258 = arith.constant 0 : index
    %c0_259 = arith.constant 0 : index
    %433 = vector.load %arg12[%c0_257, %c0_258, %c0_259] : memref<2x8x128xf32, #tpu.memory_space<vmem>>, vector<1x8x128xf32>
    %434 = vector.shape_cast %433 : vector<1x8x128xf32> to vector<8x128xf32>
    %435 = arith.mulf %429, %434 : vector<8x128xf32>
    %436 = arith.mulf %428, %432 : vector<8x128xf32>
    %437 = arith.addf %435, %436 : vector<8x128xf32>
    %438 = math.tanh %437 : vector<8x128xf32>
    %439 = arith.mulf %430, %438 : vector<8x128xf32>
    %c0_260 = arith.constant 0 : index
    %c0_261 = arith.constant 0 : index
    %c0_262 = arith.constant 0 : index
    %440 = vector.load %arg11[%c0_260, %c0_261, %c0_262] : memref<2x8x128xf32, #tpu.memory_space<vmem>>, vector<1x8x128xf32>
    %441 = vector.shape_cast %440 : vector<1x8x128xf32> to vector<8x128xf32>
    %442 = vector.shape_cast %439 : vector<8x128xf32> to vector<1x8x128xf32>
    tpu.vector_store %arg11[%c0_260, %c0_261, %c0_262], %442 {strides = array<i32>} : memref<2x8x128xf32, #tpu.memory_space<vmem>>, vector<1x8x128xf32>,
    %c0_263 = arith.constant 0 : index
    %c0_264 = arith.constant 0 : index
    %c0_265 = arith.constant 0 : index
    %443 = vector.load %arg12[%c0_263, %c0_264, %c0_265] : memref<2x8x128xf32, #tpu.memory_space<vmem>>, vector<1x8x128xf32>
    %444 = vector.shape_cast %443 : vector<1x8x128xf32> to vector<8x128xf32>
    %445 = vector.shape_cast %437 : vector<8x128xf32> to vector<1x8x128xf32>
    tpu.vector_store %arg12[%c0_263, %c0_264, %c0_265], %445 {strides = array<i32>} : memref<2x8x128xf32, #tpu.memory_space<vmem>>, vector<1x8x128xf32>,
    %c1_266 = arith.constant 1 : index
    %c0_267 = arith.constant 0 : index
    %c0_268 = arith.constant 0 : index
    %446 = vector.load %arg11[%c1_266, %c0_267, %c0_268] : memref<2x8x128xf32, #tpu.memory_space<vmem>>, vector<1x8x128xf32>
    %447 = vector.shape_cast %446 : vector<1x8x128xf32> to vector<8x128xf32>
    %448 = tpu.concatenate %439, %447 in 1 : vector<8x128xf32>, vector<8x128xf32> -> vector<8x256xf32>
    %449 = arith.truncf %448 : vector<8x256xf32> to vector<8x256xbf16>
    %c1_269 = arith.constant 1 : index
    %c0_270 = arith.constant 0 : index
    %c0_271 = arith.constant 0 : index
    %450 = vector.load %arg4[%c1_269, %c0_270, %c0_271] : memref<2x256x512xbf16, #tpu.memory_space<vmem>>, vector<1x256x512xbf16>
    %451 = vector.shape_cast %450 : vector<1x256x512xbf16> to vector<256x512xbf16>
    %cst_272 = arith.constant dense<0.000000e+00> : vector<8x512xf32>
    %452 = tpu.matmul %449, %451, %cst_272 {dimension_numbers = #tpu.dot_dimension_numbers<[1], [0], [0], [1], [0, 0, 1, 1], [], []>} : vector<8x256xbf16>, vector<256x512xbf16>, vector<8x512xf32> -> vector<8x512xf32>
    %c1_273 = arith.constant 1 : index
    %c0_274 = arith.constant 0 : index
    %c0_275 = arith.constant 0 : index
    %453 = vector.load %arg5[%c1_273, %c0_274, %c0_275] : memref<2x8x512xf32, #tpu.memory_space<vmem>>, vector<1x8x512xf32>
    %454 = vector.shape_cast %453 : vector<1x8x512xf32> to vector<8x512xf32>
    %455 = arith.addf %452, %454 : vector<8x512xf32>
    %456 = vector.extract_strided_slice %455 {offsets = [0, 0], sizes = [8, 384], strides = [1, 1]} : vector<8x512xf32> to vector<8x384xf32>
    %457 = arith.negf %456 : vector<8x384xf32>
    %458 = math.exp %457 : vector<8x384xf32>
    %cst_276 = arith.constant 1.000000e+00 : f32
    %459 = vector.broadcast %cst_276 : f32 to vector<8x384xf32>
    %460 = arith.addf %459, %458 : vector<8x384xf32>
    %461 = arith.divf %459, %460 : vector<8x384xf32>
    %462 = vector.extract_strided_slice %461 {offsets = [0, 0], sizes = [8, 128], strides = [1, 1]} : vector<8x384xf32> to vector<8x128xf32>
    %463 = vector.extract_strided_slice %461 {offsets = [0, 128], sizes = [8, 128], strides = [1, 1]} : vector<8x384xf32> to vector<8x128xf32>
    %464 = vector.extract_strided_slice %461 {offsets = [0, 256], sizes = [8, 128], strides = [1, 1]} : vector<8x384xf32> to vector<8x128xf32>
    %465 = vector.extract_strided_slice %455 {offsets = [0, 384], sizes = [8, 128], strides = [1, 1]} : vector<8x512xf32> to vector<8x128xf32>
    %466 = math.tanh %465 : vector<8x128xf32>
    %c1_277 = arith.constant 1 : index
    %c0_278 = arith.constant 0 : index
    %c0_279 = arith.constant 0 : index
    %467 = vector.load %arg12[%c1_277, %c0_278, %c0_279] : memref<2x8x128xf32, #tpu.memory_space<vmem>>, vector<1x8x128xf32>
    %468 = vector.shape_cast %467 : vector<1x8x128xf32> to vector<8x128xf32>
    %469 = arith.mulf %463, %468 : vector<8x128xf32>
    %470 = arith.mulf %462, %466 : vector<8x128xf32>
    %471 = arith.addf %469, %470 : vector<8x128xf32>
    %472 = math.tanh %471 : vector<8x128xf32>
    %473 = arith.mulf %464, %472 : vector<8x128xf32>
    %c1_280 = arith.constant 1 : index
    %c0_281 = arith.constant 0 : index
    %c0_282 = arith.constant 0 : index
    %474 = vector.load %arg11[%c1_280, %c0_281, %c0_282] : memref<2x8x128xf32, #tpu.memory_space<vmem>>, vector<1x8x128xf32>
    %475 = vector.shape_cast %474 : vector<1x8x128xf32> to vector<8x128xf32>
    %476 = vector.shape_cast %473 : vector<8x128xf32> to vector<1x8x128xf32>
    tpu.vector_store %arg11[%c1_280, %c0_281, %c0_282], %476 {strides = array<i32>} : memref<2x8x128xf32, #tpu.memory_space<vmem>>, vector<1x8x128xf32>,
    %c1_283 = arith.constant 1 : index
    %c0_284 = arith.constant 0 : index
    %c0_285 = arith.constant 0 : index
    %477 = vector.load %arg12[%c1_283, %c0_284, %c0_285] : memref<2x8x128xf32, #tpu.memory_space<vmem>>, vector<1x8x128xf32>
    %478 = vector.shape_cast %477 : vector<1x8x128xf32> to vector<8x128xf32>
    %479 = vector.shape_cast %471 : vector<8x128xf32> to vector<1x8x128xf32>
    tpu.vector_store %arg12[%c1_283, %c0_284, %c0_285], %479 {strides = array<i32>} : memref<2x8x128xf32, #tpu.memory_space<vmem>>, vector<1x8x128xf32>,
    %480 = arith.truncf %473 : vector<8x128xf32> to vector<8x128xbf16>
    %cst_286 = arith.constant dense<0.000000e+00> : vector<8x128xf32>
    %481 = tpu.matmul %480, %5, %cst_286 {dimension_numbers = #tpu.dot_dimension_numbers<[1], [0], [0], [1], [0, 0, 1, 1], [], []>} : vector<8x128xbf16>, vector<128x128xbf16>, vector<8x128xf32> -> vector<8x128xf32>
    %482 = arith.addf %481, %6 : vector<8x128xf32>
    %483 = math.tanh %482 : vector<8x128xf32>
    %c5_287 = arith.constant 5 : index
    %c0_288 = arith.constant 0 : index
    %c0_289 = arith.constant 0 : index
    %484 = vector.load %arg10[%c5_287, %c0_288, %c0_289] : memref<8x8x128xf32, #tpu.memory_space<vmem>>, vector<1x8x128xf32>
    %485 = vector.shape_cast %484 : vector<1x8x128xf32> to vector<8x128xf32>
    %486 = vector.shape_cast %483 : vector<8x128xf32> to vector<1x8x128xf32>
    tpu.vector_store %arg10[%c5_287, %c0_288, %c0_289], %486 {strides = array<i32>} : memref<8x8x128xf32, #tpu.memory_space<vmem>>, vector<1x8x128xf32>,
    %c6 = arith.constant 6 : index
    %c0_290 = arith.constant 0 : index
    %c0_291 = arith.constant 0 : index
    %487 = vector.load %arg1[%c6, %c0_290, %c0_291] : memref<8x8x64xf32, #tpu.memory_space<vmem>>, vector<1x8x64xf32>
    %488 = vector.shape_cast %487 : vector<1x8x64xf32> to vector<8x64xf32>
    %489 = arith.truncf %488 : vector<8x64xf32> to vector<8x64xbf16>
    %cst_292 = arith.constant dense<0.000000e+00> : vector<8x128xf32>
    %490 = tpu.matmul %489, %3, %cst_292 {dimension_numbers = #tpu.dot_dimension_numbers<[1], [0], [0], [1], [0, 0, 1, 1], [], []>} : vector<8x64xbf16>, vector<64x128xbf16>, vector<8x128xf32> -> vector<8x128xf32>
    %491 = arith.addf %490, %4 : vector<8x128xf32>
    %c0_293 = arith.constant 0 : index
    %c0_294 = arith.constant 0 : index
    %c0_295 = arith.constant 0 : index
    %492 = vector.load %arg11[%c0_293, %c0_294, %c0_295] : memref<2x8x128xf32, #tpu.memory_space<vmem>>, vector<1x8x128xf32>
    %493 = vector.shape_cast %492 : vector<1x8x128xf32> to vector<8x128xf32>
    %494 = tpu.concatenate %491, %493 in 1 : vector<8x128xf32>, vector<8x128xf32> -> vector<8x256xf32>
    %495 = arith.truncf %494 : vector<8x256xf32> to vector<8x256xbf16>
    %c0_296 = arith.constant 0 : index
    %c0_297 = arith.constant 0 : index
    %c0_298 = arith.constant 0 : index
    %496 = vector.load %arg4[%c0_296, %c0_297, %c0_298] : memref<2x256x512xbf16, #tpu.memory_space<vmem>>, vector<1x256x512xbf16>
    %497 = vector.shape_cast %496 : vector<1x256x512xbf16> to vector<256x512xbf16>
    %cst_299 = arith.constant dense<0.000000e+00> : vector<8x512xf32>
    %498 = tpu.matmul %495, %497, %cst_299 {dimension_numbers = #tpu.dot_dimension_numbers<[1], [0], [0], [1], [0, 0, 1, 1], [], []>} : vector<8x256xbf16>, vector<256x512xbf16>, vector<8x512xf32> -> vector<8x512xf32>
    %c0_300 = arith.constant 0 : index
    %c0_301 = arith.constant 0 : index
    %c0_302 = arith.constant 0 : index
    %499 = vector.load %arg5[%c0_300, %c0_301, %c0_302] : memref<2x8x512xf32, #tpu.memory_space<vmem>>, vector<1x8x512xf32>
    %500 = vector.shape_cast %499 : vector<1x8x512xf32> to vector<8x512xf32>
    %501 = arith.addf %498, %500 : vector<8x512xf32>
    %502 = vector.extract_strided_slice %501 {offsets = [0, 0], sizes = [8, 384], strides = [1, 1]} : vector<8x512xf32> to vector<8x384xf32>
    %503 = arith.negf %502 : vector<8x384xf32>
    %504 = math.exp %503 : vector<8x384xf32>
    %cst_303 = arith.constant 1.000000e+00 : f32
    %505 = vector.broadcast %cst_303 : f32 to vector<8x384xf32>
    %506 = arith.addf %505, %504 : vector<8x384xf32>
    %507 = arith.divf %505, %506 : vector<8x384xf32>
    %508 = vector.extract_strided_slice %507 {offsets = [0, 0], sizes = [8, 128], strides = [1, 1]} : vector<8x384xf32> to vector<8x128xf32>
    %509 = vector.extract_strided_slice %507 {offsets = [0, 128], sizes = [8, 128], strides = [1, 1]} : vector<8x384xf32> to vector<8x128xf32>
    %510 = vector.extract_strided_slice %507 {offsets = [0, 256], sizes = [8, 128], strides = [1, 1]} : vector<8x384xf32> to vector<8x128xf32>
    %511 = vector.extract_strided_slice %501 {offsets = [0, 384], sizes = [8, 128], strides = [1, 1]} : vector<8x512xf32> to vector<8x128xf32>
    %512 = math.tanh %511 : vector<8x128xf32>
    %c0_304 = arith.constant 0 : index
    %c0_305 = arith.constant 0 : index
    %c0_306 = arith.constant 0 : index
    %513 = vector.load %arg12[%c0_304, %c0_305, %c0_306] : memref<2x8x128xf32, #tpu.memory_space<vmem>>, vector<1x8x128xf32>
    %514 = vector.shape_cast %513 : vector<1x8x128xf32> to vector<8x128xf32>
    %515 = arith.mulf %509, %514 : vector<8x128xf32>
    %516 = arith.mulf %508, %512 : vector<8x128xf32>
    %517 = arith.addf %515, %516 : vector<8x128xf32>
    %518 = math.tanh %517 : vector<8x128xf32>
    %519 = arith.mulf %510, %518 : vector<8x128xf32>
    %c0_307 = arith.constant 0 : index
    %c0_308 = arith.constant 0 : index
    %c0_309 = arith.constant 0 : index
    %520 = vector.load %arg11[%c0_307, %c0_308, %c0_309] : memref<2x8x128xf32, #tpu.memory_space<vmem>>, vector<1x8x128xf32>
    %521 = vector.shape_cast %520 : vector<1x8x128xf32> to vector<8x128xf32>
    %522 = vector.shape_cast %519 : vector<8x128xf32> to vector<1x8x128xf32>
    tpu.vector_store %arg11[%c0_307, %c0_308, %c0_309], %522 {strides = array<i32>} : memref<2x8x128xf32, #tpu.memory_space<vmem>>, vector<1x8x128xf32>,
    %c0_310 = arith.constant 0 : index
    %c0_311 = arith.constant 0 : index
    %c0_312 = arith.constant 0 : index
    %523 = vector.load %arg12[%c0_310, %c0_311, %c0_312] : memref<2x8x128xf32, #tpu.memory_space<vmem>>, vector<1x8x128xf32>
    %524 = vector.shape_cast %523 : vector<1x8x128xf32> to vector<8x128xf32>
    %525 = vector.shape_cast %517 : vector<8x128xf32> to vector<1x8x128xf32>
    tpu.vector_store %arg12[%c0_310, %c0_311, %c0_312], %525 {strides = array<i32>} : memref<2x8x128xf32, #tpu.memory_space<vmem>>, vector<1x8x128xf32>,
    %c1_313 = arith.constant 1 : index
    %c0_314 = arith.constant 0 : index
    %c0_315 = arith.constant 0 : index
    %526 = vector.load %arg11[%c1_313, %c0_314, %c0_315] : memref<2x8x128xf32, #tpu.memory_space<vmem>>, vector<1x8x128xf32>
    %527 = vector.shape_cast %526 : vector<1x8x128xf32> to vector<8x128xf32>
    %528 = tpu.concatenate %519, %527 in 1 : vector<8x128xf32>, vector<8x128xf32> -> vector<8x256xf32>
    %529 = arith.truncf %528 : vector<8x256xf32> to vector<8x256xbf16>
    %c1_316 = arith.constant 1 : index
    %c0_317 = arith.constant 0 : index
    %c0_318 = arith.constant 0 : index
    %530 = vector.load %arg4[%c1_316, %c0_317, %c0_318] : memref<2x256x512xbf16, #tpu.memory_space<vmem>>, vector<1x256x512xbf16>
    %531 = vector.shape_cast %530 : vector<1x256x512xbf16> to vector<256x512xbf16>
    %cst_319 = arith.constant dense<0.000000e+00> : vector<8x512xf32>
    %532 = tpu.matmul %529, %531, %cst_319 {dimension_numbers = #tpu.dot_dimension_numbers<[1], [0], [0], [1], [0, 0, 1, 1], [], []>} : vector<8x256xbf16>, vector<256x512xbf16>, vector<8x512xf32> -> vector<8x512xf32>
    %c1_320 = arith.constant 1 : index
    %c0_321 = arith.constant 0 : index
    %c0_322 = arith.constant 0 : index
    %533 = vector.load %arg5[%c1_320, %c0_321, %c0_322] : memref<2x8x512xf32, #tpu.memory_space<vmem>>, vector<1x8x512xf32>
    %534 = vector.shape_cast %533 : vector<1x8x512xf32> to vector<8x512xf32>
    %535 = arith.addf %532, %534 : vector<8x512xf32>
    %536 = vector.extract_strided_slice %535 {offsets = [0, 0], sizes = [8, 384], strides = [1, 1]} : vector<8x512xf32> to vector<8x384xf32>
    %537 = arith.negf %536 : vector<8x384xf32>
    %538 = math.exp %537 : vector<8x384xf32>
    %cst_323 = arith.constant 1.000000e+00 : f32
    %539 = vector.broadcast %cst_323 : f32 to vector<8x384xf32>
    %540 = arith.addf %539, %538 : vector<8x384xf32>
    %541 = arith.divf %539, %540 : vector<8x384xf32>
    %542 = vector.extract_strided_slice %541 {offsets = [0, 0], sizes = [8, 128], strides = [1, 1]} : vector<8x384xf32> to vector<8x128xf32>
    %543 = vector.extract_strided_slice %541 {offsets = [0, 128], sizes = [8, 128], strides = [1, 1]} : vector<8x384xf32> to vector<8x128xf32>
    %544 = vector.extract_strided_slice %541 {offsets = [0, 256], sizes = [8, 128], strides = [1, 1]} : vector<8x384xf32> to vector<8x128xf32>
    %545 = vector.extract_strided_slice %535 {offsets = [0, 384], sizes = [8, 128], strides = [1, 1]} : vector<8x512xf32> to vector<8x128xf32>
    %546 = math.tanh %545 : vector<8x128xf32>
    %c1_324 = arith.constant 1 : index
    %c0_325 = arith.constant 0 : index
    %c0_326 = arith.constant 0 : index
    %547 = vector.load %arg12[%c1_324, %c0_325, %c0_326] : memref<2x8x128xf32, #tpu.memory_space<vmem>>, vector<1x8x128xf32>
    %548 = vector.shape_cast %547 : vector<1x8x128xf32> to vector<8x128xf32>
    %549 = arith.mulf %543, %548 : vector<8x128xf32>
    %550 = arith.mulf %542, %546 : vector<8x128xf32>
    %551 = arith.addf %549, %550 : vector<8x128xf32>
    %552 = math.tanh %551 : vector<8x128xf32>
    %553 = arith.mulf %544, %552 : vector<8x128xf32>
    %c1_327 = arith.constant 1 : index
    %c0_328 = arith.constant 0 : index
    %c0_329 = arith.constant 0 : index
    %554 = vector.load %arg11[%c1_327, %c0_328, %c0_329] : memref<2x8x128xf32, #tpu.memory_space<vmem>>, vector<1x8x128xf32>
    %555 = vector.shape_cast %554 : vector<1x8x128xf32> to vector<8x128xf32>
    %556 = vector.shape_cast %553 : vector<8x128xf32> to vector<1x8x128xf32>
    tpu.vector_store %arg11[%c1_327, %c0_328, %c0_329], %556 {strides = array<i32>} : memref<2x8x128xf32, #tpu.memory_space<vmem>>, vector<1x8x128xf32>,
    %c1_330 = arith.constant 1 : index
    %c0_331 = arith.constant 0 : index
    %c0_332 = arith.constant 0 : index
    %557 = vector.load %arg12[%c1_330, %c0_331, %c0_332] : memref<2x8x128xf32, #tpu.memory_space<vmem>>, vector<1x8x128xf32>
    %558 = vector.shape_cast %557 : vector<1x8x128xf32> to vector<8x128xf32>
    %559 = vector.shape_cast %551 : vector<8x128xf32> to vector<1x8x128xf32>
    tpu.vector_store %arg12[%c1_330, %c0_331, %c0_332], %559 {strides = array<i32>} : memref<2x8x128xf32, #tpu.memory_space<vmem>>, vector<1x8x128xf32>,
    %560 = arith.truncf %553 : vector<8x128xf32> to vector<8x128xbf16>
    %cst_333 = arith.constant dense<0.000000e+00> : vector<8x128xf32>
    %561 = tpu.matmul %560, %5, %cst_333 {dimension_numbers = #tpu.dot_dimension_numbers<[1], [0], [0], [1], [0, 0, 1, 1], [], []>} : vector<8x128xbf16>, vector<128x128xbf16>, vector<8x128xf32> -> vector<8x128xf32>
    %562 = arith.addf %561, %6 : vector<8x128xf32>
    %563 = math.tanh %562 : vector<8x128xf32>
    %c6_334 = arith.constant 6 : index
    %c0_335 = arith.constant 0 : index
    %c0_336 = arith.constant 0 : index
    %564 = vector.load %arg10[%c6_334, %c0_335, %c0_336] : memref<8x8x128xf32, #tpu.memory_space<vmem>>, vector<1x8x128xf32>
    %565 = vector.shape_cast %564 : vector<1x8x128xf32> to vector<8x128xf32>
    %566 = vector.shape_cast %563 : vector<8x128xf32> to vector<1x8x128xf32>
    tpu.vector_store %arg10[%c6_334, %c0_335, %c0_336], %566 {strides = array<i32>} : memref<8x8x128xf32, #tpu.memory_space<vmem>>, vector<1x8x128xf32>,
    %c7 = arith.constant 7 : index
    %c0_337 = arith.constant 0 : index
    %c0_338 = arith.constant 0 : index
    %567 = vector.load %arg1[%c7, %c0_337, %c0_338] : memref<8x8x64xf32, #tpu.memory_space<vmem>>, vector<1x8x64xf32>
    %568 = vector.shape_cast %567 : vector<1x8x64xf32> to vector<8x64xf32>
    %569 = arith.truncf %568 : vector<8x64xf32> to vector<8x64xbf16>
    %cst_339 = arith.constant dense<0.000000e+00> : vector<8x128xf32>
    %570 = tpu.matmul %569, %3, %cst_339 {dimension_numbers = #tpu.dot_dimension_numbers<[1], [0], [0], [1], [0, 0, 1, 1], [], []>} : vector<8x64xbf16>, vector<64x128xbf16>, vector<8x128xf32> -> vector<8x128xf32>
    %571 = arith.addf %570, %4 : vector<8x128xf32>
    %c0_340 = arith.constant 0 : index
    %c0_341 = arith.constant 0 : index
    %c0_342 = arith.constant 0 : index
    %572 = vector.load %arg11[%c0_340, %c0_341, %c0_342] : memref<2x8x128xf32, #tpu.memory_space<vmem>>, vector<1x8x128xf32>
    %573 = vector.shape_cast %572 : vector<1x8x128xf32> to vector<8x128xf32>
    %574 = tpu.concatenate %571, %573 in 1 : vector<8x128xf32>, vector<8x128xf32> -> vector<8x256xf32>
    %575 = arith.truncf %574 : vector<8x256xf32> to vector<8x256xbf16>
    %c0_343 = arith.constant 0 : index
    %c0_344 = arith.constant 0 : index
    %c0_345 = arith.constant 0 : index
    %576 = vector.load %arg4[%c0_343, %c0_344, %c0_345] : memref<2x256x512xbf16, #tpu.memory_space<vmem>>, vector<1x256x512xbf16>
    %577 = vector.shape_cast %576 : vector<1x256x512xbf16> to vector<256x512xbf16>
    %cst_346 = arith.constant dense<0.000000e+00> : vector<8x512xf32>
    %578 = tpu.matmul %575, %577, %cst_346 {dimension_numbers = #tpu.dot_dimension_numbers<[1], [0], [0], [1], [0, 0, 1, 1], [], []>} : vector<8x256xbf16>, vector<256x512xbf16>, vector<8x512xf32> -> vector<8x512xf32>
    %c0_347 = arith.constant 0 : index
    %c0_348 = arith.constant 0 : index
    %c0_349 = arith.constant 0 : index
    %579 = vector.load %arg5[%c0_347, %c0_348, %c0_349] : memref<2x8x512xf32, #tpu.memory_space<vmem>>, vector<1x8x512xf32>
    %580 = vector.shape_cast %579 : vector<1x8x512xf32> to vector<8x512xf32>
    %581 = arith.addf %578, %580 : vector<8x512xf32>
    %582 = vector.extract_strided_slice %581 {offsets = [0, 0], sizes = [8, 384], strides = [1, 1]} : vector<8x512xf32> to vector<8x384xf32>
    %583 = arith.negf %582 : vector<8x384xf32>
    %584 = math.exp %583 : vector<8x384xf32>
    %cst_350 = arith.constant 1.000000e+00 : f32
    %585 = vector.broadcast %cst_350 : f32 to vector<8x384xf32>
    %586 = arith.addf %585, %584 : vector<8x384xf32>
    %587 = arith.divf %585, %586 : vector<8x384xf32>
    %588 = vector.extract_strided_slice %587 {offsets = [0, 0], sizes = [8, 128], strides = [1, 1]} : vector<8x384xf32> to vector<8x128xf32>
    %589 = vector.extract_strided_slice %587 {offsets = [0, 128], sizes = [8, 128], strides = [1, 1]} : vector<8x384xf32> to vector<8x128xf32>
    %590 = vector.extract_strided_slice %587 {offsets = [0, 256], sizes = [8, 128], strides = [1, 1]} : vector<8x384xf32> to vector<8x128xf32>
    %591 = vector.extract_strided_slice %581 {offsets = [0, 384], sizes = [8, 128], strides = [1, 1]} : vector<8x512xf32> to vector<8x128xf32>
    %592 = math.tanh %591 : vector<8x128xf32>
    %c0_351 = arith.constant 0 : index
    %c0_352 = arith.constant 0 : index
    %c0_353 = arith.constant 0 : index
    %593 = vector.load %arg12[%c0_351, %c0_352, %c0_353] : memref<2x8x128xf32, #tpu.memory_space<vmem>>, vector<1x8x128xf32>
    %594 = vector.shape_cast %593 : vector<1x8x128xf32> to vector<8x128xf32>
    %595 = arith.mulf %589, %594 : vector<8x128xf32>
    %596 = arith.mulf %588, %592 : vector<8x128xf32>
    %597 = arith.addf %595, %596 : vector<8x128xf32>
    %598 = math.tanh %597 : vector<8x128xf32>
    %599 = arith.mulf %590, %598 : vector<8x128xf32>
    %c0_354 = arith.constant 0 : index
    %c0_355 = arith.constant 0 : index
    %c0_356 = arith.constant 0 : index
    %600 = vector.load %arg11[%c0_354, %c0_355, %c0_356] : memref<2x8x128xf32, #tpu.memory_space<vmem>>, vector<1x8x128xf32>
    %601 = vector.shape_cast %600 : vector<1x8x128xf32> to vector<8x128xf32>
    %602 = vector.shape_cast %599 : vector<8x128xf32> to vector<1x8x128xf32>
    tpu.vector_store %arg11[%c0_354, %c0_355, %c0_356], %602 {strides = array<i32>} : memref<2x8x128xf32, #tpu.memory_space<vmem>>, vector<1x8x128xf32>,
    %c0_357 = arith.constant 0 : index
    %c0_358 = arith.constant 0 : index
    %c0_359 = arith.constant 0 : index
    %603 = vector.load %arg12[%c0_357, %c0_358, %c0_359] : memref<2x8x128xf32, #tpu.memory_space<vmem>>, vector<1x8x128xf32>
    %604 = vector.shape_cast %603 : vector<1x8x128xf32> to vector<8x128xf32>
    %605 = vector.shape_cast %597 : vector<8x128xf32> to vector<1x8x128xf32>
    tpu.vector_store %arg12[%c0_357, %c0_358, %c0_359], %605 {strides = array<i32>} : memref<2x8x128xf32, #tpu.memory_space<vmem>>, vector<1x8x128xf32>,
    %c1_360 = arith.constant 1 : index
    %c0_361 = arith.constant 0 : index
    %c0_362 = arith.constant 0 : index
    %606 = vector.load %arg11[%c1_360, %c0_361, %c0_362] : memref<2x8x128xf32, #tpu.memory_space<vmem>>, vector<1x8x128xf32>
    %607 = vector.shape_cast %606 : vector<1x8x128xf32> to vector<8x128xf32>
    %608 = tpu.concatenate %599, %607 in 1 : vector<8x128xf32>, vector<8x128xf32> -> vector<8x256xf32>
    %609 = arith.truncf %608 : vector<8x256xf32> to vector<8x256xbf16>
    %c1_363 = arith.constant 1 : index
    %c0_364 = arith.constant 0 : index
    %c0_365 = arith.constant 0 : index
    %610 = vector.load %arg4[%c1_363, %c0_364, %c0_365] : memref<2x256x512xbf16, #tpu.memory_space<vmem>>, vector<1x256x512xbf16>
    %611 = vector.shape_cast %610 : vector<1x256x512xbf16> to vector<256x512xbf16>
    %cst_366 = arith.constant dense<0.000000e+00> : vector<8x512xf32>
    %612 = tpu.matmul %609, %611, %cst_366 {dimension_numbers = #tpu.dot_dimension_numbers<[1], [0], [0], [1], [0, 0, 1, 1], [], []>} : vector<8x256xbf16>, vector<256x512xbf16>, vector<8x512xf32> -> vector<8x512xf32>
    %c1_367 = arith.constant 1 : index
    %c0_368 = arith.constant 0 : index
    %c0_369 = arith.constant 0 : index
    %613 = vector.load %arg5[%c1_367, %c0_368, %c0_369] : memref<2x8x512xf32, #tpu.memory_space<vmem>>, vector<1x8x512xf32>
    %614 = vector.shape_cast %613 : vector<1x8x512xf32> to vector<8x512xf32>
    %615 = arith.addf %612, %614 : vector<8x512xf32>
    %616 = vector.extract_strided_slice %615 {offsets = [0, 0], sizes = [8, 384], strides = [1, 1]} : vector<8x512xf32> to vector<8x384xf32>
    %617 = arith.negf %616 : vector<8x384xf32>
    %618 = math.exp %617 : vector<8x384xf32>
    %cst_370 = arith.constant 1.000000e+00 : f32
    %619 = vector.broadcast %cst_370 : f32 to vector<8x384xf32>
    %620 = arith.addf %619, %618 : vector<8x384xf32>
    %621 = arith.divf %619, %620 : vector<8x384xf32>
    %622 = vector.extract_strided_slice %621 {offsets = [0, 0], sizes = [8, 128], strides = [1, 1]} : vector<8x384xf32> to vector<8x128xf32>
    %623 = vector.extract_strided_slice %621 {offsets = [0, 128], sizes = [8, 128], strides = [1, 1]} : vector<8x384xf32> to vector<8x128xf32>
    %624 = vector.extract_strided_slice %621 {offsets = [0, 256], sizes = [8, 128], strides = [1, 1]} : vector<8x384xf32> to vector<8x128xf32>
    %625 = vector.extract_strided_slice %615 {offsets = [0, 384], sizes = [8, 128], strides = [1, 1]} : vector<8x512xf32> to vector<8x128xf32>
    %626 = math.tanh %625 : vector<8x128xf32>
    %c1_371 = arith.constant 1 : index
    %c0_372 = arith.constant 0 : index
    %c0_373 = arith.constant 0 : index
    %627 = vector.load %arg12[%c1_371, %c0_372, %c0_373] : memref<2x8x128xf32, #tpu.memory_space<vmem>>, vector<1x8x128xf32>
    %628 = vector.shape_cast %627 : vector<1x8x128xf32> to vector<8x128xf32>
    %629 = arith.mulf %623, %628 : vector<8x128xf32>
    %630 = arith.mulf %622, %626 : vector<8x128xf32>
    %631 = arith.addf %629, %630 : vector<8x128xf32>
    %632 = math.tanh %631 : vector<8x128xf32>
    %633 = arith.mulf %624, %632 : vector<8x128xf32>
    %c1_374 = arith.constant 1 : index
    %c0_375 = arith.constant 0 : index
    %c0_376 = arith.constant 0 : index
    %634 = vector.load %arg11[%c1_374, %c0_375, %c0_376] : memref<2x8x128xf32, #tpu.memory_space<vmem>>, vector<1x8x128xf32>
    %635 = vector.shape_cast %634 : vector<1x8x128xf32> to vector<8x128xf32>
    %636 = vector.shape_cast %633 : vector<8x128xf32> to vector<1x8x128xf32>
    tpu.vector_store %arg11[%c1_374, %c0_375, %c0_376], %636 {strides = array<i32>} : memref<2x8x128xf32, #tpu.memory_space<vmem>>, vector<1x8x128xf32>,
    %c1_377 = arith.constant 1 : index
    %c0_378 = arith.constant 0 : index
    %c0_379 = arith.constant 0 : index
    %637 = vector.load %arg12[%c1_377, %c0_378, %c0_379] : memref<2x8x128xf32, #tpu.memory_space<vmem>>, vector<1x8x128xf32>
    %638 = vector.shape_cast %637 : vector<1x8x128xf32> to vector<8x128xf32>
    %639 = vector.shape_cast %631 : vector<8x128xf32> to vector<1x8x128xf32>
    tpu.vector_store %arg12[%c1_377, %c0_378, %c0_379], %639 {strides = array<i32>} : memref<2x8x128xf32, #tpu.memory_space<vmem>>, vector<1x8x128xf32>,
    %640 = arith.truncf %633 : vector<8x128xf32> to vector<8x128xbf16>
    %cst_380 = arith.constant dense<0.000000e+00> : vector<8x128xf32>
    %641 = tpu.matmul %640, %5, %cst_380 {dimension_numbers = #tpu.dot_dimension_numbers<[1], [0], [0], [1], [0, 0, 1, 1], [], []>} : vector<8x128xbf16>, vector<128x128xbf16>, vector<8x128xf32> -> vector<8x128xf32>
    %642 = arith.addf %641, %6 : vector<8x128xf32>
    %643 = math.tanh %642 : vector<8x128xf32>
    %c7_381 = arith.constant 7 : index
    %c0_382 = arith.constant 0 : index
    %c0_383 = arith.constant 0 : index
    %644 = vector.load %arg10[%c7_381, %c0_382, %c0_383] : memref<8x8x128xf32, #tpu.memory_space<vmem>>, vector<1x8x128xf32>
    %645 = vector.shape_cast %644 : vector<1x8x128xf32> to vector<8x128xf32>
    %646 = vector.shape_cast %643 : vector<8x128xf32> to vector<1x8x128xf32>
    tpu.vector_store %arg10[%c7_381, %c0_382, %c0_383], %646 {strides = array<i32>} : memref<8x8x128xf32, #tpu.memory_space<vmem>>, vector<1x8x128xf32>,
    return
  }
  func.func @transform_0(%arg0: i32) -> (i32, i32, i32) {
    %c0_i32 = arith.constant 0 : i32
    %c0_i32_0 = arith.constant 0 : i32
    %c0_i32_1 = arith.constant 0 : i32
    return %arg0, %c0_i32, %c0_i32_0 : i32, i32, i32
  }
  func.func @transform_1(%arg0: i32) -> (i32, i32) {
    %c0_i32 = arith.constant 0 : i32
    %c0_i32_0 = arith.constant 0 : i32
    %c0_i32_1 = arith.constant 0 : i32
    return %c0_i32, %c0_i32_0 : i32, i32
  }
  func.func @transform_2(%arg0: i32) -> (i32, i32) {
    %c0_i32 = arith.constant 0 : i32
    %c0_i32_0 = arith.constant 0 : i32
    %c0_i32_1 = arith.constant 0 : i32
    return %c0_i32, %c0_i32_0 : i32, i32
  }
  func.func @transform_3(%arg0: i32) -> (i32, i32, i32) {
    %c0_i32 = arith.constant 0 : i32
    %c0_i32_0 = arith.constant 0 : i32
    %c0_i32_1 = arith.constant 0 : i32
    %c0_i32_2 = arith.constant 0 : i32
    return %c0_i32, %c0_i32_0, %c0_i32_1 : i32, i32, i32
  }
  func.func @transform_4(%arg0: i32) -> (i32, i32, i32) {
    %c0_i32 = arith.constant 0 : i32
    %c0_i32_0 = arith.constant 0 : i32
    %c0_i32_1 = arith.constant 0 : i32
    %c0_i32_2 = arith.constant 0 : i32
    return %c0_i32, %c0_i32_0, %c0_i32_1 : i32, i32, i32
  }
  func.func @transform_5(%arg0: i32) -> (i32, i32, i32) {
    %c0_i32 = arith.constant 0 : i32
    %c0_i32_0 = arith.constant 0 : i32
    %c0_i32_1 = arith.constant 0 : i32
    %c0_i32_2 = arith.constant 0 : i32
    return %c0_i32, %c0_i32_0, %c0_i32_1 : i32, i32, i32
  }
  func.func @transform_6(%arg0: i32) -> (i32, i32, i32) {
    %c0_i32 = arith.constant 0 : i32
    %c0_i32_0 = arith.constant 0 : i32
    %c0_i32_1 = arith.constant 0 : i32
    %c0_i32_2 = arith.constant 0 : i32
    return %c0_i32, %c0_i32_0, %c0_i32_1 : i32, i32, i32
  }
  func.func @transform_7(%arg0: i32) -> (i32, i32) {
    %c0_i32 = arith.constant 0 : i32
    %c0_i32_0 = arith.constant 0 : i32
    %c0_i32_1 = arith.constant 0 : i32
    return %c0_i32, %c0_i32_0 : i32, i32
  }
  func.func @transform_8(%arg0: i32) -> (i32, i32) {
    %c0_i32 = arith.constant 0 : i32
    %c0_i32_0 = arith.constant 0 : i32
    %c0_i32_1 = arith.constant 0 : i32
    return %c0_i32, %c0_i32_0 : i32, i32
  }
  func.func @transform_9(%arg0: i32) -> (i32, i32, i32) {
    %c0_i32 = arith.constant 0 : i32
    %c0_i32_0 = arith.constant 0 : i32
    %c0_i32_1 = arith.constant 0 : i32
    return %arg0, %c0_i32, %c0_i32_0 : i32, i32, i32
  }
  func.func @transform_10(%arg0: i32) -> (i32, i32, i32) {
    %c0_i32 = arith.constant 0 : i32
    %c0_i32_0 = arith.constant 0 : i32
    %c0_i32_1 = arith.constant 0 : i32
    %c0_i32_2 = arith.constant 0 : i32
    return %c0_i32, %c0_i32_0, %c0_i32_1 : i32, i32, i32
  }
  func.func @transform_11(%arg0: i32) -> (i32, i32, i32) {
    %c0_i32 = arith.constant 0 : i32
    %c0_i32_0 = arith.constant 0 : i32
    %c0_i32_1 = arith.constant 0 : i32
    %c0_i32_2 = arith.constant 0 : i32
    return %c0_i32, %c0_i32_0, %c0_i32_1 : i32, i32, i32
  }
}

</mosaic_0001>

<llo_original>
// kernel: tpu_custom_call.1
$region0: #{tpu_custom_call.1}
  #allocation0 [shape = 'u32[]', space=smem, size = 0x4, offset = 0x4, fixed_abs, tag = 'smem constant byte address 0x4 - core index']
  #allocation1 [shape = 'u32[144,128]{1,0:T(1,128)}', space=vmem, size = 0x12000, scoped, tag = 'internal scratch']
  %s0 = inlined_call_operand.hbm [shape: f32[16,8,64], index: 0, kind: input, shape index: {}]
  %s1 = inlined_call_operand.hbm [shape: bf16[64,128], index: 1, kind: input, shape index: {}]
  %s2 = inlined_call_operand.vmem [shape: f32[8,128], index: 2, kind: input, shape index: {}]
  %s3 = inlined_call_operand.hbm [shape: bf16[2,256,512], index: 3, kind: input, shape index: {}]
  %s4 = inlined_call_operand.vmem [shape: f32[2,8,512], index: 4, kind: input, shape index: {}]
  %s5 = inlined_call_operand.hbm [shape: f32[2,8,128], index: 5, kind: input, shape index: {}, may-alias: {5,10}]
  %s6 = inlined_call_operand.hbm [shape: f32[2,8,128], index: 6, kind: input, shape index: {}, may-alias: {6,11}]
  %s7 = inlined_call_operand.hbm [shape: bf16[128,128], index: 7, kind: input, shape index: {}]
  %s8 = inlined_call_operand.hbm [shape: f32[8,128], index: 8, kind: input, shape index: {}]
  %s9 = inlined_call_operand.hbm [shape: f32[16,8,128], index: 9, kind: output, shape index: {0}]
  %s10 = inlined_call_operand.hbm [shape: f32[2,8,128], index: 10, kind: output, shape index: {1}, may-alias: {5,10}]
  %s11 = inlined_call_operand.hbm [shape: f32[2,8,128], index: 11, kind: output, shape index: {2}, may-alias: {6,11}]
  %12 = xla_tuple %s9, %s10, %s11
  %s13 = sld [smem:[#allocation0]]
  $region117: #{tpu_custom_call.1} parent=0
    _
  %s15 = ssub.s32 1, %s13
  %s16 = scalar_select 0, %s15, %s13
  $region1: #{tpu_custom_call.1} parent=0
    #allocation2 [shape = 'u8[65536]{0}', space=vmem, size = 0x10000, scoped, tag = 'input window, operand 0']
    #allocation3 [shape = 's32[2]{0}', space=sflag, size = 0x8, scoped, tag = 'scoped memory for tpu_custom_call.1']
    #allocation4 [shape = 's32[2]{0}', space=sflag, size = 0x8, scoped, tag = 'scoped memory for tpu_custom_call.1']
    #allocation5 [shape = 'u8[16384]{0}', space=vmem, size = 0x4000, scoped, tag = 'input window, operand 1, single buffered']
    #allocation6 [shape = 's32[1]{0}', space=sflag, size = 0x4, scoped, tag = 'scoped memory for tpu_custom_call.1']
    #allocation7 [shape = 'u8[524288]{0}', space=vmem, size = 0x80000, scoped, tag = 'input window, operand 3, single buffered']
    #allocation8 [shape = 'u8[8192]{0}', space=vmem, size = 0x2000, scoped, tag = 'input window, operand 5, single buffered']
    #allocation9 [shape = 's32[1]{0}', space=sflag, size = 0x4, scoped, tag = 'scoped memory for tpu_custom_call.1']
    #allocation10 [shape = 'u8[8192]{0}', space=vmem, size = 0x2000, scoped, tag = 'input window, operand 6, single buffered']
    #allocation11 [shape = 'u8[32768]{0}', space=vmem, size = 0x8000, scoped, tag = 'input window, operand 7, single buffered']
    #allocation12 [shape = 's32[1]{0}', space=sflag, size = 0x4, scoped, tag = 'scoped memory for tpu_custom_call.1']
    #allocation13 [shape = 'u8[4096]{0}', space=vmem, size = 0x1000, scoped, tag = 'input window, operand 8, single buffered']
    #allocation14 [shape = 'u8[65536]{0}', space=vmem, size = 0x10000, scoped, tag = 'output window, operand 0']
    #allocation15 [shape = 'u8[8192]{0}', space=vmem, size = 0x2000, scoped, tag = 'output window, operand 1, single buffered']
    #allocation16 [shape = 's32[1]{0}', space=sflag, size = 0x4, scoped, tag = 'scoped memory for tpu_custom_call.1']
    #allocation17 [shape = 'u8[8192]{0}', space=vmem, size = 0x2000, scoped, tag = 'output window, operand 2, single buffered']
    %17 = vsyncpa [#allocation3], 0
    %s18 = scalar_lea.sflag [#allocation3], 1
    %19 = vsyncpa %s18, 0
    %20 = vsyncpa [#allocation6], 0
    %21 = vsyncpa [#allocation9], 0
    %22 = vsyncpa [#allocation12], 0
    %23 = vsyncpa [#allocation4], 0
    %s24 = scalar_lea.sflag [#allocation4], 1
    %25 = vsyncpa %s24, 0
    %26 = vsyncpa [#allocation16], 0
    loop: start=0, step=1, limit=4
    $region2: #{tpu_custom_call.1} parent=1 // loop_pre_header
      _
    $region3: #{tpu_custom_call.1} parent=1 // loop_header
      %s28 = sphi 0, %s32
      %p29 = scmp.ge.s32.totalorder %s28, 4
      %s38 = sphi 0, %s40
      %s41 = sphi 0, %s38
      %s42 = sphi 0, %s41
      %s58 = sphi 0, %s42
      %s62 = sphi 0, %s62
      %s64 = sphi 0, %s62
      %s65 = sphi 0, %s64
      %s79 = sphi 0, %s65
      %s83 = sphi 0, %s83
      %s85 = sphi 0, %s83
      %s86 = sphi 0, %s85
      %s100 = sphi 0, %s86
      %s104 = sphi 0, %s104
      %s106 = sphi 0, %s104
      %s107 = sphi 0, %s106
      %s121 = sphi 0, %s107
      %s125 = sphi 0, %s125
      %s127 = sphi 0, %s125
      %s128 = sphi 0, %s127
      %s142 = sphi 0, %s128
      %s146 = sphi 0, %s146
      %s148 = sphi 0, %s146
      %s149 = sphi 0, %s148
      %s163 = sphi 0, %s149
      %s167 = sphi 0, %s167
      %s169 = sphi 0, %s167
      %s170 = sphi 0, %s169
      %s184 = sphi 0, %s170
      %s188 = sphi 0, %s188
      %s190 = sphi 0, %s188
      %s191 = sphi 0, %s190
      %s205 = sphi 0, %s191
      %s209 = sphi 0, %s209
      %s211 = sphi 0, %s209
      %s212 = sphi 0, %s211
      %s226 = sphi 0, %s212
      %s232 = sphi 0, %s234
      %s235 = sphi 0, %s232
      %s236 = sphi 0, %s235
      %s252 = sphi 0, %s236
      %s256 = sphi 0, %s256
      %s258 = sphi 0, %s256
      %s259 = sphi 0, %s258
      %s273 = sphi 0, %s259
      %s277 = sphi 0, %s277
      %s279 = sphi 0, %s277
      %s280 = sphi 0, %s279
      %s294 = sphi 0, %s280
    $region4: #{tpu_custom_call.1} parent=1 // loop_header_branch
      %31 = sbr.rel (%p29) target = $region8
    $region5: #{tpu_custom_call.1} parent=1 // loop_body
      %s33 = ssub.s32 %s28, 1
      %s34 = ssub.s32 %s28, 2
      %s35 = sadd.s32 %s28, 1
      %s36 = ssub.s32 %s28, %s35
      %p37 = scmp.eq.s32.totalorder %s36, 0
      %s39 = sadd.s32 %s38, 1
      %s40 = scalar_select %p37, %s38, %s39
      %p43 = pneg %p37
      %p44 = scmp.eq.s32.totalorder %s28, 1
      %p45 = por %p43, %p44
      %p46 = scmp.ne.s32.totalorder %s38, %s41
      %p47 = scmp.eq.s32.totalorder %s28, 0
      %p48 = por %p46, %p47
      %p49 = scmp.ne.s32.totalorder %s38, %s41
      %p50 = scmp.eq.s32.totalorder %s33, 1
      %p51 = por %p49, %p50
      %p52 = scmp.ne.s32.totalorder %s41, %s42
      %p53 = scmp.eq.s32.totalorder %s33, 0
      %p54 = por %p52, %p53
      %p55 = scmp.ne.s32.totalorder %s41, %s42
      %p56 = scmp.eq.s32.totalorder %s34, 1
      %p57 = por %p55, %p56
      %p59 = scmp.ne.s32.totalorder %s42, %s58
      %p60 = scmp.eq.s32.totalorder %s34, 0
      %p61 = por %p59, %p60
      %s63 = sadd.s32 %s62, 1
      %p66 = scmp.eq.s32.totalorder %s28, 1
      %p67 = scmp.ne.s32.totalorder %s62, %s64
      %p68 = scmp.eq.s32.totalorder %s28, 0
      %p69 = por %p67, %p68
      %p70 = scmp.ne.s32.totalorder %s62, %s64
      %p71 = scmp.eq.s32.totalorder %s33, 1
      %p72 = por %p70, %p71
      %p73 = scmp.ne.s32.totalorder %s64, %s65
      %p74 = scmp.eq.s32.totalorder %s33, 0
      %p75 = por %p73, %p74
      %p76 = scmp.ne.s32.totalorder %s64, %s65
      %p77 = scmp.eq.s32.totalorder %s34, 1
      %p78 = por %p76, %p77
      %p80 = scmp.ne.s32.totalorder %s65, %s79
      %p81 = scmp.eq.s32.totalorder %s34, 0
      %p82 = por %p80, %p81
      %s84 = sadd.s32 %s83, 1
      %p87 = scmp.eq.s32.totalorder %s28, 1
      %p88 = scmp.ne.s32.totalorder %s83, %s85
      %p89 = scmp.eq.s32.totalorder %s28, 0
      %p90 = por %p88, %p89
      %p91 = scmp.ne.s32.totalorder %s83, %s85
      %p92 = scmp.eq.s32.totalorder %s33, 1
      %p93 = por %p91, %p92
      %p94 = scmp.ne.s32.totalorder %s85, %s86
      %p95 = scmp.eq.s32.totalorder %s33, 0
      %p96 = por %p94, %p95
      %p97 = scmp.ne.s32.totalorder %s85, %s86
      %p98 = scmp.eq.s32.totalorder %s34, 1
      %p99 = por %p97, %p98
      %p101 = scmp.ne.s32.totalorder %s86, %s100
      %p102 = scmp.eq.s32.totalorder %s34, 0
      %p103 = por %p101, %p102
      %s105 = sadd.s32 %s104, 1
      %p108 = scmp.eq.s32.totalorder %s28, 1
      %p109 = scmp.ne.s32.totalorder %s104, %s106
      %p110 = scmp.eq.s32.totalorder %s28, 0
      %p111 = por %p109, %p110
      %p112 = scmp.ne.s32.totalorder %s104, %s106
      %p113 = scmp.eq.s32.totalorder %s33, 1
      %p114 = por %p112, %p113
      %p115 = scmp.ne.s32.totalorder %s106, %s107
      %p116 = scmp.eq.s32.totalorder %s33, 0
      %p117 = por %p115, %p116
      %p118 = scmp.ne.s32.totalorder %s106, %s107
      %p119 = scmp.eq.s32.totalorder %s34, 1
      %p120 = por %p118, %p119
      %p122 = scmp.ne.s32.totalorder %s107, %s121
      %p123 = scmp.eq.s32.totalorder %s34, 0
      %p124 = por %p122, %p123
      %s126 = sadd.s32 %s125, 1
      %p129 = scmp.eq.s32.totalorder %s28, 1
      %p130 = scmp.ne.s32.totalorder %s125, %s127
      %p131 = scmp.eq.s32.totalorder %s28, 0
      %p132 = por %p130, %p131
      %p133 = scmp.ne.s32.totalorder %s125, %s127
      %p134 = scmp.eq.s32.totalorder %s33, 1
      %p135 = por %p133, %p134
      %p136 = scmp.ne.s32.totalorder %s127, %s128
      %p137 = scmp.eq.s32.totalorder %s33, 0
      %p138 = por %p136, %p137
      %p139 = scmp.ne.s32.totalorder %s127, %s128
      %p140 = scmp.eq.s32.totalorder %s34, 1
      %p141 = por %p139, %p140
      %p143 = scmp.ne.s32.totalorder %s128, %s142
      %p144 = scmp.eq.s32.totalorder %s34, 0
      %p145 = por %p143, %p144
      %s147 = sadd.s32 %s146, 1
      %p150 = scmp.eq.s32.totalorder %s28, 1
      %p151 = scmp.ne.s32.totalorder %s146, %s148
      %p152 = scmp.eq.s32.totalorder %s28, 0
      %p153 = por %p151, %p152
      %p154 = scmp.ne.s32.totalorder %s146, %s148
      %p155 = scmp.eq.s32.totalorder %s33, 1
      %p156 = por %p154, %p155
      %p157 = scmp.ne.s32.totalorder %s148, %s149
      %p158 = scmp.eq.s32.totalorder %s33, 0
      %p159 = por %p157, %p158
      %p160 = scmp.ne.s32.totalorder %s148, %s149
      %p161 = scmp.eq.s32.totalorder %s34, 1
      %p162 = por %p160, %p161
      %p164 = scmp.ne.s32.totalorder %s149, %s163
      %p165 = scmp.eq.s32.totalorder %s34, 0
      %p166 = por %p164, %p165
      %s168 = sadd.s32 %s167, 1
      %p171 = scmp.eq.s32.totalorder %s28, 1
      %p172 = scmp.ne.s32.totalorder %s167, %s169
      %p173 = scmp.eq.s32.totalorder %s28, 0
      %p174 = por %p172, %p173
      %p175 = scmp.ne.s32.totalorder %s167, %s169
      %p176 = scmp.eq.s32.totalorder %s33, 1
      %p177 = por %p175, %p176
      %p178 = scmp.ne.s32.totalorder %s169, %s170
      %p179 = scmp.eq.s32.totalorder %s33, 0
      %p180 = por %p178, %p179
      %p181 = scmp.ne.s32.totalorder %s169, %s170
      %p182 = scmp.eq.s32.totalorder %s34, 1
      %p183 = por %p181, %p182
      %p185 = scmp.ne.s32.totalorder %s170, %s184
      %p186 = scmp.eq.s32.totalorder %s34, 0
      %p187 = por %p185, %p186
      %s189 = sadd.s32 %s188, 1
      %p192 = scmp.eq.s32.totalorder %s28, 1
      %p193 = scmp.ne.s32.totalorder %s188, %s190
      %p194 = scmp.eq.s32.totalorder %s28, 0
      %p195 = por %p193, %p194
      %p196 = scmp.ne.s32.totalorder %s188, %s190
      %p197 = scmp.eq.s32.totalorder %s33, 1
      %p198 = por %p196, %p197
      %p199 = scmp.ne.s32.totalorder %s190, %s191
      %p200 = scmp.eq.s32.totalorder %s33, 0
      %p201 = por %p199, %p200
      %p202 = scmp.ne.s32.totalorder %s190, %s191
      %p203 = scmp.eq.s32.totalorder %s34, 1
      %p204 = por %p202, %p203
      %p206 = scmp.ne.s32.totalorder %s191, %s205
      %p207 = scmp.eq.s32.totalorder %s34, 0
      %p208 = por %p206, %p207
      %s210 = sadd.s32 %s209, 1
      %p213 = scmp.eq.s32.totalorder %s28, 1
      %p214 = scmp.ne.s32.totalorder %s209, %s211
      %p215 = scmp.eq.s32.totalorder %s28, 0
      %p216 = por %p214, %p215
      %p217 = scmp.ne.s32.totalorder %s209, %s211
      %p218 = scmp.eq.s32.totalorder %s33, 1
      %p219 = por %p217, %p218
      %p220 = scmp.ne.s32.totalorder %s211, %s212
      %p221 = scmp.eq.s32.totalorder %s33, 0
      %p222 = por %p220, %p221
      %p223 = scmp.ne.s32.totalorder %s211, %s212
      %p224 = scmp.eq.s32.totalorder %s34, 1
      %p225 = por %p223, %p224
      %p227 = scmp.ne.s32.totalorder %s212, %s226
      %p228 = scmp.eq.s32.totalorder %s34, 0
      %p229 = por %p227, %p228
      %s230 = ssub.s32 %s28, %s35
      %p231 = scmp.eq.s32.totalorder %s230, 0
      %s233 = sadd.s32 %s232, 1
      %s234 = scalar_select %p231, %s232, %s233
      %p237 = pneg %p231
      %p238 = scmp.eq.s32.totalorder %s28, 1
      %p239 = por %p237, %p238
      %p240 = scmp.ne.s32.totalorder %s232, %s235
      %p241 = scmp.eq.s32.totalorder %s28, 0
      %p242 = por %p240, %p241
      %p243 = scmp.ne.s32.totalorder %s232, %s235
      %p244 = scmp.eq.s32.totalorder %s33, 1
      %p245 = por %p243, %p244
      %p246 = scmp.ne.s32.totalorder %s235, %s236
      %p247 = scmp.eq.s32.totalorder %s33, 0
      %p248 = por %p246, %p247
      %p249 = scmp.ne.s32.totalorder %s235, %s236
      %p250 = scmp.eq.s32.totalorder %s34, 1
      %p251 = por %p249, %p250
      %p253 = scmp.ne.s32.totalorder %s236, %s252
      %p254 = scmp.eq.s32.totalorder %s34, 0
      %p255 = por %p253, %p254
      %s257 = sadd.s32 %s256, 1
      %p260 = scmp.eq.s32.totalorder %s28, 1
      %p261 = scmp.ne.s32.totalorder %s256, %s258
      %p262 = scmp.eq.s32.totalorder %s28, 0
      %p263 = por %p261, %p262
      %p264 = scmp.ne.s32.totalorder %s256, %s258
      %p265 = scmp.eq.s32.totalorder %s33, 1
      %p266 = por %p264, %p265
      %p267 = scmp.ne.s32.totalorder %s258, %s259
      %p268 = scmp.eq.s32.totalorder %s33, 0
      %p269 = por %p267, %p268
      %p270 = scmp.ne.s32.totalorder %s258, %s259
      %p271 = scmp.eq.s32.totalorder %s34, 1
      %p272 = por %p270, %p271
      %p274 = scmp.ne.s32.totalorder %s259, %s273
      %p275 = scmp.eq.s32.totalorder %s34, 0
      %p276 = por %p274, %p275
      %s278 = sadd.s32 %s277, 1
      %p281 = scmp.eq.s32.totalorder %s28, 1
      %p282 = scmp.ne.s32.totalorder %s277, %s279
      %p283 = scmp.eq.s32.totalorder %s28, 0
      %p284 = por %p282, %p283
      %p285 = scmp.ne.s32.totalorder %s277, %s279
      %p286 = scmp.eq.s32.totalorder %s33, 1
      %p287 = por %p285, %p286
      %p288 = scmp.ne.s32.totalorder %s279, %s280
      %p289 = scmp.eq.s32.totalorder %s33, 0
      %p290 = por %p288, %p289
      %p291 = scmp.ne.s32.totalorder %s279, %s280
      %p292 = scmp.eq.s32.totalorder %s34, 1
      %p293 = por %p291, %p292
      %p295 = scmp.ne.s32.totalorder %s280, %s294
      %p296 = scmp.eq.s32.totalorder %s34, 0
      %p297 = por %p295, %p296
      %p298 = scmp.le.s32.totalorder 1, %s28
      %p299 = scmp.lt.s32.totalorder %s28, 3
      %p300 = pnand %p298, %p299
      %p301 = pneg %p300
      // Predicated region
      $region9: #{tpu_custom_call.1} parent=5 // pred_check
        _
      $region10: #{tpu_custom_call.1} parent=5 // pred_check_branch
        %303 = sbr.rel (%p300) target = $region12
      $region11: #{tpu_custom_call.1} parent=5 // pred_region
        %s304 = ssub.s32 %s28, 1
        // Predicated region
        $region13: #{tpu_custom_call.1} parent=11 // pred_check
          %p305 = pneg %p75
        $region14: #{tpu_custom_call.1} parent=11 // pred_check_branch
          %307 = sbr.rel (%p305) target = $region16
        $region15: #{tpu_custom_call.1} parent=11 // pred_region
          %s309 = ssub.s32 512, 512
          %310 = vsyncadd [#allocation6], %s309
          %s311 = sshll.u32 [#allocation5], 4
          %s312 = int_to_ptr.vmem [resolvable:$true] %s311
          %317 = dma.hbm_to_vmem [thread:$0]  %s1, 512, %s312, [#allocation6], 64, 64, 4
        $region16: #{tpu_custom_call.1} parent=11 // pred_fallthru
          _
        // Predicated region
        $region17: #{tpu_custom_call.1} parent=11 // pred_check
          %p318 = pneg %p96
        $region18: #{tpu_custom_call.1} parent=11 // pred_check_branch
          %320 = sbr.rel (%p318) target = $region20
        $region19: #{tpu_custom_call.1} parent=11 // pred_region
          _
        $region20: #{tpu_custom_call.1} parent=11 // pred_fallthru
          _
        // Predicated region
        $region21: #{tpu_custom_call.1} parent=11 // pred_check
          %p321 = pneg %p117
        $region22: #{tpu_custom_call.1} parent=11 // pred_check_branch
          %323 = sbr.rel (%p321) target = $region24
        $region23: #{tpu_custom_call.1} parent=11 // pred_region
          %s325 = ssub.s32 16384, 16384
          %326 = vsyncadd [#allocation6], %s325
          %s327 = sshll.u32 [#allocation7], 4
          %s328 = int_to_ptr.vmem [resolvable:$true] %s327
          %333 = dma.hbm_to_vmem [thread:$0]  %s3, 16384, %s328, [#allocation6], 256, 256, 16
        $region24: #{tpu_custom_call.1} parent=11 // pred_fallthru
          _
        // Predicated region
        $region25: #{tpu_custom_call.1} parent=11 // pred_check
          %p334 = pneg %p138
        $region26: #{tpu_custom_call.1} parent=11 // pred_check_branch
          %336 = sbr.rel (%p334) target = $region28
        $region27: #{tpu_custom_call.1} parent=11 // pred_region
          _
        $region28: #{tpu_custom_call.1} parent=11 // pred_fallthru
          _
        // Predicated region
        $region29: #{tpu_custom_call.1} parent=11 // pred_check
          %p337 = pneg %p159
        $region30: #{tpu_custom_call.1} parent=11 // pred_check_branch
          %339 = sbr.rel (%p337) target = $region32
        $region31: #{tpu_custom_call.1} parent=11 // pred_region
          %s341 = ssub.s32 256, 256
          %342 = vsyncadd [#allocation9], %s341
          %s343 = sshll.u32 [#allocation8], 4
          %s344 = int_to_ptr.vmem [resolvable:$true] %s343
          %349 = dma.hbm_to_vmem [thread:$0]  %s5, 256, %s344, [#allocation9], 128, 128, 8
        $region32: #{tpu_custom_call.1} parent=11 // pred_fallthru
          _
        // Predicated region
        $region33: #{tpu_custom_call.1} parent=11 // pred_check
          %p350 = pneg %p180
        $region34: #{tpu_custom_call.1} parent=11 // pred_check_branch
          %352 = sbr.rel (%p350) target = $region36
        $region35: #{tpu_custom_call.1} parent=11 // pred_region
          %s354 = ssub.s32 256, 256
          %355 = vsyncadd [#allocation9], %s354
          %s356 = sshll.u32 [#allocation10], 4
          %s357 = int_to_ptr.vmem [resolvable:$true] %s356
          %362 = dma.hbm_to_vmem [thread:$0]  %s6, 256, %s357, [#allocation9], 128, 128, 8
        $region36: #{tpu_custom_call.1} parent=11 // pred_fallthru
          _
        // Predicated region
        $region37: #{tpu_custom_call.1} parent=11 // pred_check
          %p363 = pneg %p201
        $region38: #{tpu_custom_call.1} parent=11 // pred_check_branch
          %365 = sbr.rel (%p363) target = $region40
        $region39: #{tpu_custom_call.1} parent=11 // pred_region
          %s367 = ssub.s32 1024, 1024
          %368 = vsyncadd [#allocation12], %s367
          %s369 = sshll.u32 [#allocation11], 4
          %s370 = int_to_ptr.vmem [resolvable:$true] %s369
          %375 = dma.hbm_to_vmem [thread:$0]  %s7, 1024, %s370, [#allocation12], 64, 64, 4
        $region40: #{tpu_custom_call.1} parent=11 // pred_fallthru
          _
        // Predicated region
        $region41: #{tpu_custom_call.1} parent=11 // pred_check
          %p376 = pneg %p222
        $region42: #{tpu_custom_call.1} parent=11 // pred_check_branch
          %378 = sbr.rel (%p376) target = $region44
        $region43: #{tpu_custom_call.1} parent=11 // pred_region
          %s380 = ssub.s32 128, 128
          %381 = vsyncadd [#allocation12], %s380
          %s383 = sshll.u32 [#allocation13], 4
          %s384 = int_to_ptr.vmem [resolvable:$true] %s383
          %386 = dma.hbm_to_vmem [thread:$0]  %s8, 128, %s384, [#allocation12]
        $region44: #{tpu_custom_call.1} parent=11 // pred_fallthru
          _
      $region12: #{tpu_custom_call.1} parent=5 // pred_fallthru
        _
      %p387 = scmp.lt.s32.totalorder %s28, 2
      // Predicated region
      $region45: #{tpu_custom_call.1} parent=5 // pred_check
        %p388 = pneg %p387
      $region46: #{tpu_custom_call.1} parent=5 // pred_check_branch
        %390 = sbr.rel (%p388) target = $region48
      $region47: #{tpu_custom_call.1} parent=5 // pred_region
        // Predicated region
        $region49: #{tpu_custom_call.1} parent=47 // pred_check
          %p391 = pneg %p48
        $region50: #{tpu_custom_call.1} parent=47 // pred_check_branch
          %393 = sbr.rel (%p391) target = $region52
        $region51: #{tpu_custom_call.1} parent=47 // pred_region
          %s394 = sand.u32 %s38, 1
          %s395 = scalar_lea.sflag [#allocation3], %s394
          %s396 = sand.u32 %s38, 1
          %s397 = smul.addr %s396, 64
          %s398 = scalar_lea.vmem [#allocation2], %s397
          %s399 = smul.u32 8, %s28
          %s401 = ssub.s32 1024, 1024
          %402 = vsyncadd %s395, %s401
          %s403 = smul.addr %s399, 128
          %s404 = scalar_lea.hbm %s0, %s403
          %s405 = sshll.u32 %s398, 4
          %s406 = int_to_ptr.vmem [resolvable:$true] %s405
          %411 = dma.hbm_to_vmem [thread:$0]  %s404, 1024, %s406, %s395, 128, 128, 8
        $region52: #{tpu_custom_call.1} parent=47 // pred_fallthru
          _
      $region48: #{tpu_custom_call.1} parent=5 // pred_fallthru
        _
      %p412 = scmp.le.s32.totalorder 1, %s28
      %p413 = scmp.lt.s32.totalorder %s28, 3
      %p414 = pnand %p412, %p413
      %p415 = pneg %p414
      // Predicated region
      $region53: #{tpu_custom_call.1} parent=5 // pred_check
        _
      $region54: #{tpu_custom_call.1} parent=5 // pred_check_branch
        %417 = sbr.rel (%p414) target = $region56
      $region55: #{tpu_custom_call.1} parent=5 // pred_region
        %s418 = ssub.s32 %s28, 1
        %s419 = sand.u32 %s41, 1
        %s420 = scalar_lea.sflag [#allocation3], %s419
        %s421 = sand.u32 %s41, 1
        %s422 = smul.addr %s421, 64
        %s423 = scalar_lea.vmem [#allocation2], %s422
        // Predicated region
        $region57: #{tpu_custom_call.1} parent=55 // pred_check
          %p424 = pneg %p54
        $region58: #{tpu_custom_call.1} parent=55 // pred_check_branch
          %426 = sbr.rel (%p424) target = $region60
        $region59: #{tpu_custom_call.1} parent=55 // pred_region
          %427 = dma.done %s420, 1024
        $region60: #{tpu_custom_call.1} parent=55 // pred_fallthru
          _
        // Predicated region
        $region61: #{tpu_custom_call.1} parent=55 // pred_check
          %p428 = pneg %p75
        $region62: #{tpu_custom_call.1} parent=55 // pred_check_branch
          %430 = sbr.rel (%p428) target = $region64
        $region63: #{tpu_custom_call.1} parent=55 // pred_region
          %431 = dma.done [#allocation6], 512
        $region64: #{tpu_custom_call.1} parent=55 // pred_fallthru
          _
        // Predicated region
        $region65: #{tpu_custom_call.1} parent=55 // pred_check
          %p432 = pneg %p117
        $region66: #{tpu_custom_call.1} parent=55 // pred_check_branch
          %434 = sbr.rel (%p432) target = $region68
        $region67: #{tpu_custom_call.1} parent=55 // pred_region
          %435 = dma.done [#allocation6], 16384
        $region68: #{tpu_custom_call.1} parent=55 // pred_fallthru
          _
        // Predicated region
        $region69: #{tpu_custom_call.1} parent=55 // pred_check
          %p436 = pneg %p159
        $region70: #{tpu_custom_call.1} parent=55 // pred_check_branch
          %438 = sbr.rel (%p436) target = $region72
        $region71: #{tpu_custom_call.1} parent=55 // pred_region
          %439 = dma.done [#allocation9], 256
        $region72: #{tpu_custom_call.1} parent=55 // pred_fallthru
          _
        // Predicated region
        $region73: #{tpu_custom_call.1} parent=55 // pred_check
          %p440 = pneg %p180
        $region74: #{tpu_custom_call.1} parent=55 // pred_check_branch
          %442 = sbr.rel (%p440) target = $region76
        $region75: #{tpu_custom_call.1} parent=55 // pred_region
          %443 = dma.done [#allocation9], 256
        $region76: #{tpu_custom_call.1} parent=55 // pred_fallthru
          _
        // Predicated region
        $region77: #{tpu_custom_call.1} parent=55 // pred_check
          %p444 = pneg %p201
        $region78: #{tpu_custom_call.1} parent=55 // pred_check_branch
          %446 = sbr.rel (%p444) target = $region80
        $region79: #{tpu_custom_call.1} parent=55 // pred_region
          %447 = dma.done [#allocation12], 1024
        $region80: #{tpu_custom_call.1} parent=55 // pred_fallthru
          _
        // Predicated region
        $region81: #{tpu_custom_call.1} parent=55 // pred_check
          %p448 = pneg %p222
        $region82: #{tpu_custom_call.1} parent=55 // pred_check_branch
          %450 = sbr.rel (%p448) target = $region84
        $region83: #{tpu_custom_call.1} parent=55 // pred_region
          %451 = dma.done [#allocation12], 128
        $region84: #{tpu_custom_call.1} parent=55 // pred_fallthru
          _
        %s452 = sand.u32 %s41, 1
        %s453 = scalar_lea.sflag [#allocation3], %s452
        %s454 = sand.u32 %s41, 1
        %s455 = smul.addr %s454, 64
        %s456 = scalar_lea.vmem [#allocation2], %s455
        %p457 = pneg %p54
        %p458 = pneg %p51
        %p459 = pneg %p75
        %p460 = pneg %p72
        %p461 = pneg %p96
        %p462 = pneg %p93
        %p463 = pneg %p117
        %p464 = pneg %p114
        %p465 = pneg %p138
        %p466 = pneg %p135
        %p467 = pneg %p159
        %p468 = pneg %p156
        %p469 = pneg %p180
        %p470 = pneg %p177
        %p471 = pneg %p201
        %p472 = pneg %p198
        %p473 = pneg %p222
        %p474 = pneg %p219
        %p475 = pneg %p248
        %p476 = pneg %p245
        %s477 = sand.u32 %s235, 1
        %s478 = scalar_lea.sflag [#allocation4], %s477
        %s479 = sand.u32 %s235, 1
        %s480 = smul.addr %s479, 64
        %s481 = scalar_lea.vmem [#allocation14], %s480
        %p482 = pneg %p269
        %p483 = pneg %p266
        %p484 = pneg %p290
        %p485 = pneg %p287
        %s486 = smul.u32 8, %s33
        %s487 = smul.u32 8, %s33
        %p489 = scmp.eq.s32.totalorder %s33, 0
        // Predicated region
        $region85: #{tpu_custom_call.1} parent=55 // pred_check
          %p490 = pneg %p489
        $region86: #{tpu_custom_call.1} parent=55 // pred_check_branch
          %492 = sbr.rel (%p490) target = $region88
        $region87: #{tpu_custom_call.1} parent=55 // pred_region
          %v493 = vld [vmem:[#allocation8] sm:$0xff]
          %v494 = vld [vmem:[#allocation8 + $0x8] sm:$0xff]
          %495 = vst [vmem:[#allocation15] sm:$0xff] %v493
          %496 = vst [vmem:[#allocation15 + $0x8] sm:$0xff] %v494
          %v497 = vld [vmem:[#allocation10] sm:$0xff]
          %v498 = vld [vmem:[#allocation10 + $0x8] sm:$0xff]
          %499 = vst [vmem:[#allocation17] sm:$0xff] %v497
          %500 = vst [vmem:[#allocation17 + $0x8] sm:$0xff] %v498
        $region88: #{tpu_custom_call.1} parent=55 // pred_fallthru
          _
        %v501 = vld [vmem:[#allocation5] sm:$0xf]
        %v502 = vld [vmem:[#allocation5 + $0x4] sm:$0xf]
        %v503 = vld [vmem:[#allocation5 + $0x8] sm:$0xf]
        %v504 = vld [vmem:[#allocation5 + $0xc] sm:$0xf]
        %v505 = vld [vmem:[#allocation5 + $0x10] sm:$0xf]
        %v506 = vld [vmem:[#allocation5 + $0x14] sm:$0xf]
        %v507 = vld [vmem:[#allocation5 + $0x18] sm:$0xf]
        %v508 = vld [vmem:[#allocation5 + $0x1c] sm:$0xf]
        %v509 = vld [vmem:[%s2] sm:$0xff]
        %v510 = vld [vmem:[#allocation11] sm:$0xf]
        %v511 = vld [vmem:[#allocation11 + $0x4] sm:$0xf]
        %v512 = vld [vmem:[#allocation11 + $0x8] sm:$0xf]
        %v513 = vld [vmem:[#allocation11 + $0xc] sm:$0xf]
        %v514 = vld [vmem:[#allocation11 + $0x10] sm:$0xf]
        %v515 = vld [vmem:[#allocation11 + $0x14] sm:$0xf]
        %v516 = vld [vmem:[#allocation11 + $0x18] sm:$0xf]
        %v517 = vld [vmem:[#allocation11 + $0x1c] sm:$0xf]
        %v518 = vld [vmem:[#allocation11 + $0x20] sm:$0xf]
        %v519 = vld [vmem:[#allocation11 + $0x24] sm:$0xf]
        %v520 = vld [vmem:[#allocation11 + $0x28] sm:$0xf]
        %v521 = vld [vmem:[#allocation11 + $0x2c] sm:$0xf]
        %v522 = vld [vmem:[#allocation11 + $0x30] sm:$0xf]
        %v523 = vld [vmem:[#allocation11 + $0x34] sm:$0xf]
        %v524 = vld [vmem:[#allocation11 + $0x38] sm:$0xf]
        %v525 = vld [vmem:[#allocation11 + $0x3c] sm:$0xf]
        %v526 = vld [vmem:[#allocation13] sm:$0xff]
        %v527 = vld [vmem:[%s423] sm:$0xff]
        %v528 = vpack.c.bf16 %v527, %v527
        %v537 = vunpack.c.l.b16 %v501
        %v538 = vunpack.c.l.b16 %v502
        %v539 = vunpack.c.l.b16 %v503
        %v540 = vunpack.c.l.b16 %v504
        %v541 = vunpack.c.l.b16 %v505
        %v542 = vunpack.c.l.b16 %v506
        %v543 = vunpack.c.l.b16 %v507
        %v544 = vunpack.c.l.b16 %v508
        %v545 = vpack.c.b16 %v538, %v537
        %v546 = vpack.c.b16 %v540, %v539
        %v547 = vpack.c.b16 %v542, %v541
        %v548 = vpack.c.b16 %v544, %v543
        %vm553 = vcmask 523264
        %v555 = vsel %vm553, %v528, 0
        %557 = vmatprep.subr.bf16.mxu0 0
        %558 = vmatpush1.bf16.msra.mxu0 0
        %559 = vmatprep.subr.bf16.mxu0 0
        %560 = vmatpush1.bf16.msra.mxu0 0
        %561 = vmatprep.subr.bf16.mxu0 0
        %562 = vmatpush1.bf16.msra.mxu0 0
        %563 = vmatprep.subr.bf16.mxu0 0
        %564 = vmatpush1.bf16.msra.mxu0 0
        %565 = vmatprep.subr.bf16.mxu0 0
        %566 = vmatpush1.bf16.msra.mxu0 %v548
        %567 = vmatprep.subr.bf16.mxu0 0
        %568 = vmatpush1.bf16.msra.mxu0 %v547
        %569 = vmatprep.subr.bf16.mxu0 0
        %570 = vmatpush1.bf16.msra.mxu0 %v546
        %571 = vmatprep.subr.bf16.mxu0 0
        %572 = vmatpush1.bf16.msra.mxu0 %v545
        %573 = vmatprep.subr.bf16.mxu0 0
        %574 = vmatpush2.bf16.msra.mxu0 0
        %575 = vmatprep.subr.bf16.mxu0 0
        %576 = vmatpush2.bf16.msra.mxu0 0
        %577 = vmatprep.subr.bf16.mxu0 0
        %578 = vmatpush2.bf16.msra.mxu0 0
        %579 = vmatprep.subr.bf16.mxu0 0
        %580 = vmatpush2.bf16.msra.mxu0 0
        %581 = vmatprep.subr.bf16.mxu0 0
        %582 = vmatpush2.bf16.msra.mxu0 0
        %583 = vmatprep.subr.bf16.mxu0 0
        %584 = vmatpush2.bf16.msra.mxu0 0
        %585 = vmatprep.subr.bf16.mxu0 0
        %586 = vmatpush2.bf16.msra.mxu0 0
        %587 = vmatprep.subr.bf16.mxu0 0
        %588 = vmatpush2.bf16.msra.mxu0 0
        %589 = vmatprep.mubr.bf16.mxu0 0
        %590 = vmatmul.mubr.bf16.gmra.mxu0 %v555
        %v591 = vpop.f32.mrf.mxu0
        %v592 = vadd.f32 %v509, %v591
        %v593 = vpop.f32.mrf.mxu0
        %v594 = vpop.f32.mrf.mxu0
        %v595 = vpop.f32.mrf.mxu0
        %596 = vdwg.mxu0
        %v597 = vld [vmem:[#allocation15] sm:$0xff]
        %v598 = vpack.c.bf16 %v592, %v592
        %v599 = vpack.c.bf16 %v597, %v597
        %v600 = vld [vmem:[#allocation7] sm:$0xff]
        %v601 = vld [vmem:[#allocation7 + $0x8] sm:$0xff]
        %v602 = vld [vmem:[#allocation7 + $0x10] sm:$0xff]
        %v603 = vld [vmem:[#allocation7 + $0x18] sm:$0xff]
        %v604 = vld [vmem:[#allocation7 + $0x20] sm:$0xff]
        %v605 = vld [vmem:[#allocation7 + $0x28] sm:$0xff]
        %v606 = vld [vmem:[#allocation7 + $0x30] sm:$0xff]
        %v607 = vld [vmem:[#allocation7 + $0x38] sm:$0xff]
        %v608 = vld [vmem:[#allocation7 + $0x40] sm:$0xff]
        %v609 = vld [vmem:[#allocation7 + $0x48] sm:$0xff]
        %v610 = vld [vmem:[#allocation7 + $0x50] sm:$0xff]
        %v611 = vld [vmem:[#allocation7 + $0x58] sm:$0xff]
        %v612 = vld [vmem:[#allocation7 + $0x60] sm:$0xff]
        %v613 = vld [vmem:[#allocation7 + $0x68] sm:$0xff]
        %v614 = vld [vmem:[#allocation7 + $0x70] sm:$0xff]
        %v615 = vld [vmem:[#allocation7 + $0x78] sm:$0xff]
        %v616 = vld [vmem:[#allocation7 + $0x80] sm:$0xff]
        %v617 = vld [vmem:[#allocation7 + $0x88] sm:$0xff]
        %v618 = vld [vmem:[#allocation7 + $0x90] sm:$0xff]
        %v619 = vld [vmem:[#allocation7 + $0x98] sm:$0xff]
        %v620 = vld [vmem:[#allocation7 + $0xa0] sm:$0xff]
        %v621 = vld [vmem:[#allocation7 + $0xa8] sm:$0xff]
        %v622 = vld [vmem:[#allocation7 + $0xb0] sm:$0xff]
        %v623 = vld [vmem:[#allocation7 + $0xb8] sm:$0xff]
        %v624 = vld [vmem:[#allocation7 + $0xc0] sm:$0xff]
        %v625 = vld [vmem:[#allocation7 + $0xc8] sm:$0xff]
        %v626 = vld [vmem:[#allocation7 + $0xd0] sm:$0xff]
        %v627 = vld [vmem:[#allocation7 + $0xd8] sm:$0xff]
        %v628 = vld [vmem:[#allocation7 + $0xe0] sm:$0xff]
        %v629 = vld [vmem:[#allocation7 + $0xe8] sm:$0xff]
        %v630 = vld [vmem:[#allocation7 + $0xf0] sm:$0xff]
        %v631 = vld [vmem:[#allocation7 + $0xf8] sm:$0xff]
        %v632 = vld [vmem:[#allocation7 + $0x100] sm:$0xff]
        %v633 = vld [vmem:[#allocation7 + $0x108] sm:$0xff]
        %v634 = vld [vmem:[#allocation7 + $0x110] sm:$0xff]
        %v635 = vld [vmem:[#allocation7 + $0x118] sm:$0xff]
        %v636 = vld [vmem:[#allocation7 + $0x120] sm:$0xff]
        %v637 = vld [vmem:[#allocation7 + $0x128] sm:$0xff]
        %v638 = vld [vmem:[#allocation7 + $0x130] sm:$0xff]
        %v639 = vld [vmem:[#allocation7 + $0x138] sm:$0xff]
        %v640 = vld [vmem:[#allocation7 + $0x140] sm:$0xff]
        %v641 = vld [vmem:[#allocation7 + $0x148] sm:$0xff]
        %v642 = vld [vmem:[#allocation7 + $0x150] sm:$0xff]
        %v643 = vld [vmem:[#allocation7 + $0x158] sm:$0xff]
        %v644 = vld [vmem:[#allocation7 + $0x160] sm:$0xff]
        %v645 = vld [vmem:[#allocation7 + $0x168] sm:$0xff]
        %v646 = vld [vmem:[#allocation7 + $0x170] sm:$0xff]
        %v647 = vld [vmem:[#allocation7 + $0x178] sm:$0xff]
        %v648 = vld [vmem:[#allocation7 + $0x180] sm:$0xff]
        %v649 = vld [vmem:[#allocation7 + $0x188] sm:$0xff]
        %v650 = vld [vmem:[#allocation7 + $0x190] sm:$0xff]
        %v651 = vld [vmem:[#allocation7 + $0x198] sm:$0xff]
        %v652 = vld [vmem:[#allocation7 + $0x1a0] sm:$0xff]
        %v653 = vld [vmem:[#allocation7 + $0x1a8] sm:$0xff]
        %v654 = vld [vmem:[#allocation7 + $0x1b0] sm:$0xff]
        %v655 = vld [vmem:[#allocation7 + $0x1b8] sm:$0xff]
        %v656 = vld [vmem:[#allocation7 + $0x1c0] sm:$0xff]
        %v657 = vld [vmem:[#allocation7 + $0x1c8] sm:$0xff]
        %v658 = vld [vmem:[#allocation7 + $0x1d0] sm:$0xff]
        %v659 = vld [vmem:[#allocation7 + $0x1d8] sm:$0xff]
        %v660 = vld [vmem:[#allocation7 + $0x1e0] sm:$0xff]
        %v661 = vld [vmem:[#allocation7 + $0x1e8] sm:$0xff]
        %v662 = vld [vmem:[#allocation7 + $0x1f0] sm:$0xff]
        %v663 = vld [vmem:[#allocation7 + $0x1f8] sm:$0xff]
        %v664 = vld [vmem:[%s4] sm:$0xff]
        %v665 = vld [vmem:[%s4 + $0x8] sm:$0xff]
        %v666 = vld [vmem:[%s4 + $0x10] sm:$0xff]
        %v667 = vld [vmem:[%s4 + $0x18] sm:$0xff]
        %v732 = vunpack.c.l.b16 %v600
        %v733 = vunpack.c.h.b16 %v600
        %v734 = vunpack.c.l.b16 %v601
        %v735 = vunpack.c.h.b16 %v601
        %v736 = vunpack.c.l.b16 %v602
        %v737 = vunpack.c.h.b16 %v602
        %v738 = vunpack.c.l.b16 %v603
        %v739 = vunpack.c.h.b16 %v603
        %v740 = vunpack.c.l.b16 %v604
        %v741 = vunpack.c.h.b16 %v604
        %v742 = vunpack.c.l.b16 %v605
        %v743 = vunpack.c.h.b16 %v605
        %v744 = vunpack.c.l.b16 %v606
        %v745 = vunpack.c.h.b16 %v606
        %v746 = vunpack.c.l.b16 %v607
        %v747 = vunpack.c.h.b16 %v607
        %v748 = vunpack.c.l.b16 %v608
        %v749 = vunpack.c.h.b16 %v608
        %v750 = vunpack.c.l.b16 %v609
        %v751 = vunpack.c.h.b16 %v609
        %v752 = vunpack.c.l.b16 %v610
        %v753 = vunpack.c.h.b16 %v610
        %v754 = vunpack.c.l.b16 %v611
        %v755 = vunpack.c.h.b16 %v611
        %v756 = vunpack.c.l.b16 %v612
        %v757 = vunpack.c.h.b16 %v612
        %v758 = vunpack.c.l.b16 %v613
        %v759 = vunpack.c.h.b16 %v613
        %v760 = vunpack.c.l.b16 %v614
        %v761 = vunpack.c.h.b16 %v614
        %v762 = vunpack.c.l.b16 %v615
        %v763 = vunpack.c.h.b16 %v615
        %v764 = vunpack.c.l.b16 %v616
        %v765 = vunpack.c.h.b16 %v616
        %v766 = vunpack.c.l.b16 %v617
        %v767 = vunpack.c.h.b16 %v617
        %v768 = vunpack.c.l.b16 %v618
        %v769 = vunpack.c.h.b16 %v618
        %v770 = vunpack.c.l.b16 %v619
        %v771 = vunpack.c.h.b16 %v619
        %v772 = vunpack.c.l.b16 %v620
        %v773 = vunpack.c.h.b16 %v620
        %v774 = vunpack.c.l.b16 %v621
        %v775 = vunpack.c.h.b16 %v621
        %v776 = vunpack.c.l.b16 %v622
        %v777 = vunpack.c.h.b16 %v622
        %v778 = vunpack.c.l.b16 %v623
        %v779 = vunpack.c.h.b16 %v623
        %v780 = vunpack.c.l.b16 %v624
        %v781 = vunpack.c.h.b16 %v624
        %v782 = vunpack.c.l.b16 %v625
        %v783 = vunpack.c.h.b16 %v625
        %v784 = vunpack.c.l.b16 %v626
        %v785 = vunpack.c.h.b16 %v626
        %v786 = vunpack.c.l.b16 %v627
        %v787 = vunpack.c.h.b16 %v627
        %v788 = vunpack.c.l.b16 %v628
        %v789 = vunpack.c.h.b16 %v628
        %v790 = vunpack.c.l.b16 %v629
        %v791 = vunpack.c.h.b16 %v629
        %v792 = vunpack.c.l.b16 %v630
        %v793 = vunpack.c.h.b16 %v630
        %v794 = vunpack.c.l.b16 %v631
        %v795 = vunpack.c.h.b16 %v631
        %v796 = vunpack.c.l.b16 %v632
        %v797 = vunpack.c.h.b16 %v632
        %v798 = vunpack.c.l.b16 %v633
        %v799 = vunpack.c.h.b16 %v633
        %v800 = vunpack.c.l.b16 %v634
        %v801 = vunpack.c.h.b16 %v634
        %v802 = vunpack.c.l.b16 %v635
        %v803 = vunpack.c.h.b16 %v635
        %v804 = vunpack.c.l.b16 %v636
        %v805 = vunpack.c.h.b16 %v636
        %v806 = vunpack.c.l.b16 %v637
        %v807 = vunpack.c.h.b16 %v637
        %v808 = vunpack.c.l.b16 %v638
        %v809 = vunpack.c.h.b16 %v638
        %v810 = vunpack.c.l.b16 %v639
        %v811 = vunpack.c.h.b16 %v639
        %v812 = vunpack.c.l.b16 %v640
        %v813 = vunpack.c.h.b16 %v640
        %v814 = vunpack.c.l.b16 %v641
        %v815 = vunpack.c.h.b16 %v641
        %v816 = vunpack.c.l.b16 %v642
        %v817 = vunpack.c.h.b16 %v642
        %v818 = vunpack.c.l.b16 %v643
        %v819 = vunpack.c.h.b16 %v643
        %v820 = vunpack.c.l.b16 %v644
        %v821 = vunpack.c.h.b16 %v644
        %v822 = vunpack.c.l.b16 %v645
        %v823 = vunpack.c.h.b16 %v645
        %v824 = vunpack.c.l.b16 %v646
        %v825 = vunpack.c.h.b16 %v646
        %v826 = vunpack.c.l.b16 %v647
        %v827 = vunpack.c.h.b16 %v647
        %v828 = vunpack.c.l.b16 %v648
        %v829 = vunpack.c.h.b16 %v648
        %v830 = vunpack.c.l.b16 %v649
        %v831 = vunpack.c.h.b16 %v649
        %v832 = vunpack.c.l.b16 %v650
        %v833 = vunpack.c.h.b16 %v650
        %v834 = vunpack.c.l.b16 %v651
        %v835 = vunpack.c.h.b16 %v651
        %v836 = vunpack.c.l.b16 %v652
        %v837 = vunpack.c.h.b16 %v652
        %v838 = vunpack.c.l.b16 %v653
        %v839 = vunpack.c.h.b16 %v653
        %v840 = vunpack.c.l.b16 %v654
        %v841 = vunpack.c.h.b16 %v654
        %v842 = vunpack.c.l.b16 %v655
        %v843 = vunpack.c.h.b16 %v655
        %v844 = vunpack.c.l.b16 %v656
        %v845 = vunpack.c.h.b16 %v656
        %v846 = vunpack.c.l.b16 %v657
        %v847 = vunpack.c.h.b16 %v657
        %v848 = vunpack.c.l.b16 %v658
        %v849 = vunpack.c.h.b16 %v658
        %v850 = vunpack.c.l.b16 %v659
        %v851 = vunpack.c.h.b16 %v659
        %v852 = vunpack.c.l.b16 %v660
        %v853 = vunpack.c.h.b16 %v660
        %v854 = vunpack.c.l.b16 %v661
        %v855 = vunpack.c.h.b16 %v661
        %v856 = vunpack.c.l.b16 %v662
        %v857 = vunpack.c.h.b16 %v662
        %v858 = vunpack.c.l.b16 %v663
        %v859 = vunpack.c.h.b16 %v663
        %v860 = vpack.c.b16 %v736, %v732
        %v861 = vpack.c.b16 %v737, %v733
        %v862 = vpack.c.b16 %v738, %v734
        %v863 = vpack.c.b16 %v739, %v735
        %v864 = vpack.c.b16 %v744, %v740
        %v865 = vpack.c.b16 %v745, %v741
        %v866 = vpack.c.b16 %v746, %v742
        %v867 = vpack.c.b16 %v747, %v743
        %v868 = vpack.c.b16 %v752, %v748
        %v869 = vpack.c.b16 %v753, %v749
        %v870 = vpack.c.b16 %v754, %v750
        %v871 = vpack.c.b16 %v755, %v751
        %v872 = vpack.c.b16 %v760, %v756
        %v873 = vpack.c.b16 %v761, %v757
        %v874 = vpack.c.b16 %v762, %v758
        %v875 = vpack.c.b16 %v763, %v759
        %v876 = vpack.c.b16 %v768, %v764
        %v877 = vpack.c.b16 %v769, %v765
        %v878 = vpack.c.b16 %v770, %v766
        %v879 = vpack.c.b16 %v771, %v767
        %v880 = vpack.c.b16 %v776, %v772
        %v881 = vpack.c.b16 %v777, %v773
        %v882 = vpack.c.b16 %v778, %v774
        %v883 = vpack.c.b16 %v779, %v775
        %v884 = vpack.c.b16 %v784, %v780
        %v885 = vpack.c.b16 %v785, %v781
        %v886 = vpack.c.b16 %v786, %v782
        %v887 = vpack.c.b16 %v787, %v783
        %v888 = vpack.c.b16 %v792, %v788
        %v889 = vpack.c.b16 %v793, %v789
        %v890 = vpack.c.b16 %v794, %v790
        %v891 = vpack.c.b16 %v795, %v791
        %v892 = vpack.c.b16 %v800, %v796
        %v893 = vpack.c.b16 %v801, %v797
        %v894 = vpack.c.b16 %v802, %v798
        %v895 = vpack.c.b16 %v803, %v799
        %v896 = vpack.c.b16 %v808, %v804
        %v897 = vpack.c.b16 %v809, %v805
        %v898 = vpack.c.b16 %v810, %v806
        %v899 = vpack.c.b16 %v811, %v807
        %v900 = vpack.c.b16 %v816, %v812
        %v901 = vpack.c.b16 %v817, %v813
        %v902 = vpack.c.b16 %v818, %v814
        %v903 = vpack.c.b16 %v819, %v815
        %v904 = vpack.c.b16 %v824, %v820
        %v905 = vpack.c.b16 %v825, %v821
        %v906 = vpack.c.b16 %v826, %v822
        %v907 = vpack.c.b16 %v827, %v823
        %v908 = vpack.c.b16 %v832, %v828
        %v909 = vpack.c.b16 %v833, %v829
        %v910 = vpack.c.b16 %v834, %v830
        %v911 = vpack.c.b16 %v835, %v831
        %v912 = vpack.c.b16 %v840, %v836
        %v913 = vpack.c.b16 %v841, %v837
        %v914 = vpack.c.b16 %v842, %v838
        %v915 = vpack.c.b16 %v843, %v839
        %v916 = vpack.c.b16 %v848, %v844
        %v917 = vpack.c.b16 %v849, %v845
        %v918 = vpack.c.b16 %v850, %v846
        %v919 = vpack.c.b16 %v851, %v847
        %v920 = vpack.c.b16 %v856, %v852
        %v921 = vpack.c.b16 %v857, %v853
        %v922 = vpack.c.b16 %v858, %v854
        %v923 = vpack.c.b16 %v859, %v855
        %988 = vmatprep.subr.bf16.mxu0 %v889
        %989 = vmatpush1.bf16.msra.mxu0 %v888
        %990 = vmatprep.subr.bf16.mxu0 %v885
        %991 = vmatpush1.bf16.msra.mxu0 %v884
        %992 = vmatprep.subr.bf16.mxu0 %v881
        %993 = vmatpush1.bf16.msra.mxu0 %v880
        %994 = vmatprep.subr.bf16.mxu0 %v877
        %995 = vmatpush1.bf16.msra.mxu0 %v876
        %996 = vmatprep.subr.bf16.mxu0 %v873
        %997 = vmatpush1.bf16.msra.mxu0 %v872
        %998 = vmatprep.subr.bf16.mxu0 %v869
        %999 = vmatpush1.bf16.msra.mxu0 %v868
        %1000 = vmatprep.subr.bf16.mxu0 %v865
        %1001 = vmatpush1.bf16.msra.mxu0 %v864
        %1002 = vmatprep.subr.bf16.mxu0 %v861
        %1003 = vmatpush1.bf16.msra.mxu0 %v860
        %1004 = vmatprep.subr.bf16.mxu0 %v921
        %1005 = vmatpush2.bf16.msra.mxu0 %v920
        %1006 = vmatprep.subr.bf16.mxu0 %v917
        %1007 = vmatpush2.bf16.msra.mxu0 %v916
        %1008 = vmatprep.subr.bf16.mxu0 %v913
        %1009 = vmatpush2.bf16.msra.mxu0 %v912
        %1010 = vmatprep.subr.bf16.mxu0 %v909
        %1011 = vmatpush2.bf16.msra.mxu0 %v908
        %1012 = vmatprep.subr.bf16.mxu0 %v905
        %1013 = vmatpush2.bf16.msra.mxu0 %v904
        %1014 = vmatprep.subr.bf16.mxu0 %v901
        %1015 = vmatpush2.bf16.msra.mxu0 %v900
        %1016 = vmatprep.subr.bf16.mxu0 %v897
        %1017 = vmatpush2.bf16.msra.mxu0 %v896
        %1018 = vmatprep.subr.bf16.mxu0 %v893
        %1019 = vmatpush2.bf16.msra.mxu0 %v892
        %1020 = vmatprep.mubr.bf16.mxu0 %v599
        %1021 = vmatmul.mubr.bf16.gmra.mxu0 %v598
        %v1022 = vpop.f32.mrf.mxu0
        %v1023 = vadd.f32 %v664, %v1022
        %v1024 = vpop.f32.mrf.mxu0
        %v1025 = vadd.f32 %v665, %v1024
        %v1026 = vpop.f32.mrf.mxu0
        %v1027 = vpop.f32.mrf.mxu0
        %1028 = vdwg.mxu0
        %1029 = vmatprep.subr.bf16.mxu0 %v891
        %1030 = vmatpush1.bf16.msra.mxu0 %v890
        %1031 = vmatprep.subr.bf16.mxu0 %v887
        %1032 = vmatpush1.bf16.msra.mxu0 %v886
        %1033 = vmatprep.subr.bf16.mxu0 %v883
        %1034 = vmatpush1.bf16.msra.mxu0 %v882
        %1035 = vmatprep.subr.bf16.mxu0 %v879
        %1036 = vmatpush1.bf16.msra.mxu0 %v878
        %1037 = vmatprep.subr.bf16.mxu0 %v875
        %1038 = vmatpush1.bf16.msra.mxu0 %v874
        %1039 = vmatprep.subr.bf16.mxu0 %v871
        %1040 = vmatpush1.bf16.msra.mxu0 %v870
        %1041 = vmatprep.subr.bf16.mxu0 %v867
        %1042 = vmatpush1.bf16.msra.mxu0 %v866
        %1043 = vmatprep.subr.bf16.mxu0 %v863
        %1044 = vmatpush1.bf16.msra.mxu0 %v862
        %1045 = vmatprep.subr.bf16.mxu0 %v923
        %1046 = vmatpush2.bf16.msra.mxu0 %v922
        %1047 = vmatprep.subr.bf16.mxu0 %v919
        %1048 = vmatpush2.bf16.msra.mxu0 %v918
        %1049 = vmatprep.subr.bf16.mxu0 %v915
        %1050 = vmatpush2.bf16.msra.mxu0 %v914
        %1051 = vmatprep.subr.bf16.mxu0 %v911
        %1052 = vmatpush2.bf16.msra.mxu0 %v910
        %1053 = vmatprep.subr.bf16.mxu0 %v907
        %1054 = vmatpush2.bf16.msra.mxu0 %v906
        %1055 = vmatprep.subr.bf16.mxu0 %v903
        %1056 = vmatpush2.bf16.msra.mxu0 %v902
        %1057 = vmatprep.subr.bf16.mxu0 %v899
        %1058 = vmatpush2.bf16.msra.mxu0 %v898
        %1059 = vmatprep.subr.bf16.mxu0 %v895
        %1060 = vmatpush2.bf16.msra.mxu0 %v894
        %1061 = vmatprep.mubr.bf16.mxu0 %v599
        %1062 = vmatmul.mubr.bf16.gmra.mxu0 %v598
        %v1063 = vpop.f32.mrf.mxu0
        %v1064 = vadd.f32 %v666, %v1063
        %v1065 = vpop.f32.mrf.mxu0
        %v1066 = vadd.f32 %v667, %v1065
        %v1067 = vpop.f32.mrf.mxu0
        %v1068 = vpop.f32.mrf.mxu0
        %1069 = vdwg.mxu0
        %v1070 = vxor.u32 %v1023, 2147483648
        %v1071 = vxor.u32 %v1025, 2147483648
        %v1072 = vxor.u32 %v1064, 2147483648
        %v1073 = vmul.f32 %v1070, 1.442695
        %v1074 = vpow.pop %v1073
        %v1075 = vmul.f32 %v1071, 1.442695
        %v1076 = vpow.pop %v1075
        %v1077 = vmul.f32 %v1072, 1.442695
        %v1078 = vpow.pop %v1077
        %v1079 = vadd.f32 %v1074, 1.0
        %v1080 = vadd.f32 %v1076, 1.0
        %v1081 = vadd.f32 %v1078, 1.0
        %v1082 = vrcp.pop %v1079
        %v1083 = vmul.f32 1.0, %v1082
        %v1084 = vrcp.pop %v1080
        %v1085 = vmul.f32 1.0, %v1084
        %v1086 = vrcp.pop %v1081
        %v1087 = vmul.f32 1.0, %v1086
        %v1088 = vtanh.pop %v1066
        %v1089 = vld [vmem:[#allocation17] sm:$0xff]
        %v1090 = vmul.f32 %v1085, %v1089
        %v1091 = vmul.f32 %v1083, %v1088
        %v1092 = vadd.f32 %v1090, %v1091
        %v1093 = vtanh.pop %v1092
        %v1094 = vmul.f32 %v1087, %v1093
        %1095 = vst [vmem:[#allocation15] sm:$0xff] %v1094
        %1096 = vst [vmem:[#allocation17] sm:$0xff] %v1092
        %s1097 = scalar_lea.vmem [#allocation15], 8
        %v1098 = vld [vmem:[%s1097] sm:$0xff]
        %v1099 = vpack.c.bf16 %v1094, %v1094
        %v1100 = vpack.c.bf16 %v1098, %v1098
        %s1101 = scalar_lea.vmem [#allocation7], 512
        %v1102 = vld [vmem:[%s1101] sm:$0xff]
        %v1103 = vld [vmem:[%s1101 + $0x8] sm:$0xff]
        %v1104 = vld [vmem:[%s1101 + $0x10] sm:$0xff]
        %v1105 = vld [vmem:[%s1101 + $0x18] sm:$0xff]
        %v1106 = vld [vmem:[%s1101 + $0x20] sm:$0xff]
        %v1107 = vld [vmem:[%s1101 + $0x28] sm:$0xff]
        %v1108 = vld [vmem:[%s1101 + $0x30] sm:$0xff]
        %v1109 = vld [vmem:[%s1101 + $0x38] sm:$0xff]
        %v1110 = vld [vmem:[%s1101 + $0x40] sm:$0xff]
        %v1111 = vld [vmem:[%s1101 + $0x48] sm:$0xff]
        %v1112 = vld [vmem:[%s1101 + $0x50] sm:$0xff]
        %v1113 = vld [vmem:[%s1101 + $0x58] sm:$0xff]
        %v1114 = vld [vmem:[%s1101 + $0x60] sm:$0xff]
        %v1115 = vld [vmem:[%s1101 + $0x68] sm:$0xff]
        %v1116 = vld [vmem:[%s1101 + $0x70] sm:$0xff]
        %v1117 = vld [vmem:[%s1101 + $0x78] sm:$0xff]
        %v1118 = vld [vmem:[%s1101 + $0x80] sm:$0xff]
        %v1119 = vld [vmem:[%s1101 + $0x88] sm:$0xff]
        %v1120 = vld [vmem:[%s1101 + $0x90] sm:$0xff]
        %v1121 = vld [vmem:[%s1101 + $0x98] sm:$0xff]
        %v1122 = vld [vmem:[%s1101 + $0xa0] sm:$0xff]
        %v1123 = vld [vmem:[%s1101 + $0xa8] sm:$0xff]
        %v1124 = vld [vmem:[%s1101 + $0xb0] sm:$0xff]
        %v1125 = vld [vmem:[%s1101 + $0xb8] sm:$0xff]
        %v1126 = vld [vmem:[%s1101 + $0xc0] sm:$0xff]
        %v1127 = vld [vmem:[%s1101 + $0xc8] sm:$0xff]
        %v1128 = vld [vmem:[%s1101 + $0xd0] sm:$0xff]
        %v1129 = vld [vmem:[%s1101 + $0xd8] sm:$0xff]
        %v1130 = vld [vmem:[%s1101 + $0xe0] sm:$0xff]
        %v1131 = vld [vmem:[%s1101 + $0xe8] sm:$0xff]
        %v1132 = vld [vmem:[%s1101 + $0xf0] sm:$0xff]
        %v1133 = vld [vmem:[%s1101 + $0xf8] sm:$0xff]
        %v1134 = vld [vmem:[%s1101 + $0x100] sm:$0xff]
        %v1135 = vld [vmem:[%s1101 + $0x108] sm:$0xff]
        %v1136 = vld [vmem:[%s1101 + $0x110] sm:$0xff]
        %v1137 = vld [vmem:[%s1101 + $0x118] sm:$0xff]
        %v1138 = vld [vmem:[%s1101 + $0x120] sm:$0xff]
        %v1139 = vld [vmem:[%s1101 + $0x128] sm:$0xff]
        %v1140 = vld [vmem:[%s1101 + $0x130] sm:$0xff]
        %v1141 = vld [vmem:[%s1101 + $0x138] sm:$0xff]
        %v1142 = vld [vmem:[%s1101 + $0x140] sm:$0xff]
        %v1143 = vld [vmem:[%s1101 + $0x148] sm:$0xff]
        %v1144 = vld [vmem:[%s1101 + $0x150] sm:$0xff]
        %v1145 = vld [vmem:[%s1101 + $0x158] sm:$0xff]
        %v1146 = vld [vmem:[%s1101 + $0x160] sm:$0xff]
        %v1147 = vld [vmem:[%s1101 + $0x168] sm:$0xff]
        %v1148 = vld [vmem:[%s1101 + $0x170] sm:$0xff]
        %v1149 = vld [vmem:[%s1101 + $0x178] sm:$0xff]
        %v1150 = vld [vmem:[%s1101 + $0x180] sm:$0xff]
        %v1151 = vld [vmem:[%s1101 + $0x188] sm:$0xff]
        %v1152 = vld [vmem:[%s1101 + $0x190] sm:$0xff]
        %v1153 = vld [vmem:[%s1101 + $0x198] sm:$0xff]
        %v1154 = vld [vmem:[%s1101 + $0x1a0] sm:$0xff]
        %v1155 = vld [vmem:[%s1101 + $0x1a8] sm:$0xff]
        %v1156 = vld [vmem:[%s1101 + $0x1b0] sm:$0xff]
        %v1157 = vld [vmem:[%s1101 + $0x1b8] sm:$0xff]
        %v1158 = vld [vmem:[%s1101 + $0x1c0] sm:$0xff]
        %v1159 = vld [vmem:[%s1101 + $0x1c8] sm:$0xff]
        %v1160 = vld [vmem:[%s1101 + $0x1d0] sm:$0xff]
        %v1161 = vld [vmem:[%s1101 + $0x1d8] sm:$0xff]
        %v1162 = vld [vmem:[%s1101 + $0x1e0] sm:$0xff]
        %v1163 = vld [vmem:[%s1101 + $0x1e8] sm:$0xff]
        %v1164 = vld [vmem:[%s1101 + $0x1f0] sm:$0xff]
        %v1165 = vld [vmem:[%s1101 + $0x1f8] sm:$0xff]
        %s1166 = scalar_lea.vmem %s4, 32
        %v1167 = vld [vmem:[%s1166] sm:$0xff]
        %v1168 = vld [vmem:[%s1166 + $0x8] sm:$0xff]
        %v1169 = vld [vmem:[%s1166 + $0x10] sm:$0xff]
        %v1170 = vld [vmem:[%s1166 + $0x18] sm:$0xff]
        %v1235 = vunpack.c.l.b16 %v1102
        %v1236 = vunpack.c.h.b16 %v1102
        %v1237 = vunpack.c.l.b16 %v1103
        %v1238 = vunpack.c.h.b16 %v1103
        %v1239 = vunpack.c.l.b16 %v1104
        %v1240 = vunpack.c.h.b16 %v1104
        %v1241 = vunpack.c.l.b16 %v1105
        %v1242 = vunpack.c.h.b16 %v1105
        %v1243 = vunpack.c.l.b16 %v1106
        %v1244 = vunpack.c.h.b16 %v1106
        %v1245 = vunpack.c.l.b16 %v1107
        %v1246 = vunpack.c.h.b16 %v1107
        %v1247 = vunpack.c.l.b16 %v1108
        %v1248 = vunpack.c.h.b16 %v1108
        %v1249 = vunpack.c.l.b16 %v1109
        %v1250 = vunpack.c.h.b16 %v1109
        %v1251 = vunpack.c.l.b16 %v1110
        %v1252 = vunpack.c.h.b16 %v1110
        %v1253 = vunpack.c.l.b16 %v1111
        %v1254 = vunpack.c.h.b16 %v1111
        %v1255 = vunpack.c.l.b16 %v1112
        %v1256 = vunpack.c.h.b16 %v1112
        %v1257 = vunpack.c.l.b16 %v1113
        %v1258 = vunpack.c.h.b16 %v1113
        %v1259 = vunpack.c.l.b16 %v1114
        %v1260 = vunpack.c.h.b16 %v1114
        %v1261 = vunpack.c.l.b16 %v1115
        %v1262 = vunpack.c.h.b16 %v1115
        %v1263 = vunpack.c.l.b16 %v1116
        %v1264 = vunpack.c.h.b16 %v1116
        %v1265 = vunpack.c.l.b16 %v1117
        %v1266 = vunpack.c.h.b16 %v1117
        %v1267 = vunpack.c.l.b16 %v1118
        %v1268 = vunpack.c.h.b16 %v1118
        %v1269 = vunpack.c.l.b16 %v1119
        %v1270 = vunpack.c.h.b16 %v1119
        %v1271 = vunpack.c.l.b16 %v1120
        %v1272 = vunpack.c.h.b16 %v1120
        %v1273 = vunpack.c.l.b16 %v1121
        %v1274 = vunpack.c.h.b16 %v1121
        %v1275 = vunpack.c.l.b16 %v1122
        %v1276 = vunpack.c.h.b16 %v1122
        %v1277 = vunpack.c.l.b16 %v1123
        %v1278 = vunpack.c.h.b16 %v1123
        %v1279 = vunpack.c.l.b16 %v1124
        %v1280 = vunpack.c.h.b16 %v1124
        %v1281 = vunpack.c.l.b16 %v1125
        %v1282 = vunpack.c.h.b16 %v1125
        %v1283 = vunpack.c.l.b16 %v1126
        %v1284 = vunpack.c.h.b16 %v1126
        %v1285 = vunpack.c.l.b16 %v1127
        %v1286 = vunpack.c.h.b16 %v1127
        %v1287 = vunpack.c.l.b16 %v1128
        %v1288 = vunpack.c.h.b16 %v1128
        %v1289 = vunpack.c.l.b16 %v1129
        %v1290 = vunpack.c.h.b16 %v1129
        %v1291 = vunpack.c.l.b16 %v1130
        %v1292 = vunpack.c.h.b16 %v1130
        %v1293 = vunpack.c.l.b16 %v1131
        %v1294 = vunpack.c.h.b16 %v1131
        %v1295 = vunpack.c.l.b16 %v1132
        %v1296 = vunpack.c.h.b16 %v1132
        %v1297 = vunpack.c.l.b16 %v1133
        %v1298 = vunpack.c.h.b16 %v1133
        %v1299 = vunpack.c.l.b16 %v1134
        %v1300 = vunpack.c.h.b16 %v1134
        %v1301 = vunpack.c.l.b16 %v1135
        %v1302 = vunpack.c.h.b16 %v1135
        %v1303 = vunpack.c.l.b16 %v1136
        %v1304 = vunpack.c.h.b16 %v1136
        %v1305 = vunpack.c.l.b16 %v1137
        %v1306 = vunpack.c.h.b16 %v1137
        %v1307 = vunpack.c.l.b16 %v1138
        %v1308 = vunpack.c.h.b16 %v1138
        %v1309 = vunpack.c.l.b16 %v1139
        %v1310 = vunpack.c.h.b16 %v1139
        %v1311 = vunpack.c.l.b16 %v1140
        %v1312 = vunpack.c.h.b16 %v1140
        %v1313 = vunpack.c.l.b16 %v1141
        %v1314 = vunpack.c.h.b16 %v1141
        %v1315 = vunpack.c.l.b16 %v1142
        %v1316 = vunpack.c.h.b16 %v1142
        %v1317 = vunpack.c.l.b16 %v1143
        %v1318 = vunpack.c.h.b16 %v1143
        %v1319 = vunpack.c.l.b16 %v1144
        %v1320 = vunpack.c.h.b16 %v1144
        %v1321 = vunpack.c.l.b16 %v1145
        %v1322 = vunpack.c.h.b16 %v1145
        %v1323 = vunpack.c.l.b16 %v1146
        %v1324 = vunpack.c.h.b16 %v1146
        %v1325 = vunpack.c.l.b16 %v1147
        %v1326 = vunpack.c.h.b16 %v1147
        %v1327 = vunpack.c.l.b16 %v1148
        %v1328 = vunpack.c.h.b16 %v1148
        %v1329 = vunpack.c.l.b16 %v1149
        %v1330 = vunpack.c.h.b16 %v1149
        %v1331 = vunpack.c.l.b16 %v1150
        %v1332 = vunpack.c.h.b16 %v1150
        %v1333 = vunpack.c.l.b16 %v1151
        %v1334 = vunpack.c.h.b16 %v1151
        %v1335 = vunpack.c.l.b16 %v1152
        %v1336 = vunpack.c.h.b16 %v1152
        %v1337 = vunpack.c.l.b16 %v1153
        %v1338 = vunpack.c.h.b16 %v1153
        %v1339 = vunpack.c.l.b16 %v1154
        %v1340 = vunpack.c.h.b16 %v1154
        %v1341 = vunpack.c.l.b16 %v1155
        %v1342 = vunpack.c.h.b16 %v1155
        %v1343 = vunpack.c.l.b16 %v1156
        %v1344 = vunpack.c.h.b16 %v1156
        %v1345 = vunpack.c.l.b16 %v1157
        %v1346 = vunpack.c.h.b16 %v1157
        %v1347 = vunpack.c.l.b16 %v1158
        %v1348 = vunpack.c.h.b16 %v1158
        %v1349 = vunpack.c.l.b16 %v1159
        %v1350 = vunpack.c.h.b16 %v1159
        %v1351 = vunpack.c.l.b16 %v1160
        %v1352 = vunpack.c.h.b16 %v1160
        %v1353 = vunpack.c.l.b16 %v1161
        %v1354 = vunpack.c.h.b16 %v1161
        %v1355 = vunpack.c.l.b16 %v1162
        %v1356 = vunpack.c.h.b16 %v1162
        %v1357 = vunpack.c.l.b16 %v1163
        %v1358 = vunpack.c.h.b16 %v1163
        %v1359 = vunpack.c.l.b16 %v1164
        %v1360 = vunpack.c.h.b16 %v1164
        %v1361 = vunpack.c.l.b16 %v1165
        %v1362 = vunpack.c.h.b16 %v1165
        %v1363 = vpack.c.b16 %v1239, %v1235
        %v1364 = vpack.c.b16 %v1240, %v1236
        %v1365 = vpack.c.b16 %v1241, %v1237
        %v1366 = vpack.c.b16 %v1242, %v1238
        %v1367 = vpack.c.b16 %v1247, %v1243
        %v1368 = vpack.c.b16 %v1248, %v1244
        %v1369 = vpack.c.b16 %v1249, %v1245
        %v1370 = vpack.c.b16 %v1250, %v1246
        %v1371 = vpack.c.b16 %v1255, %v1251
        %v1372 = vpack.c.b16 %v1256, %v1252
        %v1373 = vpack.c.b16 %v1257, %v1253
        %v1374 = vpack.c.b16 %v1258, %v1254
        %v1375 = vpack.c.b16 %v1263, %v1259
        %v1376 = vpack.c.b16 %v1264, %v1260
        %v1377 = vpack.c.b16 %v1265, %v1261
        %v1378 = vpack.c.b16 %v1266, %v1262
        %v1379 = vpack.c.b16 %v1271, %v1267
        %v1380 = vpack.c.b16 %v1272, %v1268
        %v1381 = vpack.c.b16 %v1273, %v1269
        %v1382 = vpack.c.b16 %v1274, %v1270
        %v1383 = vpack.c.b16 %v1279, %v1275
        %v1384 = vpack.c.b16 %v1280, %v1276
        %v1385 = vpack.c.b16 %v1281, %v1277
        %v1386 = vpack.c.b16 %v1282, %v1278
        %v1387 = vpack.c.b16 %v1287, %v1283
        %v1388 = vpack.c.b16 %v1288, %v1284
        %v1389 = vpack.c.b16 %v1289, %v1285
        %v1390 = vpack.c.b16 %v1290, %v1286
        %v1391 = vpack.c.b16 %v1295, %v1291
        %v1392 = vpack.c.b16 %v1296, %v1292
        %v1393 = vpack.c.b16 %v1297, %v1293
        %v1394 = vpack.c.b16 %v1298, %v1294
        %v1395 = vpack.c.b16 %v1303, %v1299
        %v1396 = vpack.c.b16 %v1304, %v1300
        %v1397 = vpack.c.b16 %v1305, %v1301
        %v1398 = vpack.c.b16 %v1306, %v1302
        %v1399 = vpack.c.b16 %v1311, %v1307
        %v1400 = vpack.c.b16 %v1312, %v1308
        %v1401 = vpack.c.b16 %v1313, %v1309
        %v1402 = vpack.c.b16 %v1314, %v1310
        %v1403 = vpack.c.b16 %v1319, %v1315
        %v1404 = vpack.c.b16 %v1320, %v1316
        %v1405 = vpack.c.b16 %v1321, %v1317
        %v1406 = vpack.c.b16 %v1322, %v1318
        %v1407 = vpack.c.b16 %v1327, %v1323
        %v1408 = vpack.c.b16 %v1328, %v1324
        %v1409 = vpack.c.b16 %v1329, %v1325
        %v1410 = vpack.c.b16 %v1330, %v1326
        %v1411 = vpack.c.b16 %v1335, %v1331
        %v1412 = vpack.c.b16 %v1336, %v1332
        %v1413 = vpack.c.b16 %v1337, %v1333
        %v1414 = vpack.c.b16 %v1338, %v1334
        %v1415 = vpack.c.b16 %v1343, %v1339
        %v1416 = vpack.c.b16 %v1344, %v1340
        %v1417 = vpack.c.b16 %v1345, %v1341
        %v1418 = vpack.c.b16 %v1346, %v1342
        %v1419 = vpack.c.b16 %v1351, %v1347
        %v1420 = vpack.c.b16 %v1352, %v1348
        %v1421 = vpack.c.b16 %v1353, %v1349
        %v1422 = vpack.c.b16 %v1354, %v1350
        %v1423 = vpack.c.b16 %v1359, %v1355
        %v1424 = vpack.c.b16 %v1360, %v1356
        %v1425 = vpack.c.b16 %v1361, %v1357
        %v1426 = vpack.c.b16 %v1362, %v1358
        %1491 = vmatprep.subr.bf16.mxu0 %v1392
        %1492 = vmatpush1.bf16.msra.mxu0 %v1391
        %1493 = vmatprep.subr.bf16.mxu0 %v1388
        %1494 = vmatpush1.bf16.msra.mxu0 %v1387
        %1495 = vmatprep.subr.bf16.mxu0 %v1384
        %1496 = vmatpush1.bf16.msra.mxu0 %v1383
        %1497 = vmatprep.subr.bf16.mxu0 %v1380
        %1498 = vmatpush1.bf16.msra.mxu0 %v1379
        %1499 = vmatprep.subr.bf16.mxu0 %v1376
        %1500 = vmatpush1.bf16.msra.mxu0 %v1375
        %1501 = vmatprep.subr.bf16.mxu0 %v1372
        %1502 = vmatpush1.bf16.msra.mxu0 %v1371
        %1503 = vmatprep.subr.bf16.mxu0 %v1368
        %1504 = vmatpush1.bf16.msra.mxu0 %v1367
        %1505 = vmatprep.subr.bf16.mxu0 %v1364
        %1506 = vmatpush1.bf16.msra.mxu0 %v1363
        %1507 = vmatprep.subr.bf16.mxu0 %v1424
        %1508 = vmatpush2.bf16.msra.mxu0 %v1423
        %1509 = vmatprep.subr.bf16.mxu0 %v1420
        %1510 = vmatpush2.bf16.msra.mxu0 %v1419
        %1511 = vmatprep.subr.bf16.mxu0 %v1416
        %1512 = vmatpush2.bf16.msra.mxu0 %v1415
        %1513 = vmatprep.subr.bf16.mxu0 %v1412
        %1514 = vmatpush2.bf16.msra.mxu0 %v1411
        %1515 = vmatprep.subr.bf16.mxu0 %v1408
        %1516 = vmatpush2.bf16.msra.mxu0 %v1407
        %1517 = vmatprep.subr.bf16.mxu0 %v1404
        %1518 = vmatpush2.bf16.msra.mxu0 %v1403
        %1519 = vmatprep.subr.bf16.mxu0 %v1400
        %1520 = vmatpush2.bf16.msra.mxu0 %v1399
        %1521 = vmatprep.subr.bf16.mxu0 %v1396
        %1522 = vmatpush2.bf16.msra.mxu0 %v1395
        %1523 = vmatprep.mubr.bf16.mxu0 %v1100
        %1524 = vmatmul.mubr.bf16.gmra.mxu0 %v1099
        %v1525 = vpop.f32.mrf.mxu0
        %v1526 = vadd.f32 %v1167, %v1525
        %v1527 = vpop.f32.mrf.mxu0
        %v1528 = vadd.f32 %v1168, %v1527
        %v1529 = vpop.f32.mrf.mxu0
        %v1530 = vpop.f32.mrf.mxu0
        %1531 = vdwg.mxu0
        %1532 = vmatprep.subr.bf16.mxu0 %v1394
        %1533 = vmatpush1.bf16.msra.mxu0 %v1393
        %1534 = vmatprep.subr.bf16.mxu0 %v1390
        %1535 = vmatpush1.bf16.msra.mxu0 %v1389
        %1536 = vmatprep.subr.bf16.mxu0 %v1386
        %1537 = vmatpush1.bf16.msra.mxu0 %v1385
        %1538 = vmatprep.subr.bf16.mxu0 %v1382
        %1539 = vmatpush1.bf16.msra.mxu0 %v1381
        %1540 = vmatprep.subr.bf16.mxu0 %v1378
        %1541 = vmatpush1.bf16.msra.mxu0 %v1377
        %1542 = vmatprep.subr.bf16.mxu0 %v1374
        %1543 = vmatpush1.bf16.msra.mxu0 %v1373
        %1544 = vmatprep.subr.bf16.mxu0 %v1370
        %1545 = vmatpush1.bf16.msra.mxu0 %v1369
        %1546 = vmatprep.subr.bf16.mxu0 %v1366
        %1547 = vmatpush1.bf16.msra.mxu0 %v1365
        %1548 = vmatprep.subr.bf16.mxu0 %v1426
        %1549 = vmatpush2.bf16.msra.mxu0 %v1425
        %1550 = vmatprep.subr.bf16.mxu0 %v1422
        %1551 = vmatpush2.bf16.msra.mxu0 %v1421
        %1552 = vmatprep.subr.bf16.mxu0 %v1418
        %1553 = vmatpush2.bf16.msra.mxu0 %v1417
        %1554 = vmatprep.subr.bf16.mxu0 %v1414
        %1555 = vmatpush2.bf16.msra.mxu0 %v1413
        %1556 = vmatprep.subr.bf16.mxu0 %v1410
        %1557 = vmatpush2.bf16.msra.mxu0 %v1409
        %1558 = vmatprep.subr.bf16.mxu0 %v1406
        %1559 = vmatpush2.bf16.msra.mxu0 %v1405
        %1560 = vmatprep.subr.bf16.mxu0 %v1402
        %1561 = vmatpush2.bf16.msra.mxu0 %v1401
        %1562 = vmatprep.subr.bf16.mxu0 %v1398
        %1563 = vmatpush2.bf16.msra.mxu0 %v1397
        %1564 = vmatprep.mubr.bf16.mxu0 %v1100
        %1565 = vmatmul.mubr.bf16.gmra.mxu0 %v1099
        %v1566 = vpop.f32.mrf.mxu0
        %v1567 = vadd.f32 %v1169, %v1566
        %v1568 = vpop.f32.mrf.mxu0
        %v1569 = vadd.f32 %v1170, %v1568
        %v1570 = vpop.f32.mrf.mxu0
        %v1571 = vpop.f32.mrf.mxu0
        %1572 = vdwg.mxu0
        %v1573 = vxor.u32 %v1526, 2147483648
        %v1574 = vxor.u32 %v1528, 2147483648
        %v1575 = vxor.u32 %v1567, 2147483648
        %v1576 = vmul.f32 %v1573, 1.442695
        %v1577 = vpow.pop %v1576
        %v1578 = vmul.f32 %v1574, 1.442695
        %v1579 = vpow.pop %v1578
        %v1580 = vmul.f32 %v1575, 1.442695
        %v1581 = vpow.pop %v1580
        %v1582 = vadd.f32 %v1577, 1.0
        %v1583 = vadd.f32 %v1579, 1.0
        %v1584 = vadd.f32 %v1581, 1.0
        %v1585 = vrcp.pop %v1582
        %v1586 = vmul.f32 1.0, %v1585
        %v1587 = vrcp.pop %v1583
        %v1588 = vmul.f32 1.0, %v1587
        %v1589 = vrcp.pop %v1584
        %v1590 = vmul.f32 1.0, %v1589
        %v1591 = vtanh.pop %v1569
        %s1592 = scalar_lea.vmem [#allocation17], 8
        %v1593 = vld [vmem:[%s1592] sm:$0xff]
        %v1594 = vmul.f32 %v1588, %v1593
        %v1595 = vmul.f32 %v1586, %v1591
        %v1596 = vadd.f32 %v1594, %v1595
        %v1597 = vtanh.pop %v1596
        %v1598 = vmul.f32 %v1590, %v1597
        %1599 = vst [vmem:[%s1097] sm:$0xff] %v1598
        %1600 = vst [vmem:[%s1592] sm:$0xff] %v1596
        %v1601 = vpack.c.bf16 %v1598, %v1598
        %v1618 = vunpack.c.l.b16 %v510
        %v1619 = vunpack.c.l.b16 %v511
        %v1620 = vunpack.c.l.b16 %v512
        %v1621 = vunpack.c.l.b16 %v513
        %v1622 = vunpack.c.l.b16 %v514
        %v1623 = vunpack.c.l.b16 %v515
        %v1624 = vunpack.c.l.b16 %v516
        %v1625 = vunpack.c.l.b16 %v517
        %v1626 = vunpack.c.l.b16 %v518
        %v1627 = vunpack.c.l.b16 %v519
        %v1628 = vunpack.c.l.b16 %v520
        %v1629 = vunpack.c.l.b16 %v521
        %v1630 = vunpack.c.l.b16 %v522
        %v1631 = vunpack.c.l.b16 %v523
        %v1632 = vunpack.c.l.b16 %v524
        %v1633 = vunpack.c.l.b16 %v525
        %v1634 = vpack.c.b16 %v1619, %v1618
        %v1635 = vpack.c.b16 %v1621, %v1620
        %v1636 = vpack.c.b16 %v1623, %v1622
        %v1637 = vpack.c.b16 %v1625, %v1624
        %v1638 = vpack.c.b16 %v1627, %v1626
        %v1639 = vpack.c.b16 %v1629, %v1628
        %v1640 = vpack.c.b16 %v1631, %v1630
        %v1641 = vpack.c.b16 %v1633, %v1632
        %1650 = vmatprep.subr.bf16.mxu0 0
        %1651 = vmatpush1.bf16.msra.mxu0 %v1641
        %1652 = vmatprep.subr.bf16.mxu0 0
        %1653 = vmatpush1.bf16.msra.mxu0 %v1640
        %1654 = vmatprep.subr.bf16.mxu0 0
        %1655 = vmatpush1.bf16.msra.mxu0 %v1639
        %1656 = vmatprep.subr.bf16.mxu0 0
        %1657 = vmatpush1.bf16.msra.mxu0 %v1638
        %1658 = vmatprep.subr.bf16.mxu0 0
        %1659 = vmatpush1.bf16.msra.mxu0 %v1637
        %1660 = vmatprep.subr.bf16.mxu0 0
        %1661 = vmatpush1.bf16.msra.mxu0 %v1636
        %1662 = vmatprep.subr.bf16.mxu0 0
        %1663 = vmatpush1.bf16.msra.mxu0 %v1635
        %1664 = vmatprep.subr.bf16.mxu0 0
        %1665 = vmatpush1.bf16.msra.mxu0 %v1634
        %1666 = vmatprep.subr.bf16.mxu0 0
        %1667 = vmatpush2.bf16.msra.mxu0 0
        %1668 = vmatprep.subr.bf16.mxu0 0
        %1669 = vmatpush2.bf16.msra.mxu0 0
        %1670 = vmatprep.subr.bf16.mxu0 0
        %1671 = vmatpush2.bf16.msra.mxu0 0
        %1672 = vmatprep.subr.bf16.mxu0 0
        %1673 = vmatpush2.bf16.msra.mxu0 0
        %1674 = vmatprep.subr.bf16.mxu0 0
        %1675 = vmatpush2.bf16.msra.mxu0 0
        %1676 = vmatprep.subr.bf16.mxu0 0
        %1677 = vmatpush2.bf16.msra.mxu0 0
        %1678 = vmatprep.subr.bf16.mxu0 0
        %1679 = vmatpush2.bf16.msra.mxu0 0
        %1680 = vmatprep.subr.bf16.mxu0 0
        %1681 = vmatpush2.bf16.msra.mxu0 0
        %1682 = vmatprep.mubr.bf16.mxu0 0
        %1683 = vmatmul.mubr.bf16.gmra.mxu0 %v1601
        %v1684 = vpop.f32.mrf.mxu0
        %v1685 = vadd.f32 %v526, %v1684
        %v1686 = vpop.f32.mrf.mxu0
        %v1687 = vpop.f32.mrf.mxu0
        %v1688 = vpop.f32.mrf.mxu0
        %1689 = vdwg.mxu0
        %v1690 = vtanh.pop %v1685
        %1691 = vst [vmem:[%s481] sm:$0xff] %v1690
        %s1692 = scalar_lea.vmem %s423, 8 [#allocation2]
        %v1693 = vld [vmem:[%s1692] sm:$0xff]
        %v1694 = vpack.c.bf16 %v1693, %v1693
        %v1696 = vsel %vm553, %v1694, 0
        %1698 = vmatprep.subr.bf16.mxu0 0
        %1699 = vmatpush1.bf16.msra.mxu0 0
        %1700 = vmatprep.subr.bf16.mxu0 0
        %1701 = vmatpush1.bf16.msra.mxu0 0
        %1702 = vmatprep.subr.bf16.mxu0 0
        %1703 = vmatpush1.bf16.msra.mxu0 0
        %1704 = vmatprep.subr.bf16.mxu0 0
        %1705 = vmatpush1.bf16.msra.mxu0 0
        %1706 = vmatprep.subr.bf16.mxu0 0
        %1707 = vmatpush1.bf16.msra.mxu0 %v548
        %1708 = vmatprep.subr.bf16.mxu0 0
        %1709 = vmatpush1.bf16.msra.mxu0 %v547
        %1710 = vmatprep.subr.bf16.mxu0 0
        %1711 = vmatpush1.bf16.msra.mxu0 %v546
        %1712 = vmatprep.subr.bf16.mxu0 0
        %1713 = vmatpush1.bf16.msra.mxu0 %v545
        %1714 = vmatprep.subr.bf16.mxu0 0
        %1715 = vmatpush2.bf16.msra.mxu0 0
        %1716 = vmatprep.subr.bf16.mxu0 0
        %1717 = vmatpush2.bf16.msra.mxu0 0
        %1718 = vmatprep.subr.bf16.mxu0 0
        %1719 = vmatpush2.bf16.msra.mxu0 0
        %1720 = vmatprep.subr.bf16.mxu0 0
        %1721 = vmatpush2.bf16.msra.mxu0 0
        %1722 = vmatprep.subr.bf16.mxu0 0
        %1723 = vmatpush2.bf16.msra.mxu0 0
        %1724 = vmatprep.subr.bf16.mxu0 0
        %1725 = vmatpush2.bf16.msra.mxu0 0
        %1726 = vmatprep.subr.bf16.mxu0 0
        %1727 = vmatpush2.bf16.msra.mxu0 0
        %1728 = vmatprep.subr.bf16.mxu0 0
        %1729 = vmatpush2.bf16.msra.mxu0 0
        %1730 = vmatprep.mubr.bf16.mxu0 0
        %1731 = vmatmul.mubr.bf16.gmra.mxu0 %v1696
        %v1732 = vpop.f32.mrf.mxu0
        %v1733 = vadd.f32 %v509, %v1732
        %v1734 = vpop.f32.mrf.mxu0
        %v1735 = vpop.f32.mrf.mxu0
        %v1736 = vpop.f32.mrf.mxu0
        %1737 = vdwg.mxu0
        %v1738 = vld [vmem:[#allocation15] sm:$0xff]
        %v1739 = vpack.c.bf16 %v1733, %v1733
        %v1740 = vpack.c.bf16 %v1738, %v1738
        %v1741 = vld [vmem:[#allocation7] sm:$0xff]
        %v1742 = vld [vmem:[#allocation7 + $0x8] sm:$0xff]
        %v1743 = vld [vmem:[#allocation7 + $0x10] sm:$0xff]
        %v1744 = vld [vmem:[#allocation7 + $0x18] sm:$0xff]
        %v1745 = vld [vmem:[#allocation7 + $0x20] sm:$0xff]
        %v1746 = vld [vmem:[#allocation7 + $0x28] sm:$0xff]
        %v1747 = vld [vmem:[#allocation7 + $0x30] sm:$0xff]
        %v1748 = vld [vmem:[#allocation7 + $0x38] sm:$0xff]
        %v1749 = vld [vmem:[#allocation7 + $0x40] sm:$0xff]
        %v1750 = vld [vmem:[#allocation7 + $0x48] sm:$0xff]
        %v1751 = vld [vmem:[#allocation7 + $0x50] sm:$0xff]
        %v1752 = vld [vmem:[#allocation7 + $0x58] sm:$0xff]
        %v1753 = vld [vmem:[#allocation7 + $0x60] sm:$0xff]
        %v1754 = vld [vmem:[#allocation7 + $0x68] sm:$0xff]
        %v1755 = vld [vmem:[#allocation7 + $0x70] sm:$0xff]
        %v1756 = vld [vmem:[#allocation7 + $0x78] sm:$0xff]
        %v1757 = vld [vmem:[#allocation7 + $0x80] sm:$0xff]
        %v1758 = vld [vmem:[#allocation7 + $0x88] sm:$0xff]
        %v1759 = vld [vmem:[#allocation7 + $0x90] sm:$0xff]
        %v1760 = vld [vmem:[#allocation7 + $0x98] sm:$0xff]
        %v1761 = vld [vmem:[#allocation7 + $0xa0] sm:$0xff]
        %v1762 = vld [vmem:[#allocation7 + $0xa8] sm:$0xff]
        %v1763 = vld [vmem:[#allocation7 + $0xb0] sm:$0xff]
        %v1764 = vld [vmem:[#allocation7 + $0xb8] sm:$0xff]
        %v1765 = vld [vmem:[#allocation7 + $0xc0] sm:$0xff]
        %v1766 = vld [vmem:[#allocation7 + $0xc8] sm:$0xff]
        %v1767 = vld [vmem:[#allocation7 + $0xd0] sm:$0xff]
        %v1768 = vld [vmem:[#allocation7 + $0xd8] sm:$0xff]
        %v1769 = vld [vmem:[#allocation7 + $0xe0] sm:$0xff]
        %v1770 = vld [vmem:[#allocation7 + $0xe8] sm:$0xff]
        %v1771 = vld [vmem:[#allocation7 + $0xf0] sm:$0xff]
        %v1772 = vld [vmem:[#allocation7 + $0xf8] sm:$0xff]
        %v1773 = vld [vmem:[#allocation7 + $0x100] sm:$0xff]
        %v1774 = vld [vmem:[#allocation7 + $0x108] sm:$0xff]
        %v1775 = vld [vmem:[#allocation7 + $0x110] sm:$0xff]
        %v1776 = vld [vmem:[#allocation7 + $0x118] sm:$0xff]
        %v1777 = vld [vmem:[#allocation7 + $0x120] sm:$0xff]
        %v1778 = vld [vmem:[#allocation7 + $0x128] sm:$0xff]
        %v1779 = vld [vmem:[#allocation7 + $0x130] sm:$0xff]
        %v1780 = vld [vmem:[#allocation7 + $0x138] sm:$0xff]
        %v1781 = vld [vmem:[#allocation7 + $0x140] sm:$0xff]
        %v1782 = vld [vmem:[#allocation7 + $0x148] sm:$0xff]
        %v1783 = vld [vmem:[#allocation7 + $0x150] sm:$0xff]
        %v1784 = vld [vmem:[#allocation7 + $0x158] sm:$0xff]
        %v1785 = vld [vmem:[#allocation7 + $0x160] sm:$0xff]
        %v1786 = vld [vmem:[#allocation7 + $0x168] sm:$0xff]
        %v1787 = vld [vmem:[#allocation7 + $0x170] sm:$0xff]
        %v1788 = vld [vmem:[#allocation7 + $0x178] sm:$0xff]
        %v1789 = vld [vmem:[#allocation7 + $0x180] sm:$0xff]
        %v1790 = vld [vmem:[#allocation7 + $0x188] sm:$0xff]
        %v1791 = vld [vmem:[#allocation7 + $0x190] sm:$0xff]
        %v1792 = vld [vmem:[#allocation7 + $0x198] sm:$0xff]
        %v1793 = vld [vmem:[#allocation7 + $0x1a0] sm:$0xff]
        %v1794 = vld [vmem:[#allocation7 + $0x1a8] sm:$0xff]
        %v1795 = vld [vmem:[#allocation7 + $0x1b0] sm:$0xff]
        %v1796 = vld [vmem:[#allocation7 + $0x1b8] sm:$0xff]
        %v1797 = vld [vmem:[#allocation7 + $0x1c0] sm:$0xff]
        %v1798 = vld [vmem:[#allocation7 + $0x1c8] sm:$0xff]
        %v1799 = vld [vmem:[#allocation7 + $0x1d0] sm:$0xff]
        %v1800 = vld [vmem:[#allocation7 + $0x1d8] sm:$0xff]
        %v1801 = vld [vmem:[#allocation7 + $0x1e0] sm:$0xff]
        %v1802 = vld [vmem:[#allocation7 + $0x1e8] sm:$0xff]
        %v1803 = vld [vmem:[#allocation7 + $0x1f0] sm:$0xff]
        %v1804 = vld [vmem:[#allocation7 + $0x1f8] sm:$0xff]
        %v1805 = vld [vmem:[%s4] sm:$0xff]
        %v1806 = vld [vmem:[%s4 + $0x8] sm:$0xff]
        %v1807 = vld [vmem:[%s4 + $0x10] sm:$0xff]
        %v1808 = vld [vmem:[%s4 + $0x18] sm:$0xff]
        %v1873 = vunpack.c.l.b16 %v1741
        %v1874 = vunpack.c.h.b16 %v1741
        %v1875 = vunpack.c.l.b16 %v1742
        %v1876 = vunpack.c.h.b16 %v1742
        %v1877 = vunpack.c.l.b16 %v1743
        %v1878 = vunpack.c.h.b16 %v1743
        %v1879 = vunpack.c.l.b16 %v1744
        %v1880 = vunpack.c.h.b16 %v1744
        %v1881 = vunpack.c.l.b16 %v1745
        %v1882 = vunpack.c.h.b16 %v1745
        %v1883 = vunpack.c.l.b16 %v1746
        %v1884 = vunpack.c.h.b16 %v1746
        %v1885 = vunpack.c.l.b16 %v1747
        %v1886 = vunpack.c.h.b16 %v1747
        %v1887 = vunpack.c.l.b16 %v1748
        %v1888 = vunpack.c.h.b16 %v1748
        %v1889 = vunpack.c.l.b16 %v1749
        %v1890 = vunpack.c.h.b16 %v1749
        %v1891 = vunpack.c.l.b16 %v1750
        %v1892 = vunpack.c.h.b16 %v1750
        %v1893 = vunpack.c.l.b16 %v1751
        %v1894 = vunpack.c.h.b16 %v1751
        %v1895 = vunpack.c.l.b16 %v1752
        %v1896 = vunpack.c.h.b16 %v1752
        %v1897 = vunpack.c.l.b16 %v1753
        %v1898 = vunpack.c.h.b16 %v1753
        %v1899 = vunpack.c.l.b16 %v1754
        %v1900 = vunpack.c.h.b16 %v1754
        %v1901 = vunpack.c.l.b16 %v1755
        %v1902 = vunpack.c.h.b16 %v1755
        %v1903 = vunpack.c.l.b16 %v1756
        %v1904 = vunpack.c.h.b16 %v1756
        %v1905 = vunpack.c.l.b16 %v1757
        %v1906 = vunpack.c.h.b16 %v1757
        %v1907 = vunpack.c.l.b16 %v1758
        %v1908 = vunpack.c.h.b16 %v1758
        %v1909 = vunpack.c.l.b16 %v1759
        %v1910 = vunpack.c.h.b16 %v1759
        %v1911 = vunpack.c.l.b16 %v1760
        %v1912 = vunpack.c.h.b16 %v1760
        %v1913 = vunpack.c.l.b16 %v1761
        %v1914 = vunpack.c.h.b16 %v1761
        %v1915 = vunpack.c.l.b16 %v1762
        %v1916 = vunpack.c.h.b16 %v1762
        %v1917 = vunpack.c.l.b16 %v1763
        %v1918 = vunpack.c.h.b16 %v1763
        %v1919 = vunpack.c.l.b16 %v1764
        %v1920 = vunpack.c.h.b16 %v1764
        %v1921 = vunpack.c.l.b16 %v1765
        %v1922 = vunpack.c.h.b16 %v1765
        %v1923 = vunpack.c.l.b16 %v1766
        %v1924 = vunpack.c.h.b16 %v1766
        %v1925 = vunpack.c.l.b16 %v1767
        %v1926 = vunpack.c.h.b16 %v1767
        %v1927 = vunpack.c.l.b16 %v1768
        %v1928 = vunpack.c.h.b16 %v1768
        %v1929 = vunpack.c.l.b16 %v1769
        %v1930 = vunpack.c.h.b16 %v1769
        %v1931 = vunpack.c.l.b16 %v1770
        %v1932 = vunpack.c.h.b16 %v1770
        %v1933 = vunpack.c.l.b16 %v1771
        %v1934 = vunpack.c.h.b16 %v1771
        %v1935 = vunpack.c.l.b16 %v1772
        %v1936 = vunpack.c.h.b16 %v1772
        %v1937 = vunpack.c.l.b16 %v1773
        %v1938 = vunpack.c.h.b16 %v1773
        %v1939 = vunpack.c.l.b16 %v1774
        %v1940 = vunpack.c.h.b16 %v1774
        %v1941 = vunpack.c.l.b16 %v1775
        %v1942 = vunpack.c.h.b16 %v1775
        %v1943 = vunpack.c.l.b16 %v1776
        %v1944 = vunpack.c.h.b16 %v1776
        %v1945 = vunpack.c.l.b16 %v1777
        %v1946 = vunpack.c.h.b16 %v1777
        %v1947 = vunpack.c.l.b16 %v1778
        %v1948 = vunpack.c.h.b16 %v1778
        %v1949 = vunpack.c.l.b16 %v1779
        %v1950 = vunpack.c.h.b16 %v1779
        %v1951 = vunpack.c.l.b16 %v1780
        %v1952 = vunpack.c.h.b16 %v1780
        %v1953 = vunpack.c.l.b16 %v1781
        %v1954 = vunpack.c.h.b16 %v1781
        %v1955 = vunpack.c.l.b16 %v1782
        %v1956 = vunpack.c.h.b16 %v1782
        %v1957 = vunpack.c.l.b16 %v1783
        %v1958 = vunpack.c.h.b16 %v1783
        %v1959 = vunpack.c.l.b16 %v1784
        %v1960 = vunpack.c.h.b16 %v1784
        %v1961 = vunpack.c.l.b16 %v1785
        %v1962 = vunpack.c.h.b16 %v1785
        %v1963 = vunpack.c.l.b16 %v1786
        %v1964 = vunpack.c.h.b16 %v1786
        %v1965 = vunpack.c.l.b16 %v1787
        %v1966 = vunpack.c.h.b16 %v1787
        %v1967 = vunpack.c.l.b16 %v1788
        %v1968 = vunpack.c.h.b16 %v1788
        %v1969 = vunpack.c.l.b16 %v1789
        %v1970 = vunpack.c.h.b16 %v1789
        %v1971 = vunpack.c.l.b16 %v1790
        %v1972 = vunpack.c.h.b16 %v1790
        %v1973 = vunpack.c.l.b16 %v1791
        %v1974 = vunpack.c.h.b16 %v1791
        %v1975 = vunpack.c.l.b16 %v1792
        %v1976 = vunpack.c.h.b16 %v1792
        %v1977 = vunpack.c.l.b16 %v1793
        %v1978 = vunpack.c.h.b16 %v1793
        %v1979 = vunpack.c.l.b16 %v1794
        %v1980 = vunpack.c.h.b16 %v1794
        %v1981 = vunpack.c.l.b16 %v1795
        %v1982 = vunpack.c.h.b16 %v1795
        %v1983 = vunpack.c.l.b16 %v1796
        %v1984 = vunpack.c.h.b16 %v1796
        %v1985 = vunpack.c.l.b16 %v1797
        %v1986 = vunpack.c.h.b16 %v1797
        %v1987 = vunpack.c.l.b16 %v1798
        %v1988 = vunpack.c.h.b16 %v1798
        %v1989 = vunpack.c.l.b16 %v1799
        %v1990 = vunpack.c.h.b16 %v1799
        %v1991 = vunpack.c.l.b16 %v1800
        %v1992 = vunpack.c.h.b16 %v1800
        %v1993 = vunpack.c.l.b16 %v1801
        %v1994 = vunpack.c.h.b16 %v1801
        %v1995 = vunpack.c.l.b16 %v1802
        %v1996 = vunpack.c.h.b16 %v1802
        %v1997 = vunpack.c.l.b16 %v1803
        %v1998 = vunpack.c.h.b16 %v1803
        %v1999 = vunpack.c.l.b16 %v1804
        %v2000 = vunpack.c.h.b16 %v1804
        %v2001 = vpack.c.b16 %v1877, %v1873
        %v2002 = vpack.c.b16 %v1878, %v1874
        %v2003 = vpack.c.b16 %v1879, %v1875
        %v2004 = vpack.c.b16 %v1880, %v1876
        %v2005 = vpack.c.b16 %v1885, %v1881
        %v2006 = vpack.c.b16 %v1886, %v1882
        %v2007 = vpack.c.b16 %v1887, %v1883
        %v2008 = vpack.c.b16 %v1888, %v1884
        %v2009 = vpack.c.b16 %v1893, %v1889
        %v2010 = vpack.c.b16 %v1894, %v1890
        %v2011 = vpack.c.b16 %v1895, %v1891
        %v2012 = vpack.c.b16 %v1896, %v1892
        %v2013 = vpack.c.b16 %v1901, %v1897
        %v2014 = vpack.c.b16 %v1902, %v1898
        %v2015 = vpack.c.b16 %v1903, %v1899
        %v2016 = vpack.c.b16 %v1904, %v1900
        %v2017 = vpack.c.b16 %v1909, %v1905
        %v2018 = vpack.c.b16 %v1910, %v1906
        %v2019 = vpack.c.b16 %v1911, %v1907
        %v2020 = vpack.c.b16 %v1912, %v1908
        %v2021 = vpack.c.b16 %v1917, %v1913
        %v2022 = vpack.c.b16 %v1918, %v1914
        %v2023 = vpack.c.b16 %v1919, %v1915
        %v2024 = vpack.c.b16 %v1920, %v1916
        %v2025 = vpack.c.b16 %v1925, %v1921
        %v2026 = vpack.c.b16 %v1926, %v1922
        %v2027 = vpack.c.b16 %v1927, %v1923
        %v2028 = vpack.c.b16 %v1928, %v1924
        %v2029 = vpack.c.b16 %v1933, %v1929
        %v2030 = vpack.c.b16 %v1934, %v1930
        %v2031 = vpack.c.b16 %v1935, %v1931
        %v2032 = vpack.c.b16 %v1936, %v1932
        %v2033 = vpack.c.b16 %v1941, %v1937
        %v2034 = vpack.c.b16 %v1942, %v1938
        %v2035 = vpack.c.b16 %v1943, %v1939
        %v2036 = vpack.c.b16 %v1944, %v1940
        %v2037 = vpack.c.b16 %v1949, %v1945
        %v2038 = vpack.c.b16 %v1950, %v1946
        %v2039 = vpack.c.b16 %v1951, %v1947
        %v2040 = vpack.c.b16 %v1952, %v1948
        %v2041 = vpack.c.b16 %v1957, %v1953
        %v2042 = vpack.c.b16 %v1958, %v1954
        %v2043 = vpack.c.b16 %v1959, %v1955
        %v2044 = vpack.c.b16 %v1960, %v1956
        %v2045 = vpack.c.b16 %v1965, %v1961
        %v2046 = vpack.c.b16 %v1966, %v1962
        %v2047 = vpack.c.b16 %v1967, %v1963
        %v2048 = vpack.c.b16 %v1968, %v1964
        %v2049 = vpack.c.b16 %v1973, %v1969
        %v2050 = vpack.c.b16 %v1974, %v1970
        %v2051 = vpack.c.b16 %v1975, %v1971
        %v2052 = vpack.c.b16 %v1976, %v1972
        %v2053 = vpack.c.b16 %v1981, %v1977
        %v2054 = vpack.c.b16 %v1982, %v1978
        %v2055 = vpack.c.b16 %v1983, %v1979
        %v2056 = vpack.c.b16 %v1984, %v1980
        %v2057 = vpack.c.b16 %v1989, %v1985
        %v2058 = vpack.c.b16 %v1990, %v1986
        %v2059 = vpack.c.b16 %v1991, %v1987
        %v2060 = vpack.c.b16 %v1992, %v1988
        %v2061 = vpack.c.b16 %v1997, %v1993
        %v2062 = vpack.c.b16 %v1998, %v1994
        %v2063 = vpack.c.b16 %v1999, %v1995
        %v2064 = vpack.c.b16 %v2000, %v1996
        %2129 = vmatprep.subr.bf16.mxu0 %v2030
        %2130 = vmatpush1.bf16.msra.mxu0 %v2029
        %2131 = vmatprep.subr.bf16.mxu0 %v2026
        %2132 = vmatpush1.bf16.msra.mxu0 %v2025
        %2133 = vmatprep.subr.bf16.mxu0 %v2022
        %2134 = vmatpush1.bf16.msra.mxu0 %v2021
        %2135 = vmatprep.subr.bf16.mxu0 %v2018
        %2136 = vmatpush1.bf16.msra.mxu0 %v2017
        %2137 = vmatprep.subr.bf16.mxu0 %v2014
        %2138 = vmatpush1.bf16.msra.mxu0 %v2013
        %2139 = vmatprep.subr.bf16.mxu0 %v2010
        %2140 = vmatpush1.bf16.msra.mxu0 %v2009
        %2141 = vmatprep.subr.bf16.mxu0 %v2006
        %2142 = vmatpush1.bf16.msra.mxu0 %v2005
        %2143 = vmatprep.subr.bf16.mxu0 %v2002
        %2144 = vmatpush1.bf16.msra.mxu0 %v2001
        %2145 = vmatprep.subr.bf16.mxu0 %v2062
        %2146 = vmatpush2.bf16.msra.mxu0 %v2061
        %2147 = vmatprep.subr.bf16.mxu0 %v2058
        %2148 = vmatpush2.bf16.msra.mxu0 %v2057
        %2149 = vmatprep.subr.bf16.mxu0 %v2054
        %2150 = vmatpush2.bf16.msra.mxu0 %v2053
        %2151 = vmatprep.subr.bf16.mxu0 %v2050
        %2152 = vmatpush2.bf16.msra.mxu0 %v2049
        %2153 = vmatprep.subr.bf16.mxu0 %v2046
        %2154 = vmatpush2.bf16.msra.mxu0 %v2045
        %2155 = vmatprep.subr.bf16.mxu0 %v2042
        %2156 = vmatpush2.bf16.msra.mxu0 %v2041
        %2157 = vmatprep.subr.bf16.mxu0 %v2038
        %2158 = vmatpush2.bf16.msra.mxu0 %v2037
        %2159 = vmatprep.subr.bf16.mxu0 %v2034
        %2160 = vmatpush2.bf16.msra.mxu0 %v2033
        %2161 = vmatprep.mubr.bf16.mxu0 %v1740
        %2162 = vmatmul.mubr.bf16.gmra.mxu0 %v1739
        %v2163 = vpop.f32.mrf.mxu0
        %v2164 = vadd.f32 %v1805, %v2163
        %v2165 = vpop.f32.mrf.mxu0
        %v2166 = vadd.f32 %v1806, %v2165
        %v2167 = vpop.f32.mrf.mxu0
        %v2168 = vpop.f32.mrf.mxu0
        %2169 = vdwg.mxu0
        %2170 = vmatprep.subr.bf16.mxu0 %v2032
        %2171 = vmatpush1.bf16.msra.mxu0 %v2031
        %2172 = vmatprep.subr.bf16.mxu0 %v2028
        %2173 = vmatpush1.bf16.msra.mxu0 %v2027
        %2174 = vmatprep.subr.bf16.mxu0 %v2024
        %2175 = vmatpush1.bf16.msra.mxu0 %v2023
        %2176 = vmatprep.subr.bf16.mxu0 %v2020
        %2177 = vmatpush1.bf16.msra.mxu0 %v2019
        %2178 = vmatprep.subr.bf16.mxu0 %v2016
        %2179 = vmatpush1.bf16.msra.mxu0 %v2015
        %2180 = vmatprep.subr.bf16.mxu0 %v2012
        %2181 = vmatpush1.bf16.msra.mxu0 %v2011
        %2182 = vmatprep.subr.bf16.mxu0 %v2008
        %2183 = vmatpush1.bf16.msra.mxu0 %v2007
        %2184 = vmatprep.subr.bf16.mxu0 %v2004
        %2185 = vmatpush1.bf16.msra.mxu0 %v2003
        %2186 = vmatprep.subr.bf16.mxu0 %v2064
        %2187 = vmatpush2.bf16.msra.mxu0 %v2063
        %2188 = vmatprep.subr.bf16.mxu0 %v2060
        %2189 = vmatpush2.bf16.msra.mxu0 %v2059
        %2190 = vmatprep.subr.bf16.mxu0 %v2056
        %2191 = vmatpush2.bf16.msra.mxu0 %v2055
        %2192 = vmatprep.subr.bf16.mxu0 %v2052
        %2193 = vmatpush2.bf16.msra.mxu0 %v2051
        %2194 = vmatprep.subr.bf16.mxu0 %v2048
        %2195 = vmatpush2.bf16.msra.mxu0 %v2047
        %2196 = vmatprep.subr.bf16.mxu0 %v2044
        %2197 = vmatpush2.bf16.msra.mxu0 %v2043
        %2198 = vmatprep.subr.bf16.mxu0 %v2040
        %2199 = vmatpush2.bf16.msra.mxu0 %v2039
        %2200 = vmatprep.subr.bf16.mxu0 %v2036
        %2201 = vmatpush2.bf16.msra.mxu0 %v2035
        %2202 = vmatprep.mubr.bf16.mxu0 %v1740
        %2203 = vmatmul.mubr.bf16.gmra.mxu0 %v1739
        %v2204 = vpop.f32.mrf.mxu0
        %v2205 = vadd.f32 %v1807, %v2204
        %v2206 = vpop.f32.mrf.mxu0
        %v2207 = vadd.f32 %v1808, %v2206
        %v2208 = vpop.f32.mrf.mxu0
        %v2209 = vpop.f32.mrf.mxu0
        %2210 = vdwg.mxu0
        %v2211 = vxor.u32 %v2164, 2147483648
        %v2212 = vxor.u32 %v2166, 2147483648
        %v2213 = vxor.u32 %v2205, 2147483648
        %v2214 = vmul.f32 %v2211, 1.442695
        %v2215 = vpow.pop %v2214
        %v2216 = vmul.f32 %v2212, 1.442695
        %v2217 = vpow.pop %v2216
        %v2218 = vmul.f32 %v2213, 1.442695
        %v2219 = vpow.pop %v2218
        %v2220 = vadd.f32 %v2215, 1.0
        %v2221 = vadd.f32 %v2217, 1.0
        %v2222 = vadd.f32 %v2219, 1.0
        %v2223 = vrcp.pop %v2220
        %v2224 = vmul.f32 1.0, %v2223
        %v2225 = vrcp.pop %v2221
        %v2226 = vmul.f32 1.0, %v2225
        %v2227 = vrcp.pop %v2222
        %v2228 = vmul.f32 1.0, %v2227
        %v2229 = vtanh.pop %v2207
        %v2230 = vld [vmem:[#allocation17] sm:$0xff]
        %v2231 = vmul.f32 %v2226, %v2230
        %v2232 = vmul.f32 %v2224, %v2229
        %v2233 = vadd.f32 %v2231, %v2232
        %v2234 = vtanh.pop %v2233
        %v2235 = vmul.f32 %v2228, %v2234
        %2236 = vst [vmem:[#allocation15] sm:$0xff] %v2235
        %2237 = vst [vmem:[#allocation17] sm:$0xff] %v2233
        %v2238 = vld [vmem:[%s1097] sm:$0xff]
        %v2239 = vpack.c.bf16 %v2235, %v2235
        %v2240 = vpack.c.bf16 %v2238, %v2238
        %v2241 = vld [vmem:[%s1101] sm:$0xff]
        %v2242 = vld [vmem:[%s1101 + $0x8] sm:$0xff]
        %v2243 = vld [vmem:[%s1101 + $0x10] sm:$0xff]
        %v2244 = vld [vmem:[%s1101 + $0x18] sm:$0xff]
        %v2245 = vld [vmem:[%s1101 + $0x20] sm:$0xff]
        %v2246 = vld [vmem:[%s1101 + $0x28] sm:$0xff]
        %v2247 = vld [vmem:[%s1101 + $0x30] sm:$0xff]
        %v2248 = vld [vmem:[%s1101 + $0x38] sm:$0xff]
        %v2249 = vld [vmem:[%s1101 + $0x40] sm:$0xff]
        %v2250 = vld [vmem:[%s1101 + $0x48] sm:$0xff]
        %v2251 = vld [vmem:[%s1101 + $0x50] sm:$0xff]
        %v2252 = vld [vmem:[%s1101 + $0x58] sm:$0xff]
        %v2253 = vld [vmem:[%s1101 + $0x60] sm:$0xff]
        %v2254 = vld [vmem:[%s1101 + $0x68] sm:$0xff]
        %v2255 = vld [vmem:[%s1101 + $0x70] sm:$0xff]
        %v2256 = vld [vmem:[%s1101 + $0x78] sm:$0xff]
        %v2257 = vld [vmem:[%s1101 + $0x80] sm:$0xff]
        %v2258 = vld [vmem:[%s1101 + $0x88] sm:$0xff]
        %v2259 = vld [vmem:[%s1101 + $0x90] sm:$0xff]
        %v2260 = vld [vmem:[%s1101 + $0x98] sm:$0xff]
        %v2261 = vld [vmem:[%s1101 + $0xa0] sm:$0xff]
        %v2262 = vld [vmem:[%s1101 + $0xa8] sm:$0xff]
        %v2263 = vld [vmem:[%s1101 + $0xb0] sm:$0xff]
        %v2264 = vld [vmem:[%s1101 + $0xb8] sm:$0xff]
        %v2265 = vld [vmem:[%s1101 + $0xc0] sm:$0xff]
        %v2266 = vld [vmem:[%s1101 + $0xc8] sm:$0xff]
        %v2267 = vld [vmem:[%s1101 + $0xd0] sm:$0xff]
        %v2268 = vld [vmem:[%s1101 + $0xd8] sm:$0xff]
        %v2269 = vld [vmem:[%s1101 + $0xe0] sm:$0xff]
        %v2270 = vld [vmem:[%s1101 + $0xe8] sm:$0xff]
        %v2271 = vld [vmem:[%s1101 + $0xf0] sm:$0xff]
        %v2272 = vld [vmem:[%s1101 + $0xf8] sm:$0xff]
        %v2273 = vld [vmem:[%s1101 + $0x100] sm:$0xff]
        %v2274 = vld [vmem:[%s1101 + $0x108] sm:$0xff]
        %v2275 = vld [vmem:[%s1101 + $0x110] sm:$0xff]
        %v2276 = vld [vmem:[%s1101 + $0x118] sm:$0xff]
        %v2277 = vld [vmem:[%s1101 + $0x120] sm:$0xff]
        %v2278 = vld [vmem:[%s1101 + $0x128] sm:$0xff]
        %v2279 = vld [vmem:[%s1101 + $0x130] sm:$0xff]
        %v2280 = vld [vmem:[%s1101 + $0x138] sm:$0xff]
        %v2281 = vld [vmem:[%s1101 + $0x140] sm:$0xff]
        %v2282 = vld [vmem:[%s1101 + $0x148] sm:$0xff]
        %v2283 = vld [vmem:[%s1101 + $0x150] sm:$0xff]
        %v2284 = vld [vmem:[%s1101 + $0x158] sm:$0xff]
        %v2285 = vld [vmem:[%s1101 + $0x160] sm:$0xff]
        %v2286 = vld [vmem:[%s1101 + $0x168] sm:$0xff]
        %v2287 = vld [vmem:[%s1101 + $0x170] sm:$0xff]
        %v2288 = vld [vmem:[%s1101 + $0x178] sm:$0xff]
        %v2289 = vld [vmem:[%s1101 + $0x180] sm:$0xff]
        %v2290 = vld [vmem:[%s1101 + $0x188] sm:$0xff]
        %v2291 = vld [vmem:[%s1101 + $0x190] sm:$0xff]
        %v2292 = vld [vmem:[%s1101 + $0x198] sm:$0xff]
        %v2293 = vld [vmem:[%s1101 + $0x1a0] sm:$0xff]
        %v2294 = vld [vmem:[%s1101 + $0x1a8] sm:$0xff]
        %v2295 = vld [vmem:[%s1101 + $0x1b0] sm:$0xff]
        %v2296 = vld [vmem:[%s1101 + $0x1b8] sm:$0xff]
        %v2297 = vld [vmem:[%s1101 + $0x1c0] sm:$0xff]
        %v2298 = vld [vmem:[%s1101 + $0x1c8] sm:$0xff]
        %v2299 = vld [vmem:[%s1101 + $0x1d0] sm:$0xff]
        %v2300 = vld [vmem:[%s1101 + $0x1d8] sm:$0xff]
        %v2301 = vld [vmem:[%s1101 + $0x1e0] sm:$0xff]
        %v2302 = vld [vmem:[%s1101 + $0x1e8] sm:$0xff]
        %v2303 = vld [vmem:[%s1101 + $0x1f0] sm:$0xff]
        %v2304 = vld [vmem:[%s1101 + $0x1f8] sm:$0xff]
        %v2305 = vld [vmem:[%s1166] sm:$0xff]
        %v2306 = vld [vmem:[%s1166 + $0x8] sm:$0xff]
        %v2307 = vld [vmem:[%s1166 + $0x10] sm:$0xff]
        %v2308 = vld [vmem:[%s1166 + $0x18] sm:$0xff]
        %v2373 = vunpack.c.l.b16 %v2241
        %v2374 = vunpack.c.h.b16 %v2241
        %v2375 = vunpack.c.l.b16 %v2242
        %v2376 = vunpack.c.h.b16 %v2242
        %v2377 = vunpack.c.l.b16 %v2243
        %v2378 = vunpack.c.h.b16 %v2243
        %v2379 = vunpack.c.l.b16 %v2244
        %v2380 = vunpack.c.h.b16 %v2244
        %v2381 = vunpack.c.l.b16 %v2245
        %v2382 = vunpack.c.h.b16 %v2245
        %v2383 = vunpack.c.l.b16 %v2246
        %v2384 = vunpack.c.h.b16 %v2246
        %v2385 = vunpack.c.l.b16 %v2247
        %v2386 = vunpack.c.h.b16 %v2247
        %v2387 = vunpack.c.l.b16 %v2248
        %v2388 = vunpack.c.h.b16 %v2248
        %v2389 = vunpack.c.l.b16 %v2249
        %v2390 = vunpack.c.h.b16 %v2249
        %v2391 = vunpack.c.l.b16 %v2250
        %v2392 = vunpack.c.h.b16 %v2250
        %v2393 = vunpack.c.l.b16 %v2251
        %v2394 = vunpack.c.h.b16 %v2251
        %v2395 = vunpack.c.l.b16 %v2252
        %v2396 = vunpack.c.h.b16 %v2252
        %v2397 = vunpack.c.l.b16 %v2253
        %v2398 = vunpack.c.h.b16 %v2253
        %v2399 = vunpack.c.l.b16 %v2254
        %v2400 = vunpack.c.h.b16 %v2254
        %v2401 = vunpack.c.l.b16 %v2255
        %v2402 = vunpack.c.h.b16 %v2255
        %v2403 = vunpack.c.l.b16 %v2256
        %v2404 = vunpack.c.h.b16 %v2256
        %v2405 = vunpack.c.l.b16 %v2257
        %v2406 = vunpack.c.h.b16 %v2257
        %v2407 = vunpack.c.l.b16 %v2258
        %v2408 = vunpack.c.h.b16 %v2258
        %v2409 = vunpack.c.l.b16 %v2259
        %v2410 = vunpack.c.h.b16 %v2259
        %v2411 = vunpack.c.l.b16 %v2260
        %v2412 = vunpack.c.h.b16 %v2260
        %v2413 = vunpack.c.l.b16 %v2261
        %v2414 = vunpack.c.h.b16 %v2261
        %v2415 = vunpack.c.l.b16 %v2262
        %v2416 = vunpack.c.h.b16 %v2262
        %v2417 = vunpack.c.l.b16 %v2263
        %v2418 = vunpack.c.h.b16 %v2263
        %v2419 = vunpack.c.l.b16 %v2264
        %v2420 = vunpack.c.h.b16 %v2264
        %v2421 = vunpack.c.l.b16 %v2265
        %v2422 = vunpack.c.h.b16 %v2265
        %v2423 = vunpack.c.l.b16 %v2266
        %v2424 = vunpack.c.h.b16 %v2266
        %v2425 = vunpack.c.l.b16 %v2267
        %v2426 = vunpack.c.h.b16 %v2267
        %v2427 = vunpack.c.l.b16 %v2268
        %v2428 = vunpack.c.h.b16 %v2268
        %v2429 = vunpack.c.l.b16 %v2269
        %v2430 = vunpack.c.h.b16 %v2269
        %v2431 = vunpack.c.l.b16 %v2270
        %v2432 = vunpack.c.h.b16 %v2270
        %v2433 = vunpack.c.l.b16 %v2271
        %v2434 = vunpack.c.h.b16 %v2271
        %v2435 = vunpack.c.l.b16 %v2272
        %v2436 = vunpack.c.h.b16 %v2272
        %v2437 = vunpack.c.l.b16 %v2273
        %v2438 = vunpack.c.h.b16 %v2273
        %v2439 = vunpack.c.l.b16 %v2274
        %v2440 = vunpack.c.h.b16 %v2274
        %v2441 = vunpack.c.l.b16 %v2275
        %v2442 = vunpack.c.h.b16 %v2275
        %v2443 = vunpack.c.l.b16 %v2276
        %v2444 = vunpack.c.h.b16 %v2276
        %v2445 = vunpack.c.l.b16 %v2277
        %v2446 = vunpack.c.h.b16 %v2277
        %v2447 = vunpack.c.l.b16 %v2278
        %v2448 = vunpack.c.h.b16 %v2278
        %v2449 = vunpack.c.l.b16 %v2279
        %v2450 = vunpack.c.h.b16 %v2279
        %v2451 = vunpack.c.l.b16 %v2280
        %v2452 = vunpack.c.h.b16 %v2280
        %v2453 = vunpack.c.l.b16 %v2281
        %v2454 = vunpack.c.h.b16 %v2281
        %v2455 = vunpack.c.l.b16 %v2282
        %v2456 = vunpack.c.h.b16 %v2282
        %v2457 = vunpack.c.l.b16 %v2283
        %v2458 = vunpack.c.h.b16 %v2283
        %v2459 = vunpack.c.l.b16 %v2284
        %v2460 = vunpack.c.h.b16 %v2284
        %v2461 = vunpack.c.l.b16 %v2285
        %v2462 = vunpack.c.h.b16 %v2285
        %v2463 = vunpack.c.l.b16 %v2286
        %v2464 = vunpack.c.h.b16 %v2286
        %v2465 = vunpack.c.l.b16 %v2287
        %v2466 = vunpack.c.h.b16 %v2287
        %v2467 = vunpack.c.l.b16 %v2288
        %v2468 = vunpack.c.h.b16 %v2288
        %v2469 = vunpack.c.l.b16 %v2289
        %v2470 = vunpack.c.h.b16 %v2289
        %v2471 = vunpack.c.l.b16 %v2290
        %v2472 = vunpack.c.h.b16 %v2290
        %v2473 = vunpack.c.l.b16 %v2291
        %v2474 = vunpack.c.h.b16 %v2291
        %v2475 = vunpack.c.l.b16 %v2292
        %v2476 = vunpack.c.h.b16 %v2292
        %v2477 = vunpack.c.l.b16 %v2293
        %v2478 = vunpack.c.h.b16 %v2293
        %v2479 = vunpack.c.l.b16 %v2294
        %v2480 = vunpack.c.h.b16 %v2294
        %v2481 = vunpack.c.l.b16 %v2295
        %v2482 = vunpack.c.h.b16 %v2295
        %v2483 = vunpack.c.l.b16 %v2296
        %v2484 = vunpack.c.h.b16 %v2296
        %v2485 = vunpack.c.l.b16 %v2297
        %v2486 = vunpack.c.h.b16 %v2297
        %v2487 = vunpack.c.l.b16 %v2298
        %v2488 = vunpack.c.h.b16 %v2298
        %v2489 = vunpack.c.l.b16 %v2299
        %v2490 = vunpack.c.h.b16 %v2299
        %v2491 = vunpack.c.l.b16 %v2300
        %v2492 = vunpack.c.h.b16 %v2300
        %v2493 = vunpack.c.l.b16 %v2301
        %v2494 = vunpack.c.h.b16 %v2301
        %v2495 = vunpack.c.l.b16 %v2302
        %v2496 = vunpack.c.h.b16 %v2302
        %v2497 = vunpack.c.l.b16 %v2303
        %v2498 = vunpack.c.h.b16 %v2303
        %v2499 = vunpack.c.l.b16 %v2304
        %v2500 = vunpack.c.h.b16 %v2304
        %v2501 = vpack.c.b16 %v2377, %v2373
        %v2502 = vpack.c.b16 %v2378, %v2374
        %v2503 = vpack.c.b16 %v2379, %v2375
        %v2504 = vpack.c.b16 %v2380, %v2376
        %v2505 = vpack.c.b16 %v2385, %v2381
        %v2506 = vpack.c.b16 %v2386, %v2382
        %v2507 = vpack.c.b16 %v2387, %v2383
        %v2508 = vpack.c.b16 %v2388, %v2384
        %v2509 = vpack.c.b16 %v2393, %v2389
        %v2510 = vpack.c.b16 %v2394, %v2390
        %v2511 = vpack.c.b16 %v2395, %v2391
        %v2512 = vpack.c.b16 %v2396, %v2392
        %v2513 = vpack.c.b16 %v2401, %v2397
        %v2514 = vpack.c.b16 %v2402, %v2398
        %v2515 = vpack.c.b16 %v2403, %v2399
        %v2516 = vpack.c.b16 %v2404, %v2400
        %v2517 = vpack.c.b16 %v2409, %v2405
        %v2518 = vpack.c.b16 %v2410, %v2406
        %v2519 = vpack.c.b16 %v2411, %v2407
        %v2520 = vpack.c.b16 %v2412, %v2408
        %v2521 = vpack.c.b16 %v2417, %v2413
        %v2522 = vpack.c.b16 %v2418, %v2414
        %v2523 = vpack.c.b16 %v2419, %v2415
        %v2524 = vpack.c.b16 %v2420, %v2416
        %v2525 = vpack.c.b16 %v2425, %v2421
        %v2526 = vpack.c.b16 %v2426, %v2422
        %v2527 = vpack.c.b16 %v2427, %v2423
        %v2528 = vpack.c.b16 %v2428, %v2424
        %v2529 = vpack.c.b16 %v2433, %v2429
        %v2530 = vpack.c.b16 %v2434, %v2430
        %v2531 = vpack.c.b16 %v2435, %v2431
        %v2532 = vpack.c.b16 %v2436, %v2432
        %v2533 = vpack.c.b16 %v2441, %v2437
        %v2534 = vpack.c.b16 %v2442, %v2438
        %v2535 = vpack.c.b16 %v2443, %v2439
        %v2536 = vpack.c.b16 %v2444, %v2440
        %v2537 = vpack.c.b16 %v2449, %v2445
        %v2538 = vpack.c.b16 %v2450, %v2446
        %v2539 = vpack.c.b16 %v2451, %v2447
        %v2540 = vpack.c.b16 %v2452, %v2448
        %v2541 = vpack.c.b16 %v2457, %v2453
        %v2542 = vpack.c.b16 %v2458, %v2454
        %v2543 = vpack.c.b16 %v2459, %v2455
        %v2544 = vpack.c.b16 %v2460, %v2456
        %v2545 = vpack.c.b16 %v2465, %v2461
        %v2546 = vpack.c.b16 %v2466, %v2462
        %v2547 = vpack.c.b16 %v2467, %v2463
        %v2548 = vpack.c.b16 %v2468, %v2464
        %v2549 = vpack.c.b16 %v2473, %v2469
        %v2550 = vpack.c.b16 %v2474, %v2470
        %v2551 = vpack.c.b16 %v2475, %v2471
        %v2552 = vpack.c.b16 %v2476, %v2472
        %v2553 = vpack.c.b16 %v2481, %v2477
        %v2554 = vpack.c.b16 %v2482, %v2478
        %v2555 = vpack.c.b16 %v2483, %v2479
        %v2556 = vpack.c.b16 %v2484, %v2480
        %v2557 = vpack.c.b16 %v2489, %v2485
        %v2558 = vpack.c.b16 %v2490, %v2486
        %v2559 = vpack.c.b16 %v2491, %v2487
        %v2560 = vpack.c.b16 %v2492, %v2488
        %v2561 = vpack.c.b16 %v2497, %v2493
        %v2562 = vpack.c.b16 %v2498, %v2494
        %v2563 = vpack.c.b16 %v2499, %v2495
        %v2564 = vpack.c.b16 %v2500, %v2496
        %2629 = vmatprep.subr.bf16.mxu0 %v2530
        %2630 = vmatpush1.bf16.msra.mxu0 %v2529
        %2631 = vmatprep.subr.bf16.mxu0 %v2526
        %2632 = vmatpush1.bf16.msra.mxu0 %v2525
        %2633 = vmatprep.subr.bf16.mxu0 %v2522
        %2634 = vmatpush1.bf16.msra.mxu0 %v2521
        %2635 = vmatprep.subr.bf16.mxu0 %v2518
        %2636 = vmatpush1.bf16.msra.mxu0 %v2517
        %2637 = vmatprep.subr.bf16.mxu0 %v2514
        %2638 = vmatpush1.bf16.msra.mxu0 %v2513
        %2639 = vmatprep.subr.bf16.mxu0 %v2510
        %2640 = vmatpush1.bf16.msra.mxu0 %v2509
        %2641 = vmatprep.subr.bf16.mxu0 %v2506
        %2642 = vmatpush1.bf16.msra.mxu0 %v2505
        %2643 = vmatprep.subr.bf16.mxu0 %v2502
        %2644 = vmatpush1.bf16.msra.mxu0 %v2501
        %2645 = vmatprep.subr.bf16.mxu0 %v2562
        %2646 = vmatpush2.bf16.msra.mxu0 %v2561
        %2647 = vmatprep.subr.bf16.mxu0 %v2558
        %2648 = vmatpush2.bf16.msra.mxu0 %v2557
        %2649 = vmatprep.subr.bf16.mxu0 %v2554
        %2650 = vmatpush2.bf16.msra.mxu0 %v2553
        %2651 = vmatprep.subr.bf16.mxu0 %v2550
        %2652 = vmatpush2.bf16.msra.mxu0 %v2549
        %2653 = vmatprep.subr.bf16.mxu0 %v2546
        %2654 = vmatpush2.bf16.msra.mxu0 %v2545
        %2655 = vmatprep.subr.bf16.mxu0 %v2542
        %2656 = vmatpush2.bf16.msra.mxu0 %v2541
        %2657 = vmatprep.subr.bf16.mxu0 %v2538
        %2658 = vmatpush2.bf16.msra.mxu0 %v2537
        %2659 = vmatprep.subr.bf16.mxu0 %v2534
        %2660 = vmatpush2.bf16.msra.mxu0 %v2533
        %2661 = vmatprep.mubr.bf16.mxu0 %v2240
        %2662 = vmatmul.mubr.bf16.gmra.mxu0 %v2239
        %v2663 = vpop.f32.mrf.mxu0
        %v2664 = vadd.f32 %v2305, %v2663
        %v2665 = vpop.f32.mrf.mxu0
        %v2666 = vadd.f32 %v2306, %v2665
        %v2667 = vpop.f32.mrf.mxu0
        %v2668 = vpop.f32.mrf.mxu0
        %2669 = vdwg.mxu0
        %2670 = vmatprep.subr.bf16.mxu0 %v2532
        %2671 = vmatpush1.bf16.msra.mxu0 %v2531
        %2672 = vmatprep.subr.bf16.mxu0 %v2528
        %2673 = vmatpush1.bf16.msra.mxu0 %v2527
        %2674 = vmatprep.subr.bf16.mxu0 %v2524
        %2675 = vmatpush1.bf16.msra.mxu0 %v2523
        %2676 = vmatprep.subr.bf16.mxu0 %v2520
        %2677 = vmatpush1.bf16.msra.mxu0 %v2519
        %2678 = vmatprep.subr.bf16.mxu0 %v2516
        %2679 = vmatpush1.bf16.msra.mxu0 %v2515
        %2680 = vmatprep.subr.bf16.mxu0 %v2512
        %2681 = vmatpush1.bf16.msra.mxu0 %v2511
        %2682 = vmatprep.subr.bf16.mxu0 %v2508
        %2683 = vmatpush1.bf16.msra.mxu0 %v2507
        %2684 = vmatprep.subr.bf16.mxu0 %v2504
        %2685 = vmatpush1.bf16.msra.mxu0 %v2503
        %2686 = vmatprep.subr.bf16.mxu0 %v2564
        %2687 = vmatpush2.bf16.msra.mxu0 %v2563
        %2688 = vmatprep.subr.bf16.mxu0 %v2560
        %2689 = vmatpush2.bf16.msra.mxu0 %v2559
        %2690 = vmatprep.subr.bf16.mxu0 %v2556
        %2691 = vmatpush2.bf16.msra.mxu0 %v2555
        %2692 = vmatprep.subr.bf16.mxu0 %v2552
        %2693 = vmatpush2.bf16.msra.mxu0 %v2551
        %2694 = vmatprep.subr.bf16.mxu0 %v2548
        %2695 = vmatpush2.bf16.msra.mxu0 %v2547
        %2696 = vmatprep.subr.bf16.mxu0 %v2544
        %2697 = vmatpush2.bf16.msra.mxu0 %v2543
        %2698 = vmatprep.subr.bf16.mxu0 %v2540
        %2699 = vmatpush2.bf16.msra.mxu0 %v2539
        %2700 = vmatprep.subr.bf16.mxu0 %v2536
        %2701 = vmatpush2.bf16.msra.mxu0 %v2535
        %2702 = vmatprep.mubr.bf16.mxu0 %v2240
        %2703 = vmatmul.mubr.bf16.gmra.mxu0 %v2239
        %v2704 = vpop.f32.mrf.mxu0
        %v2705 = vadd.f32 %v2307, %v2704
        %v2706 = vpop.f32.mrf.mxu0
        %v2707 = vadd.f32 %v2308, %v2706
        %v2708 = vpop.f32.mrf.mxu0
        %v2709 = vpop.f32.mrf.mxu0
        %2710 = vdwg.mxu0
        %v2711 = vxor.u32 %v2664, 2147483648
        %v2712 = vxor.u32 %v2666, 2147483648
        %v2713 = vxor.u32 %v2705, 2147483648
        %v2714 = vmul.f32 %v2711, 1.442695
        %v2715 = vpow.pop %v2714
        %v2716 = vmul.f32 %v2712, 1.442695
        %v2717 = vpow.pop %v2716
        %v2718 = vmul.f32 %v2713, 1.442695
        %v2719 = vpow.pop %v2718
        %v2720 = vadd.f32 %v2715, 1.0
        %v2721 = vadd.f32 %v2717, 1.0
        %v2722 = vadd.f32 %v2719, 1.0
        %v2723 = vrcp.pop %v2720
        %v2724 = vmul.f32 1.0, %v2723
        %v2725 = vrcp.pop %v2721
        %v2726 = vmul.f32 1.0, %v2725
        %v2727 = vrcp.pop %v2722
        %v2728 = vmul.f32 1.0, %v2727
        %v2729 = vtanh.pop %v2707
        %v2730 = vld [vmem:[%s1592] sm:$0xff]
        %v2731 = vmul.f32 %v2726, %v2730
        %v2732 = vmul.f32 %v2724, %v2729
        %v2733 = vadd.f32 %v2731, %v2732
        %v2734 = vtanh.pop %v2733
        %v2735 = vmul.f32 %v2728, %v2734
        %2736 = vst [vmem:[%s1097] sm:$0xff] %v2735
        %2737 = vst [vmem:[%s1592] sm:$0xff] %v2733
        %v2738 = vpack.c.bf16 %v2735, %v2735
        %2739 = vmatprep.subr.bf16.mxu0 0
        %2740 = vmatpush1.bf16.msra.mxu0 %v1641
        %2741 = vmatprep.subr.bf16.mxu0 0
        %2742 = vmatpush1.bf16.msra.mxu0 %v1640
        %2743 = vmatprep.subr.bf16.mxu0 0
        %2744 = vmatpush1.bf16.msra.mxu0 %v1639
        %2745 = vmatprep.subr.bf16.mxu0 0
        %2746 = vmatpush1.bf16.msra.mxu0 %v1638
        %2747 = vmatprep.subr.bf16.mxu0 0
        %2748 = vmatpush1.bf16.msra.mxu0 %v1637
        %2749 = vmatprep.subr.bf16.mxu0 0
        %2750 = vmatpush1.bf16.msra.mxu0 %v1636
        %2751 = vmatprep.subr.bf16.mxu0 0
        %2752 = vmatpush1.bf16.msra.mxu0 %v1635
        %2753 = vmatprep.subr.bf16.mxu0 0
        %2754 = vmatpush1.bf16.msra.mxu0 %v1634
        %2755 = vmatprep.subr.bf16.mxu0 0
        %2756 = vmatpush2.bf16.msra.mxu0 0
        %2757 = vmatprep.subr.bf16.mxu0 0
        %2758 = vmatpush2.bf16.msra.mxu0 0
        %2759 = vmatprep.subr.bf16.mxu0 0
        %2760 = vmatpush2.bf16.msra.mxu0 0
        %2761 = vmatprep.subr.bf16.mxu0 0
        %2762 = vmatpush2.bf16.msra.mxu0 0
        %2763 = vmatprep.subr.bf16.mxu0 0
        %2764 = vmatpush2.bf16.msra.mxu0 0
        %2765 = vmatprep.subr.bf16.mxu0 0
        %2766 = vmatpush2.bf16.msra.mxu0 0
        %2767 = vmatprep.subr.bf16.mxu0 0
        %2768 = vmatpush2.bf16.msra.mxu0 0
        %2769 = vmatprep.subr.bf16.mxu0 0
        %2770 = vmatpush2.bf16.msra.mxu0 0
        %2771 = vmatprep.mubr.bf16.mxu0 0
        %2772 = vmatmul.mubr.bf16.gmra.mxu0 %v2738
        %v2773 = vpop.f32.mrf.mxu0
        %v2774 = vadd.f32 %v526, %v2773
        %v2775 = vpop.f32.mrf.mxu0
        %v2776 = vpop.f32.mrf.mxu0
        %v2777 = vpop.f32.mrf.mxu0
        %2778 = vdwg.mxu0
        %v2779 = vtanh.pop %v2774
        %s2780 = scalar_lea.vmem %s481, 8 [#allocation14]
        %2781 = vst [vmem:[%s2780] sm:$0xff] %v2779
        %s2782 = scalar_lea.vmem %s423, 16 [#allocation2]
        %v2783 = vld [vmem:[%s2782] sm:$0xff]
        %v2784 = vpack.c.bf16 %v2783, %v2783
        %v2786 = vsel %vm553, %v2784, 0
        %2788 = vmatprep.subr.bf16.mxu0 0
        %2789 = vmatpush1.bf16.msra.mxu0 0
        %2790 = vmatprep.subr.bf16.mxu0 0
        %2791 = vmatpush1.bf16.msra.mxu0 0
        %2792 = vmatprep.subr.bf16.mxu0 0
        %2793 = vmatpush1.bf16.msra.mxu0 0
        %2794 = vmatprep.subr.bf16.mxu0 0
        %2795 = vmatpush1.bf16.msra.mxu0 0
        %2796 = vmatprep.subr.bf16.mxu0 0
        %2797 = vmatpush1.bf16.msra.mxu0 %v548
        %2798 = vmatprep.subr.bf16.mxu0 0
        %2799 = vmatpush1.bf16.msra.mxu0 %v547
        %2800 = vmatprep.subr.bf16.mxu0 0
        %2801 = vmatpush1.bf16.msra.mxu0 %v546
        %2802 = vmatprep.subr.bf16.mxu0 0
        %2803 = vmatpush1.bf16.msra.mxu0 %v545
        %2804 = vmatprep.subr.bf16.mxu0 0
        %2805 = vmatpush2.bf16.msra.mxu0 0
        %2806 = vmatprep.subr.bf16.mxu0 0
        %2807 = vmatpush2.bf16.msra.mxu0 0
        %2808 = vmatprep.subr.bf16.mxu0 0
        %2809 = vmatpush2.bf16.msra.mxu0 0
        %2810 = vmatprep.subr.bf16.mxu0 0
        %2811 = vmatpush2.bf16.msra.mxu0 0
        %2812 = vmatprep.subr.bf16.mxu0 0
        %2813 = vmatpush2.bf16.msra.mxu0 0
        %2814 = vmatprep.subr.bf16.mxu0 0
        %2815 = vmatpush2.bf16.msra.mxu0 0
        %2816 = vmatprep.subr.bf16.mxu0 0
        %2817 = vmatpush2.bf16.msra.mxu0 0
        %2818 = vmatprep.subr.bf16.mxu0 0
        %2819 = vmatpush2.bf16.msra.mxu0 0
        %2820 = vmatprep.mubr.bf16.mxu0 0
        %2821 = vmatmul.mubr.bf16.gmra.mxu0 %v2786
        %v2822 = vpop.f32.mrf.mxu0
        %v2823 = vadd.f32 %v509, %v2822
        %v2824 = vpop.f32.mrf.mxu0
        %v2825 = vpop.f32.mrf.mxu0
        %v2826 = vpop.f32.mrf.mxu0
        %2827 = vdwg.mxu0
        %v2828 = vld [vmem:[#allocation15] sm:$0xff]
        %v2829 = vpack.c.bf16 %v2823, %v2823
        %v2830 = vpack.c.bf16 %v2828, %v2828
        %v2831 = vld [vmem:[#allocation7] sm:$0xff]
        %v2832 = vld [vmem:[#allocation7 + $0x8] sm:$0xff]
        %v2833 = vld [vmem:[#allocation7 + $0x10] sm:$0xff]
        %v2834 = vld [vmem:[#allocation7 + $0x18] sm:$0xff]
        %v2835 = vld [vmem:[#allocation7 + $0x20] sm:$0xff]
        %v2836 = vld [vmem:[#allocation7 + $0x28] sm:$0xff]
        %v2837 = vld [vmem:[#allocation7 + $0x30] sm:$0xff]
        %v2838 = vld [vmem:[#allocation7 + $0x38] sm:$0xff]
        %v2839 = vld [vmem:[#allocation7 + $0x40] sm:$0xff]
        %v2840 = vld [vmem:[#allocation7 + $0x48] sm:$0xff]
        %v2841 = vld [vmem:[#allocation7 + $0x50] sm:$0xff]
        %v2842 = vld [vmem:[#allocation7 + $0x58] sm:$0xff]
        %v2843 = vld [vmem:[#allocation7 + $0x60] sm:$0xff]
        %v2844 = vld [vmem:[#allocation7 + $0x68] sm:$0xff]
        %v2845 = vld [vmem:[#allocation7 + $0x70] sm:$0xff]
        %v2846 = vld [vmem:[#allocation7 + $0x78] sm:$0xff]
        %v2847 = vld [vmem:[#allocation7 + $0x80] sm:$0xff]
        %v2848 = vld [vmem:[#allocation7 + $0x88] sm:$0xff]
        %v2849 = vld [vmem:[#allocation7 + $0x90] sm:$0xff]
        %v2850 = vld [vmem:[#allocation7 + $0x98] sm:$0xff]
        %v2851 = vld [vmem:[#allocation7 + $0xa0] sm:$0xff]
        %v2852 = vld [vmem:[#allocation7 + $0xa8] sm:$0xff]
        %v2853 = vld [vmem:[#allocation7 + $0xb0] sm:$0xff]
        %v2854 = vld [vmem:[#allocation7 + $0xb8] sm:$0xff]
        %v2855 = vld [vmem:[#allocation7 + $0xc0] sm:$0xff]
        %v2856 = vld [vmem:[#allocation7 + $0xc8] sm:$0xff]
        %v2857 = vld [vmem:[#allocation7 + $0xd0] sm:$0xff]
        %v2858 = vld [vmem:[#allocation7 + $0xd8] sm:$0xff]
        %v2859 = vld [vmem:[#allocation7 + $0xe0] sm:$0xff]
        %v2860 = vld [vmem:[#allocation7 + $0xe8] sm:$0xff]
        %v2861 = vld [vmem:[#allocation7 + $0xf0] sm:$0xff]
        %v2862 = vld [vmem:[#allocation7 + $0xf8] sm:$0xff]
        %v2863 = vld [vmem:[#allocation7 + $0x100] sm:$0xff]
        %v2864 = vld [vmem:[#allocation7 + $0x108] sm:$0xff]
        %v2865 = vld [vmem:[#allocation7 + $0x110] sm:$0xff]
        %v2866 = vld [vmem:[#allocation7 + $0x118] sm:$0xff]
        %v2867 = vld [vmem:[#allocation7 + $0x120] sm:$0xff]
        %v2868 = vld [vmem:[#allocation7 + $0x128] sm:$0xff]
        %v2869 = vld [vmem:[#allocation7 + $0x130] sm:$0xff]
        %v2870 = vld [vmem:[#allocation7 + $0x138] sm:$0xff]
        %v2871 = vld [vmem:[#allocation7 + $0x140] sm:$0xff]
        %v2872 = vld [vmem:[#allocation7 + $0x148] sm:$0xff]
        %v2873 = vld [vmem:[#allocation7 + $0x150] sm:$0xff]
        %v2874 = vld [vmem:[#allocation7 + $0x158] sm:$0xff]
        %v2875 = vld [vmem:[#allocation7 + $0x160] sm:$0xff]
        %v2876 = vld [vmem:[#allocation7 + $0x168] sm:$0xff]
        %v2877 = vld [vmem:[#allocation7 + $0x170] sm:$0xff]
        %v2878 = vld [vmem:[#allocation7 + $0x178] sm:$0xff]
        %v2879 = vld [vmem:[#allocation7 + $0x180] sm:$0xff]
        %v2880 = vld [vmem:[#allocation7 + $0x188] sm:$0xff]
        %v2881 = vld [vmem:[#allocation7 + $0x190] sm:$0xff]
        %v2882 = vld [vmem:[#allocation7 + $0x198] sm:$0xff]
        %v2883 = vld [vmem:[#allocation7 + $0x1a0] sm:$0xff]
        %v2884 = vld [vmem:[#allocation7 + $0x1a8] sm:$0xff]
        %v2885 = vld [vmem:[#allocation7 + $0x1b0] sm:$0xff]
        %v2886 = vld [vmem:[#allocation7 + $0x1b8] sm:$0xff]
        %v2887 = vld [vmem:[#allocation7 + $0x1c0] sm:$0xff]
        %v2888 = vld [vmem:[#allocation7 + $0x1c8] sm:$0xff]
        %v2889 = vld [vmem:[#allocation7 + $0x1d0] sm:$0xff]
        %v2890 = vld [vmem:[#allocation7 + $0x1d8] sm:$0xff]
        %v2891 = vld [vmem:[#allocation7 + $0x1e0] sm:$0xff]
        %v2892 = vld [vmem:[#allocation7 + $0x1e8] sm:$0xff]
        %v2893 = vld [vmem:[#allocation7 + $0x1f0] sm:$0xff]
        %v2894 = vld [vmem:[#allocation7 + $0x1f8] sm:$0xff]
        %v2895 = vld [vmem:[%s4] sm:$0xff]
        %v2896 = vld [vmem:[%s4 + $0x8] sm:$0xff]
        %v2897 = vld [vmem:[%s4 + $0x10] sm:$0xff]
        %v2898 = vld [vmem:[%s4 + $0x18] sm:$0xff]
        %v2963 = vunpack.c.l.b16 %v2831
        %v2964 = vunpack.c.h.b16 %v2831
        %v2965 = vunpack.c.l.b16 %v2832
        %v2966 = vunpack.c.h.b16 %v2832
        %v2967 = vunpack.c.l.b16 %v2833
        %v2968 = vunpack.c.h.b16 %v2833
        %v2969 = vunpack.c.l.b16 %v2834
        %v2970 = vunpack.c.h.b16 %v2834
        %v2971 = vunpack.c.l.b16 %v2835
        %v2972 = vunpack.c.h.b16 %v2835
        %v2973 = vunpack.c.l.b16 %v2836
        %v2974 = vunpack.c.h.b16 %v2836
        %v2975 = vunpack.c.l.b16 %v2837
        %v2976 = vunpack.c.h.b16 %v2837
        %v2977 = vunpack.c.l.b16 %v2838
        %v2978 = vunpack.c.h.b16 %v2838
        %v2979 = vunpack.c.l.b16 %v2839
        %v2980 = vunpack.c.h.b16 %v2839
        %v2981 = vunpack.c.l.b16 %v2840
        %v2982 = vunpack.c.h.b16 %v2840
        %v2983 = vunpack.c.l.b16 %v2841
        %v2984 = vunpack.c.h.b16 %v2841
        %v2985 = vunpack.c.l.b16 %v2842
        %v2986 = vunpack.c.h.b16 %v2842
        %v2987 = vunpack.c.l.b16 %v2843
        %v2988 = vunpack.c.h.b16 %v2843
        %v2989 = vunpack.c.l.b16 %v2844
        %v2990 = vunpack.c.h.b16 %v2844
        %v2991 = vunpack.c.l.b16 %v2845
        %v2992 = vunpack.c.h.b16 %v2845
        %v2993 = vunpack.c.l.b16 %v2846
        %v2994 = vunpack.c.h.b16 %v2846
        %v2995 = vunpack.c.l.b16 %v2847
        %v2996 = vunpack.c.h.b16 %v2847
        %v2997 = vunpack.c.l.b16 %v2848
        %v2998 = vunpack.c.h.b16 %v2848
        %v2999 = vunpack.c.l.b16 %v2849
        %v3000 = vunpack.c.h.b16 %v2849
        %v3001 = vunpack.c.l.b16 %v2850
        %v3002 = vunpack.c.h.b16 %v2850
        %v3003 = vunpack.c.l.b16 %v2851
        %v3004 = vunpack.c.h.b16 %v2851
        %v3005 = vunpack.c.l.b16 %v2852
        %v3006 = vunpack.c.h.b16 %v2852
        %v3007 = vunpack.c.l.b16 %v2853
        %v3008 = vunpack.c.h.b16 %v2853
        %v3009 = vunpack.c.l.b16 %v2854
        %v3010 = vunpack.c.h.b16 %v2854
        %v3011 = vunpack.c.l.b16 %v2855
        %v3012 = vunpack.c.h.b16 %v2855
        %v3013 = vunpack.c.l.b16 %v2856
        %v3014 = vunpack.c.h.b16 %v2856
        %v3015 = vunpack.c.l.b16 %v2857
        %v3016 = vunpack.c.h.b16 %v2857
        %v3017 = vunpack.c.l.b16 %v2858
        %v3018 = vunpack.c.h.b16 %v2858
        %v3019 = vunpack.c.l.b16 %v2859
        %v3020 = vunpack.c.h.b16 %v2859
        %v3021 = vunpack.c.l.b16 %v2860
        %v3022 = vunpack.c.h.b16 %v2860
        %v3023 = vunpack.c.l.b16 %v2861
        %v3024 = vunpack.c.h.b16 %v2861
        %v3025 = vunpack.c.l.b16 %v2862
        %v3026 = vunpack.c.h.b16 %v2862
        %v3027 = vunpack.c.l.b16 %v2863
        %v3028 = vunpack.c.h.b16 %v2863
        %v3029 = vunpack.c.l.b16 %v2864
        %v3030 = vunpack.c.h.b16 %v2864
        %v3031 = vunpack.c.l.b16 %v2865
        %v3032 = vunpack.c.h.b16 %v2865
        %v3033 = vunpack.c.l.b16 %v2866
        %v3034 = vunpack.c.h.b16 %v2866
        %v3035 = vunpack.c.l.b16 %v2867
        %v3036 = vunpack.c.h.b16 %v2867
        %v3037 = vunpack.c.l.b16 %v2868
        %v3038 = vunpack.c.h.b16 %v2868
        %v3039 = vunpack.c.l.b16 %v2869
        %v3040 = vunpack.c.h.b16 %v2869
        %v3041 = vunpack.c.l.b16 %v2870
        %v3042 = vunpack.c.h.b16 %v2870
        %v3043 = vunpack.c.l.b16 %v2871
        %v3044 = vunpack.c.h.b16 %v2871
        %v3045 = vunpack.c.l.b16 %v2872
        %v3046 = vunpack.c.h.b16 %v2872
        %v3047 = vunpack.c.l.b16 %v2873
        %v3048 = vunpack.c.h.b16 %v2873
        %v3049 = vunpack.c.l.b16 %v2874
        %v3050 = vunpack.c.h.b16 %v2874
        %v3051 = vunpack.c.l.b16 %v2875
        %v3052 = vunpack.c.h.b16 %v2875
        %v3053 = vunpack.c.l.b16 %v2876
        %v3054 = vunpack.c.h.b16 %v2876
        %v3055 = vunpack.c.l.b16 %v2877
        %v3056 = vunpack.c.h.b16 %v2877
        %v3057 = vunpack.c.l.b16 %v2878
        %v3058 = vunpack.c.h.b16 %v2878
        %v3059 = vunpack.c.l.b16 %v2879
        %v3060 = vunpack.c.h.b16 %v2879
        %v3061 = vunpack.c.l.b16 %v2880
        %v3062 = vunpack.c.h.b16 %v2880
        %v3063 = vunpack.c.l.b16 %v2881
        %v3064 = vunpack.c.h.b16 %v2881
        %v3065 = vunpack.c.l.b16 %v2882
        %v3066 = vunpack.c.h.b16 %v2882
        %v3067 = vunpack.c.l.b16 %v2883
        %v3068 = vunpack.c.h.b16 %v2883
        %v3069 = vunpack.c.l.b16 %v2884
        %v3070 = vunpack.c.h.b16 %v2884
        %v3071 = vunpack.c.l.b16 %v2885
        %v3072 = vunpack.c.h.b16 %v2885
        %v3073 = vunpack.c.l.b16 %v2886
        %v3074 = vunpack.c.h.b16 %v2886
        %v3075 = vunpack.c.l.b16 %v2887
        %v3076 = vunpack.c.h.b16 %v2887
        %v3077 = vunpack.c.l.b16 %v2888
        %v3078 = vunpack.c.h.b16 %v2888
        %v3079 = vunpack.c.l.b16 %v2889
        %v3080 = vunpack.c.h.b16 %v2889
        %v3081 = vunpack.c.l.b16 %v2890
        %v3082 = vunpack.c.h.b16 %v2890
        %v3083 = vunpack.c.l.b16 %v2891
        %v3084 = vunpack.c.h.b16 %v2891
        %v3085 = vunpack.c.l.b16 %v2892
        %v3086 = vunpack.c.h.b16 %v2892
        %v3087 = vunpack.c.l.b16 %v2893
        %v3088 = vunpack.c.h.b16 %v2893
        %v3089 = vunpack.c.l.b16 %v2894
        %v3090 = vunpack.c.h.b16 %v2894
        %v3091 = vpack.c.b16 %v2967, %v2963
        %v3092 = vpack.c.b16 %v2968, %v2964
        %v3093 = vpack.c.b16 %v2969, %v2965
        %v3094 = vpack.c.b16 %v2970, %v2966
        %v3095 = vpack.c.b16 %v2975, %v2971
        %v3096 = vpack.c.b16 %v2976, %v2972
        %v3097 = vpack.c.b16 %v2977, %v2973
        %v3098 = vpack.c.b16 %v2978, %v2974
        %v3099 = vpack.c.b16 %v2983, %v2979
        %v3100 = vpack.c.b16 %v2984, %v2980
        %v3101 = vpack.c.b16 %v2985, %v2981
        %v3102 = vpack.c.b16 %v2986, %v2982
        %v3103 = vpack.c.b16 %v2991, %v2987
        %v3104 = vpack.c.b16 %v2992, %v2988
        %v3105 = vpack.c.b16 %v2993, %v2989
        %v3106 = vpack.c.b16 %v2994, %v2990
        %v3107 = vpack.c.b16 %v2999, %v2995
        %v3108 = vpack.c.b16 %v3000, %v2996
        %v3109 = vpack.c.b16 %v3001, %v2997
        %v3110 = vpack.c.b16 %v3002, %v2998
        %v3111 = vpack.c.b16 %v3007, %v3003
        %v3112 = vpack.c.b16 %v3008, %v3004
        %v3113 = vpack.c.b16 %v3009, %v3005
        %v3114 = vpack.c.b16 %v3010, %v3006
        %v3115 = vpack.c.b16 %v3015, %v3011
        %v3116 = vpack.c.b16 %v3016, %v3012
        %v3117 = vpack.c.b16 %v3017, %v3013
        %v3118 = vpack.c.b16 %v3018, %v3014
        %v3119 = vpack.c.b16 %v3023, %v3019
        %v3120 = vpack.c.b16 %v3024, %v3020
        %v3121 = vpack.c.b16 %v3025, %v3021
        %v3122 = vpack.c.b16 %v3026, %v3022
        %v3123 = vpack.c.b16 %v3031, %v3027
        %v3124 = vpack.c.b16 %v3032, %v3028
        %v3125 = vpack.c.b16 %v3033, %v3029
        %v3126 = vpack.c.b16 %v3034, %v3030
        %v3127 = vpack.c.b16 %v3039, %v3035
        %v3128 = vpack.c.b16 %v3040, %v3036
        %v3129 = vpack.c.b16 %v3041, %v3037
        %v3130 = vpack.c.b16 %v3042, %v3038
        %v3131 = vpack.c.b16 %v3047, %v3043
        %v3132 = vpack.c.b16 %v3048, %v3044
        %v3133 = vpack.c.b16 %v3049, %v3045
        %v3134 = vpack.c.b16 %v3050, %v3046
        %v3135 = vpack.c.b16 %v3055, %v3051
        %v3136 = vpack.c.b16 %v3056, %v3052
        %v3137 = vpack.c.b16 %v3057, %v3053
        %v3138 = vpack.c.b16 %v3058, %v3054
        %v3139 = vpack.c.b16 %v3063, %v3059
        %v3140 = vpack.c.b16 %v3064, %v3060
        %v3141 = vpack.c.b16 %v3065, %v3061
        %v3142 = vpack.c.b16 %v3066, %v3062
        %v3143 = vpack.c.b16 %v3071, %v3067
        %v3144 = vpack.c.b16 %v3072, %v3068
        %v3145 = vpack.c.b16 %v3073, %v3069
        %v3146 = vpack.c.b16 %v3074, %v3070
        %v3147 = vpack.c.b16 %v3079, %v3075
        %v3148 = vpack.c.b16 %v3080, %v3076
        %v3149 = vpack.c.b16 %v3081, %v3077
        %v3150 = vpack.c.b16 %v3082, %v3078
        %v3151 = vpack.c.b16 %v3087, %v3083
        %v3152 = vpack.c.b16 %v3088, %v3084
        %v3153 = vpack.c.b16 %v3089, %v3085
        %v3154 = vpack.c.b16 %v3090, %v3086
        %3219 = vmatprep.subr.bf16.mxu0 %v3120
        %3220 = vmatpush1.bf16.msra.mxu0 %v3119
        %3221 = vmatprep.subr.bf16.mxu0 %v3116
        %3222 = vmatpush1.bf16.msra.mxu0 %v3115
        %3223 = vmatprep.subr.bf16.mxu0 %v3112
        %3224 = vmatpush1.bf16.msra.mxu0 %v3111
        %3225 = vmatprep.subr.bf16.mxu0 %v3108
        %3226 = vmatpush1.bf16.msra.mxu0 %v3107
        %3227 = vmatprep.subr.bf16.mxu0 %v3104
        %3228 = vmatpush1.bf16.msra.mxu0 %v3103
        %3229 = vmatprep.subr.bf16.mxu0 %v3100
        %3230 = vmatpush1.bf16.msra.mxu0 %v3099
        %3231 = vmatprep.subr.bf16.mxu0 %v3096
        %3232 = vmatpush1.bf16.msra.mxu0 %v3095
        %3233 = vmatprep.subr.bf16.mxu0 %v3092
        %3234 = vmatpush1.bf16.msra.mxu0 %v3091
        %3235 = vmatprep.subr.bf16.mxu0 %v3152
        %3236 = vmatpush2.bf16.msra.mxu0 %v3151
        %3237 = vmatprep.subr.bf16.mxu0 %v3148
        %3238 = vmatpush2.bf16.msra.mxu0 %v3147
        %3239 = vmatprep.subr.bf16.mxu0 %v3144
        %3240 = vmatpush2.bf16.msra.mxu0 %v3143
        %3241 = vmatprep.subr.bf16.mxu0 %v3140
        %3242 = vmatpush2.bf16.msra.mxu0 %v3139
        %3243 = vmatprep.subr.bf16.mxu0 %v3136
        %3244 = vmatpush2.bf16.msra.mxu0 %v3135
        %3245 = vmatprep.subr.bf16.mxu0 %v3132
        %3246 = vmatpush2.bf16.msra.mxu0 %v3131
        %3247 = vmatprep.subr.bf16.mxu0 %v3128
        %3248 = vmatpush2.bf16.msra.mxu0 %v3127
        %3249 = vmatprep.subr.bf16.mxu0 %v3124
        %3250 = vmatpush2.bf16.msra.mxu0 %v3123
        %3251 = vmatprep.mubr.bf16.mxu0 %v2830
        %3252 = vmatmul.mubr.bf16.gmra.mxu0 %v2829
        %v3253 = vpop.f32.mrf.mxu0
        %v3254 = vadd.f32 %v2895, %v3253
        %v3255 = vpop.f32.mrf.mxu0
        %v3256 = vadd.f32 %v2896, %v3255
        %v3257 = vpop.f32.mrf.mxu0
        %v3258 = vpop.f32.mrf.mxu0
        %3259 = vdwg.mxu0
        %3260 = vmatprep.subr.bf16.mxu0 %v3122
        %3261 = vmatpush1.bf16.msra.mxu0 %v3121
        %3262 = vmatprep.subr.bf16.mxu0 %v3118
        %3263 = vmatpush1.bf16.msra.mxu0 %v3117
        %3264 = vmatprep.subr.bf16.mxu0 %v3114
        %3265 = vmatpush1.bf16.msra.mxu0 %v3113
        %3266 = vmatprep.subr.bf16.mxu0 %v3110
        %3267 = vmatpush1.bf16.msra.mxu0 %v3109
        %3268 = vmatprep.subr.bf16.mxu0 %v3106
        %3269 = vmatpush1.bf16.msra.mxu0 %v3105
        %3270 = vmatprep.subr.bf16.mxu0 %v3102
        %3271 = vmatpush1.bf16.msra.mxu0 %v3101
        %3272 = vmatprep.subr.bf16.mxu0 %v3098
        %3273 = vmatpush1.bf16.msra.mxu0 %v3097
        %3274 = vmatprep.subr.bf16.mxu0 %v3094
        %3275 = vmatpush1.bf16.msra.mxu0 %v3093
        %3276 = vmatprep.subr.bf16.mxu0 %v3154
        %3277 = vmatpush2.bf16.msra.mxu0 %v3153
        %3278 = vmatprep.subr.bf16.mxu0 %v3150
        %3279 = vmatpush2.bf16.msra.mxu0 %v3149
        %3280 = vmatprep.subr.bf16.mxu0 %v3146
        %3281 = vmatpush2.bf16.msra.mxu0 %v3145
        %3282 = vmatprep.subr.bf16.mxu0 %v3142
        %3283 = vmatpush2.bf16.msra.mxu0 %v3141
        %3284 = vmatprep.subr.bf16.mxu0 %v3138
        %3285 = vmatpush2.bf16.msra.mxu0 %v3137
        %3286 = vmatprep.subr.bf16.mxu0 %v3134
        %3287 = vmatpush2.bf16.msra.mxu0 %v3133
        %3288 = vmatprep.subr.bf16.mxu0 %v3130
        %3289 = vmatpush2.bf16.msra.mxu0 %v3129
        %3290 = vmatprep.subr.bf16.mxu0 %v3126
        %3291 = vmatpush2.bf16.msra.mxu0 %v3125
        %3292 = vmatprep.mubr.bf16.mxu0 %v2830
        %3293 = vmatmul.mubr.bf16.gmra.mxu0 %v2829
        %v3294 = vpop.f32.mrf.mxu0
        %v3295 = vadd.f32 %v2897, %v3294
        %v3296 = vpop.f32.mrf.mxu0
        %v3297 = vadd.f32 %v2898, %v3296
        %v3298 = vpop.f32.mrf.mxu0
        %v3299 = vpop.f32.mrf.mxu0
        %3300 = vdwg.mxu0
        %v3301 = vxor.u32 %v3254, 2147483648
        %v3302 = vxor.u32 %v3256, 2147483648
        %v3303 = vxor.u32 %v3295, 2147483648
        %v3304 = vmul.f32 %v3301, 1.442695
        %v3305 = vpow.pop %v3304
        %v3306 = vmul.f32 %v3302, 1.442695
        %v3307 = vpow.pop %v3306
        %v3308 = vmul.f32 %v3303, 1.442695
        %v3309 = vpow.pop %v3308
        %v3310 = vadd.f32 %v3305, 1.0
        %v3311 = vadd.f32 %v3307, 1.0
        %v3312 = vadd.f32 %v3309, 1.0
        %v3313 = vrcp.pop %v3310
        %v3314 = vmul.f32 1.0, %v3313
        %v3315 = vrcp.pop %v3311
        %v3316 = vmul.f32 1.0, %v3315
        %v3317 = vrcp.pop %v3312
        %v3318 = vmul.f32 1.0, %v3317
        %v3319 = vtanh.pop %v3297
        %v3320 = vld [vmem:[#allocation17] sm:$0xff]
        %v3321 = vmul.f32 %v3316, %v3320
        %v3322 = vmul.f32 %v3314, %v3319
        %v3323 = vadd.f32 %v3321, %v3322
        %v3324 = vtanh.pop %v3323
        %v3325 = vmul.f32 %v3318, %v3324
        %3326 = vst [vmem:[#allocation15] sm:$0xff] %v3325
        %3327 = vst [vmem:[#allocation17] sm:$0xff] %v3323
        %v3328 = vld [vmem:[%s1097] sm:$0xff]
        %v3329 = vpack.c.bf16 %v3325, %v3325
        %v3330 = vpack.c.bf16 %v3328, %v3328
        %v3331 = vld [vmem:[%s1101] sm:$0xff]
        %v3332 = vld [vmem:[%s1101 + $0x8] sm:$0xff]
        %v3333 = vld [vmem:[%s1101 + $0x10] sm:$0xff]
        %v3334 = vld [vmem:[%s1101 + $0x18] sm:$0xff]
        %v3335 = vld [vmem:[%s1101 + $0x20] sm:$0xff]
        %v3336 = vld [vmem:[%s1101 + $0x28] sm:$0xff]
        %v3337 = vld [vmem:[%s1101 + $0x30] sm:$0xff]
        %v3338 = vld [vmem:[%s1101 + $0x38] sm:$0xff]
        %v3339 = vld [vmem:[%s1101 + $0x40] sm:$0xff]
        %v3340 = vld [vmem:[%s1101 + $0x48] sm:$0xff]
        %v3341 = vld [vmem:[%s1101 + $0x50] sm:$0xff]
        %v3342 = vld [vmem:[%s1101 + $0x58] sm:$0xff]
        %v3343 = vld [vmem:[%s1101 + $0x60] sm:$0xff]
        %v3344 = vld [vmem:[%s1101 + $0x68] sm:$0xff]
        %v3345 = vld [vmem:[%s1101 + $0x70] sm:$0xff]
        %v3346 = vld [vmem:[%s1101 + $0x78] sm:$0xff]
        %v3347 = vld [vmem:[%s1101 + $0x80] sm:$0xff]
        %v3348 = vld [vmem:[%s1101 + $0x88] sm:$0xff]
        %v3349 = vld [vmem:[%s1101 + $0x90] sm:$0xff]
        %v3350 = vld [vmem:[%s1101 + $0x98] sm:$0xff]
        %v3351 = vld [vmem:[%s1101 + $0xa0] sm:$0xff]
        %v3352 = vld [vmem:[%s1101 + $0xa8] sm:$0xff]
        %v3353 = vld [vmem:[%s1101 + $0xb0] sm:$0xff]
        %v3354 = vld [vmem:[%s1101 + $0xb8] sm:$0xff]
        %v3355 = vld [vmem:[%s1101 + $0xc0] sm:$0xff]
        %v3356 = vld [vmem:[%s1101 + $0xc8] sm:$0xff]
        %v3357 = vld [vmem:[%s1101 + $0xd0] sm:$0xff]
        %v3358 = vld [vmem:[%s1101 + $0xd8] sm:$0xff]
        %v3359 = vld [vmem:[%s1101 + $0xe0] sm:$0xff]
        %v3360 = vld [vmem:[%s1101 + $0xe8] sm:$0xff]
        %v3361 = vld [vmem:[%s1101 + $0xf0] sm:$0xff]
        %v3362 = vld [vmem:[%s1101 + $0xf8] sm:$0xff]
        %v3363 = vld [vmem:[%s1101 + $0x100] sm:$0xff]
        %v3364 = vld [vmem:[%s1101 + $0x108] sm:$0xff]
        %v3365 = vld [vmem:[%s1101 + $0x110] sm:$0xff]
        %v3366 = vld [vmem:[%s1101 + $0x118] sm:$0xff]
        %v3367 = vld [vmem:[%s1101 + $0x120] sm:$0xff]
        %v3368 = vld [vmem:[%s1101 + $0x128] sm:$0xff]
        %v3369 = vld [vmem:[%s1101 + $0x130] sm:$0xff]
        %v3370 = vld [vmem:[%s1101 + $0x138] sm:$0xff]
        %v3371 = vld [vmem:[%s1101 + $0x140] sm:$0xff]
        %v3372 = vld [vmem:[%s1101 + $0x148] sm:$0xff]
        %v3373 = vld [vmem:[%s1101 + $0x150] sm:$0xff]
        %v3374 = vld [vmem:[%s1101 + $0x158] sm:$0xff]
        %v3375 = vld [vmem:[%s1101 + $0x160] sm:$0xff]
        %v3376 = vld [vmem:[%s1101 + $0x168] sm:$0xff]
        %v3377 = vld [vmem:[%s1101 + $0x170] sm:$0xff]
        %v3378 = vld [vmem:[%s1101 + $0x178] sm:$0xff]
        %v3379 = vld [vmem:[%s1101 + $0x180] sm:$0xff]
        %v3380 = vld [vmem:[%s1101 + $0x188] sm:$0xff]
        %v3381 = vld [vmem:[%s1101 + $0x190] sm:$0xff]
        %v3382 = vld [vmem:[%s1101 + $0x198] sm:$0xff]
        %v3383 = vld [vmem:[%s1101 + $0x1a0] sm:$0xff]
        %v3384 = vld [vmem:[%s1101 + $0x1a8] sm:$0xff]
        %v3385 = vld [vmem:[%s1101 + $0x1b0] sm:$0xff]
        %v3386 = vld [vmem:[%s1101 + $0x1b8] sm:$0xff]
        %v3387 = vld [vmem:[%s1101 + $0x1c0] sm:$0xff]
        %v3388 = vld [vmem:[%s1101 + $0x1c8] sm:$0xff]
        %v3389 = vld [vmem:[%s1101 + $0x1d0] sm:$0xff]
        %v3390 = vld [vmem:[%s1101 + $0x1d8] sm:$0xff]
        %v3391 = vld [vmem:[%s1101 + $0x1e0] sm:$0xff]
        %v3392 = vld [vmem:[%s1101 + $0x1e8] sm:$0xff]
        %v3393 = vld [vmem:[%s1101 + $0x1f0] sm:$0xff]
        %v3394 = vld [vmem:[%s1101 + $0x1f8] sm:$0xff]
        %v3395 = vld [vmem:[%s1166] sm:$0xff]
        %v3396 = vld [vmem:[%s1166 + $0x8] sm:$0xff]
        %v3397 = vld [vmem:[%s1166 + $0x10] sm:$0xff]
        %v3398 = vld [vmem:[%s1166 + $0x18] sm:$0xff]
        %v3463 = vunpack.c.l.b16 %v3331
        %v3464 = vunpack.c.h.b16 %v3331
        %v3465 = vunpack.c.l.b16 %v3332
        %v3466 = vunpack.c.h.b16 %v3332
        %v3467 = vunpack.c.l.b16 %v3333
        %v3468 = vunpack.c.h.b16 %v3333
        %v3469 = vunpack.c.l.b16 %v3334
        %v3470 = vunpack.c.h.b16 %v3334
        %v3471 = vunpack.c.l.b16 %v3335
        %v3472 = vunpack.c.h.b16 %v3335
        %v3473 = vunpack.c.l.b16 %v3336
        %v3474 = vunpack.c.h.b16 %v3336
        %v3475 = vunpack.c.l.b16 %v3337
        %v3476 = vunpack.c.h.b16 %v3337
        %v3477 = vunpack.c.l.b16 %v3338
        %v3478 = vunpack.c.h.b16 %v3338
        %v3479 = vunpack.c.l.b16 %v3339
        %v3480 = vunpack.c.h.b16 %v3339
        %v3481 = vunpack.c.l.b16 %v3340
        %v3482 = vunpack.c.h.b16 %v3340
        %v3483 = vunpack.c.l.b16 %v3341
        %v3484 = vunpack.c.h.b16 %v3341
        %v3485 = vunpack.c.l.b16 %v3342
        %v3486 = vunpack.c.h.b16 %v3342
        %v3487 = vunpack.c.l.b16 %v3343
        %v3488 = vunpack.c.h.b16 %v3343
        %v3489 = vunpack.c.l.b16 %v3344
        %v3490 = vunpack.c.h.b16 %v3344
        %v3491 = vunpack.c.l.b16 %v3345
        %v3492 = vunpack.c.h.b16 %v3345
        %v3493 = vunpack.c.l.b16 %v3346
        %v3494 = vunpack.c.h.b16 %v3346
        %v3495 = vunpack.c.l.b16 %v3347
        %v3496 = vunpack.c.h.b16 %v3347
        %v3497 = vunpack.c.l.b16 %v3348
        %v3498 = vunpack.c.h.b16 %v3348
        %v3499 = vunpack.c.l.b16 %v3349
        %v3500 = vunpack.c.h.b16 %v3349
        %v3501 = vunpack.c.l.b16 %v3350
        %v3502 = vunpack.c.h.b16 %v3350
        %v3503 = vunpack.c.l.b16 %v3351
        %v3504 = vunpack.c.h.b16 %v3351
        %v3505 = vunpack.c.l.b16 %v3352
        %v3506 = vunpack.c.h.b16 %v3352
        %v3507 = vunpack.c.l.b16 %v3353
        %v3508 = vunpack.c.h.b16 %v3353
        %v3509 = vunpack.c.l.b16 %v3354
        %v3510 = vunpack.c.h.b16 %v3354
        %v3511 = vunpack.c.l.b16 %v3355
        %v3512 = vunpack.c.h.b16 %v3355
        %v3513 = vunpack.c.l.b16 %v3356
        %v3514 = vunpack.c.h.b16 %v3356
        %v3515 = vunpack.c.l.b16 %v3357
        %v3516 = vunpack.c.h.b16 %v3357
        %v3517 = vunpack.c.l.b16 %v3358
        %v3518 = vunpack.c.h.b16 %v3358
        %v3519 = vunpack.c.l.b16 %v3359
        %v3520 = vunpack.c.h.b16 %v3359
        %v3521 = vunpack.c.l.b16 %v3360
        %v3522 = vunpack.c.h.b16 %v3360
        %v3523 = vunpack.c.l.b16 %v3361
        %v3524 = vunpack.c.h.b16 %v3361
        %v3525 = vunpack.c.l.b16 %v3362
        %v3526 = vunpack.c.h.b16 %v3362
        %v3527 = vunpack.c.l.b16 %v3363
        %v3528 = vunpack.c.h.b16 %v3363
        %v3529 = vunpack.c.l.b16 %v3364
        %v3530 = vunpack.c.h.b16 %v3364
        %v3531 = vunpack.c.l.b16 %v3365
        %v3532 = vunpack.c.h.b16 %v3365
        %v3533 = vunpack.c.l.b16 %v3366
        %v3534 = vunpack.c.h.b16 %v3366
        %v3535 = vunpack.c.l.b16 %v3367
        %v3536 = vunpack.c.h.b16 %v3367
        %v3537 = vunpack.c.l.b16 %v3368
        %v3538 = vunpack.c.h.b16 %v3368
        %v3539 = vunpack.c.l.b16 %v3369
        %v3540 = vunpack.c.h.b16 %v3369
        %v3541 = vunpack.c.l.b16 %v3370
        %v3542 = vunpack.c.h.b16 %v3370
        %v3543 = vunpack.c.l.b16 %v3371
        %v3544 = vunpack.c.h.b16 %v3371
        %v3545 = vunpack.c.l.b16 %v3372
        %v3546 = vunpack.c.h.b16 %v3372
        %v3547 = vunpack.c.l.b16 %v3373
        %v3548 = vunpack.c.h.b16 %v3373
        %v3549 = vunpack.c.l.b16 %v3374
        %v3550 = vunpack.c.h.b16 %v3374
        %v3551 = vunpack.c.l.b16 %v3375
        %v3552 = vunpack.c.h.b16 %v3375
        %v3553 = vunpack.c.l.b16 %v3376
        %v3554 = vunpack.c.h.b16 %v3376
        %v3555 = vunpack.c.l.b16 %v3377
        %v3556 = vunpack.c.h.b16 %v3377
        %v3557 = vunpack.c.l.b16 %v3378
        %v3558 = vunpack.c.h.b16 %v3378
        %v3559 = vunpack.c.l.b16 %v3379
        %v3560 = vunpack.c.h.b16 %v3379
        %v3561 = vunpack.c.l.b16 %v3380
        %v3562 = vunpack.c.h.b16 %v3380
        %v3563 = vunpack.c.l.b16 %v3381
        %v3564 = vunpack.c.h.b16 %v3381
        %v3565 = vunpack.c.l.b16 %v3382
        %v3566 = vunpack.c.h.b16 %v3382
        %v3567 = vunpack.c.l.b16 %v3383
        %v3568 = vunpack.c.h.b16 %v3383
        %v3569 = vunpack.c.l.b16 %v3384
        %v3570 = vunpack.c.h.b16 %v3384
        %v3571 = vunpack.c.l.b16 %v3385
        %v3572 = vunpack.c.h.b16 %v3385
        %v3573 = vunpack.c.l.b16 %v3386
        %v3574 = vunpack.c.h.b16 %v3386
        %v3575 = vunpack.c.l.b16 %v3387
        %v3576 = vunpack.c.h.b16 %v3387
        %v3577 = vunpack.c.l.b16 %v3388
        %v3578 = vunpack.c.h.b16 %v3388
        %v3579 = vunpack.c.l.b16 %v3389
        %v3580 = vunpack.c.h.b16 %v3389
        %v3581 = vunpack.c.l.b16 %v3390
        %v3582 = vunpack.c.h.b16 %v3390
        %v3583 = vunpack.c.l.b16 %v3391
        %v3584 = vunpack.c.h.b16 %v3391
        %v3585 = vunpack.c.l.b16 %v3392
        %v3586 = vunpack.c.h.b16 %v3392
        %v3587 = vunpack.c.l.b16 %v3393
        %v3588 = vunpack.c.h.b16 %v3393
        %v3589 = vunpack.c.l.b16 %v3394
        %v3590 = vunpack.c.h.b16 %v3394
        %v3591 = vpack.c.b16 %v3467, %v3463
        %v3592 = vpack.c.b16 %v3468, %v3464
        %v3593 = vpack.c.b16 %v3469, %v3465
        %v3594 = vpack.c.b16 %v3470, %v3466
        %v3595 = vpack.c.b16 %v3475, %v3471
        %v3596 = vpack.c.b16 %v3476, %v3472
        %v3597 = vpack.c.b16 %v3477, %v3473
        %v3598 = vpack.c.b16 %v3478, %v3474
        %v3599 = vpack.c.b16 %v3483, %v3479
        %v3600 = vpack.c.b16 %v3484, %v3480
        %v3601 = vpack.c.b16 %v3485, %v3481
        %v3602 = vpack.c.b16 %v3486, %v3482
        %v3603 = vpack.c.b16 %v3491, %v3487
        %v3604 = vpack.c.b16 %v3492, %v3488
        %v3605 = vpack.c.b16 %v3493, %v3489
        %v3606 = vpack.c.b16 %v3494, %v3490
        %v3607 = vpack.c.b16 %v3499, %v3495
        %v3608 = vpack.c.b16 %v3500, %v3496
        %v3609 = vpack.c.b16 %v3501, %v3497
        %v3610 = vpack.c.b16 %v3502, %v3498
        %v3611 = vpack.c.b16 %v3507, %v3503
        %v3612 = vpack.c.b16 %v3508, %v3504
        %v3613 = vpack.c.b16 %v3509, %v3505
        %v3614 = vpack.c.b16 %v3510, %v3506
        %v3615 = vpack.c.b16 %v3515, %v3511
        %v3616 = vpack.c.b16 %v3516, %v3512
        %v3617 = vpack.c.b16 %v3517, %v3513
        %v3618 = vpack.c.b16 %v3518, %v3514
        %v3619 = vpack.c.b16 %v3523, %v3519
        %v3620 = vpack.c.b16 %v3524, %v3520
        %v3621 = vpack.c.b16 %v3525, %v3521
        %v3622 = vpack.c.b16 %v3526, %v3522
        %v3623 = vpack.c.b16 %v3531, %v3527
        %v3624 = vpack.c.b16 %v3532, %v3528
        %v3625 = vpack.c.b16 %v3533, %v3529
        %v3626 = vpack.c.b16 %v3534, %v3530
        %v3627 = vpack.c.b16 %v3539, %v3535
        %v3628 = vpack.c.b16 %v3540, %v3536
        %v3629 = vpack.c.b16 %v3541, %v3537
        %v3630 = vpack.c.b16 %v3542, %v3538
        %v3631 = vpack.c.b16 %v3547, %v3543
        %v3632 = vpack.c.b16 %v3548, %v3544
        %v3633 = vpack.c.b16 %v3549, %v3545
        %v3634 = vpack.c.b16 %v3550, %v3546
        %v3635 = vpack.c.b16 %v3555, %v3551
        %v3636 = vpack.c.b16 %v3556, %v3552
        %v3637 = vpack.c.b16 %v3557, %v3553
        %v3638 = vpack.c.b16 %v3558, %v3554
        %v3639 = vpack.c.b16 %v3563, %v3559
        %v3640 = vpack.c.b16 %v3564, %v3560
        %v3641 = vpack.c.b16 %v3565, %v3561
        %v3642 = vpack.c.b16 %v3566, %v3562
        %v3643 = vpack.c.b16 %v3571, %v3567
        %v3644 = vpack.c.b16 %v3572, %v3568
        %v3645 = vpack.c.b16 %v3573, %v3569
        %v3646 = vpack.c.b16 %v3574, %v3570
        %v3647 = vpack.c.b16 %v3579, %v3575
        %v3648 = vpack.c.b16 %v3580, %v3576
        %v3649 = vpack.c.b16 %v3581, %v3577
        %v3650 = vpack.c.b16 %v3582, %v3578
        %v3651 = vpack.c.b16 %v3587, %v3583
        %v3652 = vpack.c.b16 %v3588, %v3584
        %v3653 = vpack.c.b16 %v3589, %v3585
        %v3654 = vpack.c.b16 %v3590, %v3586
        %3719 = vmatprep.subr.bf16.mxu0 %v3620
        %3720 = vmatpush1.bf16.msra.mxu0 %v3619
        %3721 = vmatprep.subr.bf16.mxu0 %v3616
        %3722 = vmatpush1.bf16.msra.mxu0 %v3615
        %3723 = vmatprep.subr.bf16.mxu0 %v3612
        %3724 = vmatpush1.bf16.msra.mxu0 %v3611
        %3725 = vmatprep.subr.bf16.mxu0 %v3608
        %3726 = vmatpush1.bf16.msra.mxu0 %v3607
        %3727 = vmatprep.subr.bf16.mxu0 %v3604
        %3728 = vmatpush1.bf16.msra.mxu0 %v3603
        %3729 = vmatprep.subr.bf16.mxu0 %v3600
        %3730 = vmatpush1.bf16.msra.mxu0 %v3599
        %3731 = vmatprep.subr.bf16.mxu0 %v3596
        %3732 = vmatpush1.bf16.msra.mxu0 %v3595
        %3733 = vmatprep.subr.bf16.mxu0 %v3592
        %3734 = vmatpush1.bf16.msra.mxu0 %v3591
        %3735 = vmatprep.subr.bf16.mxu0 %v3652
        %3736 = vmatpush2.bf16.msra.mxu0 %v3651
        %3737 = vmatprep.subr.bf16.mxu0 %v3648
        %3738 = vmatpush2.bf16.msra.mxu0 %v3647
        %3739 = vmatprep.subr.bf16.mxu0 %v3644
        %3740 = vmatpush2.bf16.msra.mxu0 %v3643
        %3741 = vmatprep.subr.bf16.mxu0 %v3640
        %3742 = vmatpush2.bf16.msra.mxu0 %v3639
        %3743 = vmatprep.subr.bf16.mxu0 %v3636
        %3744 = vmatpush2.bf16.msra.mxu0 %v3635
        %3745 = vmatprep.subr.bf16.mxu0 %v3632
        %3746 = vmatpush2.bf16.msra.mxu0 %v3631
        %3747 = vmatprep.subr.bf16.mxu0 %v3628
        %3748 = vmatpush2.bf16.msra.mxu0 %v3627
        %3749 = vmatprep.subr.bf16.mxu0 %v3624
        %3750 = vmatpush2.bf16.msra.mxu0 %v3623
        %3751 = vmatprep.mubr.bf16.mxu0 %v3330
        %3752 = vmatmul.mubr.bf16.gmra.mxu0 %v3329
        %v3753 = vpop.f32.mrf.mxu0
        %v3754 = vadd.f32 %v3395, %v3753
        %v3755 = vpop.f32.mrf.mxu0
        %v3756 = vadd.f32 %v3396, %v3755
        %v3757 = vpop.f32.mrf.mxu0
        %v3758 = vpop.f32.mrf.mxu0
        %3759 = vdwg.mxu0
        %3760 = vmatprep.subr.bf16.mxu0 %v3622
        %3761 = vmatpush1.bf16.msra.mxu0 %v3621
        %3762 = vmatprep.subr.bf16.mxu0 %v3618
        %3763 = vmatpush1.bf16.msra.mxu0 %v3617
        %3764 = vmatprep.subr.bf16.mxu0 %v3614
        %3765 = vmatpush1.bf16.msra.mxu0 %v3613
        %3766 = vmatprep.subr.bf16.mxu0 %v3610
        %3767 = vmatpush1.bf16.msra.mxu0 %v3609
        %3768 = vmatprep.subr.bf16.mxu0 %v3606
        %3769 = vmatpush1.bf16.msra.mxu0 %v3605
        %3770 = vmatprep.subr.bf16.mxu0 %v3602
        %3771 = vmatpush1.bf16.msra.mxu0 %v3601
        %3772 = vmatprep.subr.bf16.mxu0 %v3598
        %3773 = vmatpush1.bf16.msra.mxu0 %v3597
        %3774 = vmatprep.subr.bf16.mxu0 %v3594
        %3775 = vmatpush1.bf16.msra.mxu0 %v3593
        %3776 = vmatprep.subr.bf16.mxu0 %v3654
        %3777 = vmatpush2.bf16.msra.mxu0 %v3653
        %3778 = vmatprep.subr.bf16.mxu0 %v3650
        %3779 = vmatpush2.bf16.msra.mxu0 %v3649
        %3780 = vmatprep.subr.bf16.mxu0 %v3646
        %3781 = vmatpush2.bf16.msra.mxu0 %v3645
        %3782 = vmatprep.subr.bf16.mxu0 %v3642
        %3783 = vmatpush2.bf16.msra.mxu0 %v3641
        %3784 = vmatprep.subr.bf16.mxu0 %v3638
        %3785 = vmatpush2.bf16.msra.mxu0 %v3637
        %3786 = vmatprep.subr.bf16.mxu0 %v3634
        %3787 = vmatpush2.bf16.msra.mxu0 %v3633
        %3788 = vmatprep.subr.bf16.mxu0 %v3630
        %3789 = vmatpush2.bf16.msra.mxu0 %v3629
        %3790 = vmatprep.subr.bf16.mxu0 %v3626
        %3791 = vmatpush2.bf16.msra.mxu0 %v3625
        %3792 = vmatprep.mubr.bf16.mxu0 %v3330
        %3793 = vmatmul.mubr.bf16.gmra.mxu0 %v3329
        %v3794 = vpop.f32.mrf.mxu0
        %v3795 = vadd.f32 %v3397, %v3794
        %v3796 = vpop.f32.mrf.mxu0
        %v3797 = vadd.f32 %v3398, %v3796
        %v3798 = vpop.f32.mrf.mxu0
        %v3799 = vpop.f32.mrf.mxu0
        %3800 = vdwg.mxu0
        %v3801 = vxor.u32 %v3754, 2147483648
        %v3802 = vxor.u32 %v3756, 2147483648
        %v3803 = vxor.u32 %v3795, 2147483648
        %v3804 = vmul.f32 %v3801, 1.442695
        %v3805 = vpow.pop %v3804
        %v3806 = vmul.f32 %v3802, 1.442695
        %v3807 = vpow.pop %v3806
        %v3808 = vmul.f32 %v3803, 1.442695
        %v3809 = vpow.pop %v3808
        %v3810 = vadd.f32 %v3805, 1.0
        %v3811 = vadd.f32 %v3807, 1.0
        %v3812 = vadd.f32 %v3809, 1.0
        %v3813 = vrcp.pop %v3810
        %v3814 = vmul.f32 1.0, %v3813
        %v3815 = vrcp.pop %v3811
        %v3816 = vmul.f32 1.0, %v3815
        %v3817 = vrcp.pop %v3812
        %v3818 = vmul.f32 1.0, %v3817
        %v3819 = vtanh.pop %v3797
        %v3820 = vld [vmem:[%s1592] sm:$0xff]
        %v3821 = vmul.f32 %v3816, %v3820
        %v3822 = vmul.f32 %v3814, %v3819
        %v3823 = vadd.f32 %v3821, %v3822
        %v3824 = vtanh.pop %v3823
        %v3825 = vmul.f32 %v3818, %v3824
        %3826 = vst [vmem:[%s1097] sm:$0xff] %v3825
        %3827 = vst [vmem:[%s1592] sm:$0xff] %v3823
        %v3828 = vpack.c.bf16 %v3825, %v3825
        %3829 = vmatprep.subr.bf16.mxu0 0
        %3830 = vmatpush1.bf16.msra.mxu0 %v1641
        %3831 = vmatprep.subr.bf16.mxu0 0
        %3832 = vmatpush1.bf16.msra.mxu0 %v1640
        %3833 = vmatprep.subr.bf16.mxu0 0
        %3834 = vmatpush1.bf16.msra.mxu0 %v1639
        %3835 = vmatprep.subr.bf16.mxu0 0
        %3836 = vmatpush1.bf16.msra.mxu0 %v1638
        %3837 = vmatprep.subr.bf16.mxu0 0
        %3838 = vmatpush1.bf16.msra.mxu0 %v1637
        %3839 = vmatprep.subr.bf16.mxu0 0
        %3840 = vmatpush1.bf16.msra.mxu0 %v1636
        %3841 = vmatprep.subr.bf16.mxu0 0
        %3842 = vmatpush1.bf16.msra.mxu0 %v1635
        %3843 = vmatprep.subr.bf16.mxu0 0
        %3844 = vmatpush1.bf16.msra.mxu0 %v1634
        %3845 = vmatprep.subr.bf16.mxu0 0
        %3846 = vmatpush2.bf16.msra.mxu0 0
        %3847 = vmatprep.subr.bf16.mxu0 0
        %3848 = vmatpush2.bf16.msra.mxu0 0
        %3849 = vmatprep.subr.bf16.mxu0 0
        %3850 = vmatpush2.bf16.msra.mxu0 0
        %3851 = vmatprep.subr.bf16.mxu0 0
        %3852 = vmatpush2.bf16.msra.mxu0 0
        %3853 = vmatprep.subr.bf16.mxu0 0
        %3854 = vmatpush2.bf16.msra.mxu0 0
        %3855 = vmatprep.subr.bf16.mxu0 0
        %3856 = vmatpush2.bf16.msra.mxu0 0
        %3857 = vmatprep.subr.bf16.mxu0 0
        %3858 = vmatpush2.bf16.msra.mxu0 0
        %3859 = vmatprep.subr.bf16.mxu0 0
        %3860 = vmatpush2.bf16.msra.mxu0 0
        %3861 = vmatprep.mubr.bf16.mxu0 0
        %3862 = vmatmul.mubr.bf16.gmra.mxu0 %v3828
        %v3863 = vpop.f32.mrf.mxu0
        %v3864 = vadd.f32 %v526, %v3863
        %v3865 = vpop.f32.mrf.mxu0
        %v3866 = vpop.f32.mrf.mxu0
        %v3867 = vpop.f32.mrf.mxu0
        %3868 = vdwg.mxu0
        %v3869 = vtanh.pop %v3864
        %s3870 = scalar_lea.vmem %s481, 16 [#allocation14]
        %3871 = vst [vmem:[%s3870] sm:$0xff] %v3869
        %s3872 = scalar_lea.vmem %s423, 24 [#allocation2]
        %v3873 = vld [vmem:[%s3872] sm:$0xff]
        %v3874 = vpack.c.bf16 %v3873, %v3873
        %v3876 = vsel %vm553, %v3874, 0
        %3878 = vmatprep.subr.bf16.mxu0 0
        %3879 = vmatpush1.bf16.msra.mxu0 0
        %3880 = vmatprep.subr.bf16.mxu0 0
        %3881 = vmatpush1.bf16.msra.mxu0 0
        %3882 = vmatprep.subr.bf16.mxu0 0
        %3883 = vmatpush1.bf16.msra.mxu0 0
        %3884 = vmatprep.subr.bf16.mxu0 0
        %3885 = vmatpush1.bf16.msra.mxu0 0
        %3886 = vmatprep.subr.bf16.mxu0 0
        %3887 = vmatpush1.bf16.msra.mxu0 %v548
        %3888 = vmatprep.subr.bf16.mxu0 0
        %3889 = vmatpush1.bf16.msra.mxu0 %v547
        %3890 = vmatprep.subr.bf16.mxu0 0
        %3891 = vmatpush1.bf16.msra.mxu0 %v546
        %3892 = vmatprep.subr.bf16.mxu0 0
        %3893 = vmatpush1.bf16.msra.mxu0 %v545
        %3894 = vmatprep.subr.bf16.mxu0 0
        %3895 = vmatpush2.bf16.msra.mxu0 0
        %3896 = vmatprep.subr.bf16.mxu0 0
        %3897 = vmatpush2.bf16.msra.mxu0 0
        %3898 = vmatprep.subr.bf16.mxu0 0
        %3899 = vmatpush2.bf16.msra.mxu0 0
        %3900 = vmatprep.subr.bf16.mxu0 0
        %3901 = vmatpush2.bf16.msra.mxu0 0
        %3902 = vmatprep.subr.bf16.mxu0 0
        %3903 = vmatpush2.bf16.msra.mxu0 0
        %3904 = vmatprep.subr.bf16.mxu0 0
        %3905 = vmatpush2.bf16.msra.mxu0 0
        %3906 = vmatprep.subr.bf16.mxu0 0
        %3907 = vmatpush2.bf16.msra.mxu0 0
        %3908 = vmatprep.subr.bf16.mxu0 0
        %3909 = vmatpush2.bf16.msra.mxu0 0
        %3910 = vmatprep.mubr.bf16.mxu0 0
        %3911 = vmatmul.mubr.bf16.gmra.mxu0 %v3876
        %v3912 = vpop.f32.mrf.mxu0
        %v3913 = vadd.f32 %v509, %v3912
        %v3914 = vpop.f32.mrf.mxu0
        %v3915 = vpop.f32.mrf.mxu0
        %v3916 = vpop.f32.mrf.mxu0
        %3917 = vdwg.mxu0
        %v3918 = vld [vmem:[#allocation15] sm:$0xff]
        %v3919 = vpack.c.bf16 %v3913, %v3913
        %v3920 = vpack.c.bf16 %v3918, %v3918
        %v3921 = vld [vmem:[#allocation7] sm:$0xff]
        %v3922 = vld [vmem:[#allocation7 + $0x8] sm:$0xff]
        %v3923 = vld [vmem:[#allocation7 + $0x10] sm:$0xff]
        %v3924 = vld [vmem:[#allocation7 + $0x18] sm:$0xff]
        %v3925 = vld [vmem:[#allocation7 + $0x20] sm:$0xff]
        %v3926 = vld [vmem:[#allocation7 + $0x28] sm:$0xff]
        %v3927 = vld [vmem:[#allocation7 + $0x30] sm:$0xff]
        %v3928 = vld [vmem:[#allocation7 + $0x38] sm:$0xff]
        %v3929 = vld [vmem:[#allocation7 + $0x40] sm:$0xff]
        %v3930 = vld [vmem:[#allocation7 + $0x48] sm:$0xff]
        %v3931 = vld [vmem:[#allocation7 + $0x50] sm:$0xff]
        %v3932 = vld [vmem:[#allocation7 + $0x58] sm:$0xff]
        %v3933 = vld [vmem:[#allocation7 + $0x60] sm:$0xff]
        %v3934 = vld [vmem:[#allocation7 + $0x68] sm:$0xff]
        %v3935 = vld [vmem:[#allocation7 + $0x70] sm:$0xff]
        %v3936 = vld [vmem:[#allocation7 + $0x78] sm:$0xff]
        %v3937 = vld [vmem:[#allocation7 + $0x80] sm:$0xff]
        %v3938 = vld [vmem:[#allocation7 + $0x88] sm:$0xff]
        %v3939 = vld [vmem:[#allocation7 + $0x90] sm:$0xff]
        %v3940 = vld [vmem:[#allocation7 + $0x98] sm:$0xff]
        %v3941 = vld [vmem:[#allocation7 + $0xa0] sm:$0xff]
        %v3942 = vld [vmem:[#allocation7 + $0xa8] sm:$0xff]
        %v3943 = vld [vmem:[#allocation7 + $0xb0] sm:$0xff]
        %v3944 = vld [vmem:[#allocation7 + $0xb8] sm:$0xff]
        %v3945 = vld [vmem:[#allocation7 + $0xc0] sm:$0xff]
        %v3946 = vld [vmem:[#allocation7 + $0xc8] sm:$0xff]
        %v3947 = vld [vmem:[#allocation7 + $0xd0] sm:$0xff]
        %v3948 = vld [vmem:[#allocation7 + $0xd8] sm:$0xff]
        %v3949 = vld [vmem:[#allocation7 + $0xe0] sm:$0xff]
        %v3950 = vld [vmem:[#allocation7 + $0xe8] sm:$0xff]
        %v3951 = vld [vmem:[#allocation7 + $0xf0] sm:$0xff]
        %v3952 = vld [vmem:[#allocation7 + $0xf8] sm:$0xff]
        %v3953 = vld [vmem:[#allocation7 + $0x100] sm:$0xff]
        %v3954 = vld [vmem:[#allocation7 + $0x108] sm:$0xff]
        %v3955 = vld [vmem:[#allocation7 + $0x110] sm:$0xff]
        %v3956 = vld [vmem:[#allocation7 + $0x118] sm:$0xff]
        %v3957 = vld [vmem:[#allocation7 + $0x120] sm:$0xff]
        %v3958 = vld [vmem:[#allocation7 + $0x128] sm:$0xff]
        %v3959 = vld [vmem:[#allocation7 + $0x130] sm:$0xff]
        %v3960 = vld [vmem:[#allocation7 + $0x138] sm:$0xff]
        %v3961 = vld [vmem:[#allocation7 + $0x140] sm:$0xff]
        %v3962 = vld [vmem:[#allocation7 + $0x148] sm:$0xff]
        %v3963 = vld [vmem:[#allocation7 + $0x150] sm:$0xff]
        %v3964 = vld [vmem:[#allocation7 + $0x158] sm:$0xff]
        %v3965 = vld [vmem:[#allocation7 + $0x160] sm:$0xff]
        %v3966 = vld [vmem:[#allocation7 + $0x168] sm:$0xff]
        %v3967 = vld [vmem:[#allocation7 + $0x170] sm:$0xff]
        %v3968 = vld [vmem:[#allocation7 + $0x178] sm:$0xff]
        %v3969 = vld [vmem:[#allocation7 + $0x180] sm:$0xff]
        %v3970 = vld [vmem:[#allocation7 + $0x188] sm:$0xff]
        %v3971 = vld [vmem:[#allocation7 + $0x190] sm:$0xff]
        %v3972 = vld [vmem:[#allocation7 + $0x198] sm:$0xff]
        %v3973 = vld [vmem:[#allocation7 + $0x1a0] sm:$0xff]
        %v3974 = vld [vmem:[#allocation7 + $0x1a8] sm:$0xff]
        %v3975 = vld [vmem:[#allocation7 + $0x1b0] sm:$0xff]
        %v3976 = vld [vmem:[#allocation7 + $0x1b8] sm:$0xff]
        %v3977 = vld [vmem:[#allocation7 + $0x1c0] sm:$0xff]
        %v3978 = vld [vmem:[#allocation7 + $0x1c8] sm:$0xff]
        %v3979 = vld [vmem:[#allocation7 + $0x1d0] sm:$0xff]
        %v3980 = vld [vmem:[#allocation7 + $0x1d8] sm:$0xff]
        %v3981 = vld [vmem:[#allocation7 + $0x1e0] sm:$0xff]
        %v3982 = vld [vmem:[#allocation7 + $0x1e8] sm:$0xff]
        %v3983 = vld [vmem:[#allocation7 + $0x1f0] sm:$0xff]
        %v3984 = vld [vmem:[#allocation7 + $0x1f8] sm:$0xff]
        %v3985 = vld [vmem:[%s4] sm:$0xff]
        %v3986 = vld [vmem:[%s4 + $0x8] sm:$0xff]
        %v3987 = vld [vmem:[%s4 + $0x10] sm:$0xff]
        %v3988 = vld [vmem:[%s4 + $0x18] sm:$0xff]
        %v4053 = vunpack.c.l.b16 %v3921
        %v4054 = vunpack.c.h.b16 %v3921
        %v4055 = vunpack.c.l.b16 %v3922
        %v4056 = vunpack.c.h.b16 %v3922
        %v4057 = vunpack.c.l.b16 %v3923
        %v4058 = vunpack.c.h.b16 %v3923
        %v4059 = vunpack.c.l.b16 %v3924
        %v4060 = vunpack.c.h.b16 %v3924
        %v4061 = vunpack.c.l.b16 %v3925
        %v4062 = vunpack.c.h.b16 %v3925
        %v4063 = vunpack.c.l.b16 %v3926
        %v4064 = vunpack.c.h.b16 %v3926
        %v4065 = vunpack.c.l.b16 %v3927
        %v4066 = vunpack.c.h.b16 %v3927
        %v4067 = vunpack.c.l.b16 %v3928
        %v4068 = vunpack.c.h.b16 %v3928
        %v4069 = vunpack.c.l.b16 %v3929
        %v4070 = vunpack.c.h.b16 %v3929
        %v4071 = vunpack.c.l.b16 %v3930
        %v4072 = vunpack.c.h.b16 %v3930
        %v4073 = vunpack.c.l.b16 %v3931
        %v4074 = vunpack.c.h.b16 %v3931
        %v4075 = vunpack.c.l.b16 %v3932
        %v4076 = vunpack.c.h.b16 %v3932
        %v4077 = vunpack.c.l.b16 %v3933
        %v4078 = vunpack.c.h.b16 %v3933
        %v4079 = vunpack.c.l.b16 %v3934
        %v4080 = vunpack.c.h.b16 %v3934
        %v4081 = vunpack.c.l.b16 %v3935
        %v4082 = vunpack.c.h.b16 %v3935
        %v4083 = vunpack.c.l.b16 %v3936
        %v4084 = vunpack.c.h.b16 %v3936
        %v4085 = vunpack.c.l.b16 %v3937
        %v4086 = vunpack.c.h.b16 %v3937
        %v4087 = vunpack.c.l.b16 %v3938
        %v4088 = vunpack.c.h.b16 %v3938
        %v4089 = vunpack.c.l.b16 %v3939
        %v4090 = vunpack.c.h.b16 %v3939
        %v4091 = vunpack.c.l.b16 %v3940
        %v4092 = vunpack.c.h.b16 %v3940
        %v4093 = vunpack.c.l.b16 %v3941
        %v4094 = vunpack.c.h.b16 %v3941
        %v4095 = vunpack.c.l.b16 %v3942
        %v4096 = vunpack.c.h.b16 %v3942
        %v4097 = vunpack.c.l.b16 %v3943
        %v4098 = vunpack.c.h.b16 %v3943
        %v4099 = vunpack.c.l.b16 %v3944
        %v4100 = vunpack.c.h.b16 %v3944
        %v4101 = vunpack.c.l.b16 %v3945
        %v4102 = vunpack.c.h.b16 %v3945
        %v4103 = vunpack.c.l.b16 %v3946
        %v4104 = vunpack.c.h.b16 %v3946
        %v4105 = vunpack.c.l.b16 %v3947
        %v4106 = vunpack.c.h.b16 %v3947
        %v4107 = vunpack.c.l.b16 %v3948
        %v4108 = vunpack.c.h.b16 %v3948
        %v4109 = vunpack.c.l.b16 %v3949
        %v4110 = vunpack.c.h.b16 %v3949
        %v4111 = vunpack.c.l.b16 %v3950
        %v4112 = vunpack.c.h.b16 %v3950
        %v4113 = vunpack.c.l.b16 %v3951
        %v4114 = vunpack.c.h.b16 %v3951
        %v4115 = vunpack.c.l.b16 %v3952
        %v4116 = vunpack.c.h.b16 %v3952
        %v4117 = vunpack.c.l.b16 %v3953
        %v4118 = vunpack.c.h.b16 %v3953
        %v4119 = vunpack.c.l.b16 %v3954
        %v4120 = vunpack.c.h.b16 %v3954
        %v4121 = vunpack.c.l.b16 %v3955
        %v4122 = vunpack.c.h.b16 %v3955
        %v4123 = vunpack.c.l.b16 %v3956
        %v4124 = vunpack.c.h.b16 %v3956
        %v4125 = vunpack.c.l.b16 %v3957
        %v4126 = vunpack.c.h.b16 %v3957
        %v4127 = vunpack.c.l.b16 %v3958
        %v4128 = vunpack.c.h.b16 %v3958
        %v4129 = vunpack.c.l.b16 %v3959
        %v4130 = vunpack.c.h.b16 %v3959
        %v4131 = vunpack.c.l.b16 %v3960
        %v4132 = vunpack.c.h.b16 %v3960
        %v4133 = vunpack.c.l.b16 %v3961
        %v4134 = vunpack.c.h.b16 %v3961
        %v4135 = vunpack.c.l.b16 %v3962
        %v4136 = vunpack.c.h.b16 %v3962
        %v4137 = vunpack.c.l.b16 %v3963
        %v4138 = vunpack.c.h.b16 %v3963
        %v4139 = vunpack.c.l.b16 %v3964
        %v4140 = vunpack.c.h.b16 %v3964
        %v4141 = vunpack.c.l.b16 %v3965
        %v4142 = vunpack.c.h.b16 %v3965
        %v4143 = vunpack.c.l.b16 %v3966
        %v4144 = vunpack.c.h.b16 %v3966
        %v4145 = vunpack.c.l.b16 %v3967
        %v4146 = vunpack.c.h.b16 %v3967
        %v4147 = vunpack.c.l.b16 %v3968
        %v4148 = vunpack.c.h.b16 %v3968
        %v4149 = vunpack.c.l.b16 %v3969
        %v4150 = vunpack.c.h.b16 %v3969
        %v4151 = vunpack.c.l.b16 %v3970
        %v4152 = vunpack.c.h.b16 %v3970
        %v4153 = vunpack.c.l.b16 %v3971
        %v4154 = vunpack.c.h.b16 %v3971
        %v4155 = vunpack.c.l.b16 %v3972
        %v4156 = vunpack.c.h.b16 %v3972
        %v4157 = vunpack.c.l.b16 %v3973
        %v4158 = vunpack.c.h.b16 %v3973
        %v4159 = vunpack.c.l.b16 %v3974
        %v4160 = vunpack.c.h.b16 %v3974
        %v4161 = vunpack.c.l.b16 %v3975
        %v4162 = vunpack.c.h.b16 %v3975
        %v4163 = vunpack.c.l.b16 %v3976
        %v4164 = vunpack.c.h.b16 %v3976
        %v4165 = vunpack.c.l.b16 %v3977
        %v4166 = vunpack.c.h.b16 %v3977
        %v4167 = vunpack.c.l.b16 %v3978
        %v4168 = vunpack.c.h.b16 %v3978
        %v4169 = vunpack.c.l.b16 %v3979
        %v4170 = vunpack.c.h.b16 %v3979
        %v4171 = vunpack.c.l.b16 %v3980
        %v4172 = vunpack.c.h.b16 %v3980
        %v4173 = vunpack.c.l.b16 %v3981
        %v4174 = vunpack.c.h.b16 %v3981
        %v4175 = vunpack.c.l.b16 %v3982
        %v4176 = vunpack.c.h.b16 %v3982
        %v4177 = vunpack.c.l.b16 %v3983
        %v4178 = vunpack.c.h.b16 %v3983
        %v4179 = vunpack.c.l.b16 %v3984
        %v4180 = vunpack.c.h.b16 %v3984
        %v4181 = vpack.c.b16 %v4057, %v4053
        %v4182 = vpack.c.b16 %v4058, %v4054
        %v4183 = vpack.c.b16 %v4059, %v4055
        %v4184 = vpack.c.b16 %v4060, %v4056
        %v4185 = vpack.c.b16 %v4065, %v4061
        %v4186 = vpack.c.b16 %v4066, %v4062
        %v4187 = vpack.c.b16 %v4067, %v4063
        %v4188 = vpack.c.b16 %v4068, %v4064
        %v4189 = vpack.c.b16 %v4073, %v4069
        %v4190 = vpack.c.b16 %v4074, %v4070
        %v4191 = vpack.c.b16 %v4075, %v4071
        %v4192 = vpack.c.b16 %v4076, %v4072
        %v4193 = vpack.c.b16 %v4081, %v4077
        %v4194 = vpack.c.b16 %v4082, %v4078
        %v4195 = vpack.c.b16 %v4083, %v4079
        %v4196 = vpack.c.b16 %v4084, %v4080
        %v4197 = vpack.c.b16 %v4089, %v4085
        %v4198 = vpack.c.b16 %v4090, %v4086
        %v4199 = vpack.c.b16 %v4091, %v4087
        %v4200 = vpack.c.b16 %v4092, %v4088
        %v4201 = vpack.c.b16 %v4097, %v4093
        %v4202 = vpack.c.b16 %v4098, %v4094
        %v4203 = vpack.c.b16 %v4099, %v4095
        %v4204 = vpack.c.b16 %v4100, %v4096
        %v4205 = vpack.c.b16 %v4105, %v4101
        %v4206 = vpack.c.b16 %v4106, %v4102
        %v4207 = vpack.c.b16 %v4107, %v4103
        %v4208 = vpack.c.b16 %v4108, %v4104
        %v4209 = vpack.c.b16 %v4113, %v4109
        %v4210 = vpack.c.b16 %v4114, %v4110
        %v4211 = vpack.c.b16 %v4115, %v4111
        %v4212 = vpack.c.b16 %v4116, %v4112
        %v4213 = vpack.c.b16 %v4121, %v4117
        %v4214 = vpack.c.b16 %v4122, %v4118
        %v4215 = vpack.c.b16 %v4123, %v4119
        %v4216 = vpack.c.b16 %v4124, %v4120
        %v4217 = vpack.c.b16 %v4129, %v4125
        %v4218 = vpack.c.b16 %v4130, %v4126
        %v4219 = vpack.c.b16 %v4131, %v4127
        %v4220 = vpack.c.b16 %v4132, %v4128
        %v4221 = vpack.c.b16 %v4137, %v4133
        %v4222 = vpack.c.b16 %v4138, %v4134
        %v4223 = vpack.c.b16 %v4139, %v4135
        %v4224 = vpack.c.b16 %v4140, %v4136
        %v4225 = vpack.c.b16 %v4145, %v4141
        %v4226 = vpack.c.b16 %v4146, %v4142
        %v4227 = vpack.c.b16 %v4147, %v4143
        %v4228 = vpack.c.b16 %v4148, %v4144
        %v4229 = vpack.c.b16 %v4153, %v4149
        %v4230 = vpack.c.b16 %v4154, %v4150
        %v4231 = vpack.c.b16 %v4155, %v4151
        %v4232 = vpack.c.b16 %v4156, %v4152
        %v4233 = vpack.c.b16 %v4161, %v4157
        %v4234 = vpack.c.b16 %v4162, %v4158
        %v4235 = vpack.c.b16 %v4163, %v4159
        %v4236 = vpack.c.b16 %v4164, %v4160
        %v4237 = vpack.c.b16 %v4169, %v4165
        %v4238 = vpack.c.b16 %v4170, %v4166
        %v4239 = vpack.c.b16 %v4171, %v4167
        %v4240 = vpack.c.b16 %v4172, %v4168
        %v4241 = vpack.c.b16 %v4177, %v4173
        %v4242 = vpack.c.b16 %v4178, %v4174
        %v4243 = vpack.c.b16 %v4179, %v4175
        %v4244 = vpack.c.b16 %v4180, %v4176
        %4309 = vmatprep.subr.bf16.mxu0 %v4210
        %4310 = vmatpush1.bf16.msra.mxu0 %v4209
        %4311 = vmatprep.subr.bf16.mxu0 %v4206
        %4312 = vmatpush1.bf16.msra.mxu0 %v4205
        %4313 = vmatprep.subr.bf16.mxu0 %v4202
        %4314 = vmatpush1.bf16.msra.mxu0 %v4201
        %4315 = vmatprep.subr.bf16.mxu0 %v4198
        %4316 = vmatpush1.bf16.msra.mxu0 %v4197
        %4317 = vmatprep.subr.bf16.mxu0 %v4194
        %4318 = vmatpush1.bf16.msra.mxu0 %v4193
        %4319 = vmatprep.subr.bf16.mxu0 %v4190
        %4320 = vmatpush1.bf16.msra.mxu0 %v4189
        %4321 = vmatprep.subr.bf16.mxu0 %v4186
        %4322 = vmatpush1.bf16.msra.mxu0 %v4185
        %4323 = vmatprep.subr.bf16.mxu0 %v4182
        %4324 = vmatpush1.bf16.msra.mxu0 %v4181
        %4325 = vmatprep.subr.bf16.mxu0 %v4242
        %4326 = vmatpush2.bf16.msra.mxu0 %v4241
        %4327 = vmatprep.subr.bf16.mxu0 %v4238
        %4328 = vmatpush2.bf16.msra.mxu0 %v4237
        %4329 = vmatprep.subr.bf16.mxu0 %v4234
        %4330 = vmatpush2.bf16.msra.mxu0 %v4233
        %4331 = vmatprep.subr.bf16.mxu0 %v4230
        %4332 = vmatpush2.bf16.msra.mxu0 %v4229
        %4333 = vmatprep.subr.bf16.mxu0 %v4226
        %4334 = vmatpush2.bf16.msra.mxu0 %v4225
        %4335 = vmatprep.subr.bf16.mxu0 %v4222
        %4336 = vmatpush2.bf16.msra.mxu0 %v4221
        %4337 = vmatprep.subr.bf16.mxu0 %v4218
        %4338 = vmatpush2.bf16.msra.mxu0 %v4217
        %4339 = vmatprep.subr.bf16.mxu0 %v4214
        %4340 = vmatpush2.bf16.msra.mxu0 %v4213
        %4341 = vmatprep.mubr.bf16.mxu0 %v3920
        %4342 = vmatmul.mubr.bf16.gmra.mxu0 %v3919
        %v4343 = vpop.f32.mrf.mxu0
        %v4344 = vadd.f32 %v3985, %v4343
        %v4345 = vpop.f32.mrf.mxu0
        %v4346 = vadd.f32 %v3986, %v4345
        %v4347 = vpop.f32.mrf.mxu0
        %v4348 = vpop.f32.mrf.mxu0
        %4349 = vdwg.mxu0
        %4350 = vmatprep.subr.bf16.mxu0 %v4212
        %4351 = vmatpush1.bf16.msra.mxu0 %v4211
        %4352 = vmatprep.subr.bf16.mxu0 %v4208
        %4353 = vmatpush1.bf16.msra.mxu0 %v4207
        %4354 = vmatprep.subr.bf16.mxu0 %v4204
        %4355 = vmatpush1.bf16.msra.mxu0 %v4203
        %4356 = vmatprep.subr.bf16.mxu0 %v4200
        %4357 = vmatpush1.bf16.msra.mxu0 %v4199
        %4358 = vmatprep.subr.bf16.mxu0 %v4196
        %4359 = vmatpush1.bf16.msra.mxu0 %v4195
        %4360 = vmatprep.subr.bf16.mxu0 %v4192
        %4361 = vmatpush1.bf16.msra.mxu0 %v4191
        %4362 = vmatprep.subr.bf16.mxu0 %v4188
        %4363 = vmatpush1.bf16.msra.mxu0 %v4187
        %4364 = vmatprep.subr.bf16.mxu0 %v4184
        %4365 = vmatpush1.bf16.msra.mxu0 %v4183
        %4366 = vmatprep.subr.bf16.mxu0 %v4244
        %4367 = vmatpush2.bf16.msra.mxu0 %v4243
        %4368 = vmatprep.subr.bf16.mxu0 %v4240
        %4369 = vmatpush2.bf16.msra.mxu0 %v4239
        %4370 = vmatprep.subr.bf16.mxu0 %v4236
        %4371 = vmatpush2.bf16.msra.mxu0 %v4235
        %4372 = vmatprep.subr.bf16.mxu0 %v4232
        %4373 = vmatpush2.bf16.msra.mxu0 %v4231
        %4374 = vmatprep.subr.bf16.mxu0 %v4228
        %4375 = vmatpush2.bf16.msra.mxu0 %v4227
        %4376 = vmatprep.subr.bf16.mxu0 %v4224
        %4377 = vmatpush2.bf16.msra.mxu0 %v4223
        %4378 = vmatprep.subr.bf16.mxu0 %v4220
        %4379 = vmatpush2.bf16.msra.mxu0 %v4219
        %4380 = vmatprep.subr.bf16.mxu0 %v4216
        %4381 = vmatpush2.bf16.msra.mxu0 %v4215
        %4382 = vmatprep.mubr.bf16.mxu0 %v3920
        %4383 = vmatmul.mubr.bf16.gmra.mxu0 %v3919
        %v4384 = vpop.f32.mrf.mxu0
        %v4385 = vadd.f32 %v3987, %v4384
        %v4386 = vpop.f32.mrf.mxu0
        %v4387 = vadd.f32 %v3988, %v4386
        %v4388 = vpop.f32.mrf.mxu0
        %v4389 = vpop.f32.mrf.mxu0
        %4390 = vdwg.mxu0
        %v4391 = vxor.u32 %v4344, 2147483648
        %v4392 = vxor.u32 %v4346, 2147483648
        %v4393 = vxor.u32 %v4385, 2147483648
        %v4394 = vmul.f32 %v4391, 1.442695
        %v4395 = vpow.pop %v4394
        %v4396 = vmul.f32 %v4392, 1.442695
        %v4397 = vpow.pop %v4396
        %v4398 = vmul.f32 %v4393, 1.442695
        %v4399 = vpow.pop %v4398
        %v4400 = vadd.f32 %v4395, 1.0
        %v4401 = vadd.f32 %v4397, 1.0
        %v4402 = vadd.f32 %v4399, 1.0
        %v4403 = vrcp.pop %v4400
        %v4404 = vmul.f32 1.0, %v4403
        %v4405 = vrcp.pop %v4401
        %v4406 = vmul.f32 1.0, %v4405
        %v4407 = vrcp.pop %v4402
        %v4408 = vmul.f32 1.0, %v4407
        %v4409 = vtanh.pop %v4387
        %v4410 = vld [vmem:[#allocation17] sm:$0xff]
        %v4411 = vmul.f32 %v4406, %v4410
        %v4412 = vmul.f32 %v4404, %v4409
        %v4413 = vadd.f32 %v4411, %v4412
        %v4414 = vtanh.pop %v4413
        %v4415 = vmul.f32 %v4408, %v4414
        %4416 = vst [vmem:[#allocation15] sm:$0xff] %v4415
        %4417 = vst [vmem:[#allocation17] sm:$0xff] %v4413
        %v4418 = vld [vmem:[%s1097] sm:$0xff]
        %v4419 = vpack.c.bf16 %v4415, %v4415
        %v4420 = vpack.c.bf16 %v4418, %v4418
        %v4421 = vld [vmem:[%s1101] sm:$0xff]
        %v4422 = vld [vmem:[%s1101 + $0x8] sm:$0xff]
        %v4423 = vld [vmem:[%s1101 + $0x10] sm:$0xff]
        %v4424 = vld [vmem:[%s1101 + $0x18] sm:$0xff]
        %v4425 = vld [vmem:[%s1101 + $0x20] sm:$0xff]
        %v4426 = vld [vmem:[%s1101 + $0x28] sm:$0xff]
        %v4427 = vld [vmem:[%s1101 + $0x30] sm:$0xff]
        %v4428 = vld [vmem:[%s1101 + $0x38] sm:$0xff]
        %v4429 = vld [vmem:[%s1101 + $0x40] sm:$0xff]
        %v4430 = vld [vmem:[%s1101 + $0x48] sm:$0xff]
        %v4431 = vld [vmem:[%s1101 + $0x50] sm:$0xff]
        %v4432 = vld [vmem:[%s1101 + $0x58] sm:$0xff]
        %v4433 = vld [vmem:[%s1101 + $0x60] sm:$0xff]
        %v4434 = vld [vmem:[%s1101 + $0x68] sm:$0xff]
        %v4435 = vld [vmem:[%s1101 + $0x70] sm:$0xff]
        %v4436 = vld [vmem:[%s1101 + $0x78] sm:$0xff]
        %v4437 = vld [vmem:[%s1101 + $0x80] sm:$0xff]
        %v4438 = vld [vmem:[%s1101 + $0x88] sm:$0xff]
        %v4439 = vld [vmem:[%s1101 + $0x90] sm:$0xff]
        %v4440 = vld [vmem:[%s1101 + $0x98] sm:$0xff]
        %v4441 = vld [vmem:[%s1101 + $0xa0] sm:$0xff]
        %v4442 = vld [vmem:[%s1101 + $0xa8] sm:$0xff]
        %v4443 = vld [vmem:[%s1101 + $0xb0] sm:$0xff]
        %v4444 = vld [vmem:[%s1101 + $0xb8] sm:$0xff]
        %v4445 = vld [vmem:[%s1101 + $0xc0] sm:$0xff]
        %v4446 = vld [vmem:[%s1101 + $0xc8] sm:$0xff]
        %v4447 = vld [vmem:[%s1101 + $0xd0] sm:$0xff]
        %v4448 = vld [vmem:[%s1101 + $0xd8] sm:$0xff]
        %v4449 = vld [vmem:[%s1101 + $0xe0] sm:$0xff]
        %v4450 = vld [vmem:[%s1101 + $0xe8] sm:$0xff]
        %v4451 = vld [vmem:[%s1101 + $0xf0] sm:$0xff]
        %v4452 = vld [vmem:[%s1101 + $0xf8] sm:$0xff]
        %v4453 = vld [vmem:[%s1101 + $0x100] sm:$0xff]
        %v4454 = vld [vmem:[%s1101 + $0x108] sm:$0xff]
        %v4455 = vld [vmem:[%s1101 + $0x110] sm:$0xff]
        %v4456 = vld [vmem:[%s1101 + $0x118] sm:$0xff]
        %v4457 = vld [vmem:[%s1101 + $0x120] sm:$0xff]
        %v4458 = vld [vmem:[%s1101 + $0x128] sm:$0xff]
        %v4459 = vld [vmem:[%s1101 + $0x130] sm:$0xff]
        %v4460 = vld [vmem:[%s1101 + $0x138] sm:$0xff]
        %v4461 = vld [vmem:[%s1101 + $0x140] sm:$0xff]
        %v4462 = vld [vmem:[%s1101 + $0x148] sm:$0xff]
        %v4463 = vld [vmem:[%s1101 + $0x150] sm:$0xff]
        %v4464 = vld [vmem:[%s1101 + $0x158] sm:$0xff]
        %v4465 = vld [vmem:[%s1101 + $0x160] sm:$0xff]
        %v4466 = vld [vmem:[%s1101 + $0x168] sm:$0xff]
        %v4467 = vld [vmem:[%s1101 + $0x170] sm:$0xff]
        %v4468 = vld [vmem:[%s1101 + $0x178] sm:$0xff]
        %v4469 = vld [vmem:[%s1101 + $0x180] sm:$0xff]
        %v4470 = vld [vmem:[%s1101 + $0x188] sm:$0xff]
        %v4471 = vld [vmem:[%s1101 + $0x190] sm:$0xff]
        %v4472 = vld [vmem:[%s1101 + $0x198] sm:$0xff]
        %v4473 = vld [vmem:[%s1101 + $0x1a0] sm:$0xff]
        %v4474 = vld [vmem:[%s1101 + $0x1a8] sm:$0xff]
        %v4475 = vld [vmem:[%s1101 + $0x1b0] sm:$0xff]
        %v4476 = vld [vmem:[%s1101 + $0x1b8] sm:$0xff]
        %v4477 = vld [vmem:[%s1101 + $0x1c0] sm:$0xff]
        %v4478 = vld [vmem:[%s1101 + $0x1c8] sm:$0xff]
        %v4479 = vld [vmem:[%s1101 + $0x1d0] sm:$0xff]
        %v4480 = vld [vmem:[%s1101 + $0x1d8] sm:$0xff]
        %v4481 = vld [vmem:[%s1101 + $0x1e0] sm:$0xff]
        %v4482 = vld [vmem:[%s1101 + $0x1e8] sm:$0xff]
        %v4483 = vld [vmem:[%s1101 + $0x1f0] sm:$0xff]
        %v4484 = vld [vmem:[%s1101 + $0x1f8] sm:$0xff]
        %v4485 = vld [vmem:[%s1166] sm:$0xff]
        %v4486 = vld [vmem:[%s1166 + $0x8] sm:$0xff]
        %v4487 = vld [vmem:[%s1166 + $0x10] sm:$0xff]
        %v4488 = vld [vmem:[%s1166 + $0x18] sm:$0xff]
        %v4553 = vunpack.c.l.b16 %v4421
        %v4554 = vunpack.c.h.b16 %v4421
        %v4555 = vunpack.c.l.b16 %v4422
        %v4556 = vunpack.c.h.b16 %v4422
        %v4557 = vunpack.c.l.b16 %v4423
        %v4558 = vunpack.c.h.b16 %v4423
        %v4559 = vunpack.c.l.b16 %v4424
        %v4560 = vunpack.c.h.b16 %v4424
        %v4561 = vunpack.c.l.b16 %v4425
        %v4562 = vunpack.c.h.b16 %v4425
        %v4563 = vunpack.c.l.b16 %v4426
        %v4564 = vunpack.c.h.b16 %v4426
        %v4565 = vunpack.c.l.b16 %v4427
        %v4566 = vunpack.c.h.b16 %v4427
        %v4567 = vunpack.c.l.b16 %v4428
        %v4568 = vunpack.c.h.b16 %v4428
        %v4569 = vunpack.c.l.b16 %v4429
        %v4570 = vunpack.c.h.b16 %v4429
        %v4571 = vunpack.c.l.b16 %v4430
        %v4572 = vunpack.c.h.b16 %v4430
        %v4573 = vunpack.c.l.b16 %v4431
        %v4574 = vunpack.c.h.b16 %v4431
        %v4575 = vunpack.c.l.b16 %v4432
        %v4576 = vunpack.c.h.b16 %v4432
        %v4577 = vunpack.c.l.b16 %v4433
        %v4578 = vunpack.c.h.b16 %v4433
        %v4579 = vunpack.c.l.b16 %v4434
        %v4580 = vunpack.c.h.b16 %v4434
        %v4581 = vunpack.c.l.b16 %v4435
        %v4582 = vunpack.c.h.b16 %v4435
        %v4583 = vunpack.c.l.b16 %v4436
        %v4584 = vunpack.c.h.b16 %v4436
        %v4585 = vunpack.c.l.b16 %v4437
        %v4586 = vunpack.c.h.b16 %v4437
        %v4587 = vunpack.c.l.b16 %v4438
        %v4588 = vunpack.c.h.b16 %v4438
        %v4589 = vunpack.c.l.b16 %v4439
        %v4590 = vunpack.c.h.b16 %v4439
        %v4591 = vunpack.c.l.b16 %v4440
        %v4592 = vunpack.c.h.b16 %v4440
        %v4593 = vunpack.c.l.b16 %v4441
        %v4594 = vunpack.c.h.b16 %v4441
        %v4595 = vunpack.c.l.b16 %v4442
        %v4596 = vunpack.c.h.b16 %v4442
        %v4597 = vunpack.c.l.b16 %v4443
        %v4598 = vunpack.c.h.b16 %v4443
        %v4599 = vunpack.c.l.b16 %v4444
        %v4600 = vunpack.c.h.b16 %v4444
        %v4601 = vunpack.c.l.b16 %v4445
        %v4602 = vunpack.c.h.b16 %v4445
        %v4603 = vunpack.c.l.b16 %v4446
        %v4604 = vunpack.c.h.b16 %v4446
        %v4605 = vunpack.c.l.b16 %v4447
        %v4606 = vunpack.c.h.b16 %v4447
        %v4607 = vunpack.c.l.b16 %v4448
        %v4608 = vunpack.c.h.b16 %v4448
        %v4609 = vunpack.c.l.b16 %v4449
        %v4610 = vunpack.c.h.b16 %v4449
        %v4611 = vunpack.c.l.b16 %v4450
        %v4612 = vunpack.c.h.b16 %v4450
        %v4613 = vunpack.c.l.b16 %v4451
        %v4614 = vunpack.c.h.b16 %v4451
        %v4615 = vunpack.c.l.b16 %v4452
        %v4616 = vunpack.c.h.b16 %v4452
        %v4617 = vunpack.c.l.b16 %v4453
        %v4618 = vunpack.c.h.b16 %v4453
        %v4619 = vunpack.c.l.b16 %v4454
        %v4620 = vunpack.c.h.b16 %v4454
        %v4621 = vunpack.c.l.b16 %v4455
        %v4622 = vunpack.c.h.b16 %v4455
        %v4623 = vunpack.c.l.b16 %v4456
        %v4624 = vunpack.c.h.b16 %v4456
        %v4625 = vunpack.c.l.b16 %v4457
        %v4626 = vunpack.c.h.b16 %v4457
        %v4627 = vunpack.c.l.b16 %v4458
        %v4628 = vunpack.c.h.b16 %v4458
        %v4629 = vunpack.c.l.b16 %v4459
        %v4630 = vunpack.c.h.b16 %v4459
        %v4631 = vunpack.c.l.b16 %v4460
        %v4632 = vunpack.c.h.b16 %v4460
        %v4633 = vunpack.c.l.b16 %v4461
        %v4634 = vunpack.c.h.b16 %v4461
        %v4635 = vunpack.c.l.b16 %v4462
        %v4636 = vunpack.c.h.b16 %v4462
        %v4637 = vunpack.c.l.b16 %v4463
        %v4638 = vunpack.c.h.b16 %v4463
        %v4639 = vunpack.c.l.b16 %v4464
        %v4640 = vunpack.c.h.b16 %v4464
        %v4641 = vunpack.c.l.b16 %v4465
        %v4642 = vunpack.c.h.b16 %v4465
        %v4643 = vunpack.c.l.b16 %v4466
        %v4644 = vunpack.c.h.b16 %v4466
        %v4645 = vunpack.c.l.b16 %v4467
        %v4646 = vunpack.c.h.b16 %v4467
        %v4647 = vunpack.c.l.b16 %v4468
        %v4648 = vunpack.c.h.b16 %v4468
        %v4649 = vunpack.c.l.b16 %v4469
        %v4650 = vunpack.c.h.b16 %v4469
        %v4651 = vunpack.c.l.b16 %v4470
        %v4652 = vunpack.c.h.b16 %v4470
        %v4653 = vunpack.c.l.b16 %v4471
        %v4654 = vunpack.c.h.b16 %v4471
        %v4655 = vunpack.c.l.b16 %v4472
        %v4656 = vunpack.c.h.b16 %v4472
        %v4657 = vunpack.c.l.b16 %v4473
        %v4658 = vunpack.c.h.b16 %v4473
        %v4659 = vunpack.c.l.b16 %v4474
        %v4660 = vunpack.c.h.b16 %v4474
        %v4661 = vunpack.c.l.b16 %v4475
        %v4662 = vunpack.c.h.b16 %v4475
        %v4663 = vunpack.c.l.b16 %v4476
        %v4664 = vunpack.c.h.b16 %v4476
        %v4665 = vunpack.c.l.b16 %v4477
        %v4666 = vunpack.c.h.b16 %v4477
        %v4667 = vunpack.c.l.b16 %v4478
        %v4668 = vunpack.c.h.b16 %v4478
        %v4669 = vunpack.c.l.b16 %v4479
        %v4670 = vunpack.c.h.b16 %v4479
        %v4671 = vunpack.c.l.b16 %v4480
        %v4672 = vunpack.c.h.b16 %v4480
        %v4673 = vunpack.c.l.b16 %v4481
        %v4674 = vunpack.c.h.b16 %v4481
        %v4675 = vunpack.c.l.b16 %v4482
        %v4676 = vunpack.c.h.b16 %v4482
        %v4677 = vunpack.c.l.b16 %v4483
        %v4678 = vunpack.c.h.b16 %v4483
        %v4679 = vunpack.c.l.b16 %v4484
        %v4680 = vunpack.c.h.b16 %v4484
        %v4681 = vpack.c.b16 %v4557, %v4553
        %v4682 = vpack.c.b16 %v4558, %v4554
        %v4683 = vpack.c.b16 %v4559, %v4555
        %v4684 = vpack.c.b16 %v4560, %v4556
        %v4685 = vpack.c.b16 %v4565, %v4561
        %v4686 = vpack.c.b16 %v4566, %v4562
        %v4687 = vpack.c.b16 %v4567, %v4563
        %v4688 = vpack.c.b16 %v4568, %v4564
        %v4689 = vpack.c.b16 %v4573, %v4569
        %v4690 = vpack.c.b16 %v4574, %v4570
        %v4691 = vpack.c.b16 %v4575, %v4571
        %v4692 = vpack.c.b16 %v4576, %v4572
        %v4693 = vpack.c.b16 %v4581, %v4577
        %v4694 = vpack.c.b16 %v4582, %v4578
        %v4695 = vpack.c.b16 %v4583, %v4579
        %v4696 = vpack.c.b16 %v4584, %v4580
        %v4697 = vpack.c.b16 %v4589, %v4585
        %v4698 = vpack.c.b16 %v4590, %v4586
        %v4699 = vpack.c.b16 %v4591, %v4587
        %v4700 = vpack.c.b16 %v4592, %v4588
        %v4701 = vpack.c.b16 %v4597, %v4593
        %v4702 = vpack.c.b16 %v4598, %v4594
        %v4703 = vpack.c.b16 %v4599, %v4595
        %v4704 = vpack.c.b16 %v4600, %v4596
        %v4705 = vpack.c.b16 %v4605, %v4601
        %v4706 = vpack.c.b16 %v4606, %v4602
        %v4707 = vpack.c.b16 %v4607, %v4603
        %v4708 = vpack.c.b16 %v4608, %v4604
        %v4709 = vpack.c.b16 %v4613, %v4609
        %v4710 = vpack.c.b16 %v4614, %v4610
        %v4711 = vpack.c.b16 %v4615, %v4611
        %v4712 = vpack.c.b16 %v4616, %v4612
        %v4713 = vpack.c.b16 %v4621, %v4617
        %v4714 = vpack.c.b16 %v4622, %v4618
        %v4715 = vpack.c.b16 %v4623, %v4619
        %v4716 = vpack.c.b16 %v4624, %v4620
        %v4717 = vpack.c.b16 %v4629, %v4625
        %v4718 = vpack.c.b16 %v4630, %v4626
        %v4719 = vpack.c.b16 %v4631, %v4627
        %v4720 = vpack.c.b16 %v4632, %v4628
        %v4721 = vpack.c.b16 %v4637, %v4633
        %v4722 = vpack.c.b16 %v4638, %v4634
        %v4723 = vpack.c.b16 %v4639, %v4635
        %v4724 = vpack.c.b16 %v4640, %v4636
        %v4725 = vpack.c.b16 %v4645, %v4641
        %v4726 = vpack.c.b16 %v4646, %v4642
        %v4727 = vpack.c.b16 %v4647, %v4643
        %v4728 = vpack.c.b16 %v4648, %v4644
        %v4729 = vpack.c.b16 %v4653, %v4649
        %v4730 = vpack.c.b16 %v4654, %v4650
        %v4731 = vpack.c.b16 %v4655, %v4651
        %v4732 = vpack.c.b16 %v4656, %v4652
        %v4733 = vpack.c.b16 %v4661, %v4657
        %v4734 = vpack.c.b16 %v4662, %v4658
        %v4735 = vpack.c.b16 %v4663, %v4659
        %v4736 = vpack.c.b16 %v4664, %v4660
        %v4737 = vpack.c.b16 %v4669, %v4665
        %v4738 = vpack.c.b16 %v4670, %v4666
        %v4739 = vpack.c.b16 %v4671, %v4667
        %v4740 = vpack.c.b16 %v4672, %v4668
        %v4741 = vpack.c.b16 %v4677, %v4673
        %v4742 = vpack.c.b16 %v4678, %v4674
        %v4743 = vpack.c.b16 %v4679, %v4675
        %v4744 = vpack.c.b16 %v4680, %v4676
        %4809 = vmatprep.subr.bf16.mxu0 %v4710
        %4810 = vmatpush1.bf16.msra.mxu0 %v4709
        %4811 = vmatprep.subr.bf16.mxu0 %v4706
        %4812 = vmatpush1.bf16.msra.mxu0 %v4705
        %4813 = vmatprep.subr.bf16.mxu0 %v4702
        %4814 = vmatpush1.bf16.msra.mxu0 %v4701
        %4815 = vmatprep.subr.bf16.mxu0 %v4698
        %4816 = vmatpush1.bf16.msra.mxu0 %v4697
        %4817 = vmatprep.subr.bf16.mxu0 %v4694
        %4818 = vmatpush1.bf16.msra.mxu0 %v4693
        %4819 = vmatprep.subr.bf16.mxu0 %v4690
        %4820 = vmatpush1.bf16.msra.mxu0 %v4689
        %4821 = vmatprep.subr.bf16.mxu0 %v4686
        %4822 = vmatpush1.bf16.msra.mxu0 %v4685
        %4823 = vmatprep.subr.bf16.mxu0 %v4682
        %4824 = vmatpush1.bf16.msra.mxu0 %v4681
        %4825 = vmatprep.subr.bf16.mxu0 %v4742
        %4826 = vmatpush2.bf16.msra.mxu0 %v4741
        %4827 = vmatprep.subr.bf16.mxu0 %v4738
        %4828 = vmatpush2.bf16.msra.mxu0 %v4737
        %4829 = vmatprep.subr.bf16.mxu0 %v4734
        %4830 = vmatpush2.bf16.msra.mxu0 %v4733
        %4831 = vmatprep.subr.bf16.mxu0 %v4730
        %4832 = vmatpush2.bf16.msra.mxu0 %v4729
        %4833 = vmatprep.subr.bf16.mxu0 %v4726
        %4834 = vmatpush2.bf16.msra.mxu0 %v4725
        %4835 = vmatprep.subr.bf16.mxu0 %v4722
        %4836 = vmatpush2.bf16.msra.mxu0 %v4721
        %4837 = vmatprep.subr.bf16.mxu0 %v4718
        %4838 = vmatpush2.bf16.msra.mxu0 %v4717
        %4839 = vmatprep.subr.bf16.mxu0 %v4714
        %4840 = vmatpush2.bf16.msra.mxu0 %v4713
        %4841 = vmatprep.mubr.bf16.mxu0 %v4420
        %4842 = vmatmul.mubr.bf16.gmra.mxu0 %v4419
        %v4843 = vpop.f32.mrf.mxu0
        %v4844 = vadd.f32 %v4485, %v4843
        %v4845 = vpop.f32.mrf.mxu0
        %v4846 = vadd.f32 %v4486, %v4845
        %v4847 = vpop.f32.mrf.mxu0
        %v4848 = vpop.f32.mrf.mxu0
        %4849 = vdwg.mxu0
        %4850 = vmatprep.subr.bf16.mxu0 %v4712
        %4851 = vmatpush1.bf16.msra.mxu0 %v4711
        %4852 = vmatprep.subr.bf16.mxu0 %v4708
        %4853 = vmatpush1.bf16.msra.mxu0 %v4707
        %4854 = vmatprep.subr.bf16.mxu0 %v4704
        %4855 = vmatpush1.bf16.msra.mxu0 %v4703
        %4856 = vmatprep.subr.bf16.mxu0 %v4700
        %4857 = vmatpush1.bf16.msra.mxu0 %v4699
        %4858 = vmatprep.subr.bf16.mxu0 %v4696
        %4859 = vmatpush1.bf16.msra.mxu0 %v4695
        %4860 = vmatprep.subr.bf16.mxu0 %v4692
        %4861 = vmatpush1.bf16.msra.mxu0 %v4691
        %4862 = vmatprep.subr.bf16.mxu0 %v4688
        %4863 = vmatpush1.bf16.msra.mxu0 %v4687
        %4864 = vmatprep.subr.bf16.mxu0 %v4684
        %4865 = vmatpush1.bf16.msra.mxu0 %v4683
        %4866 = vmatprep.subr.bf16.mxu0 %v4744
        %4867 = vmatpush2.bf16.msra.mxu0 %v4743
        %4868 = vmatprep.subr.bf16.mxu0 %v4740
        %4869 = vmatpush2.bf16.msra.mxu0 %v4739
        %4870 = vmatprep.subr.bf16.mxu0 %v4736
        %4871 = vmatpush2.bf16.msra.mxu0 %v4735
        %4872 = vmatprep.subr.bf16.mxu0 %v4732
        %4873 = vmatpush2.bf16.msra.mxu0 %v4731
        %4874 = vmatprep.subr.bf16.mxu0 %v4728
        %4875 = vmatpush2.bf16.msra.mxu0 %v4727
        %4876 = vmatprep.subr.bf16.mxu0 %v4724
        %4877 = vmatpush2.bf16.msra.mxu0 %v4723
        %4878 = vmatprep.subr.bf16.mxu0 %v4720
        %4879 = vmatpush2.bf16.msra.mxu0 %v4719
        %4880 = vmatprep.subr.bf16.mxu0 %v4716
        %4881 = vmatpush2.bf16.msra.mxu0 %v4715
        %4882 = vmatprep.mubr.bf16.mxu0 %v4420
        %4883 = vmatmul.mubr.bf16.gmra.mxu0 %v4419
        %v4884 = vpop.f32.mrf.mxu0
        %v4885 = vadd.f32 %v4487, %v4884
        %v4886 = vpop.f32.mrf.mxu0
        %v4887 = vadd.f32 %v4488, %v4886
        %v4888 = vpop.f32.mrf.mxu0
        %v4889 = vpop.f32.mrf.mxu0
        %4890 = vdwg.mxu0
        %v4891 = vxor.u32 %v4844, 2147483648
        %v4892 = vxor.u32 %v4846, 2147483648
        %v4893 = vxor.u32 %v4885, 2147483648
        %v4894 = vmul.f32 %v4891, 1.442695
        %v4895 = vpow.pop %v4894
        %v4896 = vmul.f32 %v4892, 1.442695
        %v4897 = vpow.pop %v4896
        %v4898 = vmul.f32 %v4893, 1.442695
        %v4899 = vpow.pop %v4898
        %v4900 = vadd.f32 %v4895, 1.0
        %v4901 = vadd.f32 %v4897, 1.0
        %v4902 = vadd.f32 %v4899, 1.0
        %v4903 = vrcp.pop %v4900
        %v4904 = vmul.f32 1.0, %v4903
        %v4905 = vrcp.pop %v4901
        %v4906 = vmul.f32 1.0, %v4905
        %v4907 = vrcp.pop %v4902
        %v4908 = vmul.f32 1.0, %v4907
        %v4909 = vtanh.pop %v4887
        %v4910 = vld [vmem:[%s1592] sm:$0xff]
        %v4911 = vmul.f32 %v4906, %v4910
        %v4912 = vmul.f32 %v4904, %v4909
        %v4913 = vadd.f32 %v4911, %v4912
        %v4914 = vtanh.pop %v4913
        %v4915 = vmul.f32 %v4908, %v4914
        %4916 = vst [vmem:[%s1097] sm:$0xff] %v4915
        %4917 = vst [vmem:[%s1592] sm:$0xff] %v4913
        %v4918 = vpack.c.bf16 %v4915, %v4915
        %4919 = vmatprep.subr.bf16.mxu0 0
        %4920 = vmatpush1.bf16.msra.mxu0 %v1641
        %4921 = vmatprep.subr.bf16.mxu0 0
        %4922 = vmatpush1.bf16.msra.mxu0 %v1640
        %4923 = vmatprep.subr.bf16.mxu0 0
        %4924 = vmatpush1.bf16.msra.mxu0 %v1639
        %4925 = vmatprep.subr.bf16.mxu0 0
        %4926 = vmatpush1.bf16.msra.mxu0 %v1638
        %4927 = vmatprep.subr.bf16.mxu0 0
        %4928 = vmatpush1.bf16.msra.mxu0 %v1637
        %4929 = vmatprep.subr.bf16.mxu0 0
        %4930 = vmatpush1.bf16.msra.mxu0 %v1636
        %4931 = vmatprep.subr.bf16.mxu0 0
        %4932 = vmatpush1.bf16.msra.mxu0 %v1635
        %4933 = vmatprep.subr.bf16.mxu0 0
        %4934 = vmatpush1.bf16.msra.mxu0 %v1634
        %4935 = vmatprep.subr.bf16.mxu0 0
        %4936 = vmatpush2.bf16.msra.mxu0 0
        %4937 = vmatprep.subr.bf16.mxu0 0
        %4938 = vmatpush2.bf16.msra.mxu0 0
        %4939 = vmatprep.subr.bf16.mxu0 0
        %4940 = vmatpush2.bf16.msra.mxu0 0
        %4941 = vmatprep.subr.bf16.mxu0 0
        %4942 = vmatpush2.bf16.msra.mxu0 0
        %4943 = vmatprep.subr.bf16.mxu0 0
        %4944 = vmatpush2.bf16.msra.mxu0 0
        %4945 = vmatprep.subr.bf16.mxu0 0
        %4946 = vmatpush2.bf16.msra.mxu0 0
        %4947 = vmatprep.subr.bf16.mxu0 0
        %4948 = vmatpush2.bf16.msra.mxu0 0
        %4949 = vmatprep.subr.bf16.mxu0 0
        %4950 = vmatpush2.bf16.msra.mxu0 0
        %4951 = vmatprep.mubr.bf16.mxu0 0
        %4952 = vmatmul.mubr.bf16.gmra.mxu0 %v4918
        %v4953 = vpop.f32.mrf.mxu0
        %v4954 = vadd.f32 %v526, %v4953
        %v4955 = vpop.f32.mrf.mxu0
        %v4956 = vpop.f32.mrf.mxu0
        %v4957 = vpop.f32.mrf.mxu0
        %4958 = vdwg.mxu0
        %v4959 = vtanh.pop %v4954
        %s4960 = scalar_lea.vmem %s481, 24 [#allocation14]
        %4961 = vst [vmem:[%s4960] sm:$0xff] %v4959
        %s4962 = scalar_lea.vmem %s423, 32 [#allocation2]
        %v4963 = vld [vmem:[%s4962] sm:$0xff]
        %v4964 = vpack.c.bf16 %v4963, %v4963
        %v4966 = vsel %vm553, %v4964, 0
        %4968 = vmatprep.subr.bf16.mxu0 0
        %4969 = vmatpush1.bf16.msra.mxu0 0
        %4970 = vmatprep.subr.bf16.mxu0 0
        %4971 = vmatpush1.bf16.msra.mxu0 0
        %4972 = vmatprep.subr.bf16.mxu0 0
        %4973 = vmatpush1.bf16.msra.mxu0 0
        %4974 = vmatprep.subr.bf16.mxu0 0
        %4975 = vmatpush1.bf16.msra.mxu0 0
        %4976 = vmatprep.subr.bf16.mxu0 0
        %4977 = vmatpush1.bf16.msra.mxu0 %v548
        %4978 = vmatprep.subr.bf16.mxu0 0
        %4979 = vmatpush1.bf16.msra.mxu0 %v547
        %4980 = vmatprep.subr.bf16.mxu0 0
        %4981 = vmatpush1.bf16.msra.mxu0 %v546
        %4982 = vmatprep.subr.bf16.mxu0 0
        %4983 = vmatpush1.bf16.msra.mxu0 %v545
        %4984 = vmatprep.subr.bf16.mxu0 0
        %4985 = vmatpush2.bf16.msra.mxu0 0
        %4986 = vmatprep.subr.bf16.mxu0 0
        %4987 = vmatpush2.bf16.msra.mxu0 0
        %4988 = vmatprep.subr.bf16.mxu0 0
        %4989 = vmatpush2.bf16.msra.mxu0 0
        %4990 = vmatprep.subr.bf16.mxu0 0
        %4991 = vmatpush2.bf16.msra.mxu0 0
        %4992 = vmatprep.subr.bf16.mxu0 0
        %4993 = vmatpush2.bf16.msra.mxu0 0
        %4994 = vmatprep.subr.bf16.mxu0 0
        %4995 = vmatpush2.bf16.msra.mxu0 0
        %4996 = vmatprep.subr.bf16.mxu0 0
        %4997 = vmatpush2.bf16.msra.mxu0 0
        %4998 = vmatprep.subr.bf16.mxu0 0
        %4999 = vmatpush2.bf16.msra.mxu0 0
        %5000 = vmatprep.mubr.bf16.mxu0 0
        %5001 = vmatmul.mubr.bf16.gmra.mxu0 %v4966
        %v5002 = vpop.f32.mrf.mxu0
        %v5003 = vadd.f32 %v509, %v5002
        %v5004 = vpop.f32.mrf.mxu0
        %v5005 = vpop.f32.mrf.mxu0
        %v5006 = vpop.f32.mrf.mxu0
        %5007 = vdwg.mxu0
        %v5008 = vld [vmem:[#allocation15] sm:$0xff]
        %v5009 = vpack.c.bf16 %v5003, %v5003
        %v5010 = vpack.c.bf16 %v5008, %v5008
        %v5011 = vld [vmem:[#allocation7] sm:$0xff]
        %v5012 = vld [vmem:[#allocation7 + $0x8] sm:$0xff]
        %v5013 = vld [vmem:[#allocation7 + $0x10] sm:$0xff]
        %v5014 = vld [vmem:[#allocation7 + $0x18] sm:$0xff]
        %v5015 = vld [vmem:[#allocation7 + $0x20] sm:$0xff]
        %v5016 = vld [vmem:[#allocation7 + $0x28] sm:$0xff]
        %v5017 = vld [vmem:[#allocation7 + $0x30] sm:$0xff]
        %v5018 = vld [vmem:[#allocation7 + $0x38] sm:$0xff]
        %v5019 = vld [vmem:[#allocation7 + $0x40] sm:$0xff]
        %v5020 = vld [vmem:[#allocation7 + $0x48] sm:$0xff]
        %v5021 = vld [vmem:[#allocation7 + $0x50] sm:$0xff]
        %v5022 = vld [vmem:[#allocation7 + $0x58] sm:$0xff]
        %v5023 = vld [vmem:[#allocation7 + $0x60] sm:$0xff]
        %v5024 = vld [vmem:[#allocation7 + $0x68] sm:$0xff]
        %v5025 = vld [vmem:[#allocation7 + $0x70] sm:$0xff]
        %v5026 = vld [vmem:[#allocation7 + $0x78] sm:$0xff]
        %v5027 = vld [vmem:[#allocation7 + $0x80] sm:$0xff]
        %v5028 = vld [vmem:[#allocation7 + $0x88] sm:$0xff]
        %v5029 = vld [vmem:[#allocation7 + $0x90] sm:$0xff]
        %v5030 = vld [vmem:[#allocation7 + $0x98] sm:$0xff]
        %v5031 = vld [vmem:[#allocation7 + $0xa0] sm:$0xff]
        %v5032 = vld [vmem:[#allocation7 + $0xa8] sm:$0xff]
        %v5033 = vld [vmem:[#allocation7 + $0xb0] sm:$0xff]
        %v5034 = vld [vmem:[#allocation7 + $0xb8] sm:$0xff]
        %v5035 = vld [vmem:[#allocation7 + $0xc0] sm:$0xff]
        %v5036 = vld [vmem:[#allocation7 + $0xc8] sm:$0xff]
        %v5037 = vld [vmem:[#allocation7 + $0xd0] sm:$0xff]
        %v5038 = vld [vmem:[#allocation7 + $0xd8] sm:$0xff]
        %v5039 = vld [vmem:[#allocation7 + $0xe0] sm:$0xff]
        %v5040 = vld [vmem:[#allocation7 + $0xe8] sm:$0xff]
        %v5041 = vld [vmem:[#allocation7 + $0xf0] sm:$0xff]
        %v5042 = vld [vmem:[#allocation7 + $0xf8] sm:$0xff]
        %v5043 = vld [vmem:[#allocation7 + $0x100] sm:$0xff]
        %v5044 = vld [vmem:[#allocation7 + $0x108] sm:$0xff]
        %v5045 = vld [vmem:[#allocation7 + $0x110] sm:$0xff]
        %v5046 = vld [vmem:[#allocation7 + $0x118] sm:$0xff]
        %v5047 = vld [vmem:[#allocation7 + $0x120] sm:$0xff]
        %v5048 = vld [vmem:[#allocation7 + $0x128] sm:$0xff]
        %v5049 = vld [vmem:[#allocation7 + $0x130] sm:$0xff]
        %v5050 = vld [vmem:[#allocation7 + $0x138] sm:$0xff]
        %v5051 = vld [vmem:[#allocation7 + $0x140] sm:$0xff]
        %v5052 = vld [vmem:[#allocation7 + $0x148] sm:$0xff]
        %v5053 = vld [vmem:[#allocation7 + $0x150] sm:$0xff]
        %v5054 = vld [vmem:[#allocation7 + $0x158] sm:$0xff]
        %v5055 = vld [vmem:[#allocation7 + $0x160] sm:$0xff]
        %v5056 = vld [vmem:[#allocation7 + $0x168] sm:$0xff]
        %v5057 = vld [vmem:[#allocation7 + $0x170] sm:$0xff]
        %v5058 = vld [vmem:[#allocation7 + $0x178] sm:$0xff]
        %v5059 = vld [vmem:[#allocation7 + $0x180] sm:$0xff]
        %v5060 = vld [vmem:[#allocation7 + $0x188] sm:$0xff]
        %v5061 = vld [vmem:[#allocation7 + $0x190] sm:$0xff]
        %v5062 = vld [vmem:[#allocation7 + $0x198] sm:$0xff]
        %v5063 = vld [vmem:[#allocation7 + $0x1a0] sm:$0xff]
        %v5064 = vld [vmem:[#allocation7 + $0x1a8] sm:$0xff]
        %v5065 = vld [vmem:[#allocation7 + $0x1b0] sm:$0xff]
        %v5066 = vld [vmem:[#allocation7 + $0x1b8] sm:$0xff]
        %v5067 = vld [vmem:[#allocation7 + $0x1c0] sm:$0xff]
        %v5068 = vld [vmem:[#allocation7 + $0x1c8] sm:$0xff]
        %v5069 = vld [vmem:[#allocation7 + $0x1d0] sm:$0xff]
        %v5070 = vld [vmem:[#allocation7 + $0x1d8] sm:$0xff]
        %v5071 = vld [vmem:[#allocation7 + $0x1e0] sm:$0xff]
        %v5072 = vld [vmem:[#allocation7 + $0x1e8] sm:$0xff]
        %v5073 = vld [vmem:[#allocation7 + $0x1f0] sm:$0xff]
        %v5074 = vld [vmem:[#allocation7 + $0x1f8] sm:$0xff]
        %v5075 = vld [vmem:[%s4] sm:$0xff]
        %v5076 = vld [vmem:[%s4 + $0x8] sm:$0xff]
        %v5077 = vld [vmem:[%s4 + $0x10] sm:$0xff]
        %v5078 = vld [vmem:[%s4 + $0x18] sm:$0xff]
        %v5143 = vunpack.c.l.b16 %v5011
        %v5144 = vunpack.c.h.b16 %v5011
        %v5145 = vunpack.c.l.b16 %v5012
        %v5146 = vunpack.c.h.b16 %v5012
        %v5147 = vunpack.c.l.b16 %v5013
        %v5148 = vunpack.c.h.b16 %v5013
        %v5149 = vunpack.c.l.b16 %v5014
        %v5150 = vunpack.c.h.b16 %v5014
        %v5151 = vunpack.c.l.b16 %v5015
        %v5152 = vunpack.c.h.b16 %v5015
        %v5153 = vunpack.c.l.b16 %v5016
        %v5154 = vunpack.c.h.b16 %v5016
        %v5155 = vunpack.c.l.b16 %v5017
        %v5156 = vunpack.c.h.b16 %v5017
        %v5157 = vunpack.c.l.b16 %v5018
        %v5158 = vunpack.c.h.b16 %v5018
        %v5159 = vunpack.c.l.b16 %v5019
        %v5160 = vunpack.c.h.b16 %v5019
        %v5161 = vunpack.c.l.b16 %v5020
        %v5162 = vunpack.c.h.b16 %v5020
        %v5163 = vunpack.c.l.b16 %v5021
        %v5164 = vunpack.c.h.b16 %v5021
        %v5165 = vunpack.c.l.b16 %v5022
        %v5166 = vunpack.c.h.b16 %v5022
        %v5167 = vunpack.c.l.b16 %v5023
        %v5168 = vunpack.c.h.b16 %v5023
        %v5169 = vunpack.c.l.b16 %v5024
        %v5170 = vunpack.c.h.b16 %v5024
        %v5171 = vunpack.c.l.b16 %v5025
        %v5172 = vunpack.c.h.b16 %v5025
        %v5173 = vunpack.c.l.b16 %v5026
        %v5174 = vunpack.c.h.b16 %v5026
        %v5175 = vunpack.c.l.b16 %v5027
        %v5176 = vunpack.c.h.b16 %v5027
        %v5177 = vunpack.c.l.b16 %v5028
        %v5178 = vunpack.c.h.b16 %v5028
        %v5179 = vunpack.c.l.b16 %v5029
        %v5180 = vunpack.c.h.b16 %v5029
        %v5181 = vunpack.c.l.b16 %v5030
        %v5182 = vunpack.c.h.b16 %v5030
        %v5183 = vunpack.c.l.b16 %v5031
        %v5184 = vunpack.c.h.b16 %v5031
        %v5185 = vunpack.c.l.b16 %v5032
        %v5186 = vunpack.c.h.b16 %v5032
        %v5187 = vunpack.c.l.b16 %v5033
        %v5188 = vunpack.c.h.b16 %v5033
        %v5189 = vunpack.c.l.b16 %v5034
        %v5190 = vunpack.c.h.b16 %v5034
        %v5191 = vunpack.c.l.b16 %v5035
        %v5192 = vunpack.c.h.b16 %v5035
        %v5193 = vunpack.c.l.b16 %v5036
        %v5194 = vunpack.c.h.b16 %v5036
        %v5195 = vunpack.c.l.b16 %v5037
        %v5196 = vunpack.c.h.b16 %v5037
        %v5197 = vunpack.c.l.b16 %v5038
        %v5198 = vunpack.c.h.b16 %v5038
        %v5199 = vunpack.c.l.b16 %v5039
        %v5200 = vunpack.c.h.b16 %v5039
        %v5201 = vunpack.c.l.b16 %v5040
        %v5202 = vunpack.c.h.b16 %v5040
        %v5203 = vunpack.c.l.b16 %v5041
        %v5204 = vunpack.c.h.b16 %v5041
        %v5205 = vunpack.c.l.b16 %v5042
        %v5206 = vunpack.c.h.b16 %v5042
        %v5207 = vunpack.c.l.b16 %v5043
        %v5208 = vunpack.c.h.b16 %v5043
        %v5209 = vunpack.c.l.b16 %v5044
        %v5210 = vunpack.c.h.b16 %v5044
        %v5211 = vunpack.c.l.b16 %v5045
        %v5212 = vunpack.c.h.b16 %v5045
        %v5213 = vunpack.c.l.b16 %v5046
        %v5214 = vunpack.c.h.b16 %v5046
        %v5215 = vunpack.c.l.b16 %v5047
        %v5216 = vunpack.c.h.b16 %v5047
        %v5217 = vunpack.c.l.b16 %v5048
        %v5218 = vunpack.c.h.b16 %v5048
        %v5219 = vunpack.c.l.b16 %v5049
        %v5220 = vunpack.c.h.b16 %v5049
        %v5221 = vunpack.c.l.b16 %v5050
        %v5222 = vunpack.c.h.b16 %v5050
        %v5223 = vunpack.c.l.b16 %v5051
        %v5224 = vunpack.c.h.b16 %v5051
        %v5225 = vunpack.c.l.b16 %v5052
        %v5226 = vunpack.c.h.b16 %v5052
        %v5227 = vunpack.c.l.b16 %v5053
        %v5228 = vunpack.c.h.b16 %v5053
        %v5229 = vunpack.c.l.b16 %v5054
        %v5230 = vunpack.c.h.b16 %v5054
        %v5231 = vunpack.c.l.b16 %v5055
        %v5232 = vunpack.c.h.b16 %v5055
        %v5233 = vunpack.c.l.b16 %v5056
        %v5234 = vunpack.c.h.b16 %v5056
        %v5235 = vunpack.c.l.b16 %v5057
        %v5236 = vunpack.c.h.b16 %v5057
        %v5237 = vunpack.c.l.b16 %v5058
        %v5238 = vunpack.c.h.b16 %v5058
        %v5239 = vunpack.c.l.b16 %v5059
        %v5240 = vunpack.c.h.b16 %v5059
        %v5241 = vunpack.c.l.b16 %v5060
        %v5242 = vunpack.c.h.b16 %v5060
        %v5243 = vunpack.c.l.b16 %v5061
        %v5244 = vunpack.c.h.b16 %v5061
        %v5245 = vunpack.c.l.b16 %v5062
        %v5246 = vunpack.c.h.b16 %v5062
        %v5247 = vunpack.c.l.b16 %v5063
        %v5248 = vunpack.c.h.b16 %v5063
        %v5249 = vunpack.c.l.b16 %v5064
        %v5250 = vunpack.c.h.b16 %v5064
        %v5251 = vunpack.c.l.b16 %v5065
        %v5252 = vunpack.c.h.b16 %v5065
        %v5253 = vunpack.c.l.b16 %v5066
        %v5254 = vunpack.c.h.b16 %v5066
        %v5255 = vunpack.c.l.b16 %v5067
        %v5256 = vunpack.c.h.b16 %v5067
        %v5257 = vunpack.c.l.b16 %v5068
        %v5258 = vunpack.c.h.b16 %v5068
        %v5259 = vunpack.c.l.b16 %v5069
        %v5260 = vunpack.c.h.b16 %v5069
        %v5261 = vunpack.c.l.b16 %v5070
        %v5262 = vunpack.c.h.b16 %v5070
        %v5263 = vunpack.c.l.b16 %v5071
        %v5264 = vunpack.c.h.b16 %v5071
        %v5265 = vunpack.c.l.b16 %v5072
        %v5266 = vunpack.c.h.b16 %v5072
        %v5267 = vunpack.c.l.b16 %v5073
        %v5268 = vunpack.c.h.b16 %v5073
        %v5269 = vunpack.c.l.b16 %v5074
        %v5270 = vunpack.c.h.b16 %v5074
        %v5271 = vpack.c.b16 %v5147, %v5143
        %v5272 = vpack.c.b16 %v5148, %v5144
        %v5273 = vpack.c.b16 %v5149, %v5145
        %v5274 = vpack.c.b16 %v5150, %v5146
        %v5275 = vpack.c.b16 %v5155, %v5151
        %v5276 = vpack.c.b16 %v5156, %v5152
        %v5277 = vpack.c.b16 %v5157, %v5153
        %v5278 = vpack.c.b16 %v5158, %v5154
        %v5279 = vpack.c.b16 %v5163, %v5159
        %v5280 = vpack.c.b16 %v5164, %v5160
        %v5281 = vpack.c.b16 %v5165, %v5161
        %v5282 = vpack.c.b16 %v5166, %v5162
        %v5283 = vpack.c.b16 %v5171, %v5167
        %v5284 = vpack.c.b16 %v5172, %v5168
        %v5285 = vpack.c.b16 %v5173, %v5169
        %v5286 = vpack.c.b16 %v5174, %v5170
        %v5287 = vpack.c.b16 %v5179, %v5175
        %v5288 = vpack.c.b16 %v5180, %v5176
        %v5289 = vpack.c.b16 %v5181, %v5177
        %v5290 = vpack.c.b16 %v5182, %v5178
        %v5291 = vpack.c.b16 %v5187, %v5183
        %v5292 = vpack.c.b16 %v5188, %v5184
        %v5293 = vpack.c.b16 %v5189, %v5185
        %v5294 = vpack.c.b16 %v5190, %v5186
        %v5295 = vpack.c.b16 %v5195, %v5191
        %v5296 = vpack.c.b16 %v5196, %v5192
        %v5297 = vpack.c.b16 %v5197, %v5193
        %v5298 = vpack.c.b16 %v5198, %v5194
        %v5299 = vpack.c.b16 %v5203, %v5199
        %v5300 = vpack.c.b16 %v5204, %v5200
        %v5301 = vpack.c.b16 %v5205, %v5201
        %v5302 = vpack.c.b16 %v5206, %v5202
        %v5303 = vpack.c.b16 %v5211, %v5207
        %v5304 = vpack.c.b16 %v5212, %v5208
        %v5305 = vpack.c.b16 %v5213, %v5209
        %v5306 = vpack.c.b16 %v5214, %v5210
        %v5307 = vpack.c.b16 %v5219, %v5215
        %v5308 = vpack.c.b16 %v5220, %v5216
        %v5309 = vpack.c.b16 %v5221, %v5217
        %v5310 = vpack.c.b16 %v5222, %v5218
        %v5311 = vpack.c.b16 %v5227, %v5223
        %v5312 = vpack.c.b16 %v5228, %v5224
        %v5313 = vpack.c.b16 %v5229, %v5225
        %v5314 = vpack.c.b16 %v5230, %v5226
        %v5315 = vpack.c.b16 %v5235, %v5231
        %v5316 = vpack.c.b16 %v5236, %v5232
        %v5317 = vpack.c.b16 %v5237, %v5233
        %v5318 = vpack.c.b16 %v5238, %v5234
        %v5319 = vpack.c.b16 %v5243, %v5239
        %v5320 = vpack.c.b16 %v5244, %v5240
        %v5321 = vpack.c.b16 %v5245, %v5241
        %v5322 = vpack.c.b16 %v5246, %v5242
        %v5323 = vpack.c.b16 %v5251, %v5247
        %v5324 = vpack.c.b16 %v5252, %v5248
        %v5325 = vpack.c.b16 %v5253, %v5249
        %v5326 = vpack.c.b16 %v5254, %v5250
        %v5327 = vpack.c.b16 %v5259, %v5255
        %v5328 = vpack.c.b16 %v5260, %v5256
        %v5329 = vpack.c.b16 %v5261, %v5257
        %v5330 = vpack.c.b16 %v5262, %v5258
        %v5331 = vpack.c.b16 %v5267, %v5263
        %v5332 = vpack.c.b16 %v5268, %v5264
        %v5333 = vpack.c.b16 %v5269, %v5265
        %v5334 = vpack.c.b16 %v5270, %v5266
        %5399 = vmatprep.subr.bf16.mxu0 %v5300
        %5400 = vmatpush1.bf16.msra.mxu0 %v5299
        %5401 = vmatprep.subr.bf16.mxu0 %v5296
        %5402 = vmatpush1.bf16.msra.mxu0 %v5295
        %5403 = vmatprep.subr.bf16.mxu0 %v5292
        %5404 = vmatpush1.bf16.msra.mxu0 %v5291
        %5405 = vmatprep.subr.bf16.mxu0 %v5288
        %5406 = vmatpush1.bf16.msra.mxu0 %v5287
        %5407 = vmatprep.subr.bf16.mxu0 %v5284
        %5408 = vmatpush1.bf16.msra.mxu0 %v5283
        %5409 = vmatprep.subr.bf16.mxu0 %v5280
        %5410 = vmatpush1.bf16.msra.mxu0 %v5279
        %5411 = vmatprep.subr.bf16.mxu0 %v5276
        %5412 = vmatpush1.bf16.msra.mxu0 %v5275
        %5413 = vmatprep.subr.bf16.mxu0 %v5272
        %5414 = vmatpush1.bf16.msra.mxu0 %v5271
        %5415 = vmatprep.subr.bf16.mxu0 %v5332
        %5416 = vmatpush2.bf16.msra.mxu0 %v5331
        %5417 = vmatprep.subr.bf16.mxu0 %v5328
        %5418 = vmatpush2.bf16.msra.mxu0 %v5327
        %5419 = vmatprep.subr.bf16.mxu0 %v5324
        %5420 = vmatpush2.bf16.msra.mxu0 %v5323
        %5421 = vmatprep.subr.bf16.mxu0 %v5320
        %5422 = vmatpush2.bf16.msra.mxu0 %v5319
        %5423 = vmatprep.subr.bf16.mxu0 %v5316
        %5424 = vmatpush2.bf16.msra.mxu0 %v5315
        %5425 = vmatprep.subr.bf16.mxu0 %v5312
        %5426 = vmatpush2.bf16.msra.mxu0 %v5311
        %5427 = vmatprep.subr.bf16.mxu0 %v5308
        %5428 = vmatpush2.bf16.msra.mxu0 %v5307
        %5429 = vmatprep.subr.bf16.mxu0 %v5304
        %5430 = vmatpush2.bf16.msra.mxu0 %v5303
        %5431 = vmatprep.mubr.bf16.mxu0 %v5010
        %5432 = vmatmul.mubr.bf16.gmra.mxu0 %v5009
        %v5433 = vpop.f32.mrf.mxu0
        %v5434 = vadd.f32 %v5075, %v5433
        %v5435 = vpop.f32.mrf.mxu0
        %v5436 = vadd.f32 %v5076, %v5435
        %v5437 = vpop.f32.mrf.mxu0
        %v5438 = vpop.f32.mrf.mxu0
        %5439 = vdwg.mxu0
        %5440 = vmatprep.subr.bf16.mxu0 %v5302
        %5441 = vmatpush1.bf16.msra.mxu0 %v5301
        %5442 = vmatprep.subr.bf16.mxu0 %v5298
        %5443 = vmatpush1.bf16.msra.mxu0 %v5297
        %5444 = vmatprep.subr.bf16.mxu0 %v5294
        %5445 = vmatpush1.bf16.msra.mxu0 %v5293
        %5446 = vmatprep.subr.bf16.mxu0 %v5290
        %5447 = vmatpush1.bf16.msra.mxu0 %v5289
        %5448 = vmatprep.subr.bf16.mxu0 %v5286
        %5449 = vmatpush1.bf16.msra.mxu0 %v5285
        %5450 = vmatprep.subr.bf16.mxu0 %v5282
        %5451 = vmatpush1.bf16.msra.mxu0 %v5281
        %5452 = vmatprep.subr.bf16.mxu0 %v5278
        %5453 = vmatpush1.bf16.msra.mxu0 %v5277
        %5454 = vmatprep.subr.bf16.mxu0 %v5274
        %5455 = vmatpush1.bf16.msra.mxu0 %v5273
        %5456 = vmatprep.subr.bf16.mxu0 %v5334
        %5457 = vmatpush2.bf16.msra.mxu0 %v5333
        %5458 = vmatprep.subr.bf16.mxu0 %v5330
        %5459 = vmatpush2.bf16.msra.mxu0 %v5329
        %5460 = vmatprep.subr.bf16.mxu0 %v5326
        %5461 = vmatpush2.bf16.msra.mxu0 %v5325
        %5462 = vmatprep.subr.bf16.mxu0 %v5322
        %5463 = vmatpush2.bf16.msra.mxu0 %v5321
        %5464 = vmatprep.subr.bf16.mxu0 %v5318
        %5465 = vmatpush2.bf16.msra.mxu0 %v5317
        %5466 = vmatprep.subr.bf16.mxu0 %v5314
        %5467 = vmatpush2.bf16.msra.mxu0 %v5313
        %5468 = vmatprep.subr.bf16.mxu0 %v5310
        %5469 = vmatpush2.bf16.msra.mxu0 %v5309
        %5470 = vmatprep.subr.bf16.mxu0 %v5306
        %5471 = vmatpush2.bf16.msra.mxu0 %v5305
        %5472 = vmatprep.mubr.bf16.mxu0 %v5010
        %5473 = vmatmul.mubr.bf16.gmra.mxu0 %v5009
        %v5474 = vpop.f32.mrf.mxu0
        %v5475 = vadd.f32 %v5077, %v5474
        %v5476 = vpop.f32.mrf.mxu0
        %v5477 = vadd.f32 %v5078, %v5476
        %v5478 = vpop.f32.mrf.mxu0
        %v5479 = vpop.f32.mrf.mxu0
        %5480 = vdwg.mxu0
        %v5481 = vxor.u32 %v5434, 2147483648
        %v5482 = vxor.u32 %v5436, 2147483648
        %v5483 = vxor.u32 %v5475, 2147483648
        %v5484 = vmul.f32 %v5481, 1.442695
        %v5485 = vpow.pop %v5484
        %v5486 = vmul.f32 %v5482, 1.442695
        %v5487 = vpow.pop %v5486
        %v5488 = vmul.f32 %v5483, 1.442695
        %v5489 = vpow.pop %v5488
        %v5490 = vadd.f32 %v5485, 1.0
        %v5491 = vadd.f32 %v5487, 1.0
        %v5492 = vadd.f32 %v5489, 1.0
        %v5493 = vrcp.pop %v5490
        %v5494 = vmul.f32 1.0, %v5493
        %v5495 = vrcp.pop %v5491
        %v5496 = vmul.f32 1.0, %v5495
        %v5497 = vrcp.pop %v5492
        %v5498 = vmul.f32 1.0, %v5497
        %v5499 = vtanh.pop %v5477
        %v5500 = vld [vmem:[#allocation17] sm:$0xff]
        %v5501 = vmul.f32 %v5496, %v5500
        %v5502 = vmul.f32 %v5494, %v5499
        %v5503 = vadd.f32 %v5501, %v5502
        %v5504 = vtanh.pop %v5503
        %v5505 = vmul.f32 %v5498, %v5504
        %5506 = vst [vmem:[#allocation15] sm:$0xff] %v5505
        %5507 = vst [vmem:[#allocation17] sm:$0xff] %v5503
        %v5508 = vld [vmem:[%s1097] sm:$0xff]
        %v5509 = vpack.c.bf16 %v5505, %v5505
        %v5510 = vpack.c.bf16 %v5508, %v5508
        %v5511 = vld [vmem:[%s1101] sm:$0xff]
        %v5512 = vld [vmem:[%s1101 + $0x8] sm:$0xff]
        %v5513 = vld [vmem:[%s1101 + $0x10] sm:$0xff]
        %v5514 = vld [vmem:[%s1101 + $0x18] sm:$0xff]
        %v5515 = vld [vmem:[%s1101 + $0x20] sm:$0xff]
        %v5516 = vld [vmem:[%s1101 + $0x28] sm:$0xff]
        %v5517 = vld [vmem:[%s1101 + $0x30] sm:$0xff]
        %v5518 = vld [vmem:[%s1101 + $0x38] sm:$0xff]
        %v5519 = vld [vmem:[%s1101 + $0x40] sm:$0xff]
        %v5520 = vld [vmem:[%s1101 + $0x48] sm:$0xff]
        %v5521 = vld [vmem:[%s1101 + $0x50] sm:$0xff]
        %v5522 = vld [vmem:[%s1101 + $0x58] sm:$0xff]
        %v5523 = vld [vmem:[%s1101 + $0x60] sm:$0xff]
        %v5524 = vld [vmem:[%s1101 + $0x68] sm:$0xff]
        %v5525 = vld [vmem:[%s1101 + $0x70] sm:$0xff]
        %v5526 = vld [vmem:[%s1101 + $0x78] sm:$0xff]
        %v5527 = vld [vmem:[%s1101 + $0x80] sm:$0xff]
        %v5528 = vld [vmem:[%s1101 + $0x88] sm:$0xff]
        %v5529 = vld [vmem:[%s1101 + $0x90] sm:$0xff]
        %v5530 = vld [vmem:[%s1101 + $0x98] sm:$0xff]
        %v5531 = vld [vmem:[%s1101 + $0xa0] sm:$0xff]
        %v5532 = vld [vmem:[%s1101 + $0xa8] sm:$0xff]
        %v5533 = vld [vmem:[%s1101 + $0xb0] sm:$0xff]
        %v5534 = vld [vmem:[%s1101 + $0xb8] sm:$0xff]
        %v5535 = vld [vmem:[%s1101 + $0xc0] sm:$0xff]
        %v5536 = vld [vmem:[%s1101 + $0xc8] sm:$0xff]
        %v5537 = vld [vmem:[%s1101 + $0xd0] sm:$0xff]
        %v5538 = vld [vmem:[%s1101 + $0xd8] sm:$0xff]
        %v5539 = vld [vmem:[%s1101 + $0xe0] sm:$0xff]
        %v5540 = vld [vmem:[%s1101 + $0xe8] sm:$0xff]
        %v5541 = vld [vmem:[%s1101 + $0xf0] sm:$0xff]
        %v5542 = vld [vmem:[%s1101 + $0xf8] sm:$0xff]
        %v5543 = vld [vmem:[%s1101 + $0x100] sm:$0xff]
        %v5544 = vld [vmem:[%s1101 + $0x108] sm:$0xff]
        %v5545 = vld [vmem:[%s1101 + $0x110] sm:$0xff]
        %v5546 = vld [vmem:[%s1101 + $0x118] sm:$0xff]
        %v5547 = vld [vmem:[%s1101 + $0x120] sm:$0xff]
        %v5548 = vld [vmem:[%s1101 + $0x128] sm:$0xff]
        %v5549 = vld [vmem:[%s1101 + $0x130] sm:$0xff]
        %v5550 = vld [vmem:[%s1101 + $0x138] sm:$0xff]
        %v5551 = vld [vmem:[%s1101 + $0x140] sm:$0xff]
        %v5552 = vld [vmem:[%s1101 + $0x148] sm:$0xff]
        %v5553 = vld [vmem:[%s1101 + $0x150] sm:$0xff]
        %v5554 = vld [vmem:[%s1101 + $0x158] sm:$0xff]
        %v5555 = vld [vmem:[%s1101 + $0x160] sm:$0xff]
        %v5556 = vld [vmem:[%s1101 + $0x168] sm:$0xff]
        %v5557 = vld [vmem:[%s1101 + $0x170] sm:$0xff]
        %v5558 = vld [vmem:[%s1101 + $0x178] sm:$0xff]
        %v5559 = vld [vmem:[%s1101 + $0x180] sm:$0xff]
        %v5560 = vld [vmem:[%s1101 + $0x188] sm:$0xff]
        %v5561 = vld [vmem:[%s1101 + $0x190] sm:$0xff]
        %v5562 = vld [vmem:[%s1101 + $0x198] sm:$0xff]
        %v5563 = vld [vmem:[%s1101 + $0x1a0] sm:$0xff]
        %v5564 = vld [vmem:[%s1101 + $0x1a8] sm:$0xff]
        %v5565 = vld [vmem:[%s1101 + $0x1b0] sm:$0xff]
        %v5566 = vld [vmem:[%s1101 + $0x1b8] sm:$0xff]
        %v5567 = vld [vmem:[%s1101 + $0x1c0] sm:$0xff]
        %v5568 = vld [vmem:[%s1101 + $0x1c8] sm:$0xff]
        %v5569 = vld [vmem:[%s1101 + $0x1d0] sm:$0xff]
        %v5570 = vld [vmem:[%s1101 + $0x1d8] sm:$0xff]
        %v5571 = vld [vmem:[%s1101 + $0x1e0] sm:$0xff]
        %v5572 = vld [vmem:[%s1101 + $0x1e8] sm:$0xff]
        %v5573 = vld [vmem:[%s1101 + $0x1f0] sm:$0xff]
        %v5574 = vld [vmem:[%s1101 + $0x1f8] sm:$0xff]
        %v5575 = vld [vmem:[%s1166] sm:$0xff]
        %v5576 = vld [vmem:[%s1166 + $0x8] sm:$0xff]
        %v5577 = vld [vmem:[%s1166 + $0x10] sm:$0xff]
        %v5578 = vld [vmem:[%s1166 + $0x18] sm:$0xff]
        %v5643 = vunpack.c.l.b16 %v5511
        %v5644 = vunpack.c.h.b16 %v5511
        %v5645 = vunpack.c.l.b16 %v5512
        %v5646 = vunpack.c.h.b16 %v5512
        %v5647 = vunpack.c.l.b16 %v5513
        %v5648 = vunpack.c.h.b16 %v5513
        %v5649 = vunpack.c.l.b16 %v5514
        %v5650 = vunpack.c.h.b16 %v5514
        %v5651 = vunpack.c.l.b16 %v5515
        %v5652 = vunpack.c.h.b16 %v5515
        %v5653 = vunpack.c.l.b16 %v5516
        %v5654 = vunpack.c.h.b16 %v5516
        %v5655 = vunpack.c.l.b16 %v5517
        %v5656 = vunpack.c.h.b16 %v5517
        %v5657 = vunpack.c.l.b16 %v5518
        %v5658 = vunpack.c.h.b16 %v5518
        %v5659 = vunpack.c.l.b16 %v5519
        %v5660 = vunpack.c.h.b16 %v5519
        %v5661 = vunpack.c.l.b16 %v5520
        %v5662 = vunpack.c.h.b16 %v5520
        %v5663 = vunpack.c.l.b16 %v5521
        %v5664 = vunpack.c.h.b16 %v5521
        %v5665 = vunpack.c.l.b16 %v5522
        %v5666 = vunpack.c.h.b16 %v5522
        %v5667 = vunpack.c.l.b16 %v5523
        %v5668 = vunpack.c.h.b16 %v5523
        %v5669 = vunpack.c.l.b16 %v5524
        %v5670 = vunpack.c.h.b16 %v5524
        %v5671 = vunpack.c.l.b16 %v5525
        %v5672 = vunpack.c.h.b16 %v5525
        %v5673 = vunpack.c.l.b16 %v5526
        %v5674 = vunpack.c.h.b16 %v5526
        %v5675 = vunpack.c.l.b16 %v5527
        %v5676 = vunpack.c.h.b16 %v5527
        %v5677 = vunpack.c.l.b16 %v5528
        %v5678 = vunpack.c.h.b16 %v5528
        %v5679 = vunpack.c.l.b16 %v5529
        %v5680 = vunpack.c.h.b16 %v5529
        %v5681 = vunpack.c.l.b16 %v5530
        %v5682 = vunpack.c.h.b16 %v5530
        %v5683 = vunpack.c.l.b16 %v5531
        %v5684 = vunpack.c.h.b16 %v5531
        %v5685 = vunpack.c.l.b16 %v5532
        %v5686 = vunpack.c.h.b16 %v5532
        %v5687 = vunpack.c.l.b16 %v5533
        %v5688 = vunpack.c.h.b16 %v5533
        %v5689 = vunpack.c.l.b16 %v5534
        %v5690 = vunpack.c.h.b16 %v5534
        %v5691 = vunpack.c.l.b16 %v5535
        %v5692 = vunpack.c.h.b16 %v5535
        %v5693 = vunpack.c.l.b16 %v5536
        %v5694 = vunpack.c.h.b16 %v5536
        %v5695 = vunpack.c.l.b16 %v5537
        %v5696 = vunpack.c.h.b16 %v5537
        %v5697 = vunpack.c.l.b16 %v5538
        %v5698 = vunpack.c.h.b16 %v5538
        %v5699 = vunpack.c.l.b16 %v5539
        %v5700 = vunpack.c.h.b16 %v5539
        %v5701 = vunpack.c.l.b16 %v5540
        %v5702 = vunpack.c.h.b16 %v5540
        %v5703 = vunpack.c.l.b16 %v5541
        %v5704 = vunpack.c.h.b16 %v5541
        %v5705 = vunpack.c.l.b16 %v5542
        %v5706 = vunpack.c.h.b16 %v5542
        %v5707 = vunpack.c.l.b16 %v5543
        %v5708 = vunpack.c.h.b16 %v5543
        %v5709 = vunpack.c.l.b16 %v5544
        %v5710 = vunpack.c.h.b16 %v5544
        %v5711 = vunpack.c.l.b16 %v5545
        %v5712 = vunpack.c.h.b16 %v5545
        %v5713 = vunpack.c.l.b16 %v5546
        %v5714 = vunpack.c.h.b16 %v5546
        %v5715 = vunpack.c.l.b16 %v5547
        %v5716 = vunpack.c.h.b16 %v5547
        %v5717 = vunpack.c.l.b16 %v5548
        %v5718 = vunpack.c.h.b16 %v5548
        %v5719 = vunpack.c.l.b16 %v5549
        %v5720 = vunpack.c.h.b16 %v5549
        %v5721 = vunpack.c.l.b16 %v5550
        %v5722 = vunpack.c.h.b16 %v5550
        %v5723 = vunpack.c.l.b16 %v5551
        %v5724 = vunpack.c.h.b16 %v5551
        %v5725 = vunpack.c.l.b16 %v5552
        %v5726 = vunpack.c.h.b16 %v5552
        %v5727 = vunpack.c.l.b16 %v5553
        %v5728 = vunpack.c.h.b16 %v5553
        %v5729 = vunpack.c.l.b16 %v5554
        %v5730 = vunpack.c.h.b16 %v5554
        %v5731 = vunpack.c.l.b16 %v5555
        %v5732 = vunpack.c.h.b16 %v5555
        %v5733 = vunpack.c.l.b16 %v5556
        %v5734 = vunpack.c.h.b16 %v5556
        %v5735 = vunpack.c.l.b16 %v5557
        %v5736 = vunpack.c.h.b16 %v5557
        %v5737 = vunpack.c.l.b16 %v5558
        %v5738 = vunpack.c.h.b16 %v5558
        %v5739 = vunpack.c.l.b16 %v5559
        %v5740 = vunpack.c.h.b16 %v5559
        %v5741 = vunpack.c.l.b16 %v5560
        %v5742 = vunpack.c.h.b16 %v5560
        %v5743 = vunpack.c.l.b16 %v5561
        %v5744 = vunpack.c.h.b16 %v5561
        %v5745 = vunpack.c.l.b16 %v5562
        %v5746 = vunpack.c.h.b16 %v5562
        %v5747 = vunpack.c.l.b16 %v5563
        %v5748 = vunpack.c.h.b16 %v5563
        %v5749 = vunpack.c.l.b16 %v5564
        %v5750 = vunpack.c.h.b16 %v5564
        %v5751 = vunpack.c.l.b16 %v5565
        %v5752 = vunpack.c.h.b16 %v5565
        %v5753 = vunpack.c.l.b16 %v5566
        %v5754 = vunpack.c.h.b16 %v5566
        %v5755 = vunpack.c.l.b16 %v5567
        %v5756 = vunpack.c.h.b16 %v5567
        %v5757 = vunpack.c.l.b16 %v5568
        %v5758 = vunpack.c.h.b16 %v5568
        %v5759 = vunpack.c.l.b16 %v5569
        %v5760 = vunpack.c.h.b16 %v5569
        %v5761 = vunpack.c.l.b16 %v5570
        %v5762 = vunpack.c.h.b16 %v5570
        %v5763 = vunpack.c.l.b16 %v5571
        %v5764 = vunpack.c.h.b16 %v5571
        %v5765 = vunpack.c.l.b16 %v5572
        %v5766 = vunpack.c.h.b16 %v5572
        %v5767 = vunpack.c.l.b16 %v5573
        %v5768 = vunpack.c.h.b16 %v5573
        %v5769 = vunpack.c.l.b16 %v5574
        %v5770 = vunpack.c.h.b16 %v5574
        %v5771 = vpack.c.b16 %v5647, %v5643
        %v5772 = vpack.c.b16 %v5648, %v5644
        %v5773 = vpack.c.b16 %v5649, %v5645
        %v5774 = vpack.c.b16 %v5650, %v5646
        %v5775 = vpack.c.b16 %v5655, %v5651
        %v5776 = vpack.c.b16 %v5656, %v5652
        %v5777 = vpack.c.b16 %v5657, %v5653
        %v5778 = vpack.c.b16 %v5658, %v5654
        %v5779 = vpack.c.b16 %v5663, %v5659
        %v5780 = vpack.c.b16 %v5664, %v5660
        %v5781 = vpack.c.b16 %v5665, %v5661
        %v5782 = vpack.c.b16 %v5666, %v5662
        %v5783 = vpack.c.b16 %v5671, %v5667
        %v5784 = vpack.c.b16 %v5672, %v5668
        %v5785 = vpack.c.b16 %v5673, %v5669
        %v5786 = vpack.c.b16 %v5674, %v5670
        %v5787 = vpack.c.b16 %v5679, %v5675
        %v5788 = vpack.c.b16 %v5680, %v5676
        %v5789 = vpack.c.b16 %v5681, %v5677
        %v5790 = vpack.c.b16 %v5682, %v5678
        %v5791 = vpack.c.b16 %v5687, %v5683
        %v5792 = vpack.c.b16 %v5688, %v5684
        %v5793 = vpack.c.b16 %v5689, %v5685
        %v5794 = vpack.c.b16 %v5690, %v5686
        %v5795 = vpack.c.b16 %v5695, %v5691
        %v5796 = vpack.c.b16 %v5696, %v5692
        %v5797 = vpack.c.b16 %v5697, %v5693
        %v5798 = vpack.c.b16 %v5698, %v5694
        %v5799 = vpack.c.b16 %v5703, %v5699
        %v5800 = vpack.c.b16 %v5704, %v5700
        %v5801 = vpack.c.b16 %v5705, %v5701
        %v5802 = vpack.c.b16 %v5706, %v5702
        %v5803 = vpack.c.b16 %v5711, %v5707
        %v5804 = vpack.c.b16 %v5712, %v5708
        %v5805 = vpack.c.b16 %v5713, %v5709
        %v5806 = vpack.c.b16 %v5714, %v5710
        %v5807 = vpack.c.b16 %v5719, %v5715
        %v5808 = vpack.c.b16 %v5720, %v5716
        %v5809 = vpack.c.b16 %v5721, %v5717
        %v5810 = vpack.c.b16 %v5722, %v5718
        %v5811 = vpack.c.b16 %v5727, %v5723
        %v5812 = vpack.c.b16 %v5728, %v5724
        %v5813 = vpack.c.b16 %v5729, %v5725
        %v5814 = vpack.c.b16 %v5730, %v5726
        %v5815 = vpack.c.b16 %v5735, %v5731
        %v5816 = vpack.c.b16 %v5736, %v5732
        %v5817 = vpack.c.b16 %v5737, %v5733
        %v5818 = vpack.c.b16 %v5738, %v5734
        %v5819 = vpack.c.b16 %v5743, %v5739
        %v5820 = vpack.c.b16 %v5744, %v5740
        %v5821 = vpack.c.b16 %v5745, %v5741
        %v5822 = vpack.c.b16 %v5746, %v5742
        %v5823 = vpack.c.b16 %v5751, %v5747
        %v5824 = vpack.c.b16 %v5752, %v5748
        %v5825 = vpack.c.b16 %v5753, %v5749
        %v5826 = vpack.c.b16 %v5754, %v5750
        %v5827 = vpack.c.b16 %v5759, %v5755
        %v5828 = vpack.c.b16 %v5760, %v5756
        %v5829 = vpack.c.b16 %v5761, %v5757
        %v5830 = vpack.c.b16 %v5762, %v5758
        %v5831 = vpack.c.b16 %v5767, %v5763
        %v5832 = vpack.c.b16 %v5768, %v5764
        %v5833 = vpack.c.b16 %v5769, %v5765
        %v5834 = vpack.c.b16 %v5770, %v5766
        %5899 = vmatprep.subr.bf16.mxu0 %v5800
        %5900 = vmatpush1.bf16.msra.mxu0 %v5799
        %5901 = vmatprep.subr.bf16.mxu0 %v5796
        %5902 = vmatpush1.bf16.msra.mxu0 %v5795
        %5903 = vmatprep.subr.bf16.mxu0 %v5792
        %5904 = vmatpush1.bf16.msra.mxu0 %v5791
        %5905 = vmatprep.subr.bf16.mxu0 %v5788
        %5906 = vmatpush1.bf16.msra.mxu0 %v5787
        %5907 = vmatprep.subr.bf16.mxu0 %v5784
        %5908 = vmatpush1.bf16.msra.mxu0 %v5783
        %5909 = vmatprep.subr.bf16.mxu0 %v5780
        %5910 = vmatpush1.bf16.msra.mxu0 %v5779
        %5911 = vmatprep.subr.bf16.mxu0 %v5776
        %5912 = vmatpush1.bf16.msra.mxu0 %v5775
        %5913 = vmatprep.subr.bf16.mxu0 %v5772
        %5914 = vmatpush1.bf16.msra.mxu0 %v5771
        %5915 = vmatprep.subr.bf16.mxu0 %v5832
        %5916 = vmatpush2.bf16.msra.mxu0 %v5831
        %5917 = vmatprep.subr.bf16.mxu0 %v5828
        %5918 = vmatpush2.bf16.msra.mxu0 %v5827
        %5919 = vmatprep.subr.bf16.mxu0 %v5824
        %5920 = vmatpush2.bf16.msra.mxu0 %v5823
        %5921 = vmatprep.subr.bf16.mxu0 %v5820
        %5922 = vmatpush2.bf16.msra.mxu0 %v5819
        %5923 = vmatprep.subr.bf16.mxu0 %v5816
        %5924 = vmatpush2.bf16.msra.mxu0 %v5815
        %5925 = vmatprep.subr.bf16.mxu0 %v5812
        %5926 = vmatpush2.bf16.msra.mxu0 %v5811
        %5927 = vmatprep.subr.bf16.mxu0 %v5808
        %5928 = vmatpush2.bf16.msra.mxu0 %v5807
        %5929 = vmatprep.subr.bf16.mxu0 %v5804
        %5930 = vmatpush2.bf16.msra.mxu0 %v5803
        %5931 = vmatprep.mubr.bf16.mxu0 %v5510
        %5932 = vmatmul.mubr.bf16.gmra.mxu0 %v5509
        %v5933 = vpop.f32.mrf.mxu0
        %v5934 = vadd.f32 %v5575, %v5933
        %v5935 = vpop.f32.mrf.mxu0
        %v5936 = vadd.f32 %v5576, %v5935
        %v5937 = vpop.f32.mrf.mxu0
        %v5938 = vpop.f32.mrf.mxu0
        %5939 = vdwg.mxu0
        %5940 = vmatprep.subr.bf16.mxu0 %v5802
        %5941 = vmatpush1.bf16.msra.mxu0 %v5801
        %5942 = vmatprep.subr.bf16.mxu0 %v5798
        %5943 = vmatpush1.bf16.msra.mxu0 %v5797
        %5944 = vmatprep.subr.bf16.mxu0 %v5794
        %5945 = vmatpush1.bf16.msra.mxu0 %v5793
        %5946 = vmatprep.subr.bf16.mxu0 %v5790
        %5947 = vmatpush1.bf16.msra.mxu0 %v5789
        %5948 = vmatprep.subr.bf16.mxu0 %v5786
        %5949 = vmatpush1.bf16.msra.mxu0 %v5785
        %5950 = vmatprep.subr.bf16.mxu0 %v5782
        %5951 = vmatpush1.bf16.msra.mxu0 %v5781
        %5952 = vmatprep.subr.bf16.mxu0 %v5778
        %5953 = vmatpush1.bf16.msra.mxu0 %v5777
        %5954 = vmatprep.subr.bf16.mxu0 %v5774
        %5955 = vmatpush1.bf16.msra.mxu0 %v5773
        %5956 = vmatprep.subr.bf16.mxu0 %v5834
        %5957 = vmatpush2.bf16.msra.mxu0 %v5833
        %5958 = vmatprep.subr.bf16.mxu0 %v5830
        %5959 = vmatpush2.bf16.msra.mxu0 %v5829
        %5960 = vmatprep.subr.bf16.mxu0 %v5826
        %5961 = vmatpush2.bf16.msra.mxu0 %v5825
        %5962 = vmatprep.subr.bf16.mxu0 %v5822
        %5963 = vmatpush2.bf16.msra.mxu0 %v5821
        %5964 = vmatprep.subr.bf16.mxu0 %v5818
        %5965 = vmatpush2.bf16.msra.mxu0 %v5817
        %5966 = vmatprep.subr.bf16.mxu0 %v5814
        %5967 = vmatpush2.bf16.msra.mxu0 %v5813
        %5968 = vmatprep.subr.bf16.mxu0 %v5810
        %5969 = vmatpush2.bf16.msra.mxu0 %v5809
        %5970 = vmatprep.subr.bf16.mxu0 %v5806
        %5971 = vmatpush2.bf16.msra.mxu0 %v5805
        %5972 = vmatprep.mubr.bf16.mxu0 %v5510
        %5973 = vmatmul.mubr.bf16.gmra.mxu0 %v5509
        %v5974 = vpop.f32.mrf.mxu0
        %v5975 = vadd.f32 %v5577, %v5974
        %v5976 = vpop.f32.mrf.mxu0
        %v5977 = vadd.f32 %v5578, %v5976
        %v5978 = vpop.f32.mrf.mxu0
        %v5979 = vpop.f32.mrf.mxu0
        %5980 = vdwg.mxu0
        %v5981 = vxor.u32 %v5934, 2147483648
        %v5982 = vxor.u32 %v5936, 2147483648
        %v5983 = vxor.u32 %v5975, 2147483648
        %v5984 = vmul.f32 %v5981, 1.442695
        %v5985 = vpow.pop %v5984
        %v5986 = vmul.f32 %v5982, 1.442695
        %v5987 = vpow.pop %v5986
        %v5988 = vmul.f32 %v5983, 1.442695
        %v5989 = vpow.pop %v5988
        %v5990 = vadd.f32 %v5985, 1.0
        %v5991 = vadd.f32 %v5987, 1.0
        %v5992 = vadd.f32 %v5989, 1.0
        %v5993 = vrcp.pop %v5990
        %v5994 = vmul.f32 1.0, %v5993
        %v5995 = vrcp.pop %v5991
        %v5996 = vmul.f32 1.0, %v5995
        %v5997 = vrcp.pop %v5992
        %v5998 = vmul.f32 1.0, %v5997
        %v5999 = vtanh.pop %v5977
        %v6000 = vld [vmem:[%s1592] sm:$0xff]
        %v6001 = vmul.f32 %v5996, %v6000
        %v6002 = vmul.f32 %v5994, %v5999
        %v6003 = vadd.f32 %v6001, %v6002
        %v6004 = vtanh.pop %v6003
        %v6005 = vmul.f32 %v5998, %v6004
        %6006 = vst [vmem:[%s1097] sm:$0xff] %v6005
        %6007 = vst [vmem:[%s1592] sm:$0xff] %v6003
        %v6008 = vpack.c.bf16 %v6005, %v6005
        %6009 = vmatprep.subr.bf16.mxu0 0
        %6010 = vmatpush1.bf16.msra.mxu0 %v1641
        %6011 = vmatprep.subr.bf16.mxu0 0
        %6012 = vmatpush1.bf16.msra.mxu0 %v1640
        %6013 = vmatprep.subr.bf16.mxu0 0
        %6014 = vmatpush1.bf16.msra.mxu0 %v1639
        %6015 = vmatprep.subr.bf16.mxu0 0
        %6016 = vmatpush1.bf16.msra.mxu0 %v1638
        %6017 = vmatprep.subr.bf16.mxu0 0
        %6018 = vmatpush1.bf16.msra.mxu0 %v1637
        %6019 = vmatprep.subr.bf16.mxu0 0
        %6020 = vmatpush1.bf16.msra.mxu0 %v1636
        %6021 = vmatprep.subr.bf16.mxu0 0
        %6022 = vmatpush1.bf16.msra.mxu0 %v1635
        %6023 = vmatprep.subr.bf16.mxu0 0
        %6024 = vmatpush1.bf16.msra.mxu0 %v1634
        %6025 = vmatprep.subr.bf16.mxu0 0
        %6026 = vmatpush2.bf16.msra.mxu0 0
        %6027 = vmatprep.subr.bf16.mxu0 0
        %6028 = vmatpush2.bf16.msra.mxu0 0
        %6029 = vmatprep.subr.bf16.mxu0 0
        %6030 = vmatpush2.bf16.msra.mxu0 0
        %6031 = vmatprep.subr.bf16.mxu0 0
        %6032 = vmatpush2.bf16.msra.mxu0 0
        %6033 = vmatprep.subr.bf16.mxu0 0
        %6034 = vmatpush2.bf16.msra.mxu0 0
        %6035 = vmatprep.subr.bf16.mxu0 0
        %6036 = vmatpush2.bf16.msra.mxu0 0
        %6037 = vmatprep.subr.bf16.mxu0 0
        %6038 = vmatpush2.bf16.msra.mxu0 0
        %6039 = vmatprep.subr.bf16.mxu0 0
        %6040 = vmatpush2.bf16.msra.mxu0 0
        %6041 = vmatprep.mubr.bf16.mxu0 0
        %6042 = vmatmul.mubr.bf16.gmra.mxu0 %v6008
        %v6043 = vpop.f32.mrf.mxu0
        %v6044 = vadd.f32 %v526, %v6043
        %v6045 = vpop.f32.mrf.mxu0
        %v6046 = vpop.f32.mrf.mxu0
        %v6047 = vpop.f32.mrf.mxu0
        %6048 = vdwg.mxu0
        %v6049 = vtanh.pop %v6044
        %s6050 = scalar_lea.vmem %s481, 32 [#allocation14]
        %6051 = vst [vmem:[%s6050] sm:$0xff] %v6049
        %s6052 = scalar_lea.vmem %s423, 40 [#allocation2]
        %v6053 = vld [vmem:[%s6052] sm:$0xff]
        %v6054 = vpack.c.bf16 %v6053, %v6053
        %v6056 = vsel %vm553, %v6054, 0
        %6058 = vmatprep.subr.bf16.mxu0 0
        %6059 = vmatpush1.bf16.msra.mxu0 0
        %6060 = vmatprep.subr.bf16.mxu0 0
        %6061 = vmatpush1.bf16.msra.mxu0 0
        %6062 = vmatprep.subr.bf16.mxu0 0
        %6063 = vmatpush1.bf16.msra.mxu0 0
        %6064 = vmatprep.subr.bf16.mxu0 0
        %6065 = vmatpush1.bf16.msra.mxu0 0
        %6066 = vmatprep.subr.bf16.mxu0 0
        %6067 = vmatpush1.bf16.msra.mxu0 %v548
        %6068 = vmatprep.subr.bf16.mxu0 0
        %6069 = vmatpush1.bf16.msra.mxu0 %v547
        %6070 = vmatprep.subr.bf16.mxu0 0
        %6071 = vmatpush1.bf16.msra.mxu0 %v546
        %6072 = vmatprep.subr.bf16.mxu0 0
        %6073 = vmatpush1.bf16.msra.mxu0 %v545
        %6074 = vmatprep.subr.bf16.mxu0 0
        %6075 = vmatpush2.bf16.msra.mxu0 0
        %6076 = vmatprep.subr.bf16.mxu0 0
        %6077 = vmatpush2.bf16.msra.mxu0 0
        %6078 = vmatprep.subr.bf16.mxu0 0
        %6079 = vmatpush2.bf16.msra.mxu0 0
        %6080 = vmatprep.subr.bf16.mxu0 0
        %6081 = vmatpush2.bf16.msra.mxu0 0
        %6082 = vmatprep.subr.bf16.mxu0 0
        %6083 = vmatpush2.bf16.msra.mxu0 0
        %6084 = vmatprep.subr.bf16.mxu0 0
        %6085 = vmatpush2.bf16.msra.mxu0 0
        %6086 = vmatprep.subr.bf16.mxu0 0
        %6087 = vmatpush2.bf16.msra.mxu0 0
        %6088 = vmatprep.subr.bf16.mxu0 0
        %6089 = vmatpush2.bf16.msra.mxu0 0
        %6090 = vmatprep.mubr.bf16.mxu0 0
        %6091 = vmatmul.mubr.bf16.gmra.mxu0 %v6056
        %v6092 = vpop.f32.mrf.mxu0
        %v6093 = vadd.f32 %v509, %v6092
        %v6094 = vpop.f32.mrf.mxu0
        %v6095 = vpop.f32.mrf.mxu0
        %v6096 = vpop.f32.mrf.mxu0
        %6097 = vdwg.mxu0
        %v6098 = vld [vmem:[#allocation15] sm:$0xff]
        %v6099 = vpack.c.bf16 %v6093, %v6093
        %v6100 = vpack.c.bf16 %v6098, %v6098
        %v6101 = vld [vmem:[#allocation7] sm:$0xff]
        %v6102 = vld [vmem:[#allocation7 + $0x8] sm:$0xff]
        %v6103 = vld [vmem:[#allocation7 + $0x10] sm:$0xff]
        %v6104 = vld [vmem:[#allocation7 + $0x18] sm:$0xff]
        %v6105 = vld [vmem:[#allocation7 + $0x20] sm:$0xff]
        %v6106 = vld [vmem:[#allocation7 + $0x28] sm:$0xff]
        %v6107 = vld [vmem:[#allocation7 + $0x30] sm:$0xff]
        %v6108 = vld [vmem:[#allocation7 + $0x38] sm:$0xff]
        %v6109 = vld [vmem:[#allocation7 + $0x40] sm:$0xff]
        %v6110 = vld [vmem:[#allocation7 + $0x48] sm:$0xff]
        %v6111 = vld [vmem:[#allocation7 + $0x50] sm:$0xff]
        %v6112 = vld [vmem:[#allocation7 + $0x58] sm:$0xff]
        %v6113 = vld [vmem:[#allocation7 + $0x60] sm:$0xff]
        %v6114 = vld [vmem:[#allocation7 + $0x68] sm:$0xff]
        %v6115 = vld [vmem:[#allocation7 + $0x70] sm:$0xff]
        %v6116 = vld [vmem:[#allocation7 + $0x78] sm:$0xff]
        %v6117 = vld [vmem:[#allocation7 + $0x80] sm:$0xff]
        %v6118 = vld [vmem:[#allocation7 + $0x88] sm:$0xff]
        %v6119 = vld [vmem:[#allocation7 + $0x90] sm:$0xff]
        %v6120 = vld [vmem:[#allocation7 + $0x98] sm:$0xff]
        %v6121 = vld [vmem:[#allocation7 + $0xa0] sm:$0xff]
        %v6122 = vld [vmem:[#allocation7 + $0xa8] sm:$0xff]
        %v6123 = vld [vmem:[#allocation7 + $0xb0] sm:$0xff]
        %v6124 = vld [vmem:[#allocation7 + $0xb8] sm:$0xff]
        %v6125 = vld [vmem:[#allocation7 + $0xc0] sm:$0xff]
        %v6126 = vld [vmem:[#allocation7 + $0xc8] sm:$0xff]
        %v6127 = vld [vmem:[#allocation7 + $0xd0] sm:$0xff]
        %v6128 = vld [vmem:[#allocation7 + $0xd8] sm:$0xff]
        %v6129 = vld [vmem:[#allocation7 + $0xe0] sm:$0xff]
        %v6130 = vld [vmem:[#allocation7 + $0xe8] sm:$0xff]
        %v6131 = vld [vmem:[#allocation7 + $0xf0] sm:$0xff]
        %v6132 = vld [vmem:[#allocation7 + $0xf8] sm:$0xff]
        %v6133 = vld [vmem:[#allocation7 + $0x100] sm:$0xff]
        %v6134 = vld [vmem:[#allocation7 + $0x108] sm:$0xff]
        %v6135 = vld [vmem:[#allocation7 + $0x110] sm:$0xff]
        %v6136 = vld [vmem:[#allocation7 + $0x118] sm:$0xff]
        %v6137 = vld [vmem:[#allocation7 + $0x120] sm:$0xff]
        %v6138 = vld [vmem:[#allocation7 + $0x128] sm:$0xff]
        %v6139 = vld [vmem:[#allocation7 + $0x130] sm:$0xff]
        %v6140 = vld [vmem:[#allocation7 + $0x138] sm:$0xff]
        %v6141 = vld [vmem:[#allocation7 + $0x140] sm:$0xff]
        %v6142 = vld [vmem:[#allocation7 + $0x148] sm:$0xff]
        %v6143 = vld [vmem:[#allocation7 + $0x150] sm:$0xff]
        %v6144 = vld [vmem:[#allocation7 + $0x158] sm:$0xff]
        %v6145 = vld [vmem:[#allocation7 + $0x160] sm:$0xff]
        %v6146 = vld [vmem:[#allocation7 + $0x168] sm:$0xff]
        %v6147 = vld [vmem:[#allocation7 + $0x170] sm:$0xff]
        %v6148 = vld [vmem:[#allocation7 + $0x178] sm:$0xff]
        %v6149 = vld [vmem:[#allocation7 + $0x180] sm:$0xff]
        %v6150 = vld [vmem:[#allocation7 + $0x188] sm:$0xff]
        %v6151 = vld [vmem:[#allocation7 + $0x190] sm:$0xff]
        %v6152 = vld [vmem:[#allocation7 + $0x198] sm:$0xff]
        %v6153 = vld [vmem:[#allocation7 + $0x1a0] sm:$0xff]
        %v6154 = vld [vmem:[#allocation7 + $0x1a8] sm:$0xff]
        %v6155 = vld [vmem:[#allocation7 + $0x1b0] sm:$0xff]
        %v6156 = vld [vmem:[#allocation7 + $0x1b8] sm:$0xff]
        %v6157 = vld [vmem:[#allocation7 + $0x1c0] sm:$0xff]
        %v6158 = vld [vmem:[#allocation7 + $0x1c8] sm:$0xff]
        %v6159 = vld [vmem:[#allocation7 + $0x1d0] sm:$0xff]
        %v6160 = vld [vmem:[#allocation7 + $0x1d8] sm:$0xff]
        %v6161 = vld [vmem:[#allocation7 + $0x1e0] sm:$0xff]
        %v6162 = vld [vmem:[#allocation7 + $0x1e8] sm:$0xff]
        %v6163 = vld [vmem:[#allocation7 + $0x1f0] sm:$0xff]
        %v6164 = vld [vmem:[#allocation7 + $0x1f8] sm:$0xff]
        %v6165 = vld [vmem:[%s4] sm:$0xff]
        %v6166 = vld [vmem:[%s4 + $0x8] sm:$0xff]
        %v6167 = vld [vmem:[%s4 + $0x10] sm:$0xff]
        %v6168 = vld [vmem:[%s4 + $0x18] sm:$0xff]
        %v6233 = vunpack.c.l.b16 %v6101
        %v6234 = vunpack.c.h.b16 %v6101
        %v6235 = vunpack.c.l.b16 %v6102
        %v6236 = vunpack.c.h.b16 %v6102
        %v6237 = vunpack.c.l.b16 %v6103
        %v6238 = vunpack.c.h.b16 %v6103
        %v6239 = vunpack.c.l.b16 %v6104
        %v6240 = vunpack.c.h.b16 %v6104
        %v6241 = vunpack.c.l.b16 %v6105
        %v6242 = vunpack.c.h.b16 %v6105
        %v6243 = vunpack.c.l.b16 %v6106
        %v6244 = vunpack.c.h.b16 %v6106
        %v6245 = vunpack.c.l.b16 %v6107
        %v6246 = vunpack.c.h.b16 %v6107
        %v6247 = vunpack.c.l.b16 %v6108
        %v6248 = vunpack.c.h.b16 %v6108
        %v6249 = vunpack.c.l.b16 %v6109
        %v6250 = vunpack.c.h.b16 %v6109
        %v6251 = vunpack.c.l.b16 %v6110
        %v6252 = vunpack.c.h.b16 %v6110
        %v6253 = vunpack.c.l.b16 %v6111
        %v6254 = vunpack.c.h.b16 %v6111
        %v6255 = vunpack.c.l.b16 %v6112
        %v6256 = vunpack.c.h.b16 %v6112
        %v6257 = vunpack.c.l.b16 %v6113
        %v6258 = vunpack.c.h.b16 %v6113
        %v6259 = vunpack.c.l.b16 %v6114
        %v6260 = vunpack.c.h.b16 %v6114
        %v6261 = vunpack.c.l.b16 %v6115
        %v6262 = vunpack.c.h.b16 %v6115
        %v6263 = vunpack.c.l.b16 %v6116
        %v6264 = vunpack.c.h.b16 %v6116
        %v6265 = vunpack.c.l.b16 %v6117
        %v6266 = vunpack.c.h.b16 %v6117
        %v6267 = vunpack.c.l.b16 %v6118
        %v6268 = vunpack.c.h.b16 %v6118
        %v6269 = vunpack.c.l.b16 %v6119
        %v6270 = vunpack.c.h.b16 %v6119
        %v6271 = vunpack.c.l.b16 %v6120
        %v6272 = vunpack.c.h.b16 %v6120
        %v6273 = vunpack.c.l.b16 %v6121
        %v6274 = vunpack.c.h.b16 %v6121
        %v6275 = vunpack.c.l.b16 %v6122
        %v6276 = vunpack.c.h.b16 %v6122
        %v6277 = vunpack.c.l.b16 %v6123
        %v6278 = vunpack.c.h.b16 %v6123
        %v6279 = vunpack.c.l.b16 %v6124
        %v6280 = vunpack.c.h.b16 %v6124
        %v6281 = vunpack.c.l.b16 %v6125
        %v6282 = vunpack.c.h.b16 %v6125
        %v6283 = vunpack.c.l.b16 %v6126
        %v6284 = vunpack.c.h.b16 %v6126
        %v6285 = vunpack.c.l.b16 %v6127
        %v6286 = vunpack.c.h.b16 %v6127
        %v6287 = vunpack.c.l.b16 %v6128
        %v6288 = vunpack.c.h.b16 %v6128
        %v6289 = vunpack.c.l.b16 %v6129
        %v6290 = vunpack.c.h.b16 %v6129
        %v6291 = vunpack.c.l.b16 %v6130
        %v6292 = vunpack.c.h.b16 %v6130
        %v6293 = vunpack.c.l.b16 %v6131
        %v6294 = vunpack.c.h.b16 %v6131
        %v6295 = vunpack.c.l.b16 %v6132
        %v6296 = vunpack.c.h.b16 %v6132
        %v6297 = vunpack.c.l.b16 %v6133
        %v6298 = vunpack.c.h.b16 %v6133
        %v6299 = vunpack.c.l.b16 %v6134
        %v6300 = vunpack.c.h.b16 %v6134
        %v6301 = vunpack.c.l.b16 %v6135
        %v6302 = vunpack.c.h.b16 %v6135
        %v6303 = vunpack.c.l.b16 %v6136
        %v6304 = vunpack.c.h.b16 %v6136
        %v6305 = vunpack.c.l.b16 %v6137
        %v6306 = vunpack.c.h.b16 %v6137
        %v6307 = vunpack.c.l.b16 %v6138
        %v6308 = vunpack.c.h.b16 %v6138
        %v6309 = vunpack.c.l.b16 %v6139
        %v6310 = vunpack.c.h.b16 %v6139
        %v6311 = vunpack.c.l.b16 %v6140
        %v6312 = vunpack.c.h.b16 %v6140
        %v6313 = vunpack.c.l.b16 %v6141
        %v6314 = vunpack.c.h.b16 %v6141
        %v6315 = vunpack.c.l.b16 %v6142
        %v6316 = vunpack.c.h.b16 %v6142
        %v6317 = vunpack.c.l.b16 %v6143
        %v6318 = vunpack.c.h.b16 %v6143
        %v6319 = vunpack.c.l.b16 %v6144
        %v6320 = vunpack.c.h.b16 %v6144
        %v6321 = vunpack.c.l.b16 %v6145
        %v6322 = vunpack.c.h.b16 %v6145
        %v6323 = vunpack.c.l.b16 %v6146
        %v6324 = vunpack.c.h.b16 %v6146
        %v6325 = vunpack.c.l.b16 %v6147
        %v6326 = vunpack.c.h.b16 %v6147
        %v6327 = vunpack.c.l.b16 %v6148
        %v6328 = vunpack.c.h.b16 %v6148
        %v6329 = vunpack.c.l.b16 %v6149
        %v6330 = vunpack.c.h.b16 %v6149
        %v6331 = vunpack.c.l.b16 %v6150
        %v6332 = vunpack.c.h.b16 %v6150
        %v6333 = vunpack.c.l.b16 %v6151
        %v6334 = vunpack.c.h.b16 %v6151
        %v6335 = vunpack.c.l.b16 %v6152
        %v6336 = vunpack.c.h.b16 %v6152
        %v6337 = vunpack.c.l.b16 %v6153
        %v6338 = vunpack.c.h.b16 %v6153
        %v6339 = vunpack.c.l.b16 %v6154
        %v6340 = vunpack.c.h.b16 %v6154
        %v6341 = vunpack.c.l.b16 %v6155
        %v6342 = vunpack.c.h.b16 %v6155
        %v6343 = vunpack.c.l.b16 %v6156
        %v6344 = vunpack.c.h.b16 %v6156
        %v6345 = vunpack.c.l.b16 %v6157
        %v6346 = vunpack.c.h.b16 %v6157
        %v6347 = vunpack.c.l.b16 %v6158
        %v6348 = vunpack.c.h.b16 %v6158
        %v6349 = vunpack.c.l.b16 %v6159
        %v6350 = vunpack.c.h.b16 %v6159
        %v6351 = vunpack.c.l.b16 %v6160
        %v6352 = vunpack.c.h.b16 %v6160
        %v6353 = vunpack.c.l.b16 %v6161
        %v6354 = vunpack.c.h.b16 %v6161
        %v6355 = vunpack.c.l.b16 %v6162
        %v6356 = vunpack.c.h.b16 %v6162
        %v6357 = vunpack.c.l.b16 %v6163
        %v6358 = vunpack.c.h.b16 %v6163
        %v6359 = vunpack.c.l.b16 %v6164
        %v6360 = vunpack.c.h.b16 %v6164
        %v6361 = vpack.c.b16 %v6237, %v6233
        %v6362 = vpack.c.b16 %v6238, %v6234
        %v6363 = vpack.c.b16 %v6239, %v6235
        %v6364 = vpack.c.b16 %v6240, %v6236
        %v6365 = vpack.c.b16 %v6245, %v6241
        %v6366 = vpack.c.b16 %v6246, %v6242
        %v6367 = vpack.c.b16 %v6247, %v6243
        %v6368 = vpack.c.b16 %v6248, %v6244
        %v6369 = vpack.c.b16 %v6253, %v6249
        %v6370 = vpack.c.b16 %v6254, %v6250
        %v6371 = vpack.c.b16 %v6255, %v6251
        %v6372 = vpack.c.b16 %v6256, %v6252
        %v6373 = vpack.c.b16 %v6261, %v6257
        %v6374 = vpack.c.b16 %v6262, %v6258
        %v6375 = vpack.c.b16 %v6263, %v6259
        %v6376 = vpack.c.b16 %v6264, %v6260
        %v6377 = vpack.c.b16 %v6269, %v6265
        %v6378 = vpack.c.b16 %v6270, %v6266
        %v6379 = vpack.c.b16 %v6271, %v6267
        %v6380 = vpack.c.b16 %v6272, %v6268
        %v6381 = vpack.c.b16 %v6277, %v6273
        %v6382 = vpack.c.b16 %v6278, %v6274
        %v6383 = vpack.c.b16 %v6279, %v6275
        %v6384 = vpack.c.b16 %v6280, %v6276
        %v6385 = vpack.c.b16 %v6285, %v6281
        %v6386 = vpack.c.b16 %v6286, %v6282
        %v6387 = vpack.c.b16 %v6287, %v6283
        %v6388 = vpack.c.b16 %v6288, %v6284
        %v6389 = vpack.c.b16 %v6293, %v6289
        %v6390 = vpack.c.b16 %v6294, %v6290
        %v6391 = vpack.c.b16 %v6295, %v6291
        %v6392 = vpack.c.b16 %v6296, %v6292
        %v6393 = vpack.c.b16 %v6301, %v6297
        %v6394 = vpack.c.b16 %v6302, %v6298
        %v6395 = vpack.c.b16 %v6303, %v6299
        %v6396 = vpack.c.b16 %v6304, %v6300
        %v6397 = vpack.c.b16 %v6309, %v6305
        %v6398 = vpack.c.b16 %v6310, %v6306
        %v6399 = vpack.c.b16 %v6311, %v6307
        %v6400 = vpack.c.b16 %v6312, %v6308
        %v6401 = vpack.c.b16 %v6317, %v6313
        %v6402 = vpack.c.b16 %v6318, %v6314
        %v6403 = vpack.c.b16 %v6319, %v6315
        %v6404 = vpack.c.b16 %v6320, %v6316
        %v6405 = vpack.c.b16 %v6325, %v6321
        %v6406 = vpack.c.b16 %v6326, %v6322
        %v6407 = vpack.c.b16 %v6327, %v6323
        %v6408 = vpack.c.b16 %v6328, %v6324
        %v6409 = vpack.c.b16 %v6333, %v6329
        %v6410 = vpack.c.b16 %v6334, %v6330
        %v6411 = vpack.c.b16 %v6335, %v6331
        %v6412 = vpack.c.b16 %v6336, %v6332
        %v6413 = vpack.c.b16 %v6341, %v6337
        %v6414 = vpack.c.b16 %v6342, %v6338
        %v6415 = vpack.c.b16 %v6343, %v6339
        %v6416 = vpack.c.b16 %v6344, %v6340
        %v6417 = vpack.c.b16 %v6349, %v6345
        %v6418 = vpack.c.b16 %v6350, %v6346
        %v6419 = vpack.c.b16 %v6351, %v6347
        %v6420 = vpack.c.b16 %v6352, %v6348
        %v6421 = vpack.c.b16 %v6357, %v6353
        %v6422 = vpack.c.b16 %v6358, %v6354
        %v6423 = vpack.c.b16 %v6359, %v6355
        %v6424 = vpack.c.b16 %v6360, %v6356
        %6489 = vmatprep.subr.bf16.mxu0 %v6390
        %6490 = vmatpush1.bf16.msra.mxu0 %v6389
        %6491 = vmatprep.subr.bf16.mxu0 %v6386
        %6492 = vmatpush1.bf16.msra.mxu0 %v6385
        %6493 = vmatprep.subr.bf16.mxu0 %v6382
        %6494 = vmatpush1.bf16.msra.mxu0 %v6381
        %6495 = vmatprep.subr.bf16.mxu0 %v6378
        %6496 = vmatpush1.bf16.msra.mxu0 %v6377
        %6497 = vmatprep.subr.bf16.mxu0 %v6374
        %6498 = vmatpush1.bf16.msra.mxu0 %v6373
        %6499 = vmatprep.subr.bf16.mxu0 %v6370
        %6500 = vmatpush1.bf16.msra.mxu0 %v6369
        %6501 = vmatprep.subr.bf16.mxu0 %v6366
        %6502 = vmatpush1.bf16.msra.mxu0 %v6365
        %6503 = vmatprep.subr.bf16.mxu0 %v6362
        %6504 = vmatpush1.bf16.msra.mxu0 %v6361
        %6505 = vmatprep.subr.bf16.mxu0 %v6422
        %6506 = vmatpush2.bf16.msra.mxu0 %v6421
        %6507 = vmatprep.subr.bf16.mxu0 %v6418
        %6508 = vmatpush2.bf16.msra.mxu0 %v6417
        %6509 = vmatprep.subr.bf16.mxu0 %v6414
        %6510 = vmatpush2.bf16.msra.mxu0 %v6413
        %6511 = vmatprep.subr.bf16.mxu0 %v6410
        %6512 = vmatpush2.bf16.msra.mxu0 %v6409
        %6513 = vmatprep.subr.bf16.mxu0 %v6406
        %6514 = vmatpush2.bf16.msra.mxu0 %v6405
        %6515 = vmatprep.subr.bf16.mxu0 %v6402
        %6516 = vmatpush2.bf16.msra.mxu0 %v6401
        %6517 = vmatprep.subr.bf16.mxu0 %v6398
        %6518 = vmatpush2.bf16.msra.mxu0 %v6397
        %6519 = vmatprep.subr.bf16.mxu0 %v6394
        %6520 = vmatpush2.bf16.msra.mxu0 %v6393
        %6521 = vmatprep.mubr.bf16.mxu0 %v6100
        %6522 = vmatmul.mubr.bf16.gmra.mxu0 %v6099
        %v6523 = vpop.f32.mrf.mxu0
        %v6524 = vadd.f32 %v6165, %v6523
        %v6525 = vpop.f32.mrf.mxu0
        %v6526 = vadd.f32 %v6166, %v6525
        %v6527 = vpop.f32.mrf.mxu0
        %v6528 = vpop.f32.mrf.mxu0
        %6529 = vdwg.mxu0
        %6530 = vmatprep.subr.bf16.mxu0 %v6392
        %6531 = vmatpush1.bf16.msra.mxu0 %v6391
        %6532 = vmatprep.subr.bf16.mxu0 %v6388
        %6533 = vmatpush1.bf16.msra.mxu0 %v6387
        %6534 = vmatprep.subr.bf16.mxu0 %v6384
        %6535 = vmatpush1.bf16.msra.mxu0 %v6383
        %6536 = vmatprep.subr.bf16.mxu0 %v6380
        %6537 = vmatpush1.bf16.msra.mxu0 %v6379
        %6538 = vmatprep.subr.bf16.mxu0 %v6376
        %6539 = vmatpush1.bf16.msra.mxu0 %v6375
        %6540 = vmatprep.subr.bf16.mxu0 %v6372
        %6541 = vmatpush1.bf16.msra.mxu0 %v6371
        %6542 = vmatprep.subr.bf16.mxu0 %v6368
        %6543 = vmatpush1.bf16.msra.mxu0 %v6367
        %6544 = vmatprep.subr.bf16.mxu0 %v6364
        %6545 = vmatpush1.bf16.msra.mxu0 %v6363
        %6546 = vmatprep.subr.bf16.mxu0 %v6424
        %6547 = vmatpush2.bf16.msra.mxu0 %v6423
        %6548 = vmatprep.subr.bf16.mxu0 %v6420
        %6549 = vmatpush2.bf16.msra.mxu0 %v6419
        %6550 = vmatprep.subr.bf16.mxu0 %v6416
        %6551 = vmatpush2.bf16.msra.mxu0 %v6415
        %6552 = vmatprep.subr.bf16.mxu0 %v6412
        %6553 = vmatpush2.bf16.msra.mxu0 %v6411
        %6554 = vmatprep.subr.bf16.mxu0 %v6408
        %6555 = vmatpush2.bf16.msra.mxu0 %v6407
        %6556 = vmatprep.subr.bf16.mxu0 %v6404
        %6557 = vmatpush2.bf16.msra.mxu0 %v6403
        %6558 = vmatprep.subr.bf16.mxu0 %v6400
        %6559 = vmatpush2.bf16.msra.mxu0 %v6399
        %6560 = vmatprep.subr.bf16.mxu0 %v6396
        %6561 = vmatpush2.bf16.msra.mxu0 %v6395
        %6562 = vmatprep.mubr.bf16.mxu0 %v6100
        %6563 = vmatmul.mubr.bf16.gmra.mxu0 %v6099
        %v6564 = vpop.f32.mrf.mxu0
        %v6565 = vadd.f32 %v6167, %v6564
        %v6566 = vpop.f32.mrf.mxu0
        %v6567 = vadd.f32 %v6168, %v6566
        %v6568 = vpop.f32.mrf.mxu0
        %v6569 = vpop.f32.mrf.mxu0
        %6570 = vdwg.mxu0
        %v6571 = vxor.u32 %v6524, 2147483648
        %v6572 = vxor.u32 %v6526, 2147483648
        %v6573 = vxor.u32 %v6565, 2147483648
        %v6574 = vmul.f32 %v6571, 1.442695
        %v6575 = vpow.pop %v6574
        %v6576 = vmul.f32 %v6572, 1.442695
        %v6577 = vpow.pop %v6576
        %v6578 = vmul.f32 %v6573, 1.442695
        %v6579 = vpow.pop %v6578
        %v6580 = vadd.f32 %v6575, 1.0
        %v6581 = vadd.f32 %v6577, 1.0
        %v6582 = vadd.f32 %v6579, 1.0
        %v6583 = vrcp.pop %v6580
        %v6584 = vmul.f32 1.0, %v6583
        %v6585 = vrcp.pop %v6581
        %v6586 = vmul.f32 1.0, %v6585
        %v6587 = vrcp.pop %v6582
        %v6588 = vmul.f32 1.0, %v6587
        %v6589 = vtanh.pop %v6567
        %v6590 = vld [vmem:[#allocation17] sm:$0xff]
        %v6591 = vmul.f32 %v6586, %v6590
        %v6592 = vmul.f32 %v6584, %v6589
        %v6593 = vadd.f32 %v6591, %v6592
        %v6594 = vtanh.pop %v6593
        %v6595 = vmul.f32 %v6588, %v6594
        %6596 = vst [vmem:[#allocation15] sm:$0xff] %v6595
        %6597 = vst [vmem:[#allocation17] sm:$0xff] %v6593
        %v6598 = vld [vmem:[%s1097] sm:$0xff]
        %v6599 = vpack.c.bf16 %v6595, %v6595
        %v6600 = vpack.c.bf16 %v6598, %v6598
        %v6601 = vld [vmem:[%s1101] sm:$0xff]
        %v6602 = vld [vmem:[%s1101 + $0x8] sm:$0xff]
        %v6603 = vld [vmem:[%s1101 + $0x10] sm:$0xff]
        %v6604 = vld [vmem:[%s1101 + $0x18] sm:$0xff]
        %v6605 = vld [vmem:[%s1101 + $0x20] sm:$0xff]
        %v6606 = vld [vmem:[%s1101 + $0x28] sm:$0xff]
        %v6607 = vld [vmem:[%s1101 + $0x30] sm:$0xff]
        %v6608 = vld [vmem:[%s1101 + $0x38] sm:$0xff]
        %v6609 = vld [vmem:[%s1101 + $0x40] sm:$0xff]
        %v6610 = vld [vmem:[%s1101 + $0x48] sm:$0xff]
        %v6611 = vld [vmem:[%s1101 + $0x50] sm:$0xff]
        %v6612 = vld [vmem:[%s1101 + $0x58] sm:$0xff]
        %v6613 = vld [vmem:[%s1101 + $0x60] sm:$0xff]
        %v6614 = vld [vmem:[%s1101 + $0x68] sm:$0xff]
        %v6615 = vld [vmem:[%s1101 + $0x70] sm:$0xff]
        %v6616 = vld [vmem:[%s1101 + $0x78] sm:$0xff]
        %v6617 = vld [vmem:[%s1101 + $0x80] sm:$0xff]
        %v6618 = vld [vmem:[%s1101 + $0x88] sm:$0xff]
        %v6619 = vld [vmem:[%s1101 + $0x90] sm:$0xff]
        %v6620 = vld [vmem:[%s1101 + $0x98] sm:$0xff]
        %v6621 = vld [vmem:[%s1101 + $0xa0] sm:$0xff]
        %v6622 = vld [vmem:[%s1101 + $0xa8] sm:$0xff]
        %v6623 = vld [vmem:[%s1101 + $0xb0] sm:$0xff]
        %v6624 = vld [vmem:[%s1101 + $0xb8] sm:$0xff]
        %v6625 = vld [vmem:[%s1101 + $0xc0] sm:$0xff]
        %v6626 = vld [vmem:[%s1101 + $0xc8] sm:$0xff]
        %v6627 = vld [vmem:[%s1101 + $0xd0] sm:$0xff]
        %v6628 = vld [vmem:[%s1101 + $0xd8] sm:$0xff]
        %v6629 = vld [vmem:[%s1101 + $0xe0] sm:$0xff]
        %v6630 = vld [vmem:[%s1101 + $0xe8] sm:$0xff]
        %v6631 = vld [vmem:[%s1101 + $0xf0] sm:$0xff]
        %v6632 = vld [vmem:[%s1101 + $0xf8] sm:$0xff]
        %v6633 = vld [vmem:[%s1101 + $0x100] sm:$0xff]
        %v6634 = vld [vmem:[%s1101 + $0x108] sm:$0xff]
        %v6635 = vld [vmem:[%s1101 + $0x110] sm:$0xff]
        %v6636 = vld [vmem:[%s1101 + $0x118] sm:$0xff]
        %v6637 = vld [vmem:[%s1101 + $0x120] sm:$0xff]
        %v6638 = vld [vmem:[%s1101 + $0x128] sm:$0xff]
        %v6639 = vld [vmem:[%s1101 + $0x130] sm:$0xff]
        %v6640 = vld [vmem:[%s1101 + $0x138] sm:$0xff]
        %v6641 = vld [vmem:[%s1101 + $0x140] sm:$0xff]
        %v6642 = vld [vmem:[%s1101 + $0x148] sm:$0xff]
        %v6643 = vld [vmem:[%s1101 + $0x150] sm:$0xff]
        %v6644 = vld [vmem:[%s1101 + $0x158] sm:$0xff]
        %v6645 = vld [vmem:[%s1101 + $0x160] sm:$0xff]
        %v6646 = vld [vmem:[%s1101 + $0x168] sm:$0xff]
        %v6647 = vld [vmem:[%s1101 + $0x170] sm:$0xff]
        %v6648 = vld [vmem:[%s1101 + $0x178] sm:$0xff]
        %v6649 = vld [vmem:[%s1101 + $0x180] sm:$0xff]
        %v6650 = vld [vmem:[%s1101 + $0x188] sm:$0xff]
        %v6651 = vld [vmem:[%s1101 + $0x190] sm:$0xff]
        %v6652 = vld [vmem:[%s1101 + $0x198] sm:$0xff]
        %v6653 = vld [vmem:[%s1101 + $0x1a0] sm:$0xff]
        %v6654 = vld [vmem:[%s1101 + $0x1a8] sm:$0xff]
        %v6655 = vld [vmem:[%s1101 + $0x1b0] sm:$0xff]
        %v6656 = vld [vmem:[%s1101 + $0x1b8] sm:$0xff]
        %v6657 = vld [vmem:[%s1101 + $0x1c0] sm:$0xff]
        %v6658 = vld [vmem:[%s1101 + $0x1c8] sm:$0xff]
        %v6659 = vld [vmem:[%s1101 + $0x1d0] sm:$0xff]
        %v6660 = vld [vmem:[%s1101 + $0x1d8] sm:$0xff]
        %v6661 = vld [vmem:[%s1101 + $0x1e0] sm:$0xff]
        %v6662 = vld [vmem:[%s1101 + $0x1e8] sm:$0xff]
        %v6663 = vld [vmem:[%s1101 + $0x1f0] sm:$0xff]
        %v6664 = vld [vmem:[%s1101 + $0x1f8] sm:$0xff]
        %v6665 = vld [vmem:[%s1166] sm:$0xff]
        %v6666 = vld [vmem:[%s1166 + $0x8] sm:$0xff]
        %v6667 = vld [vmem:[%s1166 + $0x10] sm:$0xff]
        %v6668 = vld [vmem:[%s1166 + $0x18] sm:$0xff]
        %v6733 = vunpack.c.l.b16 %v6601
        %v6734 = vunpack.c.h.b16 %v6601
        %v6735 = vunpack.c.l.b16 %v6602
        %v6736 = vunpack.c.h.b16 %v6602
        %v6737 = vunpack.c.l.b16 %v6603
        %v6738 = vunpack.c.h.b16 %v6603
        %v6739 = vunpack.c.l.b16 %v6604
        %v6740 = vunpack.c.h.b16 %v6604
        %v6741 = vunpack.c.l.b16 %v6605
        %v6742 = vunpack.c.h.b16 %v6605
        %v6743 = vunpack.c.l.b16 %v6606
        %v6744 = vunpack.c.h.b16 %v6606
        %v6745 = vunpack.c.l.b16 %v6607
        %v6746 = vunpack.c.h.b16 %v6607
        %v6747 = vunpack.c.l.b16 %v6608
        %v6748 = vunpack.c.h.b16 %v6608
        %v6749 = vunpack.c.l.b16 %v6609
        %v6750 = vunpack.c.h.b16 %v6609
        %v6751 = vunpack.c.l.b16 %v6610
        %v6752 = vunpack.c.h.b16 %v6610
        %v6753 = vunpack.c.l.b16 %v6611
        %v6754 = vunpack.c.h.b16 %v6611
        %v6755 = vunpack.c.l.b16 %v6612
        %v6756 = vunpack.c.h.b16 %v6612
        %v6757 = vunpack.c.l.b16 %v6613
        %v6758 = vunpack.c.h.b16 %v6613
        %v6759 = vunpack.c.l.b16 %v6614
        %v6760 = vunpack.c.h.b16 %v6614
        %v6761 = vunpack.c.l.b16 %v6615
        %v6762 = vunpack.c.h.b16 %v6615
        %v6763 = vunpack.c.l.b16 %v6616
        %v6764 = vunpack.c.h.b16 %v6616
        %v6765 = vunpack.c.l.b16 %v6617
        %v6766 = vunpack.c.h.b16 %v6617
        %v6767 = vunpack.c.l.b16 %v6618
        %v6768 = vunpack.c.h.b16 %v6618
        %v6769 = vunpack.c.l.b16 %v6619
        %v6770 = vunpack.c.h.b16 %v6619
        %v6771 = vunpack.c.l.b16 %v6620
        %v6772 = vunpack.c.h.b16 %v6620
        %v6773 = vunpack.c.l.b16 %v6621
        %v6774 = vunpack.c.h.b16 %v6621
        %v6775 = vunpack.c.l.b16 %v6622
        %v6776 = vunpack.c.h.b16 %v6622
        %v6777 = vunpack.c.l.b16 %v6623
        %v6778 = vunpack.c.h.b16 %v6623
        %v6779 = vunpack.c.l.b16 %v6624
        %v6780 = vunpack.c.h.b16 %v6624
        %v6781 = vunpack.c.l.b16 %v6625
        %v6782 = vunpack.c.h.b16 %v6625
        %v6783 = vunpack.c.l.b16 %v6626
        %v6784 = vunpack.c.h.b16 %v6626
        %v6785 = vunpack.c.l.b16 %v6627
        %v6786 = vunpack.c.h.b16 %v6627
        %v6787 = vunpack.c.l.b16 %v6628
        %v6788 = vunpack.c.h.b16 %v6628
        %v6789 = vunpack.c.l.b16 %v6629
        %v6790 = vunpack.c.h.b16 %v6629
        %v6791 = vunpack.c.l.b16 %v6630
        %v6792 = vunpack.c.h.b16 %v6630
        %v6793 = vunpack.c.l.b16 %v6631
        %v6794 = vunpack.c.h.b16 %v6631
        %v6795 = vunpack.c.l.b16 %v6632
        %v6796 = vunpack.c.h.b16 %v6632
        %v6797 = vunpack.c.l.b16 %v6633
        %v6798 = vunpack.c.h.b16 %v6633
        %v6799 = vunpack.c.l.b16 %v6634
        %v6800 = vunpack.c.h.b16 %v6634
        %v6801 = vunpack.c.l.b16 %v6635
        %v6802 = vunpack.c.h.b16 %v6635
        %v6803 = vunpack.c.l.b16 %v6636
        %v6804 = vunpack.c.h.b16 %v6636
        %v6805 = vunpack.c.l.b16 %v6637
        %v6806 = vunpack.c.h.b16 %v6637
        %v6807 = vunpack.c.l.b16 %v6638
        %v6808 = vunpack.c.h.b16 %v6638
        %v6809 = vunpack.c.l.b16 %v6639
        %v6810 = vunpack.c.h.b16 %v6639
        %v6811 = vunpack.c.l.b16 %v6640
        %v6812 = vunpack.c.h.b16 %v6640
        %v6813 = vunpack.c.l.b16 %v6641
        %v6814 = vunpack.c.h.b16 %v6641
        %v6815 = vunpack.c.l.b16 %v6642
        %v6816 = vunpack.c.h.b16 %v6642
        %v6817 = vunpack.c.l.b16 %v6643
        %v6818 = vunpack.c.h.b16 %v6643
        %v6819 = vunpack.c.l.b16 %v6644
        %v6820 = vunpack.c.h.b16 %v6644
        %v6821 = vunpack.c.l.b16 %v6645
        %v6822 = vunpack.c.h.b16 %v6645
        %v6823 = vunpack.c.l.b16 %v6646
        %v6824 = vunpack.c.h.b16 %v6646
        %v6825 = vunpack.c.l.b16 %v6647
        %v6826 = vunpack.c.h.b16 %v6647
        %v6827 = vunpack.c.l.b16 %v6648
        %v6828 = vunpack.c.h.b16 %v6648
        %v6829 = vunpack.c.l.b16 %v6649
        %v6830 = vunpack.c.h.b16 %v6649
        %v6831 = vunpack.c.l.b16 %v6650
        %v6832 = vunpack.c.h.b16 %v6650
        %v6833 = vunpack.c.l.b16 %v6651
        %v6834 = vunpack.c.h.b16 %v6651
        %v6835 = vunpack.c.l.b16 %v6652
        %v6836 = vunpack.c.h.b16 %v6652
        %v6837 = vunpack.c.l.b16 %v6653
        %v6838 = vunpack.c.h.b16 %v6653
        %v6839 = vunpack.c.l.b16 %v6654
        %v6840 = vunpack.c.h.b16 %v6654
        %v6841 = vunpack.c.l.b16 %v6655
        %v6842 = vunpack.c.h.b16 %v6655
        %v6843 = vunpack.c.l.b16 %v6656
        %v6844 = vunpack.c.h.b16 %v6656
        %v6845 = vunpack.c.l.b16 %v6657
        %v6846 = vunpack.c.h.b16 %v6657
        %v6847 = vunpack.c.l.b16 %v6658
        %v6848 = vunpack.c.h.b16 %v6658
        %v6849 = vunpack.c.l.b16 %v6659
        %v6850 = vunpack.c.h.b16 %v6659
        %v6851 = vunpack.c.l.b16 %v6660
        %v6852 = vunpack.c.h.b16 %v6660
        %v6853 = vunpack.c.l.b16 %v6661
        %v6854 = vunpack.c.h.b16 %v6661
        %v6855 = vunpack.c.l.b16 %v6662
        %v6856 = vunpack.c.h.b16 %v6662
        %v6857 = vunpack.c.l.b16 %v6663
        %v6858 = vunpack.c.h.b16 %v6663
        %v6859 = vunpack.c.l.b16 %v6664
        %v6860 = vunpack.c.h.b16 %v6664
        %v6861 = vpack.c.b16 %v6737, %v6733
        %v6862 = vpack.c.b16 %v6738, %v6734
        %v6863 = vpack.c.b16 %v6739, %v6735
        %v6864 = vpack.c.b16 %v6740, %v6736
        %v6865 = vpack.c.b16 %v6745, %v6741
        %v6866 = vpack.c.b16 %v6746, %v6742
        %v6867 = vpack.c.b16 %v6747, %v6743
        %v6868 = vpack.c.b16 %v6748, %v6744
        %v6869 = vpack.c.b16 %v6753, %v6749
        %v6870 = vpack.c.b16 %v6754, %v6750
        %v6871 = vpack.c.b16 %v6755, %v6751
        %v6872 = vpack.c.b16 %v6756, %v6752
        %v6873 = vpack.c.b16 %v6761, %v6757
        %v6874 = vpack.c.b16 %v6762, %v6758
        %v6875 = vpack.c.b16 %v6763, %v6759
        %v6876 = vpack.c.b16 %v6764, %v6760
        %v6877 = vpack.c.b16 %v6769, %v6765
        %v6878 = vpack.c.b16 %v6770, %v6766
        %v6879 = vpack.c.b16 %v6771, %v6767
        %v6880 = vpack.c.b16 %v6772, %v6768
        %v6881 = vpack.c.b16 %v6777, %v6773
        %v6882 = vpack.c.b16 %v6778, %v6774
        %v6883 = vpack.c.b16 %v6779, %v6775
        %v6884 = vpack.c.b16 %v6780, %v6776
        %v6885 = vpack.c.b16 %v6785, %v6781
        %v6886 = vpack.c.b16 %v6786, %v6782
        %v6887 = vpack.c.b16 %v6787, %v6783
        %v6888 = vpack.c.b16 %v6788, %v6784
        %v6889 = vpack.c.b16 %v6793, %v6789
        %v6890 = vpack.c.b16 %v6794, %v6790
        %v6891 = vpack.c.b16 %v6795, %v6791
        %v6892 = vpack.c.b16 %v6796, %v6792
        %v6893 = vpack.c.b16 %v6801, %v6797
        %v6894 = vpack.c.b16 %v6802, %v6798
        %v6895 = vpack.c.b16 %v6803, %v6799
        %v6896 = vpack.c.b16 %v6804, %v6800
        %v6897 = vpack.c.b16 %v6809, %v6805
        %v6898 = vpack.c.b16 %v6810, %v6806
        %v6899 = vpack.c.b16 %v6811, %v6807
        %v6900 = vpack.c.b16 %v6812, %v6808
        %v6901 = vpack.c.b16 %v6817, %v6813
        %v6902 = vpack.c.b16 %v6818, %v6814
        %v6903 = vpack.c.b16 %v6819, %v6815
        %v6904 = vpack.c.b16 %v6820, %v6816
        %v6905 = vpack.c.b16 %v6825, %v6821
        %v6906 = vpack.c.b16 %v6826, %v6822
        %v6907 = vpack.c.b16 %v6827, %v6823
        %v6908 = vpack.c.b16 %v6828, %v6824
        %v6909 = vpack.c.b16 %v6833, %v6829
        %v6910 = vpack.c.b16 %v6834, %v6830
        %v6911 = vpack.c.b16 %v6835, %v6831
        %v6912 = vpack.c.b16 %v6836, %v6832
        %v6913 = vpack.c.b16 %v6841, %v6837
        %v6914 = vpack.c.b16 %v6842, %v6838
        %v6915 = vpack.c.b16 %v6843, %v6839
        %v6916 = vpack.c.b16 %v6844, %v6840
        %v6917 = vpack.c.b16 %v6849, %v6845
        %v6918 = vpack.c.b16 %v6850, %v6846
        %v6919 = vpack.c.b16 %v6851, %v6847
        %v6920 = vpack.c.b16 %v6852, %v6848
        %v6921 = vpack.c.b16 %v6857, %v6853
        %v6922 = vpack.c.b16 %v6858, %v6854
        %v6923 = vpack.c.b16 %v6859, %v6855
        %v6924 = vpack.c.b16 %v6860, %v6856
        %6989 = vmatprep.subr.bf16.mxu0 %v6890
        %6990 = vmatpush1.bf16.msra.mxu0 %v6889
        %6991 = vmatprep.subr.bf16.mxu0 %v6886
        %6992 = vmatpush1.bf16.msra.mxu0 %v6885
        %6993 = vmatprep.subr.bf16.mxu0 %v6882
        %6994 = vmatpush1.bf16.msra.mxu0 %v6881
        %6995 = vmatprep.subr.bf16.mxu0 %v6878
        %6996 = vmatpush1.bf16.msra.mxu0 %v6877
        %6997 = vmatprep.subr.bf16.mxu0 %v6874
        %6998 = vmatpush1.bf16.msra.mxu0 %v6873
        %6999 = vmatprep.subr.bf16.mxu0 %v6870
        %7000 = vmatpush1.bf16.msra.mxu0 %v6869
        %7001 = vmatprep.subr.bf16.mxu0 %v6866
        %7002 = vmatpush1.bf16.msra.mxu0 %v6865
        %7003 = vmatprep.subr.bf16.mxu0 %v6862
        %7004 = vmatpush1.bf16.msra.mxu0 %v6861
        %7005 = vmatprep.subr.bf16.mxu0 %v6922
        %7006 = vmatpush2.bf16.msra.mxu0 %v6921
        %7007 = vmatprep.subr.bf16.mxu0 %v6918
        %7008 = vmatpush2.bf16.msra.mxu0 %v6917
        %7009 = vmatprep.subr.bf16.mxu0 %v6914
        %7010 = vmatpush2.bf16.msra.mxu0 %v6913
        %7011 = vmatprep.subr.bf16.mxu0 %v6910
        %7012 = vmatpush2.bf16.msra.mxu0 %v6909
        %7013 = vmatprep.subr.bf16.mxu0 %v6906
        %7014 = vmatpush2.bf16.msra.mxu0 %v6905
        %7015 = vmatprep.subr.bf16.mxu0 %v6902
        %7016 = vmatpush2.bf16.msra.mxu0 %v6901
        %7017 = vmatprep.subr.bf16.mxu0 %v6898
        %7018 = vmatpush2.bf16.msra.mxu0 %v6897
        %7019 = vmatprep.subr.bf16.mxu0 %v6894
        %7020 = vmatpush2.bf16.msra.mxu0 %v6893
        %7021 = vmatprep.mubr.bf16.mxu0 %v6600
        %7022 = vmatmul.mubr.bf16.gmra.mxu0 %v6599
        %v7023 = vpop.f32.mrf.mxu0
        %v7024 = vadd.f32 %v6665, %v7023
        %v7025 = vpop.f32.mrf.mxu0
        %v7026 = vadd.f32 %v6666, %v7025
        %v7027 = vpop.f32.mrf.mxu0
        %v7028 = vpop.f32.mrf.mxu0
        %7029 = vdwg.mxu0
        %7030 = vmatprep.subr.bf16.mxu0 %v6892
        %7031 = vmatpush1.bf16.msra.mxu0 %v6891
        %7032 = vmatprep.subr.bf16.mxu0 %v6888
        %7033 = vmatpush1.bf16.msra.mxu0 %v6887
        %7034 = vmatprep.subr.bf16.mxu0 %v6884
        %7035 = vmatpush1.bf16.msra.mxu0 %v6883
        %7036 = vmatprep.subr.bf16.mxu0 %v6880
        %7037 = vmatpush1.bf16.msra.mxu0 %v6879
        %7038 = vmatprep.subr.bf16.mxu0 %v6876
        %7039 = vmatpush1.bf16.msra.mxu0 %v6875
        %7040 = vmatprep.subr.bf16.mxu0 %v6872
        %7041 = vmatpush1.bf16.msra.mxu0 %v6871
        %7042 = vmatprep.subr.bf16.mxu0 %v6868
        %7043 = vmatpush1.bf16.msra.mxu0 %v6867
        %7044 = vmatprep.subr.bf16.mxu0 %v6864
        %7045 = vmatpush1.bf16.msra.mxu0 %v6863
        %7046 = vmatprep.subr.bf16.mxu0 %v6924
        %7047 = vmatpush2.bf16.msra.mxu0 %v6923
        %7048 = vmatprep.subr.bf16.mxu0 %v6920
        %7049 = vmatpush2.bf16.msra.mxu0 %v6919
        %7050 = vmatprep.subr.bf16.mxu0 %v6916
        %7051 = vmatpush2.bf16.msra.mxu0 %v6915
        %7052 = vmatprep.subr.bf16.mxu0 %v6912
        %7053 = vmatpush2.bf16.msra.mxu0 %v6911
        %7054 = vmatprep.subr.bf16.mxu0 %v6908
        %7055 = vmatpush2.bf16.msra.mxu0 %v6907
        %7056 = vmatprep.subr.bf16.mxu0 %v6904
        %7057 = vmatpush2.bf16.msra.mxu0 %v6903
        %7058 = vmatprep.subr.bf16.mxu0 %v6900
        %7059 = vmatpush2.bf16.msra.mxu0 %v6899
        %7060 = vmatprep.subr.bf16.mxu0 %v6896
        %7061 = vmatpush2.bf16.msra.mxu0 %v6895
        %7062 = vmatprep.mubr.bf16.mxu0 %v6600
        %7063 = vmatmul.mubr.bf16.gmra.mxu0 %v6599
        %v7064 = vpop.f32.mrf.mxu0
        %v7065 = vadd.f32 %v6667, %v7064
        %v7066 = vpop.f32.mrf.mxu0
        %v7067 = vadd.f32 %v6668, %v7066
        %v7068 = vpop.f32.mrf.mxu0
        %v7069 = vpop.f32.mrf.mxu0
        %7070 = vdwg.mxu0
        %v7071 = vxor.u32 %v7024, 2147483648
        %v7072 = vxor.u32 %v7026, 2147483648
        %v7073 = vxor.u32 %v7065, 2147483648
        %v7074 = vmul.f32 %v7071, 1.442695
        %v7075 = vpow.pop %v7074
        %v7076 = vmul.f32 %v7072, 1.442695
        %v7077 = vpow.pop %v7076
        %v7078 = vmul.f32 %v7073, 1.442695
        %v7079 = vpow.pop %v7078
        %v7080 = vadd.f32 %v7075, 1.0
        %v7081 = vadd.f32 %v7077, 1.0
        %v7082 = vadd.f32 %v7079, 1.0
        %v7083 = vrcp.pop %v7080
        %v7084 = vmul.f32 1.0, %v7083
        %v7085 = vrcp.pop %v7081
        %v7086 = vmul.f32 1.0, %v7085
        %v7087 = vrcp.pop %v7082
        %v7088 = vmul.f32 1.0, %v7087
        %v7089 = vtanh.pop %v7067
        %v7090 = vld [vmem:[%s1592] sm:$0xff]
        %v7091 = vmul.f32 %v7086, %v7090
        %v7092 = vmul.f32 %v7084, %v7089
        %v7093 = vadd.f32 %v7091, %v7092
        %v7094 = vtanh.pop %v7093
        %v7095 = vmul.f32 %v7088, %v7094
        %7096 = vst [vmem:[%s1097] sm:$0xff] %v7095
        %7097 = vst [vmem:[%s1592] sm:$0xff] %v7093
        %v7098 = vpack.c.bf16 %v7095, %v7095
        %7099 = vmatprep.subr.bf16.mxu0 0
        %7100 = vmatpush1.bf16.msra.mxu0 %v1641
        %7101 = vmatprep.subr.bf16.mxu0 0
        %7102 = vmatpush1.bf16.msra.mxu0 %v1640
        %7103 = vmatprep.subr.bf16.mxu0 0
        %7104 = vmatpush1.bf16.msra.mxu0 %v1639
        %7105 = vmatprep.subr.bf16.mxu0 0
        %7106 = vmatpush1.bf16.msra.mxu0 %v1638
        %7107 = vmatprep.subr.bf16.mxu0 0
        %7108 = vmatpush1.bf16.msra.mxu0 %v1637
        %7109 = vmatprep.subr.bf16.mxu0 0
        %7110 = vmatpush1.bf16.msra.mxu0 %v1636
        %7111 = vmatprep.subr.bf16.mxu0 0
        %7112 = vmatpush1.bf16.msra.mxu0 %v1635
        %7113 = vmatprep.subr.bf16.mxu0 0
        %7114 = vmatpush1.bf16.msra.mxu0 %v1634
        %7115 = vmatprep.subr.bf16.mxu0 0
        %7116 = vmatpush2.bf16.msra.mxu0 0
        %7117 = vmatprep.subr.bf16.mxu0 0
        %7118 = vmatpush2.bf16.msra.mxu0 0
        %7119 = vmatprep.subr.bf16.mxu0 0
        %7120 = vmatpush2.bf16.msra.mxu0 0
        %7121 = vmatprep.subr.bf16.mxu0 0
        %7122 = vmatpush2.bf16.msra.mxu0 0
        %7123 = vmatprep.subr.bf16.mxu0 0
        %7124 = vmatpush2.bf16.msra.mxu0 0
        %7125 = vmatprep.subr.bf16.mxu0 0
        %7126 = vmatpush2.bf16.msra.mxu0 0
        %7127 = vmatprep.subr.bf16.mxu0 0
        %7128 = vmatpush2.bf16.msra.mxu0 0
        %7129 = vmatprep.subr.bf16.mxu0 0
        %7130 = vmatpush2.bf16.msra.mxu0 0
        %7131 = vmatprep.mubr.bf16.mxu0 0
        %7132 = vmatmul.mubr.bf16.gmra.mxu0 %v7098
        %v7133 = vpop.f32.mrf.mxu0
        %v7134 = vadd.f32 %v526, %v7133
        %v7135 = vpop.f32.mrf.mxu0
        %v7136 = vpop.f32.mrf.mxu0
        %v7137 = vpop.f32.mrf.mxu0
        %7138 = vdwg.mxu0
        %v7139 = vtanh.pop %v7134
        %s7140 = scalar_lea.vmem %s481, 40 [#allocation14]
        %7141 = vst [vmem:[%s7140] sm:$0xff] %v7139
        %s7142 = scalar_lea.vmem %s423, 48 [#allocation2]
        %v7143 = vld [vmem:[%s7142] sm:$0xff]
        %v7144 = vpack.c.bf16 %v7143, %v7143
        %v7146 = vsel %vm553, %v7144, 0
        %7148 = vmatprep.subr.bf16.mxu0 0
        %7149 = vmatpush1.bf16.msra.mxu0 0
        %7150 = vmatprep.subr.bf16.mxu0 0
        %7151 = vmatpush1.bf16.msra.mxu0 0
        %7152 = vmatprep.subr.bf16.mxu0 0
        %7153 = vmatpush1.bf16.msra.mxu0 0
        %7154 = vmatprep.subr.bf16.mxu0 0
        %7155 = vmatpush1.bf16.msra.mxu0 0
        %7156 = vmatprep.subr.bf16.mxu0 0
        %7157 = vmatpush1.bf16.msra.mxu0 %v548
        %7158 = vmatprep.subr.bf16.mxu0 0
        %7159 = vmatpush1.bf16.msra.mxu0 %v547
        %7160 = vmatprep.subr.bf16.mxu0 0
        %7161 = vmatpush1.bf16.msra.mxu0 %v546
        %7162 = vmatprep.subr.bf16.mxu0 0
        %7163 = vmatpush1.bf16.msra.mxu0 %v545
        %7164 = vmatprep.subr.bf16.mxu0 0
        %7165 = vmatpush2.bf16.msra.mxu0 0
        %7166 = vmatprep.subr.bf16.mxu0 0
        %7167 = vmatpush2.bf16.msra.mxu0 0
        %7168 = vmatprep.subr.bf16.mxu0 0
        %7169 = vmatpush2.bf16.msra.mxu0 0
        %7170 = vmatprep.subr.bf16.mxu0 0
        %7171 = vmatpush2.bf16.msra.mxu0 0
        %7172 = vmatprep.subr.bf16.mxu0 0
        %7173 = vmatpush2.bf16.msra.mxu0 0
        %7174 = vmatprep.subr.bf16.mxu0 0
        %7175 = vmatpush2.bf16.msra.mxu0 0
        %7176 = vmatprep.subr.bf16.mxu0 0
        %7177 = vmatpush2.bf16.msra.mxu0 0
        %7178 = vmatprep.subr.bf16.mxu0 0
        %7179 = vmatpush2.bf16.msra.mxu0 0
        %7180 = vmatprep.mubr.bf16.mxu0 0
        %7181 = vmatmul.mubr.bf16.gmra.mxu0 %v7146
        %v7182 = vpop.f32.mrf.mxu0
        %v7183 = vadd.f32 %v509, %v7182
        %v7184 = vpop.f32.mrf.mxu0
        %v7185 = vpop.f32.mrf.mxu0
        %v7186 = vpop.f32.mrf.mxu0
        %7187 = vdwg.mxu0
        %v7188 = vld [vmem:[#allocation15] sm:$0xff]
        %v7189 = vpack.c.bf16 %v7183, %v7183
        %v7190 = vpack.c.bf16 %v7188, %v7188
        %v7191 = vld [vmem:[#allocation7] sm:$0xff]
        %v7192 = vld [vmem:[#allocation7 + $0x8] sm:$0xff]
        %v7193 = vld [vmem:[#allocation7 + $0x10] sm:$0xff]
        %v7194 = vld [vmem:[#allocation7 + $0x18] sm:$0xff]
        %v7195 = vld [vmem:[#allocation7 + $0x20] sm:$0xff]
        %v7196 = vld [vmem:[#allocation7 + $0x28] sm:$0xff]
        %v7197 = vld [vmem:[#allocation7 + $0x30] sm:$0xff]
        %v7198 = vld [vmem:[#allocation7 + $0x38] sm:$0xff]
        %v7199 = vld [vmem:[#allocation7 + $0x40] sm:$0xff]
        %v7200 = vld [vmem:[#allocation7 + $0x48] sm:$0xff]
        %v7201 = vld [vmem:[#allocation7 + $0x50] sm:$0xff]
        %v7202 = vld [vmem:[#allocation7 + $0x58] sm:$0xff]
        %v7203 = vld [vmem:[#allocation7 + $0x60] sm:$0xff]
        %v7204 = vld [vmem:[#allocation7 + $0x68] sm:$0xff]
        %v7205 = vld [vmem:[#allocation7 + $0x70] sm:$0xff]
        %v7206 = vld [vmem:[#allocation7 + $0x78] sm:$0xff]
        %v7207 = vld [vmem:[#allocation7 + $0x80] sm:$0xff]
        %v7208 = vld [vmem:[#allocation7 + $0x88] sm:$0xff]
        %v7209 = vld [vmem:[#allocation7 + $0x90] sm:$0xff]
        %v7210 = vld [vmem:[#allocation7 + $0x98] sm:$0xff]
        %v7211 = vld [vmem:[#allocation7 + $0xa0] sm:$0xff]
        %v7212 = vld [vmem:[#allocation7 + $0xa8] sm:$0xff]
        %v7213 = vld [vmem:[#allocation7 + $0xb0] sm:$0xff]
        %v7214 = vld [vmem:[#allocation7 + $0xb8] sm:$0xff]
        %v7215 = vld [vmem:[#allocation7 + $0xc0] sm:$0xff]
        %v7216 = vld [vmem:[#allocation7 + $0xc8] sm:$0xff]
        %v7217 = vld [vmem:[#allocation7 + $0xd0] sm:$0xff]
        %v7218 = vld [vmem:[#allocation7 + $0xd8] sm:$0xff]
        %v7219 = vld [vmem:[#allocation7 + $0xe0] sm:$0xff]
        %v7220 = vld [vmem:[#allocation7 + $0xe8] sm:$0xff]
        %v7221 = vld [vmem:[#allocation7 + $0xf0] sm:$0xff]
        %v7222 = vld [vmem:[#allocation7 + $0xf8] sm:$0xff]
        %v7223 = vld [vmem:[#allocation7 + $0x100] sm:$0xff]
        %v7224 = vld [vmem:[#allocation7 + $0x108] sm:$0xff]
        %v7225 = vld [vmem:[#allocation7 + $0x110] sm:$0xff]
        %v7226 = vld [vmem:[#allocation7 + $0x118] sm:$0xff]
        %v7227 = vld [vmem:[#allocation7 + $0x120] sm:$0xff]
        %v7228 = vld [vmem:[#allocation7 + $0x128] sm:$0xff]
        %v7229 = vld [vmem:[#allocation7 + $0x130] sm:$0xff]
        %v7230 = vld [vmem:[#allocation7 + $0x138] sm:$0xff]
        %v7231 = vld [vmem:[#allocation7 + $0x140] sm:$0xff]
        %v7232 = vld [vmem:[#allocation7 + $0x148] sm:$0xff]
        %v7233 = vld [vmem:[#allocation7 + $0x150] sm:$0xff]
        %v7234 = vld [vmem:[#allocation7 + $0x158] sm:$0xff]
        %v7235 = vld [vmem:[#allocation7 + $0x160] sm:$0xff]
        %v7236 = vld [vmem:[#allocation7 + $0x168] sm:$0xff]
        %v7237 = vld [vmem:[#allocation7 + $0x170] sm:$0xff]
        %v7238 = vld [vmem:[#allocation7 + $0x178] sm:$0xff]
        %v7239 = vld [vmem:[#allocation7 + $0x180] sm:$0xff]
        %v7240 = vld [vmem:[#allocation7 + $0x188] sm:$0xff]
        %v7241 = vld [vmem:[#allocation7 + $0x190] sm:$0xff]
        %v7242 = vld [vmem:[#allocation7 + $0x198] sm:$0xff]
        %v7243 = vld [vmem:[#allocation7 + $0x1a0] sm:$0xff]
        %v7244 = vld [vmem:[#allocation7 + $0x1a8] sm:$0xff]
        %v7245 = vld [vmem:[#allocation7 + $0x1b0] sm:$0xff]
        %v7246 = vld [vmem:[#allocation7 + $0x1b8] sm:$0xff]
        %v7247 = vld [vmem:[#allocation7 + $0x1c0] sm:$0xff]
        %v7248 = vld [vmem:[#allocation7 + $0x1c8] sm:$0xff]
        %v7249 = vld [vmem:[#allocation7 + $0x1d0] sm:$0xff]
        %v7250 = vld [vmem:[#allocation7 + $0x1d8] sm:$0xff]
        %v7251 = vld [vmem:[#allocation7 + $0x1e0] sm:$0xff]
        %v7252 = vld [vmem:[#allocation7 + $0x1e8] sm:$0xff]
        %v7253 = vld [vmem:[#allocation7 + $0x1f0] sm:$0xff]
        %v7254 = vld [vmem:[#allocation7 + $0x1f8] sm:$0xff]
        %v7255 = vld [vmem:[%s4] sm:$0xff]
        %v7256 = vld [vmem:[%s4 + $0x8] sm:$0xff]
        %v7257 = vld [vmem:[%s4 + $0x10] sm:$0xff]
        %v7258 = vld [vmem:[%s4 + $0x18] sm:$0xff]
        %v7323 = vunpack.c.l.b16 %v7191
        %v7324 = vunpack.c.h.b16 %v7191
        %v7325 = vunpack.c.l.b16 %v7192
        %v7326 = vunpack.c.h.b16 %v7192
        %v7327 = vunpack.c.l.b16 %v7193
        %v7328 = vunpack.c.h.b16 %v7193
        %v7329 = vunpack.c.l.b16 %v7194
        %v7330 = vunpack.c.h.b16 %v7194
        %v7331 = vunpack.c.l.b16 %v7195
        %v7332 = vunpack.c.h.b16 %v7195
        %v7333 = vunpack.c.l.b16 %v7196
        %v7334 = vunpack.c.h.b16 %v7196
        %v7335 = vunpack.c.l.b16 %v7197
        %v7336 = vunpack.c.h.b16 %v7197
        %v7337 = vunpack.c.l.b16 %v7198
        %v7338 = vunpack.c.h.b16 %v7198
        %v7339 = vunpack.c.l.b16 %v7199
        %v7340 = vunpack.c.h.b16 %v7199
        %v7341 = vunpack.c.l.b16 %v7200
        %v7342 = vunpack.c.h.b16 %v7200
        %v7343 = vunpack.c.l.b16 %v7201
        %v7344 = vunpack.c.h.b16 %v7201
        %v7345 = vunpack.c.l.b16 %v7202
        %v7346 = vunpack.c.h.b16 %v7202
        %v7347 = vunpack.c.l.b16 %v7203
        %v7348 = vunpack.c.h.b16 %v7203
        %v7349 = vunpack.c.l.b16 %v7204
        %v7350 = vunpack.c.h.b16 %v7204
        %v7351 = vunpack.c.l.b16 %v7205
        %v7352 = vunpack.c.h.b16 %v7205
        %v7353 = vunpack.c.l.b16 %v7206
        %v7354 = vunpack.c.h.b16 %v7206
        %v7355 = vunpack.c.l.b16 %v7207
        %v7356 = vunpack.c.h.b16 %v7207
        %v7357 = vunpack.c.l.b16 %v7208
        %v7358 = vunpack.c.h.b16 %v7208
        %v7359 = vunpack.c.l.b16 %v7209
        %v7360 = vunpack.c.h.b16 %v7209
        %v7361 = vunpack.c.l.b16 %v7210
        %v7362 = vunpack.c.h.b16 %v7210
        %v7363 = vunpack.c.l.b16 %v7211
        %v7364 = vunpack.c.h.b16 %v7211
        %v7365 = vunpack.c.l.b16 %v7212
        %v7366 = vunpack.c.h.b16 %v7212
        %v7367 = vunpack.c.l.b16 %v7213
        %v7368 = vunpack.c.h.b16 %v7213
        %v7369 = vunpack.c.l.b16 %v7214
        %v7370 = vunpack.c.h.b16 %v7214
        %v7371 = vunpack.c.l.b16 %v7215
        %v7372 = vunpack.c.h.b16 %v7215
        %v7373 = vunpack.c.l.b16 %v7216
        %v7374 = vunpack.c.h.b16 %v7216
        %v7375 = vunpack.c.l.b16 %v7217
        %v7376 = vunpack.c.h.b16 %v7217
        %v7377 = vunpack.c.l.b16 %v7218
        %v7378 = vunpack.c.h.b16 %v7218
        %v7379 = vunpack.c.l.b16 %v7219
        %v7380 = vunpack.c.h.b16 %v7219
        %v7381 = vunpack.c.l.b16 %v7220
        %v7382 = vunpack.c.h.b16 %v7220
        %v7383 = vunpack.c.l.b16 %v7221
        %v7384 = vunpack.c.h.b16 %v7221
        %v7385 = vunpack.c.l.b16 %v7222
        %v7386 = vunpack.c.h.b16 %v7222
        %v7387 = vunpack.c.l.b16 %v7223
        %v7388 = vunpack.c.h.b16 %v7223
        %v7389 = vunpack.c.l.b16 %v7224
        %v7390 = vunpack.c.h.b16 %v7224
        %v7391 = vunpack.c.l.b16 %v7225
        %v7392 = vunpack.c.h.b16 %v7225
        %v7393 = vunpack.c.l.b16 %v7226
        %v7394 = vunpack.c.h.b16 %v7226
        %v7395 = vunpack.c.l.b16 %v7227
        %v7396 = vunpack.c.h.b16 %v7227
        %v7397 = vunpack.c.l.b16 %v7228
        %v7398 = vunpack.c.h.b16 %v7228
        %v7399 = vunpack.c.l.b16 %v7229
        %v7400 = vunpack.c.h.b16 %v7229
        %v7401 = vunpack.c.l.b16 %v7230
        %v7402 = vunpack.c.h.b16 %v7230
        %v7403 = vunpack.c.l.b16 %v7231
        %v7404 = vunpack.c.h.b16 %v7231
        %v7405 = vunpack.c.l.b16 %v7232
        %v7406 = vunpack.c.h.b16 %v7232
        %v7407 = vunpack.c.l.b16 %v7233
        %v7408 = vunpack.c.h.b16 %v7233
        %v7409 = vunpack.c.l.b16 %v7234
        %v7410 = vunpack.c.h.b16 %v7234
        %v7411 = vunpack.c.l.b16 %v7235
        %v7412 = vunpack.c.h.b16 %v7235
        %v7413 = vunpack.c.l.b16 %v7236
        %v7414 = vunpack.c.h.b16 %v7236
        %v7415 = vunpack.c.l.b16 %v7237
        %v7416 = vunpack.c.h.b16 %v7237
        %v7417 = vunpack.c.l.b16 %v7238
        %v7418 = vunpack.c.h.b16 %v7238
        %v7419 = vunpack.c.l.b16 %v7239
        %v7420 = vunpack.c.h.b16 %v7239
        %v7421 = vunpack.c.l.b16 %v7240
        %v7422 = vunpack.c.h.b16 %v7240
        %v7423 = vunpack.c.l.b16 %v7241
        %v7424 = vunpack.c.h.b16 %v7241
        %v7425 = vunpack.c.l.b16 %v7242
        %v7426 = vunpack.c.h.b16 %v7242
        %v7427 = vunpack.c.l.b16 %v7243
        %v7428 = vunpack.c.h.b16 %v7243
        %v7429 = vunpack.c.l.b16 %v7244
        %v7430 = vunpack.c.h.b16 %v7244
        %v7431 = vunpack.c.l.b16 %v7245
        %v7432 = vunpack.c.h.b16 %v7245
        %v7433 = vunpack.c.l.b16 %v7246
        %v7434 = vunpack.c.h.b16 %v7246
        %v7435 = vunpack.c.l.b16 %v7247
        %v7436 = vunpack.c.h.b16 %v7247
        %v7437 = vunpack.c.l.b16 %v7248
        %v7438 = vunpack.c.h.b16 %v7248
        %v7439 = vunpack.c.l.b16 %v7249
        %v7440 = vunpack.c.h.b16 %v7249
        %v7441 = vunpack.c.l.b16 %v7250
        %v7442 = vunpack.c.h.b16 %v7250
        %v7443 = vunpack.c.l.b16 %v7251
        %v7444 = vunpack.c.h.b16 %v7251
        %v7445 = vunpack.c.l.b16 %v7252
        %v7446 = vunpack.c.h.b16 %v7252
        %v7447 = vunpack.c.l.b16 %v7253
        %v7448 = vunpack.c.h.b16 %v7253
        %v7449 = vunpack.c.l.b16 %v7254
        %v7450 = vunpack.c.h.b16 %v7254
        %v7451 = vpack.c.b16 %v7327, %v7323
        %v7452 = vpack.c.b16 %v7328, %v7324
        %v7453 = vpack.c.b16 %v7329, %v7325
        %v7454 = vpack.c.b16 %v7330, %v7326
        %v7455 = vpack.c.b16 %v7335, %v7331
        %v7456 = vpack.c.b16 %v7336, %v7332
        %v7457 = vpack.c.b16 %v7337, %v7333
        %v7458 = vpack.c.b16 %v7338, %v7334
        %v7459 = vpack.c.b16 %v7343, %v7339
        %v7460 = vpack.c.b16 %v7344, %v7340
        %v7461 = vpack.c.b16 %v7345, %v7341
        %v7462 = vpack.c.b16 %v7346, %v7342
        %v7463 = vpack.c.b16 %v7351, %v7347
        %v7464 = vpack.c.b16 %v7352, %v7348
        %v7465 = vpack.c.b16 %v7353, %v7349
        %v7466 = vpack.c.b16 %v7354, %v7350
        %v7467 = vpack.c.b16 %v7359, %v7355
        %v7468 = vpack.c.b16 %v7360, %v7356
        %v7469 = vpack.c.b16 %v7361, %v7357
        %v7470 = vpack.c.b16 %v7362, %v7358
        %v7471 = vpack.c.b16 %v7367, %v7363
        %v7472 = vpack.c.b16 %v7368, %v7364
        %v7473 = vpack.c.b16 %v7369, %v7365
        %v7474 = vpack.c.b16 %v7370, %v7366
        %v7475 = vpack.c.b16 %v7375, %v7371
        %v7476 = vpack.c.b16 %v7376, %v7372
        %v7477 = vpack.c.b16 %v7377, %v7373
        %v7478 = vpack.c.b16 %v7378, %v7374
        %v7479 = vpack.c.b16 %v7383, %v7379
        %v7480 = vpack.c.b16 %v7384, %v7380
        %v7481 = vpack.c.b16 %v7385, %v7381
        %v7482 = vpack.c.b16 %v7386, %v7382
        %v7483 = vpack.c.b16 %v7391, %v7387
        %v7484 = vpack.c.b16 %v7392, %v7388
        %v7485 = vpack.c.b16 %v7393, %v7389
        %v7486 = vpack.c.b16 %v7394, %v7390
        %v7487 = vpack.c.b16 %v7399, %v7395
        %v7488 = vpack.c.b16 %v7400, %v7396
        %v7489 = vpack.c.b16 %v7401, %v7397
        %v7490 = vpack.c.b16 %v7402, %v7398
        %v7491 = vpack.c.b16 %v7407, %v7403
        %v7492 = vpack.c.b16 %v7408, %v7404
        %v7493 = vpack.c.b16 %v7409, %v7405
        %v7494 = vpack.c.b16 %v7410, %v7406
        %v7495 = vpack.c.b16 %v7415, %v7411
        %v7496 = vpack.c.b16 %v7416, %v7412
        %v7497 = vpack.c.b16 %v7417, %v7413
        %v7498 = vpack.c.b16 %v7418, %v7414
        %v7499 = vpack.c.b16 %v7423, %v7419
        %v7500 = vpack.c.b16 %v7424, %v7420
        %v7501 = vpack.c.b16 %v7425, %v7421
        %v7502 = vpack.c.b16 %v7426, %v7422
        %v7503 = vpack.c.b16 %v7431, %v7427
        %v7504 = vpack.c.b16 %v7432, %v7428
        %v7505 = vpack.c.b16 %v7433, %v7429
        %v7506 = vpack.c.b16 %v7434, %v7430
        %v7507 = vpack.c.b16 %v7439, %v7435
        %v7508 = vpack.c.b16 %v7440, %v7436
        %v7509 = vpack.c.b16 %v7441, %v7437
        %v7510 = vpack.c.b16 %v7442, %v7438
        %v7511 = vpack.c.b16 %v7447, %v7443
        %v7512 = vpack.c.b16 %v7448, %v7444
        %v7513 = vpack.c.b16 %v7449, %v7445
        %v7514 = vpack.c.b16 %v7450, %v7446
        %7579 = vmatprep.subr.bf16.mxu0 %v7480
        %7580 = vmatpush1.bf16.msra.mxu0 %v7479
        %7581 = vmatprep.subr.bf16.mxu0 %v7476
        %7582 = vmatpush1.bf16.msra.mxu0 %v7475
        %7583 = vmatprep.subr.bf16.mxu0 %v7472
        %7584 = vmatpush1.bf16.msra.mxu0 %v7471
        %7585 = vmatprep.subr.bf16.mxu0 %v7468
        %7586 = vmatpush1.bf16.msra.mxu0 %v7467
        %7587 = vmatprep.subr.bf16.mxu0 %v7464
        %7588 = vmatpush1.bf16.msra.mxu0 %v7463
        %7589 = vmatprep.subr.bf16.mxu0 %v7460
        %7590 = vmatpush1.bf16.msra.mxu0 %v7459
        %7591 = vmatprep.subr.bf16.mxu0 %v7456
        %7592 = vmatpush1.bf16.msra.mxu0 %v7455
        %7593 = vmatprep.subr.bf16.mxu0 %v7452
        %7594 = vmatpush1.bf16.msra.mxu0 %v7451
        %7595 = vmatprep.subr.bf16.mxu0 %v7512
        %7596 = vmatpush2.bf16.msra.mxu0 %v7511
        %7597 = vmatprep.subr.bf16.mxu0 %v7508
        %7598 = vmatpush2.bf16.msra.mxu0 %v7507
        %7599 = vmatprep.subr.bf16.mxu0 %v7504
        %7600 = vmatpush2.bf16.msra.mxu0 %v7503
        %7601 = vmatprep.subr.bf16.mxu0 %v7500
        %7602 = vmatpush2.bf16.msra.mxu0 %v7499
        %7603 = vmatprep.subr.bf16.mxu0 %v7496
        %7604 = vmatpush2.bf16.msra.mxu0 %v7495
        %7605 = vmatprep.subr.bf16.mxu0 %v7492
        %7606 = vmatpush2.bf16.msra.mxu0 %v7491
        %7607 = vmatprep.subr.bf16.mxu0 %v7488
        %7608 = vmatpush2.bf16.msra.mxu0 %v7487
        %7609 = vmatprep.subr.bf16.mxu0 %v7484
        %7610 = vmatpush2.bf16.msra.mxu0 %v7483
        %7611 = vmatprep.mubr.bf16.mxu0 %v7190
        %7612 = vmatmul.mubr.bf16.gmra.mxu0 %v7189
        %v7613 = vpop.f32.mrf.mxu0
        %v7614 = vadd.f32 %v7255, %v7613
        %v7615 = vpop.f32.mrf.mxu0
        %v7616 = vadd.f32 %v7256, %v7615
        %v7617 = vpop.f32.mrf.mxu0
        %v7618 = vpop.f32.mrf.mxu0
        %7619 = vdwg.mxu0
        %7620 = vmatprep.subr.bf16.mxu0 %v7482
        %7621 = vmatpush1.bf16.msra.mxu0 %v7481
        %7622 = vmatprep.subr.bf16.mxu0 %v7478
        %7623 = vmatpush1.bf16.msra.mxu0 %v7477
        %7624 = vmatprep.subr.bf16.mxu0 %v7474
        %7625 = vmatpush1.bf16.msra.mxu0 %v7473
        %7626 = vmatprep.subr.bf16.mxu0 %v7470
        %7627 = vmatpush1.bf16.msra.mxu0 %v7469
        %7628 = vmatprep.subr.bf16.mxu0 %v7466
        %7629 = vmatpush1.bf16.msra.mxu0 %v7465
        %7630 = vmatprep.subr.bf16.mxu0 %v7462
        %7631 = vmatpush1.bf16.msra.mxu0 %v7461
        %7632 = vmatprep.subr.bf16.mxu0 %v7458
        %7633 = vmatpush1.bf16.msra.mxu0 %v7457
        %7634 = vmatprep.subr.bf16.mxu0 %v7454
        %7635 = vmatpush1.bf16.msra.mxu0 %v7453
        %7636 = vmatprep.subr.bf16.mxu0 %v7514
        %7637 = vmatpush2.bf16.msra.mxu0 %v7513
        %7638 = vmatprep.subr.bf16.mxu0 %v7510
        %7639 = vmatpush2.bf16.msra.mxu0 %v7509
        %7640 = vmatprep.subr.bf16.mxu0 %v7506
        %7641 = vmatpush2.bf16.msra.mxu0 %v7505
        %7642 = vmatprep.subr.bf16.mxu0 %v7502
        %7643 = vmatpush2.bf16.msra.mxu0 %v7501
        %7644 = vmatprep.subr.bf16.mxu0 %v7498
        %7645 = vmatpush2.bf16.msra.mxu0 %v7497
        %7646 = vmatprep.subr.bf16.mxu0 %v7494
        %7647 = vmatpush2.bf16.msra.mxu0 %v7493
        %7648 = vmatprep.subr.bf16.mxu0 %v7490
        %7649 = vmatpush2.bf16.msra.mxu0 %v7489
        %7650 = vmatprep.subr.bf16.mxu0 %v7486
        %7651 = vmatpush2.bf16.msra.mxu0 %v7485
        %7652 = vmatprep.mubr.bf16.mxu0 %v7190
        %7653 = vmatmul.mubr.bf16.gmra.mxu0 %v7189
        %v7654 = vpop.f32.mrf.mxu0
        %v7655 = vadd.f32 %v7257, %v7654
        %v7656 = vpop.f32.mrf.mxu0
        %v7657 = vadd.f32 %v7258, %v7656
        %v7658 = vpop.f32.mrf.mxu0
        %v7659 = vpop.f32.mrf.mxu0
        %7660 = vdwg.mxu0
        %v7661 = vxor.u32 %v7614, 2147483648
        %v7662 = vxor.u32 %v7616, 2147483648
        %v7663 = vxor.u32 %v7655, 2147483648
        %v7664 = vmul.f32 %v7661, 1.442695
        %v7665 = vpow.pop %v7664
        %v7666 = vmul.f32 %v7662, 1.442695
        %v7667 = vpow.pop %v7666
        %v7668 = vmul.f32 %v7663, 1.442695
        %v7669 = vpow.pop %v7668
        %v7670 = vadd.f32 %v7665, 1.0
        %v7671 = vadd.f32 %v7667, 1.0
        %v7672 = vadd.f32 %v7669, 1.0
        %v7673 = vrcp.pop %v7670
        %v7674 = vmul.f32 1.0, %v7673
        %v7675 = vrcp.pop %v7671
        %v7676 = vmul.f32 1.0, %v7675
        %v7677 = vrcp.pop %v7672
        %v7678 = vmul.f32 1.0, %v7677
        %v7679 = vtanh.pop %v7657
        %v7680 = vld [vmem:[#allocation17] sm:$0xff]
        %v7681 = vmul.f32 %v7676, %v7680
        %v7682 = vmul.f32 %v7674, %v7679
        %v7683 = vadd.f32 %v7681, %v7682
        %v7684 = vtanh.pop %v7683
        %v7685 = vmul.f32 %v7678, %v7684
        %7686 = vst [vmem:[#allocation15] sm:$0xff] %v7685
        %7687 = vst [vmem:[#allocation17] sm:$0xff] %v7683
        %v7688 = vld [vmem:[%s1097] sm:$0xff]
        %v7689 = vpack.c.bf16 %v7685, %v7685
        %v7690 = vpack.c.bf16 %v7688, %v7688
        %v7691 = vld [vmem:[%s1101] sm:$0xff]
        %v7692 = vld [vmem:[%s1101 + $0x8] sm:$0xff]
        %v7693 = vld [vmem:[%s1101 + $0x10] sm:$0xff]
        %v7694 = vld [vmem:[%s1101 + $0x18] sm:$0xff]
        %v7695 = vld [vmem:[%s1101 + $0x20] sm:$0xff]
        %v7696 = vld [vmem:[%s1101 + $0x28] sm:$0xff]
        %v7697 = vld [vmem:[%s1101 + $0x30] sm:$0xff]
        %v7698 = vld [vmem:[%s1101 + $0x38] sm:$0xff]
        %v7699 = vld [vmem:[%s1101 + $0x40] sm:$0xff]
        %v7700 = vld [vmem:[%s1101 + $0x48] sm:$0xff]
        %v7701 = vld [vmem:[%s1101 + $0x50] sm:$0xff]
        %v7702 = vld [vmem:[%s1101 + $0x58] sm:$0xff]
        %v7703 = vld [vmem:[%s1101 + $0x60] sm:$0xff]
        %v7704 = vld [vmem:[%s1101 + $0x68] sm:$0xff]
        %v7705 = vld [vmem:[%s1101 + $0x70] sm:$0xff]
        %v7706 = vld [vmem:[%s1101 + $0x78] sm:$0xff]
        %v7707 = vld [vmem:[%s1101 + $0x80] sm:$0xff]
        %v7708 = vld [vmem:[%s1101 + $0x88] sm:$0xff]
        %v7709 = vld [vmem:[%s1101 + $0x90] sm:$0xff]
        %v7710 = vld [vmem:[%s1101 + $0x98] sm:$0xff]
        %v7711 = vld [vmem:[%s1101 + $0xa0] sm:$0xff]
        %v7712 = vld [vmem:[%s1101 + $0xa8] sm:$0xff]
        %v7713 = vld [vmem:[%s1101 + $0xb0] sm:$0xff]
        %v7714 = vld [vmem:[%s1101 + $0xb8] sm:$0xff]
        %v7715 = vld [vmem:[%s1101 + $0xc0] sm:$0xff]
        %v7716 = vld [vmem:[%s1101 + $0xc8] sm:$0xff]
        %v7717 = vld [vmem:[%s1101 + $0xd0] sm:$0xff]
        %v7718 = vld [vmem:[%s1101 + $0xd8] sm:$0xff]
        %v7719 = vld [vmem:[%s1101 + $0xe0] sm:$0xff]
        %v7720 = vld [vmem:[%s1101 + $0xe8] sm:$0xff]
        %v7721 = vld [vmem:[%s1101 + $0xf0] sm:$0xff]
        %v7722 = vld [vmem:[%s1101 + $0xf8] sm:$0xff]
        %v7723 = vld [vmem:[%s1101 + $0x100] sm:$0xff]
        %v7724 = vld [vmem:[%s1101 + $0x108] sm:$0xff]
        %v7725 = vld [vmem:[%s1101 + $0x110] sm:$0xff]
        %v7726 = vld [vmem:[%s1101 + $0x118] sm:$0xff]
        %v7727 = vld [vmem:[%s1101 + $0x120] sm:$0xff]
        %v7728 = vld [vmem:[%s1101 + $0x128] sm:$0xff]
        %v7729 = vld [vmem:[%s1101 + $0x130] sm:$0xff]
        %v7730 = vld [vmem:[%s1101 + $0x138] sm:$0xff]
        %v7731 = vld [vmem:[%s1101 + $0x140] sm:$0xff]
        %v7732 = vld [vmem:[%s1101 + $0x148] sm:$0xff]
        %v7733 = vld [vmem:[%s1101 + $0x150] sm:$0xff]
        %v7734 = vld [vmem:[%s1101 + $0x158] sm:$0xff]
        %v7735 = vld [vmem:[%s1101 + $0x160] sm:$0xff]
        %v7736 = vld [vmem:[%s1101 + $0x168] sm:$0xff]
        %v7737 = vld [vmem:[%s1101 + $0x170] sm:$0xff]
        %v7738 = vld [vmem:[%s1101 + $0x178] sm:$0xff]
        %v7739 = vld [vmem:[%s1101 + $0x180] sm:$0xff]
        %v7740 = vld [vmem:[%s1101 + $0x188] sm:$0xff]
        %v7741 = vld [vmem:[%s1101 + $0x190] sm:$0xff]
        %v7742 = vld [vmem:[%s1101 + $0x198] sm:$0xff]
        %v7743 = vld [vmem:[%s1101 + $0x1a0] sm:$0xff]
        %v7744 = vld [vmem:[%s1101 + $0x1a8] sm:$0xff]
        %v7745 = vld [vmem:[%s1101 + $0x1b0] sm:$0xff]
        %v7746 = vld [vmem:[%s1101 + $0x1b8] sm:$0xff]
        %v7747 = vld [vmem:[%s1101 + $0x1c0] sm:$0xff]
        %v7748 = vld [vmem:[%s1101 + $0x1c8] sm:$0xff]
        %v7749 = vld [vmem:[%s1101 + $0x1d0] sm:$0xff]
        %v7750 = vld [vmem:[%s1101 + $0x1d8] sm:$0xff]
        %v7751 = vld [vmem:[%s1101 + $0x1e0] sm:$0xff]
        %v7752 = vld [vmem:[%s1101 + $0x1e8] sm:$0xff]
        %v7753 = vld [vmem:[%s1101 + $0x1f0] sm:$0xff]
        %v7754 = vld [vmem:[%s1101 + $0x1f8] sm:$0xff]
        %v7755 = vld [vmem:[%s1166] sm:$0xff]
        %v7756 = vld [vmem:[%s1166 + $0x8] sm:$0xff]
        %v7757 = vld [vmem:[%s1166 + $0x10] sm:$0xff]
        %v7758 = vld [vmem:[%s1166 + $0x18] sm:$0xff]
        %v7823 = vunpack.c.l.b16 %v7691
        %v7824 = vunpack.c.h.b16 %v7691
        %v7825 = vunpack.c.l.b16 %v7692
        %v7826 = vunpack.c.h.b16 %v7692
        %v7827 = vunpack.c.l.b16 %v7693
        %v7828 = vunpack.c.h.b16 %v7693
        %v7829 = vunpack.c.l.b16 %v7694
        %v7830 = vunpack.c.h.b16 %v7694
        %v7831 = vunpack.c.l.b16 %v7695
        %v7832 = vunpack.c.h.b16 %v7695
        %v7833 = vunpack.c.l.b16 %v7696
        %v7834 = vunpack.c.h.b16 %v7696
        %v7835 = vunpack.c.l.b16 %v7697
        %v7836 = vunpack.c.h.b16 %v7697
        %v7837 = vunpack.c.l.b16 %v7698
        %v7838 = vunpack.c.h.b16 %v7698
        %v7839 = vunpack.c.l.b16 %v7699
        %v7840 = vunpack.c.h.b16 %v7699
        %v7841 = vunpack.c.l.b16 %v7700
        %v7842 = vunpack.c.h.b16 %v7700
        %v7843 = vunpack.c.l.b16 %v7701
        %v7844 = vunpack.c.h.b16 %v7701
        %v7845 = vunpack.c.l.b16 %v7702
        %v7846 = vunpack.c.h.b16 %v7702
        %v7847 = vunpack.c.l.b16 %v7703
        %v7848 = vunpack.c.h.b16 %v7703
        %v7849 = vunpack.c.l.b16 %v7704
        %v7850 = vunpack.c.h.b16 %v7704
        %v7851 = vunpack.c.l.b16 %v7705
        %v7852 = vunpack.c.h.b16 %v7705
        %v7853 = vunpack.c.l.b16 %v7706
        %v7854 = vunpack.c.h.b16 %v7706
        %v7855 = vunpack.c.l.b16 %v7707
        %v7856 = vunpack.c.h.b16 %v7707
        %v7857 = vunpack.c.l.b16 %v7708
        %v7858 = vunpack.c.h.b16 %v7708
        %v7859 = vunpack.c.l.b16 %v7709
        %v7860 = vunpack.c.h.b16 %v7709
        %v7861 = vunpack.c.l.b16 %v7710
        %v7862 = vunpack.c.h.b16 %v7710
        %v7863 = vunpack.c.l.b16 %v7711
        %v7864 = vunpack.c.h.b16 %v7711
        %v7865 = vunpack.c.l.b16 %v7712
        %v7866 = vunpack.c.h.b16 %v7712
        %v7867 = vunpack.c.l.b16 %v7713
        %v7868 = vunpack.c.h.b16 %v7713
        %v7869 = vunpack.c.l.b16 %v7714
        %v7870 = vunpack.c.h.b16 %v7714
        %v7871 = vunpack.c.l.b16 %v7715
        %v7872 = vunpack.c.h.b16 %v7715
        %v7873 = vunpack.c.l.b16 %v7716
        %v7874 = vunpack.c.h.b16 %v7716
        %v7875 = vunpack.c.l.b16 %v7717
        %v7876 = vunpack.c.h.b16 %v7717
        %v7877 = vunpack.c.l.b16 %v7718
        %v7878 = vunpack.c.h.b16 %v7718
        %v7879 = vunpack.c.l.b16 %v7719
        %v7880 = vunpack.c.h.b16 %v7719
        %v7881 = vunpack.c.l.b16 %v7720
        %v7882 = vunpack.c.h.b16 %v7720
        %v7883 = vunpack.c.l.b16 %v7721
        %v7884 = vunpack.c.h.b16 %v7721
        %v7885 = vunpack.c.l.b16 %v7722
        %v7886 = vunpack.c.h.b16 %v7722
        %v7887 = vunpack.c.l.b16 %v7723
        %v7888 = vunpack.c.h.b16 %v7723
        %v7889 = vunpack.c.l.b16 %v7724
        %v7890 = vunpack.c.h.b16 %v7724
        %v7891 = vunpack.c.l.b16 %v7725
        %v7892 = vunpack.c.h.b16 %v7725
        %v7893 = vunpack.c.l.b16 %v7726
        %v7894 = vunpack.c.h.b16 %v7726
        %v7895 = vunpack.c.l.b16 %v7727
        %v7896 = vunpack.c.h.b16 %v7727
        %v7897 = vunpack.c.l.b16 %v7728
        %v7898 = vunpack.c.h.b16 %v7728
        %v7899 = vunpack.c.l.b16 %v7729
        %v7900 = vunpack.c.h.b16 %v7729
        %v7901 = vunpack.c.l.b16 %v7730
        %v7902 = vunpack.c.h.b16 %v7730
        %v7903 = vunpack.c.l.b16 %v7731
        %v7904 = vunpack.c.h.b16 %v7731
        %v7905 = vunpack.c.l.b16 %v7732
        %v7906 = vunpack.c.h.b16 %v7732
        %v7907 = vunpack.c.l.b16 %v7733
        %v7908 = vunpack.c.h.b16 %v7733
        %v7909 = vunpack.c.l.b16 %v7734
        %v7910 = vunpack.c.h.b16 %v7734
        %v7911 = vunpack.c.l.b16 %v7735
        %v7912 = vunpack.c.h.b16 %v7735
        %v7913 = vunpack.c.l.b16 %v7736
        %v7914 = vunpack.c.h.b16 %v7736
        %v7915 = vunpack.c.l.b16 %v7737
        %v7916 = vunpack.c.h.b16 %v7737
        %v7917 = vunpack.c.l.b16 %v7738
        %v7918 = vunpack.c.h.b16 %v7738
        %v7919 = vunpack.c.l.b16 %v7739
        %v7920 = vunpack.c.h.b16 %v7739
        %v7921 = vunpack.c.l.b16 %v7740
        %v7922 = vunpack.c.h.b16 %v7740
        %v7923 = vunpack.c.l.b16 %v7741
        %v7924 = vunpack.c.h.b16 %v7741
        %v7925 = vunpack.c.l.b16 %v7742
        %v7926 = vunpack.c.h.b16 %v7742
        %v7927 = vunpack.c.l.b16 %v7743
        %v7928 = vunpack.c.h.b16 %v7743
        %v7929 = vunpack.c.l.b16 %v7744
        %v7930 = vunpack.c.h.b16 %v7744
        %v7931 = vunpack.c.l.b16 %v7745
        %v7932 = vunpack.c.h.b16 %v7745
        %v7933 = vunpack.c.l.b16 %v7746
        %v7934 = vunpack.c.h.b16 %v7746
        %v7935 = vunpack.c.l.b16 %v7747
        %v7936 = vunpack.c.h.b16 %v7747
        %v7937 = vunpack.c.l.b16 %v7748
        %v7938 = vunpack.c.h.b16 %v7748
        %v7939 = vunpack.c.l.b16 %v7749
        %v7940 = vunpack.c.h.b16 %v7749
        %v7941 = vunpack.c.l.b16 %v7750
        %v7942 = vunpack.c.h.b16 %v7750
        %v7943 = vunpack.c.l.b16 %v7751
        %v7944 = vunpack.c.h.b16 %v7751
        %v7945 = vunpack.c.l.b16 %v7752
        %v7946 = vunpack.c.h.b16 %v7752
        %v7947 = vunpack.c.l.b16 %v7753
        %v7948 = vunpack.c.h.b16 %v7753
        %v7949 = vunpack.c.l.b16 %v7754
        %v7950 = vunpack.c.h.b16 %v7754
        %v7951 = vpack.c.b16 %v7827, %v7823
        %v7952 = vpack.c.b16 %v7828, %v7824
        %v7953 = vpack.c.b16 %v7829, %v7825
        %v7954 = vpack.c.b16 %v7830, %v7826
        %v7955 = vpack.c.b16 %v7835, %v7831
        %v7956 = vpack.c.b16 %v7836, %v7832
        %v7957 = vpack.c.b16 %v7837, %v7833
        %v7958 = vpack.c.b16 %v7838, %v7834
        %v7959 = vpack.c.b16 %v7843, %v7839
        %v7960 = vpack.c.b16 %v7844, %v7840
        %v7961 = vpack.c.b16 %v7845, %v7841
        %v7962 = vpack.c.b16 %v7846, %v7842
        %v7963 = vpack.c.b16 %v7851, %v7847
        %v7964 = vpack.c.b16 %v7852, %v7848
        %v7965 = vpack.c.b16 %v7853, %v7849
        %v7966 = vpack.c.b16 %v7854, %v7850
        %v7967 = vpack.c.b16 %v7859, %v7855
        %v7968 = vpack.c.b16 %v7860, %v7856
        %v7969 = vpack.c.b16 %v7861, %v7857
        %v7970 = vpack.c.b16 %v7862, %v7858
        %v7971 = vpack.c.b16 %v7867, %v7863
        %v7972 = vpack.c.b16 %v7868, %v7864
        %v7973 = vpack.c.b16 %v7869, %v7865
        %v7974 = vpack.c.b16 %v7870, %v7866
        %v7975 = vpack.c.b16 %v7875, %v7871
        %v7976 = vpack.c.b16 %v7876, %v7872
        %v7977 = vpack.c.b16 %v7877, %v7873
        %v7978 = vpack.c.b16 %v7878, %v7874
        %v7979 = vpack.c.b16 %v7883, %v7879
        %v7980 = vpack.c.b16 %v7884, %v7880
        %v7981 = vpack.c.b16 %v7885, %v7881
        %v7982 = vpack.c.b16 %v7886, %v7882
        %v7983 = vpack.c.b16 %v7891, %v7887
        %v7984 = vpack.c.b16 %v7892, %v7888
        %v7985 = vpack.c.b16 %v7893, %v7889
        %v7986 = vpack.c.b16 %v7894, %v7890
        %v7987 = vpack.c.b16 %v7899, %v7895
        %v7988 = vpack.c.b16 %v7900, %v7896
        %v7989 = vpack.c.b16 %v7901, %v7897
        %v7990 = vpack.c.b16 %v7902, %v7898
        %v7991 = vpack.c.b16 %v7907, %v7903
        %v7992 = vpack.c.b16 %v7908, %v7904
        %v7993 = vpack.c.b16 %v7909, %v7905
        %v7994 = vpack.c.b16 %v7910, %v7906
        %v7995 = vpack.c.b16 %v7915, %v7911
        %v7996 = vpack.c.b16 %v7916, %v7912
        %v7997 = vpack.c.b16 %v7917, %v7913
        %v7998 = vpack.c.b16 %v7918, %v7914
        %v7999 = vpack.c.b16 %v7923, %v7919
        %v8000 = vpack.c.b16 %v7924, %v7920
        %v8001 = vpack.c.b16 %v7925, %v7921
        %v8002 = vpack.c.b16 %v7926, %v7922
        %v8003 = vpack.c.b16 %v7931, %v7927
        %v8004 = vpack.c.b16 %v7932, %v7928
        %v8005 = vpack.c.b16 %v7933, %v7929
        %v8006 = vpack.c.b16 %v7934, %v7930
        %v8007 = vpack.c.b16 %v7939, %v7935
        %v8008 = vpack.c.b16 %v7940, %v7936
        %v8009 = vpack.c.b16 %v7941, %v7937
        %v8010 = vpack.c.b16 %v7942, %v7938
        %v8011 = vpack.c.b16 %v7947, %v7943
        %v8012 = vpack.c.b16 %v7948, %v7944
        %v8013 = vpack.c.b16 %v7949, %v7945
        %v8014 = vpack.c.b16 %v7950, %v7946
        %8079 = vmatprep.subr.bf16.mxu0 %v7980
        %8080 = vmatpush1.bf16.msra.mxu0 %v7979
        %8081 = vmatprep.subr.bf16.mxu0 %v7976
        %8082 = vmatpush1.bf16.msra.mxu0 %v7975
        %8083 = vmatprep.subr.bf16.mxu0 %v7972
        %8084 = vmatpush1.bf16.msra.mxu0 %v7971
        %8085 = vmatprep.subr.bf16.mxu0 %v7968
        %8086 = vmatpush1.bf16.msra.mxu0 %v7967
        %8087 = vmatprep.subr.bf16.mxu0 %v7964
        %8088 = vmatpush1.bf16.msra.mxu0 %v7963
        %8089 = vmatprep.subr.bf16.mxu0 %v7960
        %8090 = vmatpush1.bf16.msra.mxu0 %v7959
        %8091 = vmatprep.subr.bf16.mxu0 %v7956
        %8092 = vmatpush1.bf16.msra.mxu0 %v7955
        %8093 = vmatprep.subr.bf16.mxu0 %v7952
        %8094 = vmatpush1.bf16.msra.mxu0 %v7951
        %8095 = vmatprep.subr.bf16.mxu0 %v8012
        %8096 = vmatpush2.bf16.msra.mxu0 %v8011
        %8097 = vmatprep.subr.bf16.mxu0 %v8008
        %8098 = vmatpush2.bf16.msra.mxu0 %v8007
        %8099 = vmatprep.subr.bf16.mxu0 %v8004
        %8100 = vmatpush2.bf16.msra.mxu0 %v8003
        %8101 = vmatprep.subr.bf16.mxu0 %v8000
        %8102 = vmatpush2.bf16.msra.mxu0 %v7999
        %8103 = vmatprep.subr.bf16.mxu0 %v7996
        %8104 = vmatpush2.bf16.msra.mxu0 %v7995
        %8105 = vmatprep.subr.bf16.mxu0 %v7992
        %8106 = vmatpush2.bf16.msra.mxu0 %v7991
        %8107 = vmatprep.subr.bf16.mxu0 %v7988
        %8108 = vmatpush2.bf16.msra.mxu0 %v7987
        %8109 = vmatprep.subr.bf16.mxu0 %v7984
        %8110 = vmatpush2.bf16.msra.mxu0 %v7983
        %8111 = vmatprep.mubr.bf16.mxu0 %v7690
        %8112 = vmatmul.mubr.bf16.gmra.mxu0 %v7689
        %v8113 = vpop.f32.mrf.mxu0
        %v8114 = vadd.f32 %v7755, %v8113
        %v8115 = vpop.f32.mrf.mxu0
        %v8116 = vadd.f32 %v7756, %v8115
        %v8117 = vpop.f32.mrf.mxu0
        %v8118 = vpop.f32.mrf.mxu0
        %8119 = vdwg.mxu0
        %8120 = vmatprep.subr.bf16.mxu0 %v7982
        %8121 = vmatpush1.bf16.msra.mxu0 %v7981
        %8122 = vmatprep.subr.bf16.mxu0 %v7978
        %8123 = vmatpush1.bf16.msra.mxu0 %v7977
        %8124 = vmatprep.subr.bf16.mxu0 %v7974
        %8125 = vmatpush1.bf16.msra.mxu0 %v7973
        %8126 = vmatprep.subr.bf16.mxu0 %v7970
        %8127 = vmatpush1.bf16.msra.mxu0 %v7969
        %8128 = vmatprep.subr.bf16.mxu0 %v7966
        %8129 = vmatpush1.bf16.msra.mxu0 %v7965
        %8130 = vmatprep.subr.bf16.mxu0 %v7962
        %8131 = vmatpush1.bf16.msra.mxu0 %v7961
        %8132 = vmatprep.subr.bf16.mxu0 %v7958
        %8133 = vmatpush1.bf16.msra.mxu0 %v7957
        %8134 = vmatprep.subr.bf16.mxu0 %v7954
        %8135 = vmatpush1.bf16.msra.mxu0 %v7953
        %8136 = vmatprep.subr.bf16.mxu0 %v8014
        %8137 = vmatpush2.bf16.msra.mxu0 %v8013
        %8138 = vmatprep.subr.bf16.mxu0 %v8010
        %8139 = vmatpush2.bf16.msra.mxu0 %v8009
        %8140 = vmatprep.subr.bf16.mxu0 %v8006
        %8141 = vmatpush2.bf16.msra.mxu0 %v8005
        %8142 = vmatprep.subr.bf16.mxu0 %v8002
        %8143 = vmatpush2.bf16.msra.mxu0 %v8001
        %8144 = vmatprep.subr.bf16.mxu0 %v7998
        %8145 = vmatpush2.bf16.msra.mxu0 %v7997
        %8146 = vmatprep.subr.bf16.mxu0 %v7994
        %8147 = vmatpush2.bf16.msra.mxu0 %v7993
        %8148 = vmatprep.subr.bf16.mxu0 %v7990
        %8149 = vmatpush2.bf16.msra.mxu0 %v7989
        %8150 = vmatprep.subr.bf16.mxu0 %v7986
        %8151 = vmatpush2.bf16.msra.mxu0 %v7985
        %8152 = vmatprep.mubr.bf16.mxu0 %v7690
        %8153 = vmatmul.mubr.bf16.gmra.mxu0 %v7689
        %v8154 = vpop.f32.mrf.mxu0
        %v8155 = vadd.f32 %v7757, %v8154
        %v8156 = vpop.f32.mrf.mxu0
        %v8157 = vadd.f32 %v7758, %v8156
        %v8158 = vpop.f32.mrf.mxu0
        %v8159 = vpop.f32.mrf.mxu0
        %8160 = vdwg.mxu0
        %v8161 = vxor.u32 %v8114, 2147483648
        %v8162 = vxor.u32 %v8116, 2147483648
        %v8163 = vxor.u32 %v8155, 2147483648
        %v8164 = vmul.f32 %v8161, 1.442695
        %v8165 = vpow.pop %v8164
        %v8166 = vmul.f32 %v8162, 1.442695
        %v8167 = vpow.pop %v8166
        %v8168 = vmul.f32 %v8163, 1.442695
        %v8169 = vpow.pop %v8168
        %v8170 = vadd.f32 %v8165, 1.0
        %v8171 = vadd.f32 %v8167, 1.0
        %v8172 = vadd.f32 %v8169, 1.0
        %v8173 = vrcp.pop %v8170
        %v8174 = vmul.f32 1.0, %v8173
        %v8175 = vrcp.pop %v8171
        %v8176 = vmul.f32 1.0, %v8175
        %v8177 = vrcp.pop %v8172
        %v8178 = vmul.f32 1.0, %v8177
        %v8179 = vtanh.pop %v8157
        %v8180 = vld [vmem:[%s1592] sm:$0xff]
        %v8181 = vmul.f32 %v8176, %v8180
        %v8182 = vmul.f32 %v8174, %v8179
        %v8183 = vadd.f32 %v8181, %v8182
        %v8184 = vtanh.pop %v8183
        %v8185 = vmul.f32 %v8178, %v8184
        %8186 = vst [vmem:[%s1097] sm:$0xff] %v8185
        %8187 = vst [vmem:[%s1592] sm:$0xff] %v8183
        %v8188 = vpack.c.bf16 %v8185, %v8185
        %8189 = vmatprep.subr.bf16.mxu0 0
        %8190 = vmatpush1.bf16.msra.mxu0 %v1641
        %8191 = vmatprep.subr.bf16.mxu0 0
        %8192 = vmatpush1.bf16.msra.mxu0 %v1640
        %8193 = vmatprep.subr.bf16.mxu0 0
        %8194 = vmatpush1.bf16.msra.mxu0 %v1639
        %8195 = vmatprep.subr.bf16.mxu0 0
        %8196 = vmatpush1.bf16.msra.mxu0 %v1638
        %8197 = vmatprep.subr.bf16.mxu0 0
        %8198 = vmatpush1.bf16.msra.mxu0 %v1637
        %8199 = vmatprep.subr.bf16.mxu0 0
        %8200 = vmatpush1.bf16.msra.mxu0 %v1636
        %8201 = vmatprep.subr.bf16.mxu0 0
        %8202 = vmatpush1.bf16.msra.mxu0 %v1635
        %8203 = vmatprep.subr.bf16.mxu0 0
        %8204 = vmatpush1.bf16.msra.mxu0 %v1634
        %8205 = vmatprep.subr.bf16.mxu0 0
        %8206 = vmatpush2.bf16.msra.mxu0 0
        %8207 = vmatprep.subr.bf16.mxu0 0
        %8208 = vmatpush2.bf16.msra.mxu0 0
        %8209 = vmatprep.subr.bf16.mxu0 0
        %8210 = vmatpush2.bf16.msra.mxu0 0
        %8211 = vmatprep.subr.bf16.mxu0 0
        %8212 = vmatpush2.bf16.msra.mxu0 0
        %8213 = vmatprep.subr.bf16.mxu0 0
        %8214 = vmatpush2.bf16.msra.mxu0 0
        %8215 = vmatprep.subr.bf16.mxu0 0
        %8216 = vmatpush2.bf16.msra.mxu0 0
        %8217 = vmatprep.subr.bf16.mxu0 0
        %8218 = vmatpush2.bf16.msra.mxu0 0
        %8219 = vmatprep.subr.bf16.mxu0 0
        %8220 = vmatpush2.bf16.msra.mxu0 0
        %8221 = vmatprep.mubr.bf16.mxu0 0
        %8222 = vmatmul.mubr.bf16.gmra.mxu0 %v8188
        %v8223 = vpop.f32.mrf.mxu0
        %v8224 = vadd.f32 %v526, %v8223
        %v8225 = vpop.f32.mrf.mxu0
        %v8226 = vpop.f32.mrf.mxu0
        %v8227 = vpop.f32.mrf.mxu0
        %8228 = vdwg.mxu0
        %v8229 = vtanh.pop %v8224
        %s8230 = scalar_lea.vmem %s481, 48 [#allocation14]
        %8231 = vst [vmem:[%s8230] sm:$0xff] %v8229
        %s8232 = scalar_lea.vmem %s423, 56 [#allocation2]
        %v8233 = vld [vmem:[%s8232] sm:$0xff]
        %v8234 = vpack.c.bf16 %v8233, %v8233
        %v8236 = vsel %vm553, %v8234, 0
        %8238 = vmatprep.subr.bf16.mxu0 0
        %8239 = vmatpush1.bf16.msra.mxu0 0
        %8240 = vmatprep.subr.bf16.mxu0 0
        %8241 = vmatpush1.bf16.msra.mxu0 0
        %8242 = vmatprep.subr.bf16.mxu0 0
        %8243 = vmatpush1.bf16.msra.mxu0 0
        %8244 = vmatprep.subr.bf16.mxu0 0
        %8245 = vmatpush1.bf16.msra.mxu0 0
        %8246 = vmatprep.subr.bf16.mxu0 0
        %8247 = vmatpush1.bf16.msra.mxu0 %v548
        %8248 = vmatprep.subr.bf16.mxu0 0
        %8249 = vmatpush1.bf16.msra.mxu0 %v547
        %8250 = vmatprep.subr.bf16.mxu0 0
        %8251 = vmatpush1.bf16.msra.mxu0 %v546
        %8252 = vmatprep.subr.bf16.mxu0 0
        %8253 = vmatpush1.bf16.msra.mxu0 %v545
        %8254 = vmatprep.subr.bf16.mxu0 0
        %8255 = vmatpush2.bf16.msra.mxu0 0
        %8256 = vmatprep.subr.bf16.mxu0 0
        %8257 = vmatpush2.bf16.msra.mxu0 0
        %8258 = vmatprep.subr.bf16.mxu0 0
        %8259 = vmatpush2.bf16.msra.mxu0 0
        %8260 = vmatprep.subr.bf16.mxu0 0
        %8261 = vmatpush2.bf16.msra.mxu0 0
        %8262 = vmatprep.subr.bf16.mxu0 0
        %8263 = vmatpush2.bf16.msra.mxu0 0
        %8264 = vmatprep.subr.bf16.mxu0 0
        %8265 = vmatpush2.bf16.msra.mxu0 0
        %8266 = vmatprep.subr.bf16.mxu0 0
        %8267 = vmatpush2.bf16.msra.mxu0 0
        %8268 = vmatprep.subr.bf16.mxu0 0
        %8269 = vmatpush2.bf16.msra.mxu0 0
        %8270 = vmatprep.mubr.bf16.mxu0 0
        %8271 = vmatmul.mubr.bf16.gmra.mxu0 %v8236
        %v8272 = vpop.f32.mrf.mxu0
        %v8273 = vadd.f32 %v509, %v8272
        %v8274 = vpop.f32.mrf.mxu0
        %v8275 = vpop.f32.mrf.mxu0
        %v8276 = vpop.f32.mrf.mxu0
        %8277 = vdwg.mxu0
        %v8278 = vld [vmem:[#allocation15] sm:$0xff]
        %v8279 = vpack.c.bf16 %v8273, %v8273
        %v8280 = vpack.c.bf16 %v8278, %v8278
        %v8281 = vld [vmem:[#allocation7] sm:$0xff]
        %v8282 = vld [vmem:[#allocation7 + $0x8] sm:$0xff]
        %v8283 = vld [vmem:[#allocation7 + $0x10] sm:$0xff]
        %v8284 = vld [vmem:[#allocation7 + $0x18] sm:$0xff]
        %v8285 = vld [vmem:[#allocation7 + $0x20] sm:$0xff]
        %v8286 = vld [vmem:[#allocation7 + $0x28] sm:$0xff]
        %v8287 = vld [vmem:[#allocation7 + $0x30] sm:$0xff]
        %v8288 = vld [vmem:[#allocation7 + $0x38] sm:$0xff]
        %v8289 = vld [vmem:[#allocation7 + $0x40] sm:$0xff]
        %v8290 = vld [vmem:[#allocation7 + $0x48] sm:$0xff]
        %v8291 = vld [vmem:[#allocation7 + $0x50] sm:$0xff]
        %v8292 = vld [vmem:[#allocation7 + $0x58] sm:$0xff]
        %v8293 = vld [vmem:[#allocation7 + $0x60] sm:$0xff]
        %v8294 = vld [vmem:[#allocation7 + $0x68] sm:$0xff]
        %v8295 = vld [vmem:[#allocation7 + $0x70] sm:$0xff]
        %v8296 = vld [vmem:[#allocation7 + $0x78] sm:$0xff]
        %v8297 = vld [vmem:[#allocation7 + $0x80] sm:$0xff]
        %v8298 = vld [vmem:[#allocation7 + $0x88] sm:$0xff]
        %v8299 = vld [vmem:[#allocation7 + $0x90] sm:$0xff]
        %v8300 = vld [vmem:[#allocation7 + $0x98] sm:$0xff]
        %v8301 = vld [vmem:[#allocation7 + $0xa0] sm:$0xff]
        %v8302 = vld [vmem:[#allocation7 + $0xa8] sm:$0xff]
        %v8303 = vld [vmem:[#allocation7 + $0xb0] sm:$0xff]
        %v8304 = vld [vmem:[#allocation7 + $0xb8] sm:$0xff]
        %v8305 = vld [vmem:[#allocation7 + $0xc0] sm:$0xff]
        %v8306 = vld [vmem:[#allocation7 + $0xc8] sm:$0xff]
        %v8307 = vld [vmem:[#allocation7 + $0xd0] sm:$0xff]
        %v8308 = vld [vmem:[#allocation7 + $0xd8] sm:$0xff]
        %v8309 = vld [vmem:[#allocation7 + $0xe0] sm:$0xff]
        %v8310 = vld [vmem:[#allocation7 + $0xe8] sm:$0xff]
        %v8311 = vld [vmem:[#allocation7 + $0xf0] sm:$0xff]
        %v8312 = vld [vmem:[#allocation7 + $0xf8] sm:$0xff]
        %v8313 = vld [vmem:[#allocation7 + $0x100] sm:$0xff]
        %v8314 = vld [vmem:[#allocation7 + $0x108] sm:$0xff]
        %v8315 = vld [vmem:[#allocation7 + $0x110] sm:$0xff]
        %v8316 = vld [vmem:[#allocation7 + $0x118] sm:$0xff]
        %v8317 = vld [vmem:[#allocation7 + $0x120] sm:$0xff]
        %v8318 = vld [vmem:[#allocation7 + $0x128] sm:$0xff]
        %v8319 = vld [vmem:[#allocation7 + $0x130] sm:$0xff]
        %v8320 = vld [vmem:[#allocation7 + $0x138] sm:$0xff]
        %v8321 = vld [vmem:[#allocation7 + $0x140] sm:$0xff]
        %v8322 = vld [vmem:[#allocation7 + $0x148] sm:$0xff]
        %v8323 = vld [vmem:[#allocation7 + $0x150] sm:$0xff]
        %v8324 = vld [vmem:[#allocation7 + $0x158] sm:$0xff]
        %v8325 = vld [vmem:[#allocation7 + $0x160] sm:$0xff]
        %v8326 = vld [vmem:[#allocation7 + $0x168] sm:$0xff]
        %v8327 = vld [vmem:[#allocation7 + $0x170] sm:$0xff]
        %v8328 = vld [vmem:[#allocation7 + $0x178] sm:$0xff]
        %v8329 = vld [vmem:[#allocation7 + $0x180] sm:$0xff]
        %v8330 = vld [vmem:[#allocation7 + $0x188] sm:$0xff]
        %v8331 = vld [vmem:[#allocation7 + $0x190] sm:$0xff]
        %v8332 = vld [vmem:[#allocation7 + $0x198] sm:$0xff]
        %v8333 = vld [vmem:[#allocation7 + $0x1a0] sm:$0xff]
        %v8334 = vld [vmem:[#allocation7 + $0x1a8] sm:$0xff]
        %v8335 = vld [vmem:[#allocation7 + $0x1b0] sm:$0xff]
        %v8336 = vld [vmem:[#allocation7 + $0x1b8] sm:$0xff]
        %v8337 = vld [vmem:[#allocation7 + $0x1c0] sm:$0xff]
        %v8338 = vld [vmem:[#allocation7 + $0x1c8] sm:$0xff]
        %v8339 = vld [vmem:[#allocation7 + $0x1d0] sm:$0xff]
        %v8340 = vld [vmem:[#allocation7 + $0x1d8] sm:$0xff]
        %v8341 = vld [vmem:[#allocation7 + $0x1e0] sm:$0xff]
        %v8342 = vld [vmem:[#allocation7 + $0x1e8] sm:$0xff]
        %v8343 = vld [vmem:[#allocation7 + $0x1f0] sm:$0xff]
        %v8344 = vld [vmem:[#allocation7 + $0x1f8] sm:$0xff]
        %v8345 = vld [vmem:[%s4] sm:$0xff]
        %v8346 = vld [vmem:[%s4 + $0x8] sm:$0xff]
        %v8347 = vld [vmem:[%s4 + $0x10] sm:$0xff]
        %v8348 = vld [vmem:[%s4 + $0x18] sm:$0xff]
        %v8413 = vunpack.c.l.b16 %v8281
        %v8414 = vunpack.c.h.b16 %v8281
        %v8415 = vunpack.c.l.b16 %v8282
        %v8416 = vunpack.c.h.b16 %v8282
        %v8417 = vunpack.c.l.b16 %v8283
        %v8418 = vunpack.c.h.b16 %v8283
        %v8419 = vunpack.c.l.b16 %v8284
        %v8420 = vunpack.c.h.b16 %v8284
        %v8421 = vunpack.c.l.b16 %v8285
        %v8422 = vunpack.c.h.b16 %v8285
        %v8423 = vunpack.c.l.b16 %v8286
        %v8424 = vunpack.c.h.b16 %v8286
        %v8425 = vunpack.c.l.b16 %v8287
        %v8426 = vunpack.c.h.b16 %v8287
        %v8427 = vunpack.c.l.b16 %v8288
        %v8428 = vunpack.c.h.b16 %v8288
        %v8429 = vunpack.c.l.b16 %v8289
        %v8430 = vunpack.c.h.b16 %v8289
        %v8431 = vunpack.c.l.b16 %v8290
        %v8432 = vunpack.c.h.b16 %v8290
        %v8433 = vunpack.c.l.b16 %v8291
        %v8434 = vunpack.c.h.b16 %v8291
        %v8435 = vunpack.c.l.b16 %v8292
        %v8436 = vunpack.c.h.b16 %v8292
        %v8437 = vunpack.c.l.b16 %v8293
        %v8438 = vunpack.c.h.b16 %v8293
        %v8439 = vunpack.c.l.b16 %v8294
        %v8440 = vunpack.c.h.b16 %v8294
        %v8441 = vunpack.c.l.b16 %v8295
        %v8442 = vunpack.c.h.b16 %v8295
        %v8443 = vunpack.c.l.b16 %v8296
        %v8444 = vunpack.c.h.b16 %v8296
        %v8445 = vunpack.c.l.b16 %v8297
        %v8446 = vunpack.c.h.b16 %v8297
        %v8447 = vunpack.c.l.b16 %v8298
        %v8448 = vunpack.c.h.b16 %v8298
        %v8449 = vunpack.c.l.b16 %v8299
        %v8450 = vunpack.c.h.b16 %v8299
        %v8451 = vunpack.c.l.b16 %v8300
        %v8452 = vunpack.c.h.b16 %v8300
        %v8453 = vunpack.c.l.b16 %v8301
        %v8454 = vunpack.c.h.b16 %v8301
        %v8455 = vunpack.c.l.b16 %v8302
        %v8456 = vunpack.c.h.b16 %v8302
        %v8457 = vunpack.c.l.b16 %v8303
        %v8458 = vunpack.c.h.b16 %v8303
        %v8459 = vunpack.c.l.b16 %v8304
        %v8460 = vunpack.c.h.b16 %v8304
        %v8461 = vunpack.c.l.b16 %v8305
        %v8462 = vunpack.c.h.b16 %v8305
        %v8463 = vunpack.c.l.b16 %v8306
        %v8464 = vunpack.c.h.b16 %v8306
        %v8465 = vunpack.c.l.b16 %v8307
        %v8466 = vunpack.c.h.b16 %v8307
        %v8467 = vunpack.c.l.b16 %v8308
        %v8468 = vunpack.c.h.b16 %v8308
        %v8469 = vunpack.c.l.b16 %v8309
        %v8470 = vunpack.c.h.b16 %v8309
        %v8471 = vunpack.c.l.b16 %v8310
        %v8472 = vunpack.c.h.b16 %v8310
        %v8473 = vunpack.c.l.b16 %v8311
        %v8474 = vunpack.c.h.b16 %v8311
        %v8475 = vunpack.c.l.b16 %v8312
        %v8476 = vunpack.c.h.b16 %v8312
        %v8477 = vunpack.c.l.b16 %v8313
        %v8478 = vunpack.c.h.b16 %v8313
        %v8479 = vunpack.c.l.b16 %v8314
        %v8480 = vunpack.c.h.b16 %v8314
        %v8481 = vunpack.c.l.b16 %v8315
        %v8482 = vunpack.c.h.b16 %v8315
        %v8483 = vunpack.c.l.b16 %v8316
        %v8484 = vunpack.c.h.b16 %v8316
        %v8485 = vunpack.c.l.b16 %v8317
        %v8486 = vunpack.c.h.b16 %v8317
        %v8487 = vunpack.c.l.b16 %v8318
        %v8488 = vunpack.c.h.b16 %v8318
        %v8489 = vunpack.c.l.b16 %v8319
        %v8490 = vunpack.c.h.b16 %v8319
        %v8491 = vunpack.c.l.b16 %v8320
        %v8492 = vunpack.c.h.b16 %v8320
        %v8493 = vunpack.c.l.b16 %v8321
        %v8494 = vunpack.c.h.b16 %v8321
        %v8495 = vunpack.c.l.b16 %v8322
        %v8496 = vunpack.c.h.b16 %v8322
        %v8497 = vunpack.c.l.b16 %v8323
        %v8498 = vunpack.c.h.b16 %v8323
        %v8499 = vunpack.c.l.b16 %v8324
        %v8500 = vunpack.c.h.b16 %v8324
        %v8501 = vunpack.c.l.b16 %v8325
        %v8502 = vunpack.c.h.b16 %v8325
        %v8503 = vunpack.c.l.b16 %v8326
        %v8504 = vunpack.c.h.b16 %v8326
        %v8505 = vunpack.c.l.b16 %v8327
        %v8506 = vunpack.c.h.b16 %v8327
        %v8507 = vunpack.c.l.b16 %v8328
        %v8508 = vunpack.c.h.b16 %v8328
        %v8509 = vunpack.c.l.b16 %v8329
        %v8510 = vunpack.c.h.b16 %v8329
        %v8511 = vunpack.c.l.b16 %v8330
        %v8512 = vunpack.c.h.b16 %v8330
        %v8513 = vunpack.c.l.b16 %v8331
        %v8514 = vunpack.c.h.b16 %v8331
        %v8515 = vunpack.c.l.b16 %v8332
        %v8516 = vunpack.c.h.b16 %v8332
        %v8517 = vunpack.c.l.b16 %v8333
        %v8518 = vunpack.c.h.b16 %v8333
        %v8519 = vunpack.c.l.b16 %v8334
        %v8520 = vunpack.c.h.b16 %v8334
        %v8521 = vunpack.c.l.b16 %v8335
        %v8522 = vunpack.c.h.b16 %v8335
        %v8523 = vunpack.c.l.b16 %v8336
        %v8524 = vunpack.c.h.b16 %v8336
        %v8525 = vunpack.c.l.b16 %v8337
        %v8526 = vunpack.c.h.b16 %v8337
        %v8527 = vunpack.c.l.b16 %v8338
        %v8528 = vunpack.c.h.b16 %v8338
        %v8529 = vunpack.c.l.b16 %v8339
        %v8530 = vunpack.c.h.b16 %v8339
        %v8531 = vunpack.c.l.b16 %v8340
        %v8532 = vunpack.c.h.b16 %v8340
        %v8533 = vunpack.c.l.b16 %v8341
        %v8534 = vunpack.c.h.b16 %v8341
        %v8535 = vunpack.c.l.b16 %v8342
        %v8536 = vunpack.c.h.b16 %v8342
        %v8537 = vunpack.c.l.b16 %v8343
        %v8538 = vunpack.c.h.b16 %v8343
        %v8539 = vunpack.c.l.b16 %v8344
        %v8540 = vunpack.c.h.b16 %v8344
        %v8541 = vpack.c.b16 %v8417, %v8413
        %v8542 = vpack.c.b16 %v8418, %v8414
        %v8543 = vpack.c.b16 %v8419, %v8415
        %v8544 = vpack.c.b16 %v8420, %v8416
        %v8545 = vpack.c.b16 %v8425, %v8421
        %v8546 = vpack.c.b16 %v8426, %v8422
        %v8547 = vpack.c.b16 %v8427, %v8423
        %v8548 = vpack.c.b16 %v8428, %v8424
        %v8549 = vpack.c.b16 %v8433, %v8429
        %v8550 = vpack.c.b16 %v8434, %v8430
        %v8551 = vpack.c.b16 %v8435, %v8431
        %v8552 = vpack.c.b16 %v8436, %v8432
        %v8553 = vpack.c.b16 %v8441, %v8437
        %v8554 = vpack.c.b16 %v8442, %v8438
        %v8555 = vpack.c.b16 %v8443, %v8439
        %v8556 = vpack.c.b16 %v8444, %v8440
        %v8557 = vpack.c.b16 %v8449, %v8445
        %v8558 = vpack.c.b16 %v8450, %v8446
        %v8559 = vpack.c.b16 %v8451, %v8447
        %v8560 = vpack.c.b16 %v8452, %v8448
        %v8561 = vpack.c.b16 %v8457, %v8453
        %v8562 = vpack.c.b16 %v8458, %v8454
        %v8563 = vpack.c.b16 %v8459, %v8455
        %v8564 = vpack.c.b16 %v8460, %v8456
        %v8565 = vpack.c.b16 %v8465, %v8461
        %v8566 = vpack.c.b16 %v8466, %v8462
        %v8567 = vpack.c.b16 %v8467, %v8463
        %v8568 = vpack.c.b16 %v8468, %v8464
        %v8569 = vpack.c.b16 %v8473, %v8469
        %v8570 = vpack.c.b16 %v8474, %v8470
        %v8571 = vpack.c.b16 %v8475, %v8471
        %v8572 = vpack.c.b16 %v8476, %v8472
        %v8573 = vpack.c.b16 %v8481, %v8477
        %v8574 = vpack.c.b16 %v8482, %v8478
        %v8575 = vpack.c.b16 %v8483, %v8479
        %v8576 = vpack.c.b16 %v8484, %v8480
        %v8577 = vpack.c.b16 %v8489, %v8485
        %v8578 = vpack.c.b16 %v8490, %v8486
        %v8579 = vpack.c.b16 %v8491, %v8487
        %v8580 = vpack.c.b16 %v8492, %v8488
        %v8581 = vpack.c.b16 %v8497, %v8493
        %v8582 = vpack.c.b16 %v8498, %v8494
        %v8583 = vpack.c.b16 %v8499, %v8495
        %v8584 = vpack.c.b16 %v8500, %v8496
        %v8585 = vpack.c.b16 %v8505, %v8501
        %v8586 = vpack.c.b16 %v8506, %v8502
        %v8587 = vpack.c.b16 %v8507, %v8503
        %v8588 = vpack.c.b16 %v8508, %v8504
        %v8589 = vpack.c.b16 %v8513, %v8509
        %v8590 = vpack.c.b16 %v8514, %v8510
        %v8591 = vpack.c.b16 %v8515, %v8511
        %v8592 = vpack.c.b16 %v8516, %v8512
        %v8593 = vpack.c.b16 %v8521, %v8517
        %v8594 = vpack.c.b16 %v8522, %v8518
        %v8595 = vpack.c.b16 %v8523, %v8519
        %v8596 = vpack.c.b16 %v8524, %v8520
        %v8597 = vpack.c.b16 %v8529, %v8525
        %v8598 = vpack.c.b16 %v8530, %v8526
        %v8599 = vpack.c.b16 %v8531, %v8527
        %v8600 = vpack.c.b16 %v8532, %v8528
        %v8601 = vpack.c.b16 %v8537, %v8533
        %v8602 = vpack.c.b16 %v8538, %v8534
        %v8603 = vpack.c.b16 %v8539, %v8535
        %v8604 = vpack.c.b16 %v8540, %v8536
        %8669 = vmatprep.subr.bf16.mxu0 %v8570
        %8670 = vmatpush1.bf16.msra.mxu0 %v8569
        %8671 = vmatprep.subr.bf16.mxu0 %v8566
        %8672 = vmatpush1.bf16.msra.mxu0 %v8565
        %8673 = vmatprep.subr.bf16.mxu0 %v8562
        %8674 = vmatpush1.bf16.msra.mxu0 %v8561
        %8675 = vmatprep.subr.bf16.mxu0 %v8558
        %8676 = vmatpush1.bf16.msra.mxu0 %v8557
        %8677 = vmatprep.subr.bf16.mxu0 %v8554
        %8678 = vmatpush1.bf16.msra.mxu0 %v8553
        %8679 = vmatprep.subr.bf16.mxu0 %v8550
        %8680 = vmatpush1.bf16.msra.mxu0 %v8549
        %8681 = vmatprep.subr.bf16.mxu0 %v8546
        %8682 = vmatpush1.bf16.msra.mxu0 %v8545
        %8683 = vmatprep.subr.bf16.mxu0 %v8542
        %8684 = vmatpush1.bf16.msra.mxu0 %v8541
        %8685 = vmatprep.subr.bf16.mxu0 %v8602
        %8686 = vmatpush2.bf16.msra.mxu0 %v8601
        %8687 = vmatprep.subr.bf16.mxu0 %v8598
        %8688 = vmatpush2.bf16.msra.mxu0 %v8597
        %8689 = vmatprep.subr.bf16.mxu0 %v8594
        %8690 = vmatpush2.bf16.msra.mxu0 %v8593
        %8691 = vmatprep.subr.bf16.mxu0 %v8590
        %8692 = vmatpush2.bf16.msra.mxu0 %v8589
        %8693 = vmatprep.subr.bf16.mxu0 %v8586
        %8694 = vmatpush2.bf16.msra.mxu0 %v8585
        %8695 = vmatprep.subr.bf16.mxu0 %v8582
        %8696 = vmatpush2.bf16.msra.mxu0 %v8581
        %8697 = vmatprep.subr.bf16.mxu0 %v8578
        %8698 = vmatpush2.bf16.msra.mxu0 %v8577
        %8699 = vmatprep.subr.bf16.mxu0 %v8574
        %8700 = vmatpush2.bf16.msra.mxu0 %v8573
        %8701 = vmatprep.mubr.bf16.mxu0 %v8280
        %8702 = vmatmul.mubr.bf16.gmra.mxu0 %v8279
        %v8703 = vpop.f32.mrf.mxu0
        %v8704 = vadd.f32 %v8345, %v8703
        %v8705 = vpop.f32.mrf.mxu0
        %v8706 = vadd.f32 %v8346, %v8705
        %v8707 = vpop.f32.mrf.mxu0
        %v8708 = vpop.f32.mrf.mxu0
        %8709 = vdwg.mxu0
        %8710 = vmatprep.subr.bf16.mxu0 %v8572
        %8711 = vmatpush1.bf16.msra.mxu0 %v8571
        %8712 = vmatprep.subr.bf16.mxu0 %v8568
        %8713 = vmatpush1.bf16.msra.mxu0 %v8567
        %8714 = vmatprep.subr.bf16.mxu0 %v8564
        %8715 = vmatpush1.bf16.msra.mxu0 %v8563
        %8716 = vmatprep.subr.bf16.mxu0 %v8560
        %8717 = vmatpush1.bf16.msra.mxu0 %v8559
        %8718 = vmatprep.subr.bf16.mxu0 %v8556
        %8719 = vmatpush1.bf16.msra.mxu0 %v8555
        %8720 = vmatprep.subr.bf16.mxu0 %v8552
        %8721 = vmatpush1.bf16.msra.mxu0 %v8551
        %8722 = vmatprep.subr.bf16.mxu0 %v8548
        %8723 = vmatpush1.bf16.msra.mxu0 %v8547
        %8724 = vmatprep.subr.bf16.mxu0 %v8544
        %8725 = vmatpush1.bf16.msra.mxu0 %v8543
        %8726 = vmatprep.subr.bf16.mxu0 %v8604
        %8727 = vmatpush2.bf16.msra.mxu0 %v8603
        %8728 = vmatprep.subr.bf16.mxu0 %v8600
        %8729 = vmatpush2.bf16.msra.mxu0 %v8599
        %8730 = vmatprep.subr.bf16.mxu0 %v8596
        %8731 = vmatpush2.bf16.msra.mxu0 %v8595
        %8732 = vmatprep.subr.bf16.mxu0 %v8592
        %8733 = vmatpush2.bf16.msra.mxu0 %v8591
        %8734 = vmatprep.subr.bf16.mxu0 %v8588
        %8735 = vmatpush2.bf16.msra.mxu0 %v8587
        %8736 = vmatprep.subr.bf16.mxu0 %v8584
        %8737 = vmatpush2.bf16.msra.mxu0 %v8583
        %8738 = vmatprep.subr.bf16.mxu0 %v8580
        %8739 = vmatpush2.bf16.msra.mxu0 %v8579
        %8740 = vmatprep.subr.bf16.mxu0 %v8576
        %8741 = vmatpush2.bf16.msra.mxu0 %v8575
        %8742 = vmatprep.mubr.bf16.mxu0 %v8280
        %8743 = vmatmul.mubr.bf16.gmra.mxu0 %v8279
        %v8744 = vpop.f32.mrf.mxu0
        %v8745 = vadd.f32 %v8347, %v8744
        %v8746 = vpop.f32.mrf.mxu0
        %v8747 = vadd.f32 %v8348, %v8746
        %v8748 = vpop.f32.mrf.mxu0
        %v8749 = vpop.f32.mrf.mxu0
        %8750 = vdwg.mxu0
        %v8751 = vxor.u32 %v8704, 2147483648
        %v8752 = vxor.u32 %v8706, 2147483648
        %v8753 = vxor.u32 %v8745, 2147483648
        %v8754 = vmul.f32 %v8751, 1.442695
        %v8755 = vpow.pop %v8754
        %v8756 = vmul.f32 %v8752, 1.442695
        %v8757 = vpow.pop %v8756
        %v8758 = vmul.f32 %v8753, 1.442695
        %v8759 = vpow.pop %v8758
        %v8760 = vadd.f32 %v8755, 1.0
        %v8761 = vadd.f32 %v8757, 1.0
        %v8762 = vadd.f32 %v8759, 1.0
        %v8763 = vrcp.pop %v8760
        %v8764 = vmul.f32 1.0, %v8763
        %v8765 = vrcp.pop %v8761
        %v8766 = vmul.f32 1.0, %v8765
        %v8767 = vrcp.pop %v8762
        %v8768 = vmul.f32 1.0, %v8767
        %v8769 = vtanh.pop %v8747
        %v8770 = vld [vmem:[#allocation17] sm:$0xff]
        %v8771 = vmul.f32 %v8766, %v8770
        %v8772 = vmul.f32 %v8764, %v8769
        %v8773 = vadd.f32 %v8771, %v8772
        %v8774 = vtanh.pop %v8773
        %v8775 = vmul.f32 %v8768, %v8774
        %8776 = vst [vmem:[#allocation15] sm:$0xff] %v8775
        %8777 = vst [vmem:[#allocation17] sm:$0xff] %v8773
        %v8778 = vld [vmem:[%s1097] sm:$0xff]
        %v8779 = vpack.c.bf16 %v8775, %v8775
        %v8780 = vpack.c.bf16 %v8778, %v8778
        %v8781 = vld [vmem:[%s1101] sm:$0xff]
        %v8782 = vld [vmem:[%s1101 + $0x8] sm:$0xff]
        %v8783 = vld [vmem:[%s1101 + $0x10] sm:$0xff]
        %v8784 = vld [vmem:[%s1101 + $0x18] sm:$0xff]
        %v8785 = vld [vmem:[%s1101 + $0x20] sm:$0xff]
        %v8786 = vld [vmem:[%s1101 + $0x28] sm:$0xff]
        %v8787 = vld [vmem:[%s1101 + $0x30] sm:$0xff]
        %v8788 = vld [vmem:[%s1101 + $0x38] sm:$0xff]
        %v8789 = vld [vmem:[%s1101 + $0x40] sm:$0xff]
        %v8790 = vld [vmem:[%s1101 + $0x48] sm:$0xff]
        %v8791 = vld [vmem:[%s1101 + $0x50] sm:$0xff]
        %v8792 = vld [vmem:[%s1101 + $0x58] sm:$0xff]
        %v8793 = vld [vmem:[%s1101 + $0x60] sm:$0xff]
        %v8794 = vld [vmem:[%s1101 + $0x68] sm:$0xff]
        %v8795 = vld [vmem:[%s1101 + $0x70] sm:$0xff]
        %v8796 = vld [vmem:[%s1101 + $0x78] sm:$0xff]
        %v8797 = vld [vmem:[%s1101 + $0x80] sm:$0xff]
        %v8798 = vld [vmem:[%s1101 + $0x88] sm:$0xff]
        %v8799 = vld [vmem:[%s1101 + $0x90] sm:$0xff]
        %v8800 = vld [vmem:[%s1101 + $0x98] sm:$0xff]
        %v8801 = vld [vmem:[%s1101 + $0xa0] sm:$0xff]
        %v8802 = vld [vmem:[%s1101 + $0xa8] sm:$0xff]
        %v8803 = vld [vmem:[%s1101 + $0xb0] sm:$0xff]
        %v8804 = vld [vmem:[%s1101 + $0xb8] sm:$0xff]
        %v8805 = vld [vmem:[%s1101 + $0xc0] sm:$0xff]
        %v8806 = vld [vmem:[%s1101 + $0xc8] sm:$0xff]
        %v8807 = vld [vmem:[%s1101 + $0xd0] sm:$0xff]
        %v8808 = vld [vmem:[%s1101 + $0xd8] sm:$0xff]
        %v8809 = vld [vmem:[%s1101 + $0xe0] sm:$0xff]
        %v8810 = vld [vmem:[%s1101 + $0xe8] sm:$0xff]
        %v8811 = vld [vmem:[%s1101 + $0xf0] sm:$0xff]
        %v8812 = vld [vmem:[%s1101 + $0xf8] sm:$0xff]
        %v8813 = vld [vmem:[%s1101 + $0x100] sm:$0xff]
        %v8814 = vld [vmem:[%s1101 + $0x108] sm:$0xff]
        %v8815 = vld [vmem:[%s1101 + $0x110] sm:$0xff]
        %v8816 = vld [vmem:[%s1101 + $0x118] sm:$0xff]
        %v8817 = vld [vmem:[%s1101 + $0x120] sm:$0xff]
        %v8818 = vld [vmem:[%s1101 + $0x128] sm:$0xff]
        %v8819 = vld [vmem:[%s1101 + $0x130] sm:$0xff]
        %v8820 = vld [vmem:[%s1101 + $0x138] sm:$0xff]
        %v8821 = vld [vmem:[%s1101 + $0x140] sm:$0xff]
        %v8822 = vld [vmem:[%s1101 + $0x148] sm:$0xff]
        %v8823 = vld [vmem:[%s1101 + $0x150] sm:$0xff]
        %v8824 = vld [vmem:[%s1101 + $0x158] sm:$0xff]
        %v8825 = vld [vmem:[%s1101 + $0x160] sm:$0xff]
        %v8826 = vld [vmem:[%s1101 + $0x168] sm:$0xff]
        %v8827 = vld [vmem:[%s1101 + $0x170] sm:$0xff]
        %v8828 = vld [vmem:[%s1101 + $0x178] sm:$0xff]
        %v8829 = vld [vmem:[%s1101 + $0x180] sm:$0xff]
        %v8830 = vld [vmem:[%s1101 + $0x188] sm:$0xff]
        %v8831 = vld [vmem:[%s1101 + $0x190] sm:$0xff]
        %v8832 = vld [vmem:[%s1101 + $0x198] sm:$0xff]
        %v8833 = vld [vmem:[%s1101 + $0x1a0] sm:$0xff]
        %v8834 = vld [vmem:[%s1101 + $0x1a8] sm:$0xff]
        %v8835 = vld [vmem:[%s1101 + $0x1b0] sm:$0xff]
        %v8836 = vld [vmem:[%s1101 + $0x1b8] sm:$0xff]
        %v8837 = vld [vmem:[%s1101 + $0x1c0] sm:$0xff]
        %v8838 = vld [vmem:[%s1101 + $0x1c8] sm:$0xff]
        %v8839 = vld [vmem:[%s1101 + $0x1d0] sm:$0xff]
        %v8840 = vld [vmem:[%s1101 + $0x1d8] sm:$0xff]
        %v8841 = vld [vmem:[%s1101 + $0x1e0] sm:$0xff]
        %v8842 = vld [vmem:[%s1101 + $0x1e8] sm:$0xff]
        %v8843 = vld [vmem:[%s1101 + $0x1f0] sm:$0xff]
        %v8844 = vld [vmem:[%s1101 + $0x1f8] sm:$0xff]
        %v8845 = vld [vmem:[%s1166] sm:$0xff]
        %v8846 = vld [vmem:[%s1166 + $0x8] sm:$0xff]
        %v8847 = vld [vmem:[%s1166 + $0x10] sm:$0xff]
        %v8848 = vld [vmem:[%s1166 + $0x18] sm:$0xff]
        %v8913 = vunpack.c.l.b16 %v8781
        %v8914 = vunpack.c.h.b16 %v8781
        %v8915 = vunpack.c.l.b16 %v8782
        %v8916 = vunpack.c.h.b16 %v8782
        %v8917 = vunpack.c.l.b16 %v8783
        %v8918 = vunpack.c.h.b16 %v8783
        %v8919 = vunpack.c.l.b16 %v8784
        %v8920 = vunpack.c.h.b16 %v8784
        %v8921 = vunpack.c.l.b16 %v8785
        %v8922 = vunpack.c.h.b16 %v8785
        %v8923 = vunpack.c.l.b16 %v8786
        %v8924 = vunpack.c.h.b16 %v8786
        %v8925 = vunpack.c.l.b16 %v8787
        %v8926 = vunpack.c.h.b16 %v8787
        %v8927 = vunpack.c.l.b16 %v8788
        %v8928 = vunpack.c.h.b16 %v8788
        %v8929 = vunpack.c.l.b16 %v8789
        %v8930 = vunpack.c.h.b16 %v8789
        %v8931 = vunpack.c.l.b16 %v8790
        %v8932 = vunpack.c.h.b16 %v8790
        %v8933 = vunpack.c.l.b16 %v8791
        %v8934 = vunpack.c.h.b16 %v8791
        %v8935 = vunpack.c.l.b16 %v8792
        %v8936 = vunpack.c.h.b16 %v8792
        %v8937 = vunpack.c.l.b16 %v8793
        %v8938 = vunpack.c.h.b16 %v8793
        %v8939 = vunpack.c.l.b16 %v8794
        %v8940 = vunpack.c.h.b16 %v8794
        %v8941 = vunpack.c.l.b16 %v8795
        %v8942 = vunpack.c.h.b16 %v8795
        %v8943 = vunpack.c.l.b16 %v8796
        %v8944 = vunpack.c.h.b16 %v8796
        %v8945 = vunpack.c.l.b16 %v8797
        %v8946 = vunpack.c.h.b16 %v8797
        %v8947 = vunpack.c.l.b16 %v8798
        %v8948 = vunpack.c.h.b16 %v8798
        %v8949 = vunpack.c.l.b16 %v8799
        %v8950 = vunpack.c.h.b16 %v8799
        %v8951 = vunpack.c.l.b16 %v8800
        %v8952 = vunpack.c.h.b16 %v8800
        %v8953 = vunpack.c.l.b16 %v8801
        %v8954 = vunpack.c.h.b16 %v8801
        %v8955 = vunpack.c.l.b16 %v8802
        %v8956 = vunpack.c.h.b16 %v8802
        %v8957 = vunpack.c.l.b16 %v8803
        %v8958 = vunpack.c.h.b16 %v8803
        %v8959 = vunpack.c.l.b16 %v8804
        %v8960 = vunpack.c.h.b16 %v8804
        %v8961 = vunpack.c.l.b16 %v8805
        %v8962 = vunpack.c.h.b16 %v8805
        %v8963 = vunpack.c.l.b16 %v8806
        %v8964 = vunpack.c.h.b16 %v8806
        %v8965 = vunpack.c.l.b16 %v8807
        %v8966 = vunpack.c.h.b16 %v8807
        %v8967 = vunpack.c.l.b16 %v8808
        %v8968 = vunpack.c.h.b16 %v8808
        %v8969 = vunpack.c.l.b16 %v8809
        %v8970 = vunpack.c.h.b16 %v8809
        %v8971 = vunpack.c.l.b16 %v8810
        %v8972 = vunpack.c.h.b16 %v8810
        %v8973 = vunpack.c.l.b16 %v8811
        %v8974 = vunpack.c.h.b16 %v8811
        %v8975 = vunpack.c.l.b16 %v8812
        %v8976 = vunpack.c.h.b16 %v8812
        %v8977 = vunpack.c.l.b16 %v8813
        %v8978 = vunpack.c.h.b16 %v8813
        %v8979 = vunpack.c.l.b16 %v8814
        %v8980 = vunpack.c.h.b16 %v8814
        %v8981 = vunpack.c.l.b16 %v8815
        %v8982 = vunpack.c.h.b16 %v8815
        %v8983 = vunpack.c.l.b16 %v8816
        %v8984 = vunpack.c.h.b16 %v8816
        %v8985 = vunpack.c.l.b16 %v8817
        %v8986 = vunpack.c.h.b16 %v8817
        %v8987 = vunpack.c.l.b16 %v8818
        %v8988 = vunpack.c.h.b16 %v8818
        %v8989 = vunpack.c.l.b16 %v8819
        %v8990 = vunpack.c.h.b16 %v8819
        %v8991 = vunpack.c.l.b16 %v8820
        %v8992 = vunpack.c.h.b16 %v8820
        %v8993 = vunpack.c.l.b16 %v8821
        %v8994 = vunpack.c.h.b16 %v8821
        %v8995 = vunpack.c.l.b16 %v8822
        %v8996 = vunpack.c.h.b16 %v8822
        %v8997 = vunpack.c.l.b16 %v8823
        %v8998 = vunpack.c.h.b16 %v8823
        %v8999 = vunpack.c.l.b16 %v8824
        %v9000 = vunpack.c.h.b16 %v8824
        %v9001 = vunpack.c.l.b16 %v8825
        %v9002 = vunpack.c.h.b16 %v8825
        %v9003 = vunpack.c.l.b16 %v8826
        %v9004 = vunpack.c.h.b16 %v8826
        %v9005 = vunpack.c.l.b16 %v8827
        %v9006 = vunpack.c.h.b16 %v8827
        %v9007 = vunpack.c.l.b16 %v8828
        %v9008 = vunpack.c.h.b16 %v8828
        %v9009 = vunpack.c.l.b16 %v8829
        %v9010 = vunpack.c.h.b16 %v8829
        %v9011 = vunpack.c.l.b16 %v8830
        %v9012 = vunpack.c.h.b16 %v8830
        %v9013 = vunpack.c.l.b16 %v8831
        %v9014 = vunpack.c.h.b16 %v8831
        %v9015 = vunpack.c.l.b16 %v8832
        %v9016 = vunpack.c.h.b16 %v8832
        %v9017 = vunpack.c.l.b16 %v8833
        %v9018 = vunpack.c.h.b16 %v8833
        %v9019 = vunpack.c.l.b16 %v8834
        %v9020 = vunpack.c.h.b16 %v8834
        %v9021 = vunpack.c.l.b16 %v8835
        %v9022 = vunpack.c.h.b16 %v8835
        %v9023 = vunpack.c.l.b16 %v8836
        %v9024 = vunpack.c.h.b16 %v8836
        %v9025 = vunpack.c.l.b16 %v8837
        %v9026 = vunpack.c.h.b16 %v8837
        %v9027 = vunpack.c.l.b16 %v8838
        %v9028 = vunpack.c.h.b16 %v8838
        %v9029 = vunpack.c.l.b16 %v8839
        %v9030 = vunpack.c.h.b16 %v8839
        %v9031 = vunpack.c.l.b16 %v8840
        %v9032 = vunpack.c.h.b16 %v8840
        %v9033 = vunpack.c.l.b16 %v8841
        %v9034 = vunpack.c.h.b16 %v8841
        %v9035 = vunpack.c.l.b16 %v8842
        %v9036 = vunpack.c.h.b16 %v8842
        %v9037 = vunpack.c.l.b16 %v8843
        %v9038 = vunpack.c.h.b16 %v8843
        %v9039 = vunpack.c.l.b16 %v8844
        %v9040 = vunpack.c.h.b16 %v8844
        %v9041 = vpack.c.b16 %v8917, %v8913
        %v9042 = vpack.c.b16 %v8918, %v8914
        %v9043 = vpack.c.b16 %v8919, %v8915
        %v9044 = vpack.c.b16 %v8920, %v8916
        %v9045 = vpack.c.b16 %v8925, %v8921
        %v9046 = vpack.c.b16 %v8926, %v8922
        %v9047 = vpack.c.b16 %v8927, %v8923
        %v9048 = vpack.c.b16 %v8928, %v8924
        %v9049 = vpack.c.b16 %v8933, %v8929
        %v9050 = vpack.c.b16 %v8934, %v8930
        %v9051 = vpack.c.b16 %v8935, %v8931
        %v9052 = vpack.c.b16 %v8936, %v8932
        %v9053 = vpack.c.b16 %v8941, %v8937
        %v9054 = vpack.c.b16 %v8942, %v8938
        %v9055 = vpack.c.b16 %v8943, %v8939
        %v9056 = vpack.c.b16 %v8944, %v8940
        %v9057 = vpack.c.b16 %v8949, %v8945
        %v9058 = vpack.c.b16 %v8950, %v8946
        %v9059 = vpack.c.b16 %v8951, %v8947
        %v9060 = vpack.c.b16 %v8952, %v8948
        %v9061 = vpack.c.b16 %v8957, %v8953
        %v9062 = vpack.c.b16 %v8958, %v8954
        %v9063 = vpack.c.b16 %v8959, %v8955
        %v9064 = vpack.c.b16 %v8960, %v8956
        %v9065 = vpack.c.b16 %v8965, %v8961
        %v9066 = vpack.c.b16 %v8966, %v8962
        %v9067 = vpack.c.b16 %v8967, %v8963
        %v9068 = vpack.c.b16 %v8968, %v8964
        %v9069 = vpack.c.b16 %v8973, %v8969
        %v9070 = vpack.c.b16 %v8974, %v8970
        %v9071 = vpack.c.b16 %v8975, %v8971
        %v9072 = vpack.c.b16 %v8976, %v8972
        %v9073 = vpack.c.b16 %v8981, %v8977
        %v9074 = vpack.c.b16 %v8982, %v8978
        %v9075 = vpack.c.b16 %v8983, %v8979
        %v9076 = vpack.c.b16 %v8984, %v8980
        %v9077 = vpack.c.b16 %v8989, %v8985
        %v9078 = vpack.c.b16 %v8990, %v8986
        %v9079 = vpack.c.b16 %v8991, %v8987
        %v9080 = vpack.c.b16 %v8992, %v8988
        %v9081 = vpack.c.b16 %v8997, %v8993
        %v9082 = vpack.c.b16 %v8998, %v8994
        %v9083 = vpack.c.b16 %v8999, %v8995
        %v9084 = vpack.c.b16 %v9000, %v8996
        %v9085 = vpack.c.b16 %v9005, %v9001
        %v9086 = vpack.c.b16 %v9006, %v9002
        %v9087 = vpack.c.b16 %v9007, %v9003
        %v9088 = vpack.c.b16 %v9008, %v9004
        %v9089 = vpack.c.b16 %v9013, %v9009
        %v9090 = vpack.c.b16 %v9014, %v9010
        %v9091 = vpack.c.b16 %v9015, %v9011
        %v9092 = vpack.c.b16 %v9016, %v9012
        %v9093 = vpack.c.b16 %v9021, %v9017
        %v9094 = vpack.c.b16 %v9022, %v9018
        %v9095 = vpack.c.b16 %v9023, %v9019
        %v9096 = vpack.c.b16 %v9024, %v9020
        %v9097 = vpack.c.b16 %v9029, %v9025
        %v9098 = vpack.c.b16 %v9030, %v9026
        %v9099 = vpack.c.b16 %v9031, %v9027
        %v9100 = vpack.c.b16 %v9032, %v9028
        %v9101 = vpack.c.b16 %v9037, %v9033
        %v9102 = vpack.c.b16 %v9038, %v9034
        %v9103 = vpack.c.b16 %v9039, %v9035
        %v9104 = vpack.c.b16 %v9040, %v9036
        %9169 = vmatprep.subr.bf16.mxu0 %v9070
        %9170 = vmatpush1.bf16.msra.mxu0 %v9069
        %9171 = vmatprep.subr.bf16.mxu0 %v9066
        %9172 = vmatpush1.bf16.msra.mxu0 %v9065
        %9173 = vmatprep.subr.bf16.mxu0 %v9062
        %9174 = vmatpush1.bf16.msra.mxu0 %v9061
        %9175 = vmatprep.subr.bf16.mxu0 %v9058
        %9176 = vmatpush1.bf16.msra.mxu0 %v9057
        %9177 = vmatprep.subr.bf16.mxu0 %v9054
        %9178 = vmatpush1.bf16.msra.mxu0 %v9053
        %9179 = vmatprep.subr.bf16.mxu0 %v9050
        %9180 = vmatpush1.bf16.msra.mxu0 %v9049
        %9181 = vmatprep.subr.bf16.mxu0 %v9046
        %9182 = vmatpush1.bf16.msra.mxu0 %v9045
        %9183 = vmatprep.subr.bf16.mxu0 %v9042
        %9184 = vmatpush1.bf16.msra.mxu0 %v9041
        %9185 = vmatprep.subr.bf16.mxu0 %v9102
        %9186 = vmatpush2.bf16.msra.mxu0 %v9101
        %9187 = vmatprep.subr.bf16.mxu0 %v9098
        %9188 = vmatpush2.bf16.msra.mxu0 %v9097
        %9189 = vmatprep.subr.bf16.mxu0 %v9094
        %9190 = vmatpush2.bf16.msra.mxu0 %v9093
        %9191 = vmatprep.subr.bf16.mxu0 %v9090
        %9192 = vmatpush2.bf16.msra.mxu0 %v9089
        %9193 = vmatprep.subr.bf16.mxu0 %v9086
        %9194 = vmatpush2.bf16.msra.mxu0 %v9085
        %9195 = vmatprep.subr.bf16.mxu0 %v9082
        %9196 = vmatpush2.bf16.msra.mxu0 %v9081
        %9197 = vmatprep.subr.bf16.mxu0 %v9078
        %9198 = vmatpush2.bf16.msra.mxu0 %v9077
        %9199 = vmatprep.subr.bf16.mxu0 %v9074
        %9200 = vmatpush2.bf16.msra.mxu0 %v9073
        %9201 = vmatprep.mubr.bf16.mxu0 %v8780
        %9202 = vmatmul.mubr.bf16.gmra.mxu0 %v8779
        %v9203 = vpop.f32.mrf.mxu0
        %v9204 = vadd.f32 %v8845, %v9203
        %v9205 = vpop.f32.mrf.mxu0
        %v9206 = vadd.f32 %v8846, %v9205
        %v9207 = vpop.f32.mrf.mxu0
        %v9208 = vpop.f32.mrf.mxu0
        %9209 = vdwg.mxu0
        %9210 = vmatprep.subr.bf16.mxu0 %v9072
        %9211 = vmatpush1.bf16.msra.mxu0 %v9071
        %9212 = vmatprep.subr.bf16.mxu0 %v9068
        %9213 = vmatpush1.bf16.msra.mxu0 %v9067
        %9214 = vmatprep.subr.bf16.mxu0 %v9064
        %9215 = vmatpush1.bf16.msra.mxu0 %v9063
        %9216 = vmatprep.subr.bf16.mxu0 %v9060
        %9217 = vmatpush1.bf16.msra.mxu0 %v9059
        %9218 = vmatprep.subr.bf16.mxu0 %v9056
        %9219 = vmatpush1.bf16.msra.mxu0 %v9055
        %9220 = vmatprep.subr.bf16.mxu0 %v9052
        %9221 = vmatpush1.bf16.msra.mxu0 %v9051
        %9222 = vmatprep.subr.bf16.mxu0 %v9048
        %9223 = vmatpush1.bf16.msra.mxu0 %v9047
        %9224 = vmatprep.subr.bf16.mxu0 %v9044
        %9225 = vmatpush1.bf16.msra.mxu0 %v9043
        %9226 = vmatprep.subr.bf16.mxu0 %v9104
        %9227 = vmatpush2.bf16.msra.mxu0 %v9103
        %9228 = vmatprep.subr.bf16.mxu0 %v9100
        %9229 = vmatpush2.bf16.msra.mxu0 %v9099
        %9230 = vmatprep.subr.bf16.mxu0 %v9096
        %9231 = vmatpush2.bf16.msra.mxu0 %v9095
        %9232 = vmatprep.subr.bf16.mxu0 %v9092
        %9233 = vmatpush2.bf16.msra.mxu0 %v9091
        %9234 = vmatprep.subr.bf16.mxu0 %v9088
        %9235 = vmatpush2.bf16.msra.mxu0 %v9087
        %9236 = vmatprep.subr.bf16.mxu0 %v9084
        %9237 = vmatpush2.bf16.msra.mxu0 %v9083
        %9238 = vmatprep.subr.bf16.mxu0 %v9080
        %9239 = vmatpush2.bf16.msra.mxu0 %v9079
        %9240 = vmatprep.subr.bf16.mxu0 %v9076
        %9241 = vmatpush2.bf16.msra.mxu0 %v9075
        %9242 = vmatprep.mubr.bf16.mxu0 %v8780
        %9243 = vmatmul.mubr.bf16.gmra.mxu0 %v8779
        %v9244 = vpop.f32.mrf.mxu0
        %v9245 = vadd.f32 %v8847, %v9244
        %v9246 = vpop.f32.mrf.mxu0
        %v9247 = vadd.f32 %v8848, %v9246
        %v9248 = vpop.f32.mrf.mxu0
        %v9249 = vpop.f32.mrf.mxu0
        %9250 = vdwg.mxu0
        %v9251 = vxor.u32 %v9204, 2147483648
        %v9252 = vxor.u32 %v9206, 2147483648
        %v9253 = vxor.u32 %v9245, 2147483648
        %v9254 = vmul.f32 %v9251, 1.442695
        %v9255 = vpow.pop %v9254
        %v9256 = vmul.f32 %v9252, 1.442695
        %v9257 = vpow.pop %v9256
        %v9258 = vmul.f32 %v9253, 1.442695
        %v9259 = vpow.pop %v9258
        %v9260 = vadd.f32 %v9255, 1.0
        %v9261 = vadd.f32 %v9257, 1.0
        %v9262 = vadd.f32 %v9259, 1.0
        %v9263 = vrcp.pop %v9260
        %v9264 = vmul.f32 1.0, %v9263
        %v9265 = vrcp.pop %v9261
        %v9266 = vmul.f32 1.0, %v9265
        %v9267 = vrcp.pop %v9262
        %v9268 = vmul.f32 1.0, %v9267
        %v9269 = vtanh.pop %v9247
        %v9270 = vld [vmem:[%s1592] sm:$0xff]
        %v9271 = vmul.f32 %v9266, %v9270
        %v9272 = vmul.f32 %v9264, %v9269
        %v9273 = vadd.f32 %v9271, %v9272
        %v9274 = vtanh.pop %v9273
        %v9275 = vmul.f32 %v9268, %v9274
        %9276 = vst [vmem:[%s1097] sm:$0xff] %v9275
        %9277 = vst [vmem:[%s1592] sm:$0xff] %v9273
        %v9278 = vpack.c.bf16 %v9275, %v9275
        %9279 = vmatprep.subr.bf16.mxu0 0
        %9280 = vmatpush1.bf16.msra.mxu0 %v1641
        %9281 = vmatprep.subr.bf16.mxu0 0
        %9282 = vmatpush1.bf16.msra.mxu0 %v1640
        %9283 = vmatprep.subr.bf16.mxu0 0
        %9284 = vmatpush1.bf16.msra.mxu0 %v1639
        %9285 = vmatprep.subr.bf16.mxu0 0
        %9286 = vmatpush1.bf16.msra.mxu0 %v1638
        %9287 = vmatprep.subr.bf16.mxu0 0
        %9288 = vmatpush1.bf16.msra.mxu0 %v1637
        %9289 = vmatprep.subr.bf16.mxu0 0
        %9290 = vmatpush1.bf16.msra.mxu0 %v1636
        %9291 = vmatprep.subr.bf16.mxu0 0
        %9292 = vmatpush1.bf16.msra.mxu0 %v1635
        %9293 = vmatprep.subr.bf16.mxu0 0
        %9294 = vmatpush1.bf16.msra.mxu0 %v1634
        %9295 = vmatprep.subr.bf16.mxu0 0
        %9296 = vmatpush2.bf16.msra.mxu0 0
        %9297 = vmatprep.subr.bf16.mxu0 0
        %9298 = vmatpush2.bf16.msra.mxu0 0
        %9299 = vmatprep.subr.bf16.mxu0 0
        %9300 = vmatpush2.bf16.msra.mxu0 0
        %9301 = vmatprep.subr.bf16.mxu0 0
        %9302 = vmatpush2.bf16.msra.mxu0 0
        %9303 = vmatprep.subr.bf16.mxu0 0
        %9304 = vmatpush2.bf16.msra.mxu0 0
        %9305 = vmatprep.subr.bf16.mxu0 0
        %9306 = vmatpush2.bf16.msra.mxu0 0
        %9307 = vmatprep.subr.bf16.mxu0 0
        %9308 = vmatpush2.bf16.msra.mxu0 0
        %9309 = vmatprep.subr.bf16.mxu0 0
        %9310 = vmatpush2.bf16.msra.mxu0 0
        %9311 = vmatprep.mubr.bf16.mxu0 0
        %9312 = vmatmul.mubr.bf16.gmra.mxu0 %v9278
        %v9313 = vpop.f32.mrf.mxu0
        %v9314 = vadd.f32 %v526, %v9313
        %v9315 = vpop.f32.mrf.mxu0
        %v9316 = vpop.f32.mrf.mxu0
        %v9317 = vpop.f32.mrf.mxu0
        %9318 = vdwg.mxu0
        %v9319 = vtanh.pop %v9314
        %s9320 = scalar_lea.vmem %s481, 56 [#allocation14]
        %9321 = vst [vmem:[%s9320] sm:$0xff] %v9319
        %s9322 = sand.u32 %s235, 1
        %s9323 = scalar_lea.sflag [#allocation4], %s9322
        %s9324 = sand.u32 %s235, 1
        %s9325 = smul.addr %s9324, 64
        %s9326 = scalar_lea.vmem [#allocation14], %s9325
        // Predicated region
        $region89: #{tpu_custom_call.1} parent=55 // pred_check
          %p9327 = pneg %p245
        $region90: #{tpu_custom_call.1} parent=55 // pred_check_branch
          %9329 = sbr.rel (%p9327) target = $region92
        $region91: #{tpu_custom_call.1} parent=55 // pred_region
          %s9330 = smul.u32 8, %s33
          %s9332 = ssub.s32 1024, 1024
          %9333 = vsyncadd %s9323, %s9332
          %s9334 = smul.addr %s9330, 128
          %s9335 = scalar_lea.hbm %s9, %s9334
          %s9336 = sshll.u32 %s9326, 4
          %s9337 = int_to_ptr.vmem [resolvable:$true] %s9336
          %9342 = dma.vmem_to_hbm [thread:$0]  %s9337, 1024, %s9335, %s9323, 128, 128, 8
        $region92: #{tpu_custom_call.1} parent=55 // pred_fallthru
          _
        // Predicated region
        $region93: #{tpu_custom_call.1} parent=55 // pred_check
          %p9343 = pneg %p266
        $region94: #{tpu_custom_call.1} parent=55 // pred_check_branch
          %9345 = sbr.rel (%p9343) target = $region96
        $region95: #{tpu_custom_call.1} parent=55 // pred_region
          %s9347 = ssub.s32 256, 256
          %9348 = vsyncadd [#allocation16], %s9347
          %s9349 = sshll.u32 [#allocation15], 4
          %s9350 = int_to_ptr.vmem [resolvable:$true] %s9349
          %9355 = dma.vmem_to_hbm [thread:$0]  %s9350, 256, %s10, [#allocation16], 128, 128, 8
        $region96: #{tpu_custom_call.1} parent=55 // pred_fallthru
          _
        // Predicated region
        $region97: #{tpu_custom_call.1} parent=55 // pred_check
          %p9356 = pneg %p287
        $region98: #{tpu_custom_call.1} parent=55 // pred_check_branch
          %9358 = sbr.rel (%p9356) target = $region100
        $region99: #{tpu_custom_call.1} parent=55 // pred_region
          %s9360 = ssub.s32 256, 256
          %9361 = vsyncadd [#allocation16], %s9360
          %s9362 = sshll.u32 [#allocation17], 4
          %s9363 = int_to_ptr.vmem [resolvable:$true] %s9362
          %9368 = dma.vmem_to_hbm [thread:$0]  %s9363, 256, %s11, [#allocation16], 128, 128, 8
        $region100: #{tpu_custom_call.1} parent=55 // pred_fallthru
          _
        // Predicated region
        $region101: #{tpu_custom_call.1} parent=55 // pred_check
          %p9369 = pneg %p266
        $region102: #{tpu_custom_call.1} parent=55 // pred_check_branch
          %9371 = sbr.rel (%p9369) target = $region104
        $region103: #{tpu_custom_call.1} parent=55 // pred_region
          %9372 = dma.done [#allocation16], 256
        $region104: #{tpu_custom_call.1} parent=55 // pred_fallthru
          _
        // Predicated region
        $region105: #{tpu_custom_call.1} parent=55 // pred_check
          %p9373 = pneg %p287
        $region106: #{tpu_custom_call.1} parent=55 // pred_check_branch
          %9375 = sbr.rel (%p9373) target = $region108
        $region107: #{tpu_custom_call.1} parent=55 // pred_region
          %9376 = dma.done [#allocation16], 256
        $region108: #{tpu_custom_call.1} parent=55 // pred_fallthru
          _
      $region56: #{tpu_custom_call.1} parent=5 // pred_fallthru
        _
      %p9377 = scmp.le.s32.totalorder 2, %s28
      // Predicated region
      $region109: #{tpu_custom_call.1} parent=5 // pred_check
        %p9378 = pneg %p9377
      $region110: #{tpu_custom_call.1} parent=5 // pred_check_branch
        %9380 = sbr.rel (%p9378) target = $region112
      $region111: #{tpu_custom_call.1} parent=5 // pred_region
        %s9381 = ssub.s32 %s28, 2
        // Predicated region
        $region113: #{tpu_custom_call.1} parent=111 // pred_check
          %p9382 = pneg %p251
        $region114: #{tpu_custom_call.1} parent=111 // pred_check_branch
          %9384 = sbr.rel (%p9382) target = $region116
        $region115: #{tpu_custom_call.1} parent=111 // pred_region
          %s9385 = sand.u32 %s236, 1
          %s9386 = scalar_lea.sflag [#allocation4], %s9385
          %s9387 = sand.u32 %s236, 1
          %s9388 = smul.addr %s9387, 64
          %s9389 = scalar_lea.vmem [#allocation14], %s9388
          %9390 = dma.done %s9386, 1024
        $region116: #{tpu_custom_call.1} parent=111 // pred_fallthru
          _
      $region112: #{tpu_custom_call.1} parent=5 // pred_fallthru
        _
    $region6: #{tpu_custom_call.1} parent=1 // loop_footer
      %s32 = sadd.s32 1, %s28
    $region7: #{tpu_custom_call.1} parent=1 // loop_footer_branch
      %27 = sbr.rel target = $region3
    $region8: #{tpu_custom_call.1} parent=1 // loop_exit
      _
    %9391 = vsyncpa [#allocation3], 1
    %s9392 = scalar_lea.sflag [#allocation3], 1
    %9393 = vsyncpa %s9392, 1
    %9394 = vsyncpa [#allocation6], 1
    %9395 = vsyncpa [#allocation9], 1
    %9396 = vsyncpa [#allocation12], 1
    %9397 = vsyncpa [#allocation4], 1
    %s9398 = scalar_lea.sflag [#allocation4], 1
    %9399 = vsyncpa %s9398, 1
    %9400 = vsyncpa [#allocation16], 1

</llo_original>
